<compile_context>
chip_gen: v6e
topology: v6e:2x2x1
jax: 0.10.0
libtpu: 0.0.40
codegen_flags: <defaults>
</compile_context>

<pallas_src>
import functools
import numpy as np
import jax
import jax.numpy as jnp
from jax.experimental import pallas as pl
from jax.experimental.pallas import tpu as pltpu

BN_EPS = 1e-5
BN_SCALE = float(1.0 / np.sqrt(1.0 + BN_EPS))
NUM_CLASSES = 21
MIN_PALLAS_ROWS = 128          # below this, use a plain jnp.dot epilogue
ACT_DTYPE = jnp.bfloat16       # activations end-to-end
VMEM_LIMIT_BYTES = 32 * 1024 * 1024   # > worst-case tile budget (~8 MiB),
                                       # safe on v5e/v6e (128 MiB) and v7x (64 MiB)
DEEP_K_STEPS = 16              # >= this many K steps -> 3-deep weight buffering


def _round_up(x, m):
    return ((x + m - 1) // m) * m


# ----------------------------------------------------------------------------
# Pallas kernels: tiled matmul (bf16 in / bf16 out, f32 acc) + fused epilogues
# ----------------------------------------------------------------------------
def _mm_kernel(a_ref, b_ref, o_ref, acc_ref, *, relu):
    @pl.when(pl.program_id(2) == 0)
    def _():
        acc_ref[...] = jnp.zeros_like(acc_ref)

    acc_ref[...] += jnp.dot(a_ref[...], b_ref[...],
                            preferred_element_type=jnp.float32)

    @pl.when(pl.program_id(2) == pl.num_programs(2) - 1)
    def _():
        y = acc_ref[...]
        if relu:
            y = jnp.maximum(y, 0.0)
        o_ref[...] = y.astype(o_ref.dtype)


def _mm_add_relu_kernel(a_ref, b_ref, r_ref, o_ref, acc_ref):
    """Matmul with fused residual add + ReLU (CFF block epilogue)."""
    @pl.when(pl.program_id(2) == 0)
    def _():
        acc_ref[...] = jnp.zeros_like(acc_ref)

    acc_ref[...] += jnp.dot(a_ref[...], b_ref[...],
                            preferred_element_type=jnp.float32)

    @pl.when(pl.program_id(2) == pl.num_programs(2) - 1)
    def _():
        y = acc_ref[...] + r_ref[...].astype(jnp.float32)
        o_ref[...] = jnp.maximum(y, 0.0).astype(o_ref.dtype)


def _pick_tiles(M, K, Np):
    # Np is pre-padded to a multiple of 128 (lane-dense stores).
    if Np % 512 == 0:
        tn = 512
    elif Np % 256 == 0:
        tn = 256
    else:
        tn = 128
    tk = K                                    # full-extent block (no K pad)
    for cand in (1024, 512, 256, 128):
        if K % cand == 0:
            tk = cand
            break
    if M % 512 == 0:
        tm = 512
    elif M % 256 == 0:
        tm = 256
    else:
        tm = 128                              # Pallas path only runs for M>=128
    return tm, tk, tn


def matmul_pallas(a, b, *, relu, residual=None):
    """a:(M,K) bf16, b:(K,Np) bf16 pre-packed; optional fused bf16 residual."""
    M, K = a.shape
    Kb, Np = b.shape
    assert K == Kb and Np % 128 == 0
    tm, tk, tn = _pick_tiles(M, K, Np)
    Mp = _round_up(M, tm)
    # Keep both v7x TensorCores busy: prefer splitting N (full-height MXU
    # passes, lane-dense 128-wide stores); never let tm drop below 128.
    if (Mp // tm) * (Np // tn) < 2:
        if tn >= 256:
            tn //= 2
        elif tm >= 256:
            tm //= 2
            Mp = _round_up(M, tm)

    a_p = a if Mp == M else jnp.pad(a, ((0, Mp - M), (0, 0)))

    k_steps = K // tk
    if k_steps >= DEEP_K_STEPS:
        # Deep reduction (e.g. psp_conv, K=36864 at real sizes): stream the
        # weight tiles with 3-deep buffering to hide residual DMA latency.
        b_spec = pl.BlockSpec((tk, tn), lambda i, j, k: (k, j),
                              pipeline_mode=pl.Buffered(3))
    else:
        b_spec = pl.BlockSpec((tk, tn), lambda i, j, k: (k, j))

    in_specs = [pl.BlockSpec((tm, tk), lambda i, j, k: (i, k)), b_spec]
    args = [a_p, b]
    if residual is not None:
        assert relu
        r_p = residual.astype(ACT_DTYPE)          # bf16 residual tile DMA
        if r_p.shape[1] != Np:
            r_p = jnp.pad(r_p, ((0, 0), (0, Np - r_p.shape[1])))
        if Mp != M:
            r_p = jnp.pad(r_p, ((0, Mp - M), (0, 0)))
        in_specs.append(pl.BlockSpec((tm, tn), lambda i, j, k: (i, j)))
        args.append(r_p)
        kernel = _mm_add_relu_kernel
    else:
        kernel = functools.partial(_mm_kernel, relu=relu)

    out = pl.pallas_call(
        kernel,
        out_shape=jax.ShapeDtypeStruct((Mp, Np), ACT_DTYPE),   # bf16 writeback
        grid_spec=pltpu.PrefetchScalarGridSpec(
            num_scalar_prefetch=0,
            grid=(Mp // tm, Np // tn, k_steps),
            in_specs=in_specs,
            out_specs=pl.BlockSpec((tm, tn), lambda i, j, k: (i, j)),
            scratch_shapes=[pltpu.VMEM((tm, tn), jnp.float32)],
        ),
        compiler_params=pltpu.CompilerParams(
            dimension_semantics=("parallel", "parallel", "arbitrary"),
            vmem_limit_bytes=VMEM_LIMIT_BYTES),
    )(*args)
    return out[:M] if Mp != M else out


def matmul_fused(a, b, *, relu, residual=None):
    """Dispatch: Pallas for big-M layers, jnp.dot for tiny ones. bf16 out."""
    assert residual is None or relu
    Kb, Np = b.shape
    a = a.astype(ACT_DTYPE)                      # no-op when already bf16
    if a.shape[1] != Kb:                         # weight K was padded to 16k
        a = jnp.pad(a, ((0, 0), (0, Kb - a.shape[1])))
    M = a.shape[0]
    if M < MIN_PALLAS_ROWS:
        y = jnp.dot(a, b, preferred_element_type=jnp.float32)
        if residual is not None:
            if residual.shape[1] != Np:
                residual = jnp.pad(residual,
                                   ((0, 0), (0, Np - residual.shape[1])))
            y = y + residual.astype(jnp.float32)
        if relu:
            y = jnp.maximum(y, 0.0)
        return y.astype(ACT_DTYPE)
    return matmul_pallas(a, b, relu=relu, residual=residual)


# ----------------------------------------------------------------------------
# Glue: NHWC im2col (bf16), bilinear resize (align_corners=True), adaptive pool
# ----------------------------------------------------------------------------
def im2col_nhwc(x, kh, kw, stride, padding, dilation):
    # x is bf16, so the 9-tap matrix is a single bf16 copy (one XLA fusion).
    N, H, W, C = x.shape
    OH = (H + 2 * padding - dilation * (kh - 1) - 1) // stride + 1
    OW = (W + 2 * padding - dilation * (kw - 1) - 1) // stride + 1
    xp = jnp.pad(x, ((0, 0), (padding, padding), (padding, padding), (0, 0)))
    taps = []
    for ky in range(kh):
        for kx in range(kw):
            y0, x0 = ky * dilation, kx * dilation
            patch = jax.lax.slice(
                xp, (0, y0, x0, 0),
                (N, y0 + (OH - 1) * stride + 1, x0 + (OW - 1) * stride + 1, C),
                (1, stride, stride, 1))               # (N,OH,OW,C)
            taps.append(patch)
    A = jnp.stack(taps, axis=3).reshape(N * OH * OW, kh * kw * C)
    return A, OH, OW


CONV_SHAPES = {   # name -> (cout, cin, kh, kw), shapes dictated by __init__
    'b1_c1': (32, 3, 3, 3), 'b1_c2': (32, 32, 3, 3), 'b1_c3': (64, 32, 3, 3),
    'bb0_c1': (32, 3, 3, 3), 'bb0_c2': (64, 32, 3, 3), 'bb0_c3': (64, 64, 3, 3),
    'bb1_c1': (2048, 64, 1, 1),
    'psp_b1': (512, 2048, 1, 1), 'psp_b2': (512, 2048, 1, 1),
    'psp_b3': (512, 2048, 1, 1), 'psp_b4': (512, 2048, 1, 1),
    'psp_conv': (512, 4096, 3, 3),
    'fb': (256, 512, 1, 1),
    'conv_y2': (256, 64, 1, 1),
    'cff24_low': (128, 256, 3, 3), 'cff24_high': (128, 256, 1, 1),
    'cff24_cls': (NUM_CLASSES, 128, 1, 1),
    'cff12_low': (128, 128, 3, 3), 'cff12_high': (128, 64, 1, 1),
    'cff12_cls': (NUM_CLASSES, 128, 1, 1),
    'head_cls': (NUM_CLASSES, 128, 1, 1),
}
NO_BN = {'cff24_cls', 'cff12_cls', 'head_cls'}   # plain conv1x1 (no BN/act)


def conv_block(x, params, name, *, stride=1, dilation=1, act=True,
               residual=None):
    """Conv2d (bias=False) + folded eval-mode BN + optional (fused) ReLU."""
    cout, cin, kh, kw = CONV_SHAPES[name]
    N, H, W, C = x.shape
    assert C == cin
    if kh == 1 and kw == 1 and stride == 1:
        A, OH, OW = x.reshape(N * H * W, C), H, W       # 1x1: no im2col
    else:
        padding = (kh // 2) * dilation
        A, OH, OW = im2col_nhwc(x, kh, kw, stride, padding, dilation)
    res2d = residual.reshape(N * OH * OW, -1) if residual is not None else None
    y = matmul_fused(A, params[name], relu=act, residual=res2d)
    # lane-padded Cout sliced off; bf16 halves this writeback vs. the old f32
    return y[:, :cout].reshape(N, OH, OW, cout)


def _interp_matrix(lo, li):      # bilinear, align_corners=True
    W = np.zeros((lo, li), np.float32)
    if lo == 1:
        W[0, 0] = 1.0
        return W
    scale = (li - 1) / (lo - 1)
    for i in range(lo):
        src = i * scale
        i0 = min(int(np.floor(src)), li - 1)
        i1 = min(i0 + 1, li - 1)
        w1 = src - i0
        W[i, i0] += 1.0 - w1
        W[i, i1] += w1
    return W


def _pool_matrix(lo, li):        # PyTorch AdaptiveAvgPool2d windows
    W = np.zeros((lo, li), np.float32)
    for i in range(lo):
        s = (i * li) // lo
        e = -(-((i + 1) * li) // lo)
        W[i, s:e] = 1.0 / (e - s)
    return W


def bilinear_resize(x, out_hw):
    _, H, Wd, _ = x.shape
    wh = jnp.asarray(_interp_matrix(out_hw[0], H), dtype=ACT_DTYPE)
    ww = jnp.asarray(_interp_matrix(out_hw[1], Wd), dtype=ACT_DTYPE)
    y = jnp.einsum('oh,nhwc->nowc', wh, x)
    return jnp.einsum('pw,nowc->nopc', ww, y)


def adaptive_avg_pool(x, out_hw):
    _, H, Wd, _ = x.shape
    ph = jnp.asarray(_pool_matrix(out_hw[0], H), dtype=ACT_DTYPE)
    pw = jnp.asarray(_pool_matrix(out_hw[1], Wd), dtype=ACT_DTYPE)
    y = jnp.einsum('oh,nhwc->nowc', ph, x)
    return jnp.einsum('pw,nowc->nopc', pw, y)


# ----------------------------------------------------------------------------
# ICNet model (forward only, NHWC / bf16 internally)
# ----------------------------------------------------------------------------
def ic_init_block(x, p):
    x = conv_block(x, p, 'b1_c1', stride=2)
    x = conv_block(x, p, 'b1_c2', stride=2)
    x = conv_block(x, p, 'b1_c3', stride=2)
    return x


def backbone0(x, p):   # user-supplied feature extractor (x8 downsample)
    x = conv_block(x, p, 'bb0_c1', stride=2)
    x = conv_block(x, p, 'bb0_c2', stride=2)
    x = conv_block(x, p, 'bb0_c3', stride=2)
    return x


def backbone1(x, p):   # user-supplied feature extractor (no downsample)
    return conv_block(x, p, 'bb1_c1')


def pyramid_pooling(x, p, out_size):
    branches = [x]
    for i, ps in enumerate((1, 2, 3, 6)):
        y = adaptive_avg_pool(x, (ps, ps))
        y = conv_block(y, p, 'psp_b%d' % (i + 1))
        y = bilinear_resize(y, out_size)
        branches.append(y)
    return jnp.concatenate(branches, axis=3)


def psp_block(x, p, out_size):
    x = pyramid_pooling(x, p, out_size)
    x = conv_block(x, p, 'psp_conv')
    # Dropout(p=0.1) is identity in eval mode.
    return x


def branch2(x, p, in_size):
    x = bilinear_resize(x, (x.shape[1] // 2, x.shape[2] // 2))     # down1
    y2 = backbone0(x, p)                                           # do_output
    x = bilinear_resize(y2, (y2.shape[1] // 2, y2.shape[2] // 2))  # down2
    x = backbone1(x, p)
    x = psp_block(x, p, (in_size[0] // 32, in_size[1] // 32))
    x = conv_block(x, p, 'fb')                                     # final_block
    return x, y2                                                   # (y3, y2)


def cff_block(xl, xh, p, prefix):
    xl = bilinear_resize(xl, (xl.shape[1] * 2, xl.shape[2] * 2))
    xl = conv_block(xl, p, prefix + '_low', dilation=2, act=False)
    # x = relu(conv_low(xl) + conv_high(xh)) fused into conv_high's epilogue
    x = conv_block(xh, p, prefix + '_high', act=True, residual=xl)
    x_cls = conv_block(xl, p, prefix + '_cls', act=False)   # conv_cls(xl)
    return x, x_cls


def ic_head(x1, x2, x4, p):
    outputs = []
    x_cff_24, x_24_cls = cff_block(x4, x2, p, 'cff24')
    outputs.append(x_24_cls)
    x_cff_12, x_12_cls = cff_block(x_cff_24, x1, p, 'cff12')
    outputs.append(x_12_cls)
    # conv_cls is a bias-free 1x1 conv with no activation, so it commutes with
    # the channel-wise bilinear 2x upsample: run 128->21 at low resolution,
    # then upsample the 21-channel logits (identical result, 4x fewer rows).
    cls_lo = conv_block(x_cff_12, p, 'head_cls', act=False)
    up_x2 = bilinear_resize(cls_lo, (cls_lo.shape[1] * 2, cls_lo.shape[2] * 2))
    outputs.append(up_x2)
    up_x8 = bilinear_resize(up_x2, (up_x2.shape[1] * 4, up_x2.shape[2] * 4))
    outputs.append(up_x8)
    outputs.reverse()
    return tuple(outputs)


def icnet_forward(x_nchw, params, in_size, aux=False):
    # NCHW -> NHWC and cast to bf16 ONCE; everything downstream stays bf16.
    x = jnp.transpose(x_nchw, (0, 2, 3, 1)).astype(ACT_DTYPE)
    y1 = ic_init_block(x, params)
    y3, y2 = branch2(x, params, in_size)
    y2 = conv_block(y2, params, 'conv_y2')
    outs = ic_head(y1, y2, y3, params)
    outs = tuple(jnp.transpose(o, (0, 3, 1, 2)).astype(jnp.float32)
                 for o in outs)                               # back to NCHW f32
    return outs if aux else outs[0]


# ----------------------------------------------------------------------------
# Deterministic parameter init + one-time weight packing
# ----------------------------------------------------------------------------
def _pack_conv(w, use_bn):
    """(Cout,Cin,KH,KW) -> (K,Np) bf16 matrix with BN scale folded in.

    K ordering is (ky, kx, cin) to match im2col_nhwc; K padded to 16k for
    clean bf16 sublane packing, Cout padded to a lane-dense multiple of 128.
    """
    cout, cin, kh, kw = w.shape
    wm = jnp.transpose(w, (2, 3, 1, 0)).reshape(kh * kw * cin, cout)
    if use_bn:
        wm = wm * BN_SCALE          # eval-mode BN (gamma=1,beta=0,mean=0,var=1)
    k = wm.shape[0]
    wm = jnp.pad(wm, ((0, _round_up(k, 16) - k),
                      (0, _round_up(cout, 128) - cout)))
    return wm.astype(jnp.bfloat16)


def init_params(key):
    names = sorted(CONV_SHAPES)
    keys = jax.random.split(key, len(names))
    params = {}
    for k_, name in zip(keys, names):
        cout, cin, kh, kw = CONV_SHAPES[name]
        fan_in = cin * kh * kw
        w = (jax.random.normal(k_, (cout, cin, kh, kw), jnp.float32)
             * np.sqrt(2.0 / fan_in))
        params[name] = _pack_conv(w, use_bn=(name not in NO_BN))
    return params


if __name__ == "__main__":
    IN_SIZE = (64, 64)   # must be divisible by 32 for the fixed-size PSP head
    key = jax.random.PRNGKey(0)
    pkey, xkey = jax.random.split(key)
    params = init_params(pkey)
    x = jax.random.normal(xkey, (2, 3, IN_SIZE[0], IN_SIZE[1]), jnp.float32)

    fwd = jax.jit(functools.partial(icnet_forward, in_size=IN_SIZE))
    out = fwd(x, params)
    out = jax.block_until_ready(out)
    assert out.shape == (2, NUM_CLASSES, IN_SIZE[0], IN_SIZE[1])
    assert jnp.isfinite(out).all()
    print("KERNEL_OK")
</pallas_src>

<mosaic_0001>
module attributes {stable_mosaic.version = 11 : i64} {
  func.func @_mm_kernel(%arg0: i32, %arg1: i32, %arg2: i32, %arg3: memref<256x32xbf16, #tpu.memory_space<vmem>>, %arg4: memref<32x128xbf16, #tpu.memory_space<vmem>>, %arg5: memref<256x128xbf16, #tpu.memory_space<vmem>>, %arg6: memref<256x128xf32, #tpu.memory_space<vmem>>) attributes {dimension_semantics = [#tpu.dimension_semantics<parallel>, #tpu.dimension_semantics<parallel>, #tpu.dimension_semantics<arbitrary>], iteration_bounds = array<i64: 2, 1, 1>, scalar_prefetch = 0 : i64, scratch_operands = 1 : i64, tpu.core_type = #tpu.core_type<tc>, window_params = [{transform_indices = @transform_0, window_bounds = array<i64: 256, 32>}, {transform_indices = @transform_1, window_bounds = array<i64: 32, 128>}, {transform_indices = @transform_2, window_bounds = array<i64: 256, 128>}]} {
    %c0_i32 = arith.constant 0 : i32
    %0 = arith.cmpi eq, %arg2, %c0_i32 : i32
    %1 = arith.extui %0 : i1 to i32
    %c0_i32_0 = arith.constant 0 : i32
    %2 = arith.cmpi ne, %1, %c0_i32_0 : i32
    scf.if %2 {
      %cst_10 = arith.constant 0.000000e+00 : f32
      %12 = vector.broadcast %cst_10 : f32 to vector<256x128xf32>
      %c0_11 = arith.constant 0 : index
      %c0_12 = arith.constant 0 : index
      %13 = vector.load %arg6[%c0_11, %c0_12] : memref<256x128xf32, #tpu.memory_space<vmem>>, vector<256x128xf32>
      tpu.vector_store %arg6[%c0_11, %c0_12], %12 {strides = array<i32>} : memref<256x128xf32, #tpu.memory_space<vmem>>, vector<256x128xf32>,
    } else {
    }
    %c0 = arith.constant 0 : index
    %c0_1 = arith.constant 0 : index
    %3 = vector.load %arg6[%c0, %c0_1] : memref<256x128xf32, #tpu.memory_space<vmem>>, vector<256x128xf32>
    %c0_2 = arith.constant 0 : index
    %c0_3 = arith.constant 0 : index
    %4 = vector.load %arg3[%c0_2, %c0_3] : memref<256x32xbf16, #tpu.memory_space<vmem>>, vector<256x32xbf16>
    %c0_4 = arith.constant 0 : index
    %c0_5 = arith.constant 0 : index
    %5 = vector.load %arg4[%c0_4, %c0_5] : memref<32x128xbf16, #tpu.memory_space<vmem>>, vector<32x128xbf16>
    %cst = arith.constant dense<0.000000e+00> : vector<256x128xf32>
    %6 = tpu.matmul %4, %5, %cst {dimension_numbers = #tpu.dot_dimension_numbers<[1], [0], [0], [1], [0, 0, 1, 1], [], []>} : vector<256x32xbf16>, vector<32x128xbf16>, vector<256x128xf32> -> vector<256x128xf32>
    %7 = arith.addf %3, %6 : vector<256x128xf32>
    %c0_6 = arith.constant 0 : index
    %c0_7 = arith.constant 0 : index
    %8 = vector.load %arg6[%c0_6, %c0_7] : memref<256x128xf32, #tpu.memory_space<vmem>>, vector<256x128xf32>
    tpu.vector_store %arg6[%c0_6, %c0_7], %7 {strides = array<i32>} : memref<256x128xf32, #tpu.memory_space<vmem>>, vector<256x128xf32>,
    %c0_i32_8 = arith.constant 0 : i32
    %9 = arith.cmpi eq, %arg2, %c0_i32_8 : i32
    %10 = arith.extui %9 : i1 to i32
    %c0_i32_9 = arith.constant 0 : i32
    %11 = arith.cmpi ne, %10, %c0_i32_9 : i32
    scf.if %11 {
      %c0_10 = arith.constant 0 : index
      %c0_11 = arith.constant 0 : index
      %12 = vector.load %arg6[%c0_10, %c0_11] : memref<256x128xf32, #tpu.memory_space<vmem>>, vector<256x128xf32>
      %cst_12 = arith.constant 0.000000e+00 : f32
      %13 = vector.broadcast %cst_12 : f32 to vector<256x128xf32>
      %14 = arith.maximumf %12, %13 : vector<256x128xf32>
      %15 = arith.truncf %14 : vector<256x128xf32> to vector<256x128xbf16>
      %c0_13 = arith.constant 0 : index
      %c0_14 = arith.constant 0 : index
      %16 = vector.load %arg5[%c0_13, %c0_14] : memref<256x128xbf16, #tpu.memory_space<vmem>>, vector<256x128xbf16>
      tpu.vector_store %arg5[%c0_13, %c0_14], %15 {strides = array<i32>} : memref<256x128xbf16, #tpu.memory_space<vmem>>, vector<256x128xbf16>,
    } else {
    }
    return
  }
  func.func @transform_0(%arg0: i32, %arg1: i32, %arg2: i32) -> (i32, i32) {
    %c0_i32 = arith.constant 0 : i32
    return %arg0, %arg2 : i32, i32
  }
  func.func @transform_1(%arg0: i32, %arg1: i32, %arg2: i32) -> (i32, i32) {
    %c0_i32 = arith.constant 0 : i32
    return %arg2, %arg1 : i32, i32
  }
  func.func @transform_2(%arg0: i32, %arg1: i32, %arg2: i32) -> (i32, i32) {
    %c0_i32 = arith.constant 0 : i32
    return %arg0, %arg1 : i32, i32
  }
}

module attributes {stable_mosaic.version = 11 : i64} {
  func.func @_mm_kernel(%arg0: i32, %arg1: i32, %arg2: i32, %arg3: memref<128x288xbf16, #tpu.memory_space<vmem>>, %arg4: memref<288x128xbf16, #tpu.memory_space<vmem>>, %arg5: memref<128x128xbf16, #tpu.memory_space<vmem>>, %arg6: memref<128x128xf32, #tpu.memory_space<vmem>>) attributes {dimension_semantics = [#tpu.dimension_semantics<parallel>, #tpu.dimension_semantics<parallel>, #tpu.dimension_semantics<arbitrary>], iteration_bounds = array<i64: 1, 1, 1>, scalar_prefetch = 0 : i64, scratch_operands = 1 : i64, tpu.core_type = #tpu.core_type<tc>, window_params = [{transform_indices = @transform_0, window_bounds = array<i64: 128, 288>}, {transform_indices = @transform_1, window_bounds = array<i64: 288, 128>}, {transform_indices = @transform_2, window_bounds = array<i64: 128, 128>}]} {
    %c0_i32 = arith.constant 0 : i32
    %0 = arith.cmpi eq, %arg2, %c0_i32 : i32
    %1 = arith.extui %0 : i1 to i32
    %c0_i32_0 = arith.constant 0 : i32
    %2 = arith.cmpi ne, %1, %c0_i32_0 : i32
    scf.if %2 {
      %cst_10 = arith.constant 0.000000e+00 : f32
      %12 = vector.broadcast %cst_10 : f32 to vector<128x128xf32>
      %c0_11 = arith.constant 0 : index
      %c0_12 = arith.constant 0 : index
      %13 = vector.load %arg6[%c0_11, %c0_12] : memref<128x128xf32, #tpu.memory_space<vmem>>, vector<128x128xf32>
      tpu.vector_store %arg6[%c0_11, %c0_12], %12 {strides = array<i32>} : memref<128x128xf32, #tpu.memory_space<vmem>>, vector<128x128xf32>,
    } else {
    }
    %c0 = arith.constant 0 : index
    %c0_1 = arith.constant 0 : index
    %3 = vector.load %arg6[%c0, %c0_1] : memref<128x128xf32, #tpu.memory_space<vmem>>, vector<128x128xf32>
    %c0_2 = arith.constant 0 : index
    %c0_3 = arith.constant 0 : index
    %4 = vector.load %arg3[%c0_2, %c0_3] : memref<128x288xbf16, #tpu.memory_space<vmem>>, vector<128x288xbf16>
    %c0_4 = arith.constant 0 : index
    %c0_5 = arith.constant 0 : index
    %5 = vector.load %arg4[%c0_4, %c0_5] : memref<288x128xbf16, #tpu.memory_space<vmem>>, vector<288x128xbf16>
    %cst = arith.constant dense<0.000000e+00> : vector<128x128xf32>
    %6 = tpu.matmul %4, %5, %cst {dimension_numbers = #tpu.dot_dimension_numbers<[1], [0], [0], [1], [0, 0, 1, 1], [], []>} : vector<128x288xbf16>, vector<288x128xbf16>, vector<128x128xf32> -> vector<128x128xf32>
    %7 = arith.addf %3, %6 : vector<128x128xf32>
    %c0_6 = arith.constant 0 : index
    %c0_7 = arith.constant 0 : index
    %8 = vector.load %arg6[%c0_6, %c0_7] : memref<128x128xf32, #tpu.memory_space<vmem>>, vector<128x128xf32>
    tpu.vector_store %arg6[%c0_6, %c0_7], %7 {strides = array<i32>} : memref<128x128xf32, #tpu.memory_space<vmem>>, vector<128x128xf32>,
    %c0_i32_8 = arith.constant 0 : i32
    %9 = arith.cmpi eq, %arg2, %c0_i32_8 : i32
    %10 = arith.extui %9 : i1 to i32
    %c0_i32_9 = arith.constant 0 : i32
    %11 = arith.cmpi ne, %10, %c0_i32_9 : i32
    scf.if %11 {
      %c0_10 = arith.constant 0 : index
      %c0_11 = arith.constant 0 : index
      %12 = vector.load %arg6[%c0_10, %c0_11] : memref<128x128xf32, #tpu.memory_space<vmem>>, vector<128x128xf32>
      %cst_12 = arith.constant 0.000000e+00 : f32
      %13 = vector.broadcast %cst_12 : f32 to vector<128x128xf32>
      %14 = arith.maximumf %12, %13 : vector<128x128xf32>
      %15 = arith.truncf %14 : vector<128x128xf32> to vector<128x128xbf16>
      %c0_13 = arith.constant 0 : index
      %c0_14 = arith.constant 0 : index
      %16 = vector.load %arg5[%c0_13, %c0_14] : memref<128x128xbf16, #tpu.memory_space<vmem>>, vector<128x128xbf16>
      tpu.vector_store %arg5[%c0_13, %c0_14], %15 {strides = array<i32>} : memref<128x128xbf16, #tpu.memory_space<vmem>>, vector<128x128xbf16>,
    } else {
    }
    return
  }
  func.func @transform_0(%arg0: i32, %arg1: i32, %arg2: i32) -> (i32, i32) {
    %c0_i32 = arith.constant 0 : i32
    return %arg0, %arg2 : i32, i32
  }
  func.func @transform_1(%arg0: i32, %arg1: i32, %arg2: i32) -> (i32, i32) {
    %c0_i32 = arith.constant 0 : i32
    return %arg2, %arg1 : i32, i32
  }
  func.func @transform_2(%arg0: i32, %arg1: i32, %arg2: i32) -> (i32, i32) {
    %c0_i32 = arith.constant 0 : i32
    return %arg0, %arg1 : i32, i32
  }
}

module attributes {stable_mosaic.version = 11 : i64} {
  func.func @_mm_kernel(%arg0: i32, %arg1: i32, %arg2: i32, %arg3: memref<128x128xbf16, #tpu.memory_space<vmem>>, %arg4: memref<128x128xbf16, #tpu.memory_space<vmem>>, %arg5: memref<128x128xbf16, #tpu.memory_space<vmem>>, %arg6: memref<128x128xf32, #tpu.memory_space<vmem>>) attributes {dimension_semantics = [#tpu.dimension_semantics<parallel>, #tpu.dimension_semantics<parallel>, #tpu.dimension_semantics<arbitrary>], iteration_bounds = array<i64: 1, 1, 9>, scalar_prefetch = 0 : i64, scratch_operands = 1 : i64, tpu.core_type = #tpu.core_type<tc>, window_params = [{transform_indices = @transform_0, window_bounds = array<i64: 128, 128>}, {transform_indices = @transform_1, window_bounds = array<i64: 128, 128>}, {transform_indices = @transform_2, window_bounds = array<i64: 128, 128>}]} {
    %c0_i32 = arith.constant 0 : i32
    %0 = arith.cmpi eq, %arg2, %c0_i32 : i32
    %1 = arith.extui %0 : i1 to i32
    %c0_i32_0 = arith.constant 0 : i32
    %2 = arith.cmpi ne, %1, %c0_i32_0 : i32
    scf.if %2 {
      %cst_9 = arith.constant 0.000000e+00 : f32
      %12 = vector.broadcast %cst_9 : f32 to vector<128x128xf32>
      %c0_10 = arith.constant 0 : index
      %c0_11 = arith.constant 0 : index
      %13 = vector.load %arg6[%c0_10, %c0_11] : memref<128x128xf32, #tpu.memory_space<vmem>>, vector<128x128xf32>
      tpu.vector_store %arg6[%c0_10, %c0_11], %12 {strides = array<i32>} : memref<128x128xf32, #tpu.memory_space<vmem>>, vector<128x128xf32>,
    } else {
    }
    %c0 = arith.constant 0 : index
    %c0_1 = arith.constant 0 : index
    %3 = vector.load %arg6[%c0, %c0_1] : memref<128x128xf32, #tpu.memory_space<vmem>>, vector<128x128xf32>
    %c0_2 = arith.constant 0 : index
    %c0_3 = arith.constant 0 : index
    %4 = vector.load %arg3[%c0_2, %c0_3] : memref<128x128xbf16, #tpu.memory_space<vmem>>, vector<128x128xbf16>
    %c0_4 = arith.constant 0 : index
    %c0_5 = arith.constant 0 : index
    %5 = vector.load %arg4[%c0_4, %c0_5] : memref<128x128xbf16, #tpu.memory_space<vmem>>, vector<128x128xbf16>
    %cst = arith.constant dense<0.000000e+00> : vector<128x128xf32>
    %6 = tpu.matmul %4, %5, %cst {dimension_numbers = #tpu.dot_dimension_numbers<[1], [0], [0], [1], [0, 0, 1, 1], [], []>} : vector<128x128xbf16>, vector<128x128xbf16>, vector<128x128xf32> -> vector<128x128xf32>
    %7 = arith.addf %3, %6 : vector<128x128xf32>
    %c0_6 = arith.constant 0 : index
    %c0_7 = arith.constant 0 : index
    %8 = vector.load %arg6[%c0_6, %c0_7] : memref<128x128xf32, #tpu.memory_space<vmem>>, vector<128x128xf32>
    tpu.vector_store %arg6[%c0_6, %c0_7], %7 {strides = array<i32>} : memref<128x128xf32, #tpu.memory_space<vmem>>, vector<128x128xf32>,
    %c8_i32 = arith.constant 8 : i32
    %9 = arith.cmpi eq, %arg2, %c8_i32 : i32
    %10 = arith.extui %9 : i1 to i32
    %c0_i32_8 = arith.constant 0 : i32
    %11 = arith.cmpi ne, %10, %c0_i32_8 : i32
    scf.if %11 {
      %c0_9 = arith.constant 0 : index
      %c0_10 = arith.constant 0 : index
      %12 = vector.load %arg6[%c0_9, %c0_10] : memref<128x128xf32, #tpu.memory_space<vmem>>, vector<128x128xf32>
      %13 = arith.truncf %12 : vector<128x128xf32> to vector<128x128xbf16>
      %c0_11 = arith.constant 0 : index
      %c0_12 = arith.constant 0 : index
      %14 = vector.load %arg5[%c0_11, %c0_12] : memref<128x128xbf16, #tpu.memory_space<vmem>>, vector<128x128xbf16>
      tpu.vector_store %arg5[%c0_11, %c0_12], %13 {strides = array<i32>} : memref<128x128xbf16, #tpu.memory_space<vmem>>, vector<128x128xbf16>,
    } else {
    }
    return
  }
  func.func @transform_0(%arg0: i32, %arg1: i32, %arg2: i32) -> (i32, i32) {
    %c0_i32 = arith.constant 0 : i32
    return %arg0, %arg2 : i32, i32
  }
  func.func @transform_1(%arg0: i32, %arg1: i32, %arg2: i32) -> (i32, i32) {
    %c0_i32 = arith.constant 0 : i32
    return %arg2, %arg1 : i32, i32
  }
  func.func @transform_2(%arg0: i32, %arg1: i32, %arg2: i32) -> (i32, i32) {
    %c0_i32 = arith.constant 0 : i32
    return %arg0, %arg1 : i32, i32
  }
}

module attributes {stable_mosaic.version = 11 : i64} {
  func.func @_mm_kernel(%arg0: i32, %arg1: i32, %arg2: i32, %arg3: memref<512x32xbf16, #tpu.memory_space<vmem>>, %arg4: memref<32x128xbf16, #tpu.memory_space<vmem>>, %arg5: memref<512x128xbf16, #tpu.memory_space<vmem>>, %arg6: memref<512x128xf32, #tpu.memory_space<vmem>>) attributes {dimension_semantics = [#tpu.dimension_semantics<parallel>, #tpu.dimension_semantics<parallel>, #tpu.dimension_semantics<arbitrary>], iteration_bounds = array<i64: 4, 1, 1>, scalar_prefetch = 0 : i64, scratch_operands = 1 : i64, tpu.core_type = #tpu.core_type<tc>, window_params = [{transform_indices = @transform_0, window_bounds = array<i64: 512, 32>}, {transform_indices = @transform_1, window_bounds = array<i64: 32, 128>}, {transform_indices = @transform_2, window_bounds = array<i64: 512, 128>}]} {
    %c0_i32 = arith.constant 0 : i32
    %0 = arith.cmpi eq, %arg2, %c0_i32 : i32
    %1 = arith.extui %0 : i1 to i32
    %c0_i32_0 = arith.constant 0 : i32
    %2 = arith.cmpi ne, %1, %c0_i32_0 : i32
    scf.if %2 {
      %cst_10 = arith.constant 0.000000e+00 : f32
      %12 = vector.broadcast %cst_10 : f32 to vector<512x128xf32>
      %c0_11 = arith.constant 0 : index
      %c0_12 = arith.constant 0 : index
      %13 = vector.load %arg6[%c0_11, %c0_12] : memref<512x128xf32, #tpu.memory_space<vmem>>, vector<512x128xf32>
      tpu.vector_store %arg6[%c0_11, %c0_12], %12 {strides = array<i32>} : memref<512x128xf32, #tpu.memory_space<vmem>>, vector<512x128xf32>,
    } else {
    }
    %c0 = arith.constant 0 : index
    %c0_1 = arith.constant 0 : index
    %3 = vector.load %arg6[%c0, %c0_1] : memref<512x128xf32, #tpu.memory_space<vmem>>, vector<512x128xf32>
    %c0_2 = arith.constant 0 : index
    %c0_3 = arith.constant 0 : index
    %4 = vector.load %arg3[%c0_2, %c0_3] : memref<512x32xbf16, #tpu.memory_space<vmem>>, vector<512x32xbf16>
    %c0_4 = arith.constant 0 : index
    %c0_5 = arith.constant 0 : index
    %5 = vector.load %arg4[%c0_4, %c0_5] : memref<32x128xbf16, #tpu.memory_space<vmem>>, vector<32x128xbf16>
    %cst = arith.constant dense<0.000000e+00> : vector<512x128xf32>
    %6 = tpu.matmul %4, %5, %cst {dimension_numbers = #tpu.dot_dimension_numbers<[1], [0], [0], [1], [0, 0, 1, 1], [], []>} : vector<512x32xbf16>, vector<32x128xbf16>, vector<512x128xf32> -> vector<512x128xf32>
    %7 = arith.addf %3, %6 : vector<512x128xf32>
    %c0_6 = arith.constant 0 : index
    %c0_7 = arith.constant 0 : index
    %8 = vector.load %arg6[%c0_6, %c0_7] : memref<512x128xf32, #tpu.memory_space<vmem>>, vector<512x128xf32>
    tpu.vector_store %arg6[%c0_6, %c0_7], %7 {strides = array<i32>} : memref<512x128xf32, #tpu.memory_space<vmem>>, vector<512x128xf32>,
    %c0_i32_8 = arith.constant 0 : i32
    %9 = arith.cmpi eq, %arg2, %c0_i32_8 : i32
    %10 = arith.extui %9 : i1 to i32
    %c0_i32_9 = arith.constant 0 : i32
    %11 = arith.cmpi ne, %10, %c0_i32_9 : i32
    scf.if %11 {
      %c0_10 = arith.constant 0 : index
      %c0_11 = arith.constant 0 : index
      %12 = vector.load %arg6[%c0_10, %c0_11] : memref<512x128xf32, #tpu.memory_space<vmem>>, vector<512x128xf32>
      %cst_12 = arith.constant 0.000000e+00 : f32
      %13 = vector.broadcast %cst_12 : f32 to vector<512x128xf32>
      %14 = arith.maximumf %12, %13 : vector<512x128xf32>
      %15 = arith.truncf %14 : vector<512x128xf32> to vector<512x128xbf16>
      %c0_13 = arith.constant 0 : index
      %c0_14 = arith.constant 0 : index
      %16 = vector.load %arg5[%c0_13, %c0_14] : memref<512x128xbf16, #tpu.memory_space<vmem>>, vector<512x128xbf16>
      tpu.vector_store %arg5[%c0_13, %c0_14], %15 {strides = array<i32>} : memref<512x128xbf16, #tpu.memory_space<vmem>>, vector<512x128xbf16>,
    } else {
    }
    return
  }
  func.func @transform_0(%arg0: i32, %arg1: i32, %arg2: i32) -> (i32, i32) {
    %c0_i32 = arith.constant 0 : i32
    return %arg0, %arg2 : i32, i32
  }
  func.func @transform_1(%arg0: i32, %arg1: i32, %arg2: i32) -> (i32, i32) {
    %c0_i32 = arith.constant 0 : i32
    return %arg2, %arg1 : i32, i32
  }
  func.func @transform_2(%arg0: i32, %arg1: i32, %arg2: i32) -> (i32, i32) {
    %c0_i32 = arith.constant 0 : i32
    return %arg0, %arg1 : i32, i32
  }
}

module attributes {stable_mosaic.version = 11 : i64} {
  func.func @_mm_kernel(%arg0: i32, %arg1: i32, %arg2: i32, %arg3: memref<256x288xbf16, #tpu.memory_space<vmem>>, %arg4: memref<288x128xbf16, #tpu.memory_space<vmem>>, %arg5: memref<256x128xbf16, #tpu.memory_space<vmem>>, %arg6: memref<256x128xf32, #tpu.memory_space<vmem>>) attributes {dimension_semantics = [#tpu.dimension_semantics<parallel>, #tpu.dimension_semantics<parallel>, #tpu.dimension_semantics<arbitrary>], iteration_bounds = array<i64: 2, 1, 1>, scalar_prefetch = 0 : i64, scratch_operands = 1 : i64, tpu.core_type = #tpu.core_type<tc>, window_params = [{transform_indices = @transform_0, window_bounds = array<i64: 256, 288>}, {transform_indices = @transform_1, window_bounds = array<i64: 288, 128>}, {transform_indices = @transform_2, window_bounds = array<i64: 256, 128>}]} {
    %c0_i32 = arith.constant 0 : i32
    %0 = arith.cmpi eq, %arg2, %c0_i32 : i32
    %1 = arith.extui %0 : i1 to i32
    %c0_i32_0 = arith.constant 0 : i32
    %2 = arith.cmpi ne, %1, %c0_i32_0 : i32
    scf.if %2 {
      %cst_10 = arith.constant 0.000000e+00 : f32
      %12 = vector.broadcast %cst_10 : f32 to vector<256x128xf32>
      %c0_11 = arith.constant 0 : index
      %c0_12 = arith.constant 0 : index
      %13 = vector.load %arg6[%c0_11, %c0_12] : memref<256x128xf32, #tpu.memory_space<vmem>>, vector<256x128xf32>
      tpu.vector_store %arg6[%c0_11, %c0_12], %12 {strides = array<i32>} : memref<256x128xf32, #tpu.memory_space<vmem>>, vector<256x128xf32>,
    } else {
    }
    %c0 = arith.constant 0 : index
    %c0_1 = arith.constant 0 : index
    %3 = vector.load %arg6[%c0, %c0_1] : memref<256x128xf32, #tpu.memory_space<vmem>>, vector<256x128xf32>
    %c0_2 = arith.constant 0 : index
    %c0_3 = arith.constant 0 : index
    %4 = vector.load %arg3[%c0_2, %c0_3] : memref<256x288xbf16, #tpu.memory_space<vmem>>, vector<256x288xbf16>
    %c0_4 = arith.constant 0 : index
    %c0_5 = arith.constant 0 : index
    %5 = vector.load %arg4[%c0_4, %c0_5] : memref<288x128xbf16, #tpu.memory_space<vmem>>, vector<288x128xbf16>
    %cst = arith.constant dense<0.000000e+00> : vector<256x128xf32>
    %6 = tpu.matmul %4, %5, %cst {dimension_numbers = #tpu.dot_dimension_numbers<[1], [0], [0], [1], [0, 0, 1, 1], [], []>} : vector<256x288xbf16>, vector<288x128xbf16>, vector<256x128xf32> -> vector<256x128xf32>
    %7 = arith.addf %3, %6 : vector<256x128xf32>
    %c0_6 = arith.constant 0 : index
    %c0_7 = arith.constant 0 : index
    %8 = vector.load %arg6[%c0_6, %c0_7] : memref<256x128xf32, #tpu.memory_space<vmem>>, vector<256x128xf32>
    tpu.vector_store %arg6[%c0_6, %c0_7], %7 {strides = array<i32>} : memref<256x128xf32, #tpu.memory_space<vmem>>, vector<256x128xf32>,
    %c0_i32_8 = arith.constant 0 : i32
    %9 = arith.cmpi eq, %arg2, %c0_i32_8 : i32
    %10 = arith.extui %9 : i1 to i32
    %c0_i32_9 = arith.constant 0 : i32
    %11 = arith.cmpi ne, %10, %c0_i32_9 : i32
    scf.if %11 {
      %c0_10 = arith.constant 0 : index
      %c0_11 = arith.constant 0 : index
      %12 = vector.load %arg6[%c0_10, %c0_11] : memref<256x128xf32, #tpu.memory_space<vmem>>, vector<256x128xf32>
      %cst_12 = arith.constant 0.000000e+00 : f32
      %13 = vector.broadcast %cst_12 : f32 to vector<256x128xf32>
      %14 = arith.maximumf %12, %13 : vector<256x128xf32>
      %15 = arith.truncf %14 : vector<256x128xf32> to vector<256x128xbf16>
      %c0_13 = arith.constant 0 : index
      %c0_14 = arith.constant 0 : index
      %16 = vector.load %arg5[%c0_13, %c0_14] : memref<256x128xbf16, #tpu.memory_space<vmem>>, vector<256x128xbf16>
      tpu.vector_store %arg5[%c0_13, %c0_14], %15 {strides = array<i32>} : memref<256x128xbf16, #tpu.memory_space<vmem>>, vector<256x128xbf16>,
    } else {
    }
    return
  }
  func.func @transform_0(%arg0: i32, %arg1: i32, %arg2: i32) -> (i32, i32) {
    %c0_i32 = arith.constant 0 : i32
    return %arg0, %arg2 : i32, i32
  }
  func.func @transform_1(%arg0: i32, %arg1: i32, %arg2: i32) -> (i32, i32) {
    %c0_i32 = arith.constant 0 : i32
    return %arg2, %arg1 : i32, i32
  }
  func.func @transform_2(%arg0: i32, %arg1: i32, %arg2: i32) -> (i32, i32) {
    %c0_i32 = arith.constant 0 : i32
    return %arg0, %arg1 : i32, i32
  }
}

module attributes {stable_mosaic.version = 11 : i64} {
  func.func @_mm_add_relu_kernel(%arg0: i32, %arg1: i32, %arg2: i32, %arg3: memref<128x64xbf16, #tpu.memory_space<vmem>>, %arg4: memref<64x128xbf16, #tpu.memory_space<vmem>>, %arg5: memref<128x128xbf16, #tpu.memory_space<vmem>>, %arg6: memref<128x128xbf16, #tpu.memory_space<vmem>>, %arg7: memref<128x128xf32, #tpu.memory_space<vmem>>) attributes {dimension_semantics = [#tpu.dimension_semantics<parallel>, #tpu.dimension_semantics<parallel>, #tpu.dimension_semantics<arbitrary>], iteration_bounds = array<i64: 1, 1, 1>, scalar_prefetch = 0 : i64, scratch_operands = 1 : i64, tpu.core_type = #tpu.core_type<tc>, window_params = [{transform_indices = @transform_0, window_bounds = array<i64: 128, 64>}, {transform_indices = @transform_1, window_bounds = array<i64: 64, 128>}, {transform_indices = @transform_2, window_bounds = array<i64: 128, 128>}, {transform_indices = @transform_3, window_bounds = array<i64: 128, 128>}]} {
    %c0_i32 = arith.constant 0 : i32
    %0 = arith.cmpi eq, %arg2, %c0_i32 : i32
    %1 = arith.extui %0 : i1 to i32
    %c0_i32_0 = arith.constant 0 : i32
    %2 = arith.cmpi ne, %1, %c0_i32_0 : i32
    scf.if %2 {
      %cst_10 = arith.constant 0.000000e+00 : f32
      %12 = vector.broadcast %cst_10 : f32 to vector<128x128xf32>
      %c0_11 = arith.constant 0 : index
      %c0_12 = arith.constant 0 : index
      %13 = vector.load %arg7[%c0_11, %c0_12] : memref<128x128xf32, #tpu.memory_space<vmem>>, vector<128x128xf32>
      tpu.vector_store %arg7[%c0_11, %c0_12], %12 {strides = array<i32>} : memref<128x128xf32, #tpu.memory_space<vmem>>, vector<128x128xf32>,
    } else {
    }
    %c0 = arith.constant 0 : index
    %c0_1 = arith.constant 0 : index
    %3 = vector.load %arg7[%c0, %c0_1] : memref<128x128xf32, #tpu.memory_space<vmem>>, vector<128x128xf32>
    %c0_2 = arith.constant 0 : index
    %c0_3 = arith.constant 0 : index
    %4 = vector.load %arg3[%c0_2, %c0_3] : memref<128x64xbf16, #tpu.memory_space<vmem>>, vector<128x64xbf16>
    %c0_4 = arith.constant 0 : index
    %c0_5 = arith.constant 0 : index
    %5 = vector.load %arg4[%c0_4, %c0_5] : memref<64x128xbf16, #tpu.memory_space<vmem>>, vector<64x128xbf16>
    %cst = arith.constant dense<0.000000e+00> : vector<128x128xf32>
    %6 = tpu.matmul %4, %5, %cst {dimension_numbers = #tpu.dot_dimension_numbers<[1], [0], [0], [1], [0, 0, 1, 1], [], []>} : vector<128x64xbf16>, vector<64x128xbf16>, vector<128x128xf32> -> vector<128x128xf32>
    %7 = arith.addf %3, %6 : vector<128x128xf32>
    %c0_6 = arith.constant 0 : index
    %c0_7 = arith.constant 0 : index
    %8 = vector.load %arg7[%c0_6, %c0_7] : memref<128x128xf32, #tpu.memory_space<vmem>>, vector<128x128xf32>
    tpu.vector_store %arg7[%c0_6, %c0_7], %7 {strides = array<i32>} : memref<128x128xf32, #tpu.memory_space<vmem>>, vector<128x128xf32>,
    %c0_i32_8 = arith.constant 0 : i32
    %9 = arith.cmpi eq, %arg2, %c0_i32_8 : i32
    %10 = arith.extui %9 : i1 to i32
    %c0_i32_9 = arith.constant 0 : i32
    %11 = arith.cmpi ne, %10, %c0_i32_9 : i32
    scf.if %11 {
      %c0_10 = arith.constant 0 : index
      %c0_11 = arith.constant 0 : index
      %12 = vector.load %arg7[%c0_10, %c0_11] : memref<128x128xf32, #tpu.memory_space<vmem>>, vector<128x128xf32>
      %c0_12 = arith.constant 0 : index
      %c0_13 = arith.constant 0 : index
      %13 = vector.load %arg5[%c0_12, %c0_13] : memref<128x128xbf16, #tpu.memory_space<vmem>>, vector<128x128xbf16>
      %14 = arith.extf %13 : vector<128x128xbf16> to vector<128x128xf32>
      %15 = arith.addf %12, %14 : vector<128x128xf32>
      %cst_14 = arith.constant 0.000000e+00 : f32
      %16 = vector.broadcast %cst_14 : f32 to vector<128x128xf32>
      %17 = arith.maximumf %15, %16 : vector<128x128xf32>
      %18 = arith.truncf %17 : vector<128x128xf32> to vector<128x128xbf16>
      %c0_15 = arith.constant 0 : index
      %c0_16 = arith.constant 0 : index
      %19 = vector.load %arg6[%c0_15, %c0_16] : memref<128x128xbf16, #tpu.memory_space<vmem>>, vector<128x128xbf16>
      tpu.vector_store %arg6[%c0_15, %c0_16], %18 {strides = array<i32>} : memref<128x128xbf16, #tpu.memory_space<vmem>>, vector<128x128xbf16>,
    } else {
    }
    return
  }
  func.func @transform_0(%arg0: i32, %arg1: i32, %arg2: i32) -> (i32, i32) {
    %c0_i32 = arith.constant 0 : i32
    return %arg0, %arg2 : i32, i32
  }
  func.func @transform_1(%arg0: i32, %arg1: i32, %arg2: i32) -> (i32, i32) {
    %c0_i32 = arith.constant 0 : i32
    return %arg2, %arg1 : i32, i32
  }
  func.func @transform_2(%arg0: i32, %arg1: i32, %arg2: i32) -> (i32, i32) {
    %c0_i32 = arith.constant 0 : i32
    return %arg0, %arg1 : i32, i32
  }
  func.func @transform_3(%arg0: i32, %arg1: i32, %arg2: i32) -> (i32, i32) {
    %c0_i32 = arith.constant 0 : i32
    return %arg0, %arg1 : i32, i32
  }
}

module attributes {stable_mosaic.version = 11 : i64} {
  func.func @_mm_kernel(%arg0: i32, %arg1: i32, %arg2: i32, %arg3: memref<128x128xbf16, #tpu.memory_space<vmem>>, %arg4: memref<128x128xbf16, #tpu.memory_space<vmem>>, %arg5: memref<128x128xbf16, #tpu.memory_space<vmem>>, %arg6: memref<128x128xf32, #tpu.memory_space<vmem>>) attributes {dimension_semantics = [#tpu.dimension_semantics<parallel>, #tpu.dimension_semantics<parallel>, #tpu.dimension_semantics<arbitrary>], iteration_bounds = array<i64: 1, 1, 1>, scalar_prefetch = 0 : i64, scratch_operands = 1 : i64, tpu.core_type = #tpu.core_type<tc>, window_params = [{transform_indices = @transform_0, window_bounds = array<i64: 128, 128>}, {transform_indices = @transform_1, window_bounds = array<i64: 128, 128>}, {transform_indices = @transform_2, window_bounds = array<i64: 128, 128>}]} {
    %c0_i32 = arith.constant 0 : i32
    %0 = arith.cmpi eq, %arg2, %c0_i32 : i32
    %1 = arith.extui %0 : i1 to i32
    %c0_i32_0 = arith.constant 0 : i32
    %2 = arith.cmpi ne, %1, %c0_i32_0 : i32
    scf.if %2 {
      %cst_10 = arith.constant 0.000000e+00 : f32
      %12 = vector.broadcast %cst_10 : f32 to vector<128x128xf32>
      %c0_11 = arith.constant 0 : index
      %c0_12 = arith.constant 0 : index
      %13 = vector.load %arg6[%c0_11, %c0_12] : memref<128x128xf32, #tpu.memory_space<vmem>>, vector<128x128xf32>
      tpu.vector_store %arg6[%c0_11, %c0_12], %12 {strides = array<i32>} : memref<128x128xf32, #tpu.memory_space<vmem>>, vector<128x128xf32>,
    } else {
    }
    %c0 = arith.constant 0 : index
    %c0_1 = arith.constant 0 : index
    %3 = vector.load %arg6[%c0, %c0_1] : memref<128x128xf32, #tpu.memory_space<vmem>>, vector<128x128xf32>
    %c0_2 = arith.constant 0 : index
    %c0_3 = arith.constant 0 : index
    %4 = vector.load %arg3[%c0_2, %c0_3] : memref<128x128xbf16, #tpu.memory_space<vmem>>, vector<128x128xbf16>
    %c0_4 = arith.constant 0 : index
    %c0_5 = arith.constant 0 : index
    %5 = vector.load %arg4[%c0_4, %c0_5] : memref<128x128xbf16, #tpu.memory_space<vmem>>, vector<128x128xbf16>
    %cst = arith.constant dense<0.000000e+00> : vector<128x128xf32>
    %6 = tpu.matmul %4, %5, %cst {dimension_numbers = #tpu.dot_dimension_numbers<[1], [0], [0], [1], [0, 0, 1, 1], [], []>} : vector<128x128xbf16>, vector<128x128xbf16>, vector<128x128xf32> -> vector<128x128xf32>
    %7 = arith.addf %3, %6 : vector<128x128xf32>
    %c0_6 = arith.constant 0 : index
    %c0_7 = arith.constant 0 : index
    %8 = vector.load %arg6[%c0_6, %c0_7] : memref<128x128xf32, #tpu.memory_space<vmem>>, vector<128x128xf32>
    tpu.vector_store %arg6[%c0_6, %c0_7], %7 {strides = array<i32>} : memref<128x128xf32, #tpu.memory_space<vmem>>, vector<128x128xf32>,
    %c0_i32_8 = arith.constant 0 : i32
    %9 = arith.cmpi eq, %arg2, %c0_i32_8 : i32
    %10 = arith.extui %9 : i1 to i32
    %c0_i32_9 = arith.constant 0 : i32
    %11 = arith.cmpi ne, %10, %c0_i32_9 : i32
    scf.if %11 {
      %c0_10 = arith.constant 0 : index
      %c0_11 = arith.constant 0 : index
      %12 = vector.load %arg6[%c0_10, %c0_11] : memref<128x128xf32, #tpu.memory_space<vmem>>, vector<128x128xf32>
      %13 = arith.truncf %12 : vector<128x128xf32> to vector<128x128xbf16>
      %c0_12 = arith.constant 0 : index
      %c0_13 = arith.constant 0 : index
      %14 = vector.load %arg5[%c0_12, %c0_13] : memref<128x128xbf16, #tpu.memory_space<vmem>>, vector<128x128xbf16>
      tpu.vector_store %arg5[%c0_12, %c0_13], %13 {strides = array<i32>} : memref<128x128xbf16, #tpu.memory_space<vmem>>, vector<128x128xbf16>,
    } else {
    }
    return
  }
  func.func @transform_0(%arg0: i32, %arg1: i32, %arg2: i32) -> (i32, i32) {
    %c0_i32 = arith.constant 0 : i32
    return %arg0, %arg2 : i32, i32
  }
  func.func @transform_1(%arg0: i32, %arg1: i32, %arg2: i32) -> (i32, i32) {
    %c0_i32 = arith.constant 0 : i32
    return %arg2, %arg1 : i32, i32
  }
  func.func @transform_2(%arg0: i32, %arg1: i32, %arg2: i32) -> (i32, i32) {
    %c0_i32 = arith.constant 0 : i32
    return %arg0, %arg1 : i32, i32
  }
}

</mosaic_0001>

<llo_original>
// kernel: icnet_forward.11
$region0: #{icnet_forward.11}
  #allocation0 [shape = 'u32[]', space=smem, size = 0x4, offset = 0x4, fixed_abs, tag = 'smem constant byte address 0x4 - core index']
  #allocation1 [shape = 'u32[144,128]{1,0:T(1,128)}', space=vmem, size = 0x12000, scoped, tag = 'internal scratch']
  #allocation2 [shape = 'f32[256,128]{1,0:T(8,128)}', space=vmem, size = 0x20000, scoped, tag = 'scratch operand']
  %s0 = inlined_call_operand.vmem [shape: bf16[512,32], index: 0, kind: input, shape index: {}]
  %s1 = inlined_call_operand.vmem [shape: bf16[32,128], index: 1, kind: input, shape index: {}]
  %s2 = inlined_call_operand.vmem [shape: bf16[512,128], index: 2, kind: output, shape index: {}]
  %s3 = sld [smem:[#allocation0]]
  $region49: #{icnet_forward.11} parent=0
    _
  %s5 = ssub.s32 1, %s3
  %s6 = scalar_select 0, %s5, %s3
  loop: start=0, step=1, limit=4
  $region2: #{icnet_forward.11} parent=0 // loop_pre_header
    _
  $region3: #{icnet_forward.11} parent=0 // loop_header
    %s8 = sphi 0, %s12
    %p9 = scmp.ge.s32.totalorder %s8, 4
    %s15 = sphi 0, %s34
    %s16 = sphi 0, %s30
    %s17 = sphi 0, %s26
    %s18 = sphi 0, %s15
    %s19 = sphi 0, %s16
    %s20 = sphi 0, %s17
    %s21 = sphi 0, %s18
    %s22 = sphi 0, %s19
    %s23 = sphi 0, %s20
    %s39 = sphi 0, %s41
    %s42 = sphi 0, %s39
    %s43 = sphi 0, %s42
    %s59 = sphi 0, %s43
    %s67 = sphi 0, %s69
    %s70 = sphi 0, %s67
    %s71 = sphi 0, %s70
    %s87 = sphi 0, %s71
    %s95 = sphi 0, %s97
    %s98 = sphi 0, %s95
    %s99 = sphi 0, %s98
    %s115 = sphi 0, %s99
  $region4: #{icnet_forward.11} parent=0 // loop_header_branch
    %11 = sbr.rel (%p9) target = $region8
  $region5: #{icnet_forward.11} parent=0 // loop_body
    %s13 = ssub.s32 %s8, 1
    %s14 = ssub.s32 %s8, 2
    %s24 = sadd.s32 1, %s17
    %p25 = scmp.ge.s32.totalorder %s24, 1
    %s26 = scalar_select %p25, 0, %s24
    %s27 = sadd.s32 1, %s16
    %s28 = scalar_select %p25, %s27, %s16
    %p29 = scmp.ge.s32.totalorder %s28, 1
    %s30 = scalar_select %p29, 0, %s28
    %s31 = sadd.s32 1, %s15
    %s32 = scalar_select %p29, %s31, %s15
    %p33 = scmp.ge.s32.totalorder %s32, 2
    %s34 = scalar_select %p33, 0, %s32
    %s35 = ssub.s32 %s15, %s34
    %s36 = ssub.s32 %s17, %s26
    %s37 = sor.u32 %s35, %s36
    %p38 = scmp.eq.s32.totalorder %s37, 0
    %s40 = sadd.s32 %s39, 1
    %s41 = scalar_select %p38, %s39, %s40
    %p44 = pneg %p38
    %p45 = scmp.eq.s32.totalorder %s8, 1
    %p46 = por %p44, %p45
    %p47 = scmp.ne.s32.totalorder %s39, %s42
    %p48 = scmp.eq.s32.totalorder %s8, 0
    %p49 = por %p47, %p48
    %p50 = scmp.ne.s32.totalorder %s39, %s42
    %p51 = scmp.eq.s32.totalorder %s13, 1
    %p52 = por %p50, %p51
    %p53 = scmp.ne.s32.totalorder %s42, %s43
    %p54 = scmp.eq.s32.totalorder %s13, 0
    %p55 = por %p53, %p54
    %p56 = scmp.ne.s32.totalorder %s42, %s43
    %p57 = scmp.eq.s32.totalorder %s14, 1
    %p58 = por %p56, %p57
    %p60 = scmp.ne.s32.totalorder %s43, %s59
    %p61 = scmp.eq.s32.totalorder %s14, 0
    %p62 = por %p60, %p61
    %s63 = ssub.s32 %s17, %s26
    %s64 = ssub.s32 %s16, %s30
    %s65 = sor.u32 %s63, %s64
    %p66 = scmp.eq.s32.totalorder %s65, 0
    %s68 = sadd.s32 %s67, 1
    %s69 = scalar_select %p66, %s67, %s68
    %p72 = pneg %p66
    %p73 = scmp.eq.s32.totalorder %s8, 1
    %p74 = por %p72, %p73
    %p75 = scmp.ne.s32.totalorder %s67, %s70
    %p76 = scmp.eq.s32.totalorder %s8, 0
    %p77 = por %p75, %p76
    %p78 = scmp.ne.s32.totalorder %s67, %s70
    %p79 = scmp.eq.s32.totalorder %s13, 1
    %p80 = por %p78, %p79
    %p81 = scmp.ne.s32.totalorder %s70, %s71
    %p82 = scmp.eq.s32.totalorder %s13, 0
    %p83 = por %p81, %p82
    %p84 = scmp.ne.s32.totalorder %s70, %s71
    %p85 = scmp.eq.s32.totalorder %s14, 1
    %p86 = por %p84, %p85
    %p88 = scmp.ne.s32.totalorder %s71, %s87
    %p89 = scmp.eq.s32.totalorder %s14, 0
    %p90 = por %p88, %p89
    %s91 = ssub.s32 %s15, %s34
    %s92 = ssub.s32 %s16, %s30
    %s93 = sor.u32 %s91, %s92
    %p94 = scmp.eq.s32.totalorder %s93, 0
    %s96 = sadd.s32 %s95, 1
    %s97 = scalar_select %p94, %s95, %s96
    %p100 = pneg %p94
    %p101 = scmp.eq.s32.totalorder %s8, 1
    %p102 = por %p100, %p101
    %p103 = scmp.ne.s32.totalorder %s95, %s98
    %p104 = scmp.eq.s32.totalorder %s8, 0
    %p105 = por %p103, %p104
    %p106 = scmp.ne.s32.totalorder %s95, %s98
    %p107 = scmp.eq.s32.totalorder %s13, 1
    %p108 = por %p106, %p107
    %p109 = scmp.ne.s32.totalorder %s98, %s99
    %p110 = scmp.eq.s32.totalorder %s13, 0
    %p111 = por %p109, %p110
    %p112 = scmp.ne.s32.totalorder %s98, %s99
    %p113 = scmp.eq.s32.totalorder %s14, 1
    %p114 = por %p112, %p113
    %p116 = scmp.ne.s32.totalorder %s99, %s115
    %p117 = scmp.eq.s32.totalorder %s14, 0
    %p118 = por %p116, %p117
    %p119 = scmp.le.s32.totalorder 1, %s8
    %p120 = scmp.lt.s32.totalorder %s8, 3
    %p121 = pnand %p119, %p120
    %p122 = pneg %p121
    // Predicated region
    $region9: #{icnet_forward.11} parent=5 // pred_check
      _
    $region10: #{icnet_forward.11} parent=5 // pred_check_branch
      %124 = sbr.rel (%p121) target = $region12
    $region11: #{icnet_forward.11} parent=5 // pred_region
      %s125 = ssub.s32 %s8, 1
      // Predicated region
      $region13: #{icnet_forward.11} parent=11 // pred_check
        %p126 = pneg %p83
      $region14: #{icnet_forward.11} parent=11 // pred_check_branch
        %128 = sbr.rel (%p126) target = $region16
      $region15: #{icnet_forward.11} parent=11 // pred_region
        %s129 = smul.u32 4, %s20
        %p130 = scmp.lt.s32.totalorder %s129, 3
        %s131 = scalar_select %p130, %s129, 3
        %p132 = scmp.lt.s32.totalorder %s19, 0
        %s133 = scalar_select %p132, %s19, 0
        %s134 = sadd.s32 %s133, %s131
        %s135 = smul.addr %s134, 4
        %s136 = scalar_lea.vmem %s1, %s135
        %s137 = smul.u32 4, %s20
      $region16: #{icnet_forward.11} parent=11 // pred_fallthru
        _
    $region12: #{icnet_forward.11} parent=5 // pred_fallthru
      _
    %p138 = scmp.lt.s32.totalorder %s8, 2
    // Predicated region
    $region17: #{icnet_forward.11} parent=5 // pred_check
      %p139 = pneg %p138
    $region18: #{icnet_forward.11} parent=5 // pred_check_branch
      %141 = sbr.rel (%p139) target = $region20
    $region19: #{icnet_forward.11} parent=5 // pred_region
      // Predicated region
      $region21: #{icnet_forward.11} parent=19 // pred_check
        %p142 = pneg %p49
      $region22: #{icnet_forward.11} parent=19 // pred_check_branch
        %144 = sbr.rel (%p142) target = $region24
      $region23: #{icnet_forward.11} parent=19 // pred_region
        %s145 = smul.u32 32, %s15
        %p146 = scmp.lt.s32.totalorder %s145, 63
        %s147 = scalar_select %p146, %s145, 63
        %p148 = scmp.lt.s32.totalorder %s17, 0
        %s149 = scalar_select %p148, %s17, 0
        %s150 = sadd.s32 %s149, %s147
        %s151 = smul.addr %s150, 4
        %s152 = scalar_lea.vmem %s0, %s151
        %s153 = smul.u32 32, %s15
      $region24: #{icnet_forward.11} parent=19 // pred_fallthru
        _
    $region20: #{icnet_forward.11} parent=5 // pred_fallthru
      _
    %p154 = scmp.le.s32.totalorder 1, %s8
    %p155 = scmp.lt.s32.totalorder %s8, 3
    %p156 = pnand %p154, %p155
    %p157 = pneg %p156
    // Predicated region
    $region25: #{icnet_forward.11} parent=5 // pred_check
      _
    $region26: #{icnet_forward.11} parent=5 // pred_check_branch
      %159 = sbr.rel (%p156) target = $region28
    $region27: #{icnet_forward.11} parent=5 // pred_region
      %s160 = ssub.s32 %s8, 1
      %s161 = smul.u32 32, %s18
      %p162 = scmp.lt.s32.totalorder %s161, 63
      %s163 = scalar_select %p162, %s161, 63
      %p164 = scmp.lt.s32.totalorder %s20, 0
      %s165 = scalar_select %p164, %s20, 0
      %s166 = sadd.s32 %s165, %s163
      %s167 = smul.addr %s166, 4
      %s168 = scalar_lea.vmem %s0, %s167
      %p169 = pneg %p55
      %p170 = pneg %p52
      %s171 = smul.u32 4, %s20
      %p172 = scmp.lt.s32.totalorder %s171, 3
      %s173 = scalar_select %p172, %s171, 3
      %p174 = scmp.lt.s32.totalorder %s19, 0
      %s175 = scalar_select %p174, %s19, 0
      %s176 = sadd.s32 %s175, %s173
      %s177 = smul.addr %s176, 4
      %s178 = scalar_lea.vmem %s1, %s177
      %p179 = pneg %p83
      %p180 = pneg %p80
      %p181 = pneg %p111
      %p182 = pneg %p108
      %s183 = smul.u32 32, %s18
      %p184 = scmp.lt.s32.totalorder %s183, 63
      %s185 = scalar_select %p184, %s183, 63
      %p186 = scmp.lt.s32.totalorder %s19, 0
      %s187 = scalar_select %p186, %s19, 0
      %s188 = sadd.s32 %s187, %s185
      %s189 = smul.addr %s188, 4
      %s190 = scalar_lea.vmem %s2, %s189
      %s191 = smul.u32 32, %s18
      %p192 = scmp.lt.s32.totalorder %s191, 63
      %s193 = scalar_select %p192, %s191, 63
      %p194 = scmp.lt.s32.totalorder %s20, 0
      %s195 = scalar_select %p194, %s20, 0
      %s196 = sadd.s32 %s195, %s193
      %s197 = smul.addr %s196, 4
      %s198 = scalar_lea.vmem %s0, %s197
      %s199 = smul.u32 32, %s18
      %s200 = smul.u32 4, %s20
      %p201 = scmp.lt.s32.totalorder %s200, 3
      %s202 = scalar_select %p201, %s200, 3
      %p203 = scmp.lt.s32.totalorder %s19, 0
      %s204 = scalar_select %p203, %s19, 0
      %s205 = sadd.s32 %s204, %s202
      %s206 = smul.addr %s205, 4
      %s207 = scalar_lea.vmem %s1, %s206
      %s208 = smul.u32 4, %s20
      %s209 = smul.u32 32, %s18
      %p210 = scmp.lt.s32.totalorder %s209, 63
      %s211 = scalar_select %p210, %s209, 63
      %p212 = scmp.lt.s32.totalorder %s19, 0
      %s213 = scalar_select %p212, %s19, 0
      %s214 = sadd.s32 %s213, %s211
      %s215 = smul.addr %s214, 4
      %s216 = scalar_lea.vmem %s2, %s215
      %s217 = smul.u32 32, %s18
      %p219 = scmp.eq.s32.totalorder %s20, 0
      // Predicated region
      $region29: #{icnet_forward.11} parent=27 // pred_check
        %p220 = pneg %p219
      $region30: #{icnet_forward.11} parent=27 // pred_check_branch
        %222 = sbr.rel (%p220) target = $region32
      $region31: #{icnet_forward.11} parent=27 // pred_region
        %223 = vst [vmem:[#allocation2] sm:$0xff] 0.0
        %224 = vst [vmem:[#allocation2 + $0x8] sm:$0xff] 0.0
        %225 = vst [vmem:[#allocation2 + $0x10] sm:$0xff] 0.0
        %226 = vst [vmem:[#allocation2 + $0x18] sm:$0xff] 0.0
        %227 = vst [vmem:[#allocation2 + $0x20] sm:$0xff] 0.0
        %228 = vst [vmem:[#allocation2 + $0x28] sm:$0xff] 0.0
        %229 = vst [vmem:[#allocation2 + $0x30] sm:$0xff] 0.0
        %230 = vst [vmem:[#allocation2 + $0x38] sm:$0xff] 0.0
        %231 = vst [vmem:[#allocation2 + $0x40] sm:$0xff] 0.0
        %232 = vst [vmem:[#allocation2 + $0x48] sm:$0xff] 0.0
        %233 = vst [vmem:[#allocation2 + $0x50] sm:$0xff] 0.0
        %234 = vst [vmem:[#allocation2 + $0x58] sm:$0xff] 0.0
        %235 = vst [vmem:[#allocation2 + $0x60] sm:$0xff] 0.0
        %236 = vst [vmem:[#allocation2 + $0x68] sm:$0xff] 0.0
        %237 = vst [vmem:[#allocation2 + $0x70] sm:$0xff] 0.0
        %238 = vst [vmem:[#allocation2 + $0x78] sm:$0xff] 0.0
        %239 = vst [vmem:[#allocation2 + $0x80] sm:$0xff] 0.0
        %240 = vst [vmem:[#allocation2 + $0x88] sm:$0xff] 0.0
        %241 = vst [vmem:[#allocation2 + $0x90] sm:$0xff] 0.0
        %242 = vst [vmem:[#allocation2 + $0x98] sm:$0xff] 0.0
        %243 = vst [vmem:[#allocation2 + $0xa0] sm:$0xff] 0.0
        %244 = vst [vmem:[#allocation2 + $0xa8] sm:$0xff] 0.0
        %245 = vst [vmem:[#allocation2 + $0xb0] sm:$0xff] 0.0
        %246 = vst [vmem:[#allocation2 + $0xb8] sm:$0xff] 0.0
        %247 = vst [vmem:[#allocation2 + $0xc0] sm:$0xff] 0.0
        %248 = vst [vmem:[#allocation2 + $0xc8] sm:$0xff] 0.0
        %249 = vst [vmem:[#allocation2 + $0xd0] sm:$0xff] 0.0
        %250 = vst [vmem:[#allocation2 + $0xd8] sm:$0xff] 0.0
        %251 = vst [vmem:[#allocation2 + $0xe0] sm:$0xff] 0.0
        %252 = vst [vmem:[#allocation2 + $0xe8] sm:$0xff] 0.0
        %253 = vst [vmem:[#allocation2 + $0xf0] sm:$0xff] 0.0
        %254 = vst [vmem:[#allocation2 + $0xf8] sm:$0xff] 0.0
      $region32: #{icnet_forward.11} parent=27 // pred_fallthru
        _
      %v255 = vld [vmem:[#allocation2] sm:$0xff]
      %v256 = vld [vmem:[#allocation2 + $0x8] sm:$0xff]
      %v257 = vld [vmem:[#allocation2 + $0x10] sm:$0xff]
      %v258 = vld [vmem:[#allocation2 + $0x18] sm:$0xff]
      %v259 = vld [vmem:[#allocation2 + $0x20] sm:$0xff]
      %v260 = vld [vmem:[#allocation2 + $0x28] sm:$0xff]
      %v261 = vld [vmem:[#allocation2 + $0x30] sm:$0xff]
      %v262 = vld [vmem:[#allocation2 + $0x38] sm:$0xff]
      %v263 = vld [vmem:[#allocation2 + $0x40] sm:$0xff]
      %v264 = vld [vmem:[#allocation2 + $0x48] sm:$0xff]
      %v265 = vld [vmem:[#allocation2 + $0x50] sm:$0xff]
      %v266 = vld [vmem:[#allocation2 + $0x58] sm:$0xff]
      %v267 = vld [vmem:[#allocation2 + $0x60] sm:$0xff]
      %v268 = vld [vmem:[#allocation2 + $0x68] sm:$0xff]
      %v269 = vld [vmem:[#allocation2 + $0x70] sm:$0xff]
      %v270 = vld [vmem:[#allocation2 + $0x78] sm:$0xff]
      %v271 = vld [vmem:[#allocation2 + $0x80] sm:$0xff]
      %v272 = vld [vmem:[#allocation2 + $0x88] sm:$0xff]
      %v273 = vld [vmem:[#allocation2 + $0x90] sm:$0xff]
      %v274 = vld [vmem:[#allocation2 + $0x98] sm:$0xff]
      %v275 = vld [vmem:[#allocation2 + $0xa0] sm:$0xff]
      %v276 = vld [vmem:[#allocation2 + $0xa8] sm:$0xff]
      %v277 = vld [vmem:[#allocation2 + $0xb0] sm:$0xff]
      %v278 = vld [vmem:[#allocation2 + $0xb8] sm:$0xff]
      %v279 = vld [vmem:[#allocation2 + $0xc0] sm:$0xff]
      %v280 = vld [vmem:[#allocation2 + $0xc8] sm:$0xff]
      %v281 = vld [vmem:[#allocation2 + $0xd0] sm:$0xff]
      %v282 = vld [vmem:[#allocation2 + $0xd8] sm:$0xff]
      %v283 = vld [vmem:[#allocation2 + $0xe0] sm:$0xff]
      %v284 = vld [vmem:[#allocation2 + $0xe8] sm:$0xff]
      %v285 = vld [vmem:[#allocation2 + $0xf0] sm:$0xff]
      %v286 = vld [vmem:[#allocation2 + $0xf8] sm:$0xff]
      %v287 = vld [vmem:[%s198] sm:$0xf]
      %v288 = vld [vmem:[%s198 + $0x4] sm:$0xf]
      %v289 = vld [vmem:[%s198 + $0x8] sm:$0xf]
      %v290 = vld [vmem:[%s198 + $0xc] sm:$0xf]
      %v291 = vld [vmem:[%s198 + $0x10] sm:$0xf]
      %v292 = vld [vmem:[%s198 + $0x14] sm:$0xf]
      %v293 = vld [vmem:[%s198 + $0x18] sm:$0xf]
      %v294 = vld [vmem:[%s198 + $0x1c] sm:$0xf]
      %v295 = vld [vmem:[%s198 + $0x20] sm:$0xf]
      %v296 = vld [vmem:[%s198 + $0x24] sm:$0xf]
      %v297 = vld [vmem:[%s198 + $0x28] sm:$0xf]
      %v298 = vld [vmem:[%s198 + $0x2c] sm:$0xf]
      %v299 = vld [vmem:[%s198 + $0x30] sm:$0xf]
      %v300 = vld [vmem:[%s198 + $0x34] sm:$0xf]
      %v301 = vld [vmem:[%s198 + $0x38] sm:$0xf]
      %v302 = vld [vmem:[%s198 + $0x3c] sm:$0xf]
      %v303 = vld [vmem:[%s198 + $0x40] sm:$0xf]
      %v304 = vld [vmem:[%s198 + $0x44] sm:$0xf]
      %v305 = vld [vmem:[%s198 + $0x48] sm:$0xf]
      %v306 = vld [vmem:[%s198 + $0x4c] sm:$0xf]
      %v307 = vld [vmem:[%s198 + $0x50] sm:$0xf]
      %v308 = vld [vmem:[%s198 + $0x54] sm:$0xf]
      %v309 = vld [vmem:[%s198 + $0x58] sm:$0xf]
      %v310 = vld [vmem:[%s198 + $0x5c] sm:$0xf]
      %v311 = vld [vmem:[%s198 + $0x60] sm:$0xf]
      %v312 = vld [vmem:[%s198 + $0x64] sm:$0xf]
      %v313 = vld [vmem:[%s198 + $0x68] sm:$0xf]
      %v314 = vld [vmem:[%s198 + $0x6c] sm:$0xf]
      %v315 = vld [vmem:[%s198 + $0x70] sm:$0xf]
      %v316 = vld [vmem:[%s198 + $0x74] sm:$0xf]
      %v317 = vld [vmem:[%s198 + $0x78] sm:$0xf]
      %v318 = vld [vmem:[%s198 + $0x7c] sm:$0xf]
      %v319 = vld [vmem:[%s207] sm:$0xf]
      %v320 = vld [vmem:[%s207 + $0x4] sm:$0xf]
      %v321 = vld [vmem:[%s207 + $0x8] sm:$0xf]
      %v322 = vld [vmem:[%s207 + $0xc] sm:$0xf]
      %v355 = vunpack.c.l.b16 %v287
      %v356 = vunpack.c.l.b16 %v288
      %v357 = vunpack.c.l.b16 %v289
      %v358 = vunpack.c.l.b16 %v290
      %v359 = vunpack.c.l.b16 %v291
      %v360 = vunpack.c.l.b16 %v292
      %v361 = vunpack.c.l.b16 %v293
      %v362 = vunpack.c.l.b16 %v294
      %v363 = vunpack.c.l.b16 %v295
      %v364 = vunpack.c.l.b16 %v296
      %v365 = vunpack.c.l.b16 %v297
      %v366 = vunpack.c.l.b16 %v298
      %v367 = vunpack.c.l.b16 %v299
      %v368 = vunpack.c.l.b16 %v300
      %v369 = vunpack.c.l.b16 %v301
      %v370 = vunpack.c.l.b16 %v302
      %v371 = vunpack.c.l.b16 %v303
      %v372 = vunpack.c.l.b16 %v304
      %v373 = vunpack.c.l.b16 %v305
      %v374 = vunpack.c.l.b16 %v306
      %v375 = vunpack.c.l.b16 %v307
      %v376 = vunpack.c.l.b16 %v308
      %v377 = vunpack.c.l.b16 %v309
      %v378 = vunpack.c.l.b16 %v310
      %v379 = vunpack.c.l.b16 %v311
      %v380 = vunpack.c.l.b16 %v312
      %v381 = vunpack.c.l.b16 %v313
      %v382 = vunpack.c.l.b16 %v314
      %v383 = vunpack.c.l.b16 %v315
      %v384 = vunpack.c.l.b16 %v316
      %v385 = vunpack.c.l.b16 %v317
      %v386 = vunpack.c.l.b16 %v318
      %v387 = vpack.c.b16 %v356, %v355
      %v388 = vpack.c.b16 %v358, %v357
      %v389 = vpack.c.b16 %v360, %v359
      %v390 = vpack.c.b16 %v362, %v361
      %v391 = vpack.c.b16 %v364, %v363
      %v392 = vpack.c.b16 %v366, %v365
      %v393 = vpack.c.b16 %v368, %v367
      %v394 = vpack.c.b16 %v370, %v369
      %v395 = vpack.c.b16 %v372, %v371
      %v396 = vpack.c.b16 %v374, %v373
      %v397 = vpack.c.b16 %v376, %v375
      %v398 = vpack.c.b16 %v378, %v377
      %v399 = vpack.c.b16 %v380, %v379
      %v400 = vpack.c.b16 %v382, %v381
      %v401 = vpack.c.b16 %v384, %v383
      %v402 = vpack.c.b16 %v386, %v385
      %v407 = vunpack.c.l.b16 %v319
      %v408 = vunpack.c.l.b16 %v320
      %v409 = vunpack.c.l.b16 %v321
      %v410 = vunpack.c.l.b16 %v322
      %v411 = vpack.c.b16 %v408, %v407
      %v412 = vpack.c.b16 %v410, %v409
      %vm415 = vcmask 261120
      %v417 = vsel %vm415, %v387, 0
      %v420 = vsel %vm415, %v388, 0
      %v423 = vsel %vm415, %v389, 0
      %v426 = vsel %vm415, %v390, 0
      %v429 = vsel %vm415, %v391, 0
      %v432 = vsel %vm415, %v392, 0
      %v435 = vsel %vm415, %v393, 0
      %v438 = vsel %vm415, %v394, 0
      %v441 = vsel %vm415, %v395, 0
      %v444 = vsel %vm415, %v396, 0
      %v447 = vsel %vm415, %v397, 0
      %v450 = vsel %vm415, %v398, 0
      %v453 = vsel %vm415, %v399, 0
      %v456 = vsel %vm415, %v400, 0
      %v459 = vsel %vm415, %v401, 0
      %v462 = vsel %vm415, %v402, 0
      %464 = vmatprep.subr.bf16.mxu0 0
      %465 = vmatpush1.bf16.msra.mxu0 0
      %466 = vmatprep.subr.bf16.mxu0 0
      %467 = vmatpush1.bf16.msra.mxu0 0
      %468 = vmatprep.subr.bf16.mxu0 0
      %469 = vmatpush1.bf16.msra.mxu0 0
      %470 = vmatprep.subr.bf16.mxu0 0
      %471 = vmatpush1.bf16.msra.mxu0 0
      %472 = vmatprep.subr.bf16.mxu0 0
      %473 = vmatpush1.bf16.msra.mxu0 0
      %474 = vmatprep.subr.bf16.mxu0 0
      %475 = vmatpush1.bf16.msra.mxu0 0
      %476 = vmatprep.subr.bf16.mxu0 0
      %477 = vmatpush1.bf16.msra.mxu0 %v412
      %478 = vmatprep.subr.bf16.mxu0 0
      %479 = vmatpush1.bf16.msra.mxu0 %v411
      %480 = vmatprep.subr.bf16.mxu0 0
      %481 = vmatpush2.bf16.msra.mxu0 0
      %482 = vmatprep.subr.bf16.mxu0 0
      %483 = vmatpush2.bf16.msra.mxu0 0
      %484 = vmatprep.subr.bf16.mxu0 0
      %485 = vmatpush2.bf16.msra.mxu0 0
      %486 = vmatprep.subr.bf16.mxu0 0
      %487 = vmatpush2.bf16.msra.mxu0 0
      %488 = vmatprep.subr.bf16.mxu0 0
      %489 = vmatpush2.bf16.msra.mxu0 0
      %490 = vmatprep.subr.bf16.mxu0 0
      %491 = vmatpush2.bf16.msra.mxu0 0
      %492 = vmatprep.subr.bf16.mxu0 0
      %493 = vmatpush2.bf16.msra.mxu0 0
      %494 = vmatprep.subr.bf16.mxu0 0
      %495 = vmatpush2.bf16.msra.mxu0 0
      %496 = vmatprep.mubr.bf16.mxu0 0
      %497 = vmatmul.mubr.bf16.gmra.mxu0 %v417
      %v498 = vpop.f32.mrf.mxu0
      %v499 = vadd.f32 0.0, %v498
      %v500 = vpop.f32.mrf.mxu0
      %v501 = vpop.f32.mrf.mxu0
      %v502 = vadd.f32 0.0, %v501
      %v503 = vpop.f32.mrf.mxu0
      %504 = vmatprep.mubr.bf16.mxu0 0
      %505 = vmatmul.mubr.bf16.gmra.mxu0 %v420
      %v506 = vpop.f32.mrf.mxu0
      %v507 = vadd.f32 0.0, %v506
      %v508 = vpop.f32.mrf.mxu0
      %v509 = vpop.f32.mrf.mxu0
      %v510 = vadd.f32 0.0, %v509
      %v511 = vpop.f32.mrf.mxu0
      %512 = vmatprep.mubr.bf16.mxu0 0
      %513 = vmatmul.mubr.bf16.gmra.mxu0 %v423
      %v514 = vpop.f32.mrf.mxu0
      %v515 = vadd.f32 0.0, %v514
      %v516 = vpop.f32.mrf.mxu0
      %v517 = vpop.f32.mrf.mxu0
      %v518 = vadd.f32 0.0, %v517
      %v519 = vpop.f32.mrf.mxu0
      %520 = vmatprep.mubr.bf16.mxu0 0
      %521 = vmatmul.mubr.bf16.gmra.mxu0 %v426
      %v522 = vpop.f32.mrf.mxu0
      %v523 = vadd.f32 0.0, %v522
      %v524 = vpop.f32.mrf.mxu0
      %v525 = vpop.f32.mrf.mxu0
      %v526 = vadd.f32 0.0, %v525
      %v527 = vpop.f32.mrf.mxu0
      %528 = vmatprep.mubr.bf16.mxu0 0
      %529 = vmatmul.mubr.bf16.gmra.mxu0 %v429
      %v530 = vpop.f32.mrf.mxu0
      %v531 = vadd.f32 0.0, %v530
      %v532 = vpop.f32.mrf.mxu0
      %v533 = vpop.f32.mrf.mxu0
      %v534 = vadd.f32 0.0, %v533
      %v535 = vpop.f32.mrf.mxu0
      %536 = vmatprep.mubr.bf16.mxu0 0
      %537 = vmatmul.mubr.bf16.gmra.mxu0 %v432
      %v538 = vpop.f32.mrf.mxu0
      %v539 = vadd.f32 0.0, %v538
      %v540 = vpop.f32.mrf.mxu0
      %v541 = vpop.f32.mrf.mxu0
      %v542 = vadd.f32 0.0, %v541
      %v543 = vpop.f32.mrf.mxu0
      %544 = vmatprep.mubr.bf16.mxu0 0
      %545 = vmatmul.mubr.bf16.gmra.mxu0 %v435
      %v546 = vpop.f32.mrf.mxu0
      %v547 = vadd.f32 0.0, %v546
      %v548 = vpop.f32.mrf.mxu0
      %v549 = vpop.f32.mrf.mxu0
      %v550 = vadd.f32 0.0, %v549
      %v551 = vpop.f32.mrf.mxu0
      %552 = vmatprep.mubr.bf16.mxu0 0
      %553 = vmatmul.mubr.bf16.gmra.mxu0 %v438
      %v554 = vpop.f32.mrf.mxu0
      %v555 = vadd.f32 0.0, %v554
      %v556 = vpop.f32.mrf.mxu0
      %v557 = vpop.f32.mrf.mxu0
      %v558 = vadd.f32 0.0, %v557
      %v559 = vpop.f32.mrf.mxu0
      %560 = vmatprep.mubr.bf16.mxu0 0
      %561 = vmatmul.mubr.bf16.gmra.mxu0 %v441
      %v562 = vpop.f32.mrf.mxu0
      %v563 = vadd.f32 0.0, %v562
      %v564 = vpop.f32.mrf.mxu0
      %v565 = vpop.f32.mrf.mxu0
      %v566 = vadd.f32 0.0, %v565
      %v567 = vpop.f32.mrf.mxu0
      %568 = vmatprep.mubr.bf16.mxu0 0
      %569 = vmatmul.mubr.bf16.gmra.mxu0 %v444
      %v570 = vpop.f32.mrf.mxu0
      %v571 = vadd.f32 0.0, %v570
      %v572 = vpop.f32.mrf.mxu0
      %v573 = vpop.f32.mrf.mxu0
      %v574 = vadd.f32 0.0, %v573
      %v575 = vpop.f32.mrf.mxu0
      %576 = vmatprep.mubr.bf16.mxu0 0
      %577 = vmatmul.mubr.bf16.gmra.mxu0 %v447
      %v578 = vpop.f32.mrf.mxu0
      %v579 = vadd.f32 0.0, %v578
      %v580 = vpop.f32.mrf.mxu0
      %v581 = vpop.f32.mrf.mxu0
      %v582 = vadd.f32 0.0, %v581
      %v583 = vpop.f32.mrf.mxu0
      %584 = vmatprep.mubr.bf16.mxu0 0
      %585 = vmatmul.mubr.bf16.gmra.mxu0 %v450
      %v586 = vpop.f32.mrf.mxu0
      %v587 = vadd.f32 0.0, %v586
      %v588 = vpop.f32.mrf.mxu0
      %v589 = vpop.f32.mrf.mxu0
      %v590 = vadd.f32 0.0, %v589
      %v591 = vpop.f32.mrf.mxu0
      %592 = vmatprep.mubr.bf16.mxu0 0
      %593 = vmatmul.mubr.bf16.gmra.mxu0 %v453
      %v594 = vpop.f32.mrf.mxu0
      %v595 = vadd.f32 0.0, %v594
      %v596 = vpop.f32.mrf.mxu0
      %v597 = vpop.f32.mrf.mxu0
      %v598 = vadd.f32 0.0, %v597
      %v599 = vpop.f32.mrf.mxu0
      %600 = vmatprep.mubr.bf16.mxu0 0
      %601 = vmatmul.mubr.bf16.gmra.mxu0 %v456
      %v602 = vpop.f32.mrf.mxu0
      %v603 = vadd.f32 0.0, %v602
      %v604 = vpop.f32.mrf.mxu0
      %v605 = vpop.f32.mrf.mxu0
      %v606 = vadd.f32 0.0, %v605
      %v607 = vpop.f32.mrf.mxu0
      %608 = vmatprep.mubr.bf16.mxu0 0
      %609 = vmatmul.mubr.bf16.gmra.mxu0 %v459
      %v610 = vpop.f32.mrf.mxu0
      %v611 = vadd.f32 0.0, %v610
      %v612 = vpop.f32.mrf.mxu0
      %v613 = vpop.f32.mrf.mxu0
      %v614 = vadd.f32 0.0, %v613
      %v615 = vpop.f32.mrf.mxu0
      %616 = vmatprep.mubr.bf16.mxu0 0
      %617 = vmatmul.mubr.bf16.gmra.mxu0 %v462
      %v618 = vpop.f32.mrf.mxu0
      %v619 = vadd.f32 0.0, %v618
      %v620 = vpop.f32.mrf.mxu0
      %v621 = vpop.f32.mrf.mxu0
      %v622 = vadd.f32 0.0, %v621
      %v623 = vpop.f32.mrf.mxu0
      %624 = vdwg.mxu0
      %v625 = vadd.f32 %v255, %v499
      %v626 = vadd.f32 %v256, %v502
      %v627 = vadd.f32 %v257, %v507
      %v628 = vadd.f32 %v258, %v510
      %v629 = vadd.f32 %v259, %v515
      %v630 = vadd.f32 %v260, %v518
      %v631 = vadd.f32 %v261, %v523
      %v632 = vadd.f32 %v262, %v526
      %v633 = vadd.f32 %v263, %v531
      %v634 = vadd.f32 %v264, %v534
      %v635 = vadd.f32 %v265, %v539
      %v636 = vadd.f32 %v266, %v542
      %v637 = vadd.f32 %v267, %v547
      %v638 = vadd.f32 %v268, %v550
      %v639 = vadd.f32 %v269, %v555
      %v640 = vadd.f32 %v270, %v558
      %v641 = vadd.f32 %v271, %v563
      %v642 = vadd.f32 %v272, %v566
      %v643 = vadd.f32 %v273, %v571
      %v644 = vadd.f32 %v274, %v574
      %v645 = vadd.f32 %v275, %v579
      %v646 = vadd.f32 %v276, %v582
      %v647 = vadd.f32 %v277, %v587
      %v648 = vadd.f32 %v278, %v590
      %v649 = vadd.f32 %v279, %v595
      %v650 = vadd.f32 %v280, %v598
      %v651 = vadd.f32 %v281, %v603
      %v652 = vadd.f32 %v282, %v606
      %v653 = vadd.f32 %v283, %v611
      %v654 = vadd.f32 %v284, %v614
      %v655 = vadd.f32 %v285, %v619
      %v656 = vadd.f32 %v286, %v622
      %657 = vst [vmem:[#allocation2] sm:$0xff] %v625
      %658 = vst [vmem:[#allocation2 + $0x8] sm:$0xff] %v626
      %659 = vst [vmem:[#allocation2 + $0x10] sm:$0xff] %v627
      %660 = vst [vmem:[#allocation2 + $0x18] sm:$0xff] %v628
      %661 = vst [vmem:[#allocation2 + $0x20] sm:$0xff] %v629
      %662 = vst [vmem:[#allocation2 + $0x28] sm:$0xff] %v630
      %663 = vst [vmem:[#allocation2 + $0x30] sm:$0xff] %v631
      %664 = vst [vmem:[#allocation2 + $0x38] sm:$0xff] %v632
      %665 = vst [vmem:[#allocation2 + $0x40] sm:$0xff] %v633
      %666 = vst [vmem:[#allocation2 + $0x48] sm:$0xff] %v634
      %667 = vst [vmem:[#allocation2 + $0x50] sm:$0xff] %v635
      %668 = vst [vmem:[#allocation2 + $0x58] sm:$0xff] %v636
      %669 = vst [vmem:[#allocation2 + $0x60] sm:$0xff] %v637
      %670 = vst [vmem:[#allocation2 + $0x68] sm:$0xff] %v638
      %671 = vst [vmem:[#allocation2 + $0x70] sm:$0xff] %v639
      %672 = vst [vmem:[#allocation2 + $0x78] sm:$0xff] %v640
      %673 = vst [vmem:[#allocation2 + $0x80] sm:$0xff] %v641
      %674 = vst [vmem:[#allocation2 + $0x88] sm:$0xff] %v642
      %675 = vst [vmem:[#allocation2 + $0x90] sm:$0xff] %v643
      %676 = vst [vmem:[#allocation2 + $0x98] sm:$0xff] %v644
      %677 = vst [vmem:[#allocation2 + $0xa0] sm:$0xff] %v645
      %678 = vst [vmem:[#allocation2 + $0xa8] sm:$0xff] %v646
      %679 = vst [vmem:[#allocation2 + $0xb0] sm:$0xff] %v647
      %680 = vst [vmem:[#allocation2 + $0xb8] sm:$0xff] %v648
      %681 = vst [vmem:[#allocation2 + $0xc0] sm:$0xff] %v649
      %682 = vst [vmem:[#allocation2 + $0xc8] sm:$0xff] %v650
      %683 = vst [vmem:[#allocation2 + $0xd0] sm:$0xff] %v651
      %684 = vst [vmem:[#allocation2 + $0xd8] sm:$0xff] %v652
      %685 = vst [vmem:[#allocation2 + $0xe0] sm:$0xff] %v653
      %686 = vst [vmem:[#allocation2 + $0xe8] sm:$0xff] %v654
      %687 = vst [vmem:[#allocation2 + $0xf0] sm:$0xff] %v655
      %688 = vst [vmem:[#allocation2 + $0xf8] sm:$0xff] %v656
      // Predicated region
      $region33: #{icnet_forward.11} parent=27 // pred_check
        %p689 = pneg %p219
      $region34: #{icnet_forward.11} parent=27 // pred_check_branch
        %691 = sbr.rel (%p689) target = $region36
      $region35: #{icnet_forward.11} parent=27 // pred_region
        %v692 = vld [vmem:[#allocation2] sm:$0xff]
        %v693 = vld [vmem:[#allocation2 + $0x8] sm:$0xff]
        %v694 = vld [vmem:[#allocation2 + $0x10] sm:$0xff]
        %v695 = vld [vmem:[#allocation2 + $0x18] sm:$0xff]
        %v696 = vld [vmem:[#allocation2 + $0x20] sm:$0xff]
        %v697 = vld [vmem:[#allocation2 + $0x28] sm:$0xff]
        %v698 = vld [vmem:[#allocation2 + $0x30] sm:$0xff]
        %v699 = vld [vmem:[#allocation2 + $0x38] sm:$0xff]
        %v700 = vld [vmem:[#allocation2 + $0x40] sm:$0xff]
        %v701 = vld [vmem:[#allocation2 + $0x48] sm:$0xff]
        %v702 = vld [vmem:[#allocation2 + $0x50] sm:$0xff]
        %v703 = vld [vmem:[#allocation2 + $0x58] sm:$0xff]
        %v704 = vld [vmem:[#allocation2 + $0x60] sm:$0xff]
        %v705 = vld [vmem:[#allocation2 + $0x68] sm:$0xff]
        %v706 = vld [vmem:[#allocation2 + $0x70] sm:$0xff]
        %v707 = vld [vmem:[#allocation2 + $0x78] sm:$0xff]
        %v708 = vld [vmem:[#allocation2 + $0x80] sm:$0xff]
        %v709 = vld [vmem:[#allocation2 + $0x88] sm:$0xff]
        %v710 = vld [vmem:[#allocation2 + $0x90] sm:$0xff]
        %v711 = vld [vmem:[#allocation2 + $0x98] sm:$0xff]
        %v712 = vld [vmem:[#allocation2 + $0xa0] sm:$0xff]
        %v713 = vld [vmem:[#allocation2 + $0xa8] sm:$0xff]
        %v714 = vld [vmem:[#allocation2 + $0xb0] sm:$0xff]
        %v715 = vld [vmem:[#allocation2 + $0xb8] sm:$0xff]
        %v716 = vld [vmem:[#allocation2 + $0xc0] sm:$0xff]
        %v717 = vld [vmem:[#allocation2 + $0xc8] sm:$0xff]
        %v718 = vld [vmem:[#allocation2 + $0xd0] sm:$0xff]
        %v719 = vld [vmem:[#allocation2 + $0xd8] sm:$0xff]
        %v720 = vld [vmem:[#allocation2 + $0xe0] sm:$0xff]
        %v721 = vld [vmem:[#allocation2 + $0xe8] sm:$0xff]
        %v722 = vld [vmem:[#allocation2 + $0xf0] sm:$0xff]
        %v723 = vld [vmem:[#allocation2 + $0xf8] sm:$0xff]
        %v724 = vmax.f32 %v692, 0.0
        %v725 = vmax.f32 %v693, 0.0
        %v726 = vmax.f32 %v694, 0.0
        %v727 = vmax.f32 %v695, 0.0
        %v728 = vmax.f32 %v696, 0.0
        %v729 = vmax.f32 %v697, 0.0
        %v730 = vmax.f32 %v698, 0.0
        %v731 = vmax.f32 %v699, 0.0
        %v732 = vmax.f32 %v700, 0.0
        %v733 = vmax.f32 %v701, 0.0
        %v734 = vmax.f32 %v702, 0.0
        %v735 = vmax.f32 %v703, 0.0
        %v736 = vmax.f32 %v704, 0.0
        %v737 = vmax.f32 %v705, 0.0
        %v738 = vmax.f32 %v706, 0.0
        %v739 = vmax.f32 %v707, 0.0
        %v740 = vmax.f32 %v708, 0.0
        %v741 = vmax.f32 %v709, 0.0
        %v742 = vmax.f32 %v710, 0.0
        %v743 = vmax.f32 %v711, 0.0
        %v744 = vmax.f32 %v712, 0.0
        %v745 = vmax.f32 %v713, 0.0
        %v746 = vmax.f32 %v714, 0.0
        %v747 = vmax.f32 %v715, 0.0
        %v748 = vmax.f32 %v716, 0.0
        %v749 = vmax.f32 %v717, 0.0
        %v750 = vmax.f32 %v718, 0.0
        %v751 = vmax.f32 %v719, 0.0
        %v752 = vmax.f32 %v720, 0.0
        %v753 = vmax.f32 %v721, 0.0
        %v754 = vmax.f32 %v722, 0.0
        %v755 = vmax.f32 %v723, 0.0
        %v756 = vpack.c.bf16 %v725, %v724
        %v757 = vpack.c.bf16 %v727, %v726
        %v758 = vpack.c.bf16 %v729, %v728
        %v759 = vpack.c.bf16 %v731, %v730
        %v760 = vpack.c.bf16 %v733, %v732
        %v761 = vpack.c.bf16 %v735, %v734
        %v762 = vpack.c.bf16 %v737, %v736
        %v763 = vpack.c.bf16 %v739, %v738
        %v764 = vpack.c.bf16 %v741, %v740
        %v765 = vpack.c.bf16 %v743, %v742
        %v766 = vpack.c.bf16 %v745, %v744
        %v767 = vpack.c.bf16 %v747, %v746
        %v768 = vpack.c.bf16 %v749, %v748
        %v769 = vpack.c.bf16 %v751, %v750
        %v770 = vpack.c.bf16 %v753, %v752
        %v771 = vpack.c.bf16 %v755, %v754
        %v788 = vunpack.c.l.b16 %v756
        %v789 = vunpack.c.h.b16 %v756
        %v790 = vunpack.c.l.b16 %v757
        %v791 = vunpack.c.h.b16 %v757
        %v792 = vunpack.c.l.b16 %v758
        %v793 = vunpack.c.h.b16 %v758
        %v794 = vunpack.c.l.b16 %v759
        %v795 = vunpack.c.h.b16 %v759
        %v796 = vunpack.c.l.b16 %v760
        %v797 = vunpack.c.h.b16 %v760
        %v798 = vunpack.c.l.b16 %v761
        %v799 = vunpack.c.h.b16 %v761
        %v800 = vunpack.c.l.b16 %v762
        %v801 = vunpack.c.h.b16 %v762
        %v802 = vunpack.c.l.b16 %v763
        %v803 = vunpack.c.h.b16 %v763
        %v804 = vunpack.c.l.b16 %v764
        %v805 = vunpack.c.h.b16 %v764
        %v806 = vunpack.c.l.b16 %v765
        %v807 = vunpack.c.h.b16 %v765
        %v808 = vunpack.c.l.b16 %v766
        %v809 = vunpack.c.h.b16 %v766
        %v810 = vunpack.c.l.b16 %v767
        %v811 = vunpack.c.h.b16 %v767
        %v812 = vunpack.c.l.b16 %v768
        %v813 = vunpack.c.h.b16 %v768
        %v814 = vunpack.c.l.b16 %v769
        %v815 = vunpack.c.h.b16 %v769
        %v816 = vunpack.c.l.b16 %v770
        %v817 = vunpack.c.h.b16 %v770
        %v818 = vunpack.c.l.b16 %v771
        %v819 = vunpack.c.h.b16 %v771
        %v820 = vpack.c.b16 %v788, %v788
        %v821 = vpack.c.b16 %v789, %v789
        %v822 = vpack.c.b16 %v790, %v790
        %v823 = vpack.c.b16 %v791, %v791
        %v824 = vpack.c.b16 %v792, %v792
        %v825 = vpack.c.b16 %v793, %v793
        %v826 = vpack.c.b16 %v794, %v794
        %v827 = vpack.c.b16 %v795, %v795
        %v828 = vpack.c.b16 %v796, %v796
        %v829 = vpack.c.b16 %v797, %v797
        %v830 = vpack.c.b16 %v798, %v798
        %v831 = vpack.c.b16 %v799, %v799
        %v832 = vpack.c.b16 %v800, %v800
        %v833 = vpack.c.b16 %v801, %v801
        %v834 = vpack.c.b16 %v802, %v802
        %v835 = vpack.c.b16 %v803, %v803
        %v836 = vpack.c.b16 %v804, %v804
        %v837 = vpack.c.b16 %v805, %v805
        %v838 = vpack.c.b16 %v806, %v806
        %v839 = vpack.c.b16 %v807, %v807
        %v840 = vpack.c.b16 %v808, %v808
        %v841 = vpack.c.b16 %v809, %v809
        %v842 = vpack.c.b16 %v810, %v810
        %v843 = vpack.c.b16 %v811, %v811
        %v844 = vpack.c.b16 %v812, %v812
        %v845 = vpack.c.b16 %v813, %v813
        %v846 = vpack.c.b16 %v814, %v814
        %v847 = vpack.c.b16 %v815, %v815
        %v848 = vpack.c.b16 %v816, %v816
        %v849 = vpack.c.b16 %v817, %v817
        %v850 = vpack.c.b16 %v818, %v818
        %v851 = vpack.c.b16 %v819, %v819
        %884 = vst [vmem:[%s216] sm:$0xf] %v820
        %885 = vst [vmem:[%s216 + $0x4] sm:$0xf] %v821
        %886 = vst [vmem:[%s216 + $0x8] sm:$0xf] %v822
        %887 = vst [vmem:[%s216 + $0xc] sm:$0xf] %v823
        %888 = vst [vmem:[%s216 + $0x10] sm:$0xf] %v824
        %889 = vst [vmem:[%s216 + $0x14] sm:$0xf] %v825
        %890 = vst [vmem:[%s216 + $0x18] sm:$0xf] %v826
        %891 = vst [vmem:[%s216 + $0x1c] sm:$0xf] %v827
        %892 = vst [vmem:[%s216 + $0x20] sm:$0xf] %v828
        %893 = vst [vmem:[%s216 + $0x24] sm:$0xf] %v829
        %894 = vst [vmem:[%s216 + $0x28] sm:$0xf] %v830
        %895 = vst [vmem:[%s216 + $0x2c] sm:$0xf] %v831
        %896 = vst [vmem:[%s216 + $0x30] sm:$0xf] %v832
        %897 = vst [vmem:[%s216 + $0x34] sm:$0xf] %v833
        %898 = vst [vmem:[%s216 + $0x38] sm:$0xf] %v834
        %899 = vst [vmem:[%s216 + $0x3c] sm:$0xf] %v835
        %900 = vst [vmem:[%s216 + $0x40] sm:$0xf] %v836
        %901 = vst [vmem:[%s216 + $0x44] sm:$0xf] %v837
        %902 = vst [vmem:[%s216 + $0x48] sm:$0xf] %v838
        %903 = vst [vmem:[%s216 + $0x4c] sm:$0xf] %v839
        %904 = vst [vmem:[%s216 + $0x50] sm:$0xf] %v840
        %905 = vst [vmem:[%s216 + $0x54] sm:$0xf] %v841
        %906 = vst [vmem:[%s216 + $0x58] sm:$0xf] %v842
        %907 = vst [vmem:[%s216 + $0x5c] sm:$0xf] %v843
        %908 = vst [vmem:[%s216 + $0x60] sm:$0xf] %v844
        %909 = vst [vmem:[%s216 + $0x64] sm:$0xf] %v845
        %910 = vst [vmem:[%s216 + $0x68] sm:$0xf] %v846
        %911 = vst [vmem:[%s216 + $0x6c] sm:$0xf] %v847
        %912 = vst [vmem:[%s216 + $0x70] sm:$0xf] %v848
        %913 = vst [vmem:[%s216 + $0x74] sm:$0xf] %v849
        %914 = vst [vmem:[%s216 + $0x78] sm:$0xf] %v850
        %915 = vst [vmem:[%s216 + $0x7c] sm:$0xf] %v851
      $region36: #{icnet_forward.11} parent=27 // pred_fallthru
        _
      %s916 = smul.u32 32, %s18
      %p917 = scmp.lt.s32.totalorder %s916, 63
      %s918 = scalar_select %p917, %s916, 63
      %p919 = scmp.lt.s32.totalorder %s19, 0
      %s920 = scalar_select %p919, %s19, 0
      %s921 = sadd.s32 %s920, %s918
      %s922 = smul.addr %s921, 4
      %s923 = scalar_lea.vmem %s2, %s922
      // Predicated region
      $region37: #{icnet_forward.11} parent=27 // pred_check
        %p924 = pneg %p108
      $region38: #{icnet_forward.11} parent=27 // pred_check_branch
        %926 = sbr.rel (%p924) target = $region40
      $region39: #{icnet_forward.11} parent=27 // pred_region
        %s927 = smul.u32 32, %s18
      $region40: #{icnet_forward.11} parent=27 // pred_fallthru
        _
    $region28: #{icnet_forward.11} parent=5 // pred_fallthru
      _
    %p928 = scmp.le.s32.totalorder 2, %s8
    // Predicated region
    $region41: #{icnet_forward.11} parent=5 // pred_check
      %p929 = pneg %p928
    $region42: #{icnet_forward.11} parent=5 // pred_check_branch
      %931 = sbr.rel (%p929) target = $region44
    $region43: #{icnet_forward.11} parent=5 // pred_region
      %s932 = ssub.s32 %s8, 2
      // Predicated region
      $region45: #{icnet_forward.11} parent=43 // pred_check
        %p933 = pneg %p114
      $region46: #{icnet_forward.11} parent=43 // pred_check_branch
        %935 = sbr.rel (%p933) target = $region48
      $region47: #{icnet_forward.11} parent=43 // pred_region
        %s936 = smul.u32 32, %s21
        %p937 = scmp.lt.s32.totalorder %s936, 63
        %s938 = scalar_select %p937, %s936, 63
        %p939 = scmp.lt.s32.totalorder %s22, 0
        %s940 = scalar_select %p939, %s22, 0
        %s941 = sadd.s32 %s940, %s938
        %s942 = smul.addr %s941, 4
        %s943 = scalar_lea.vmem %s2, %s942
      $region48: #{icnet_forward.11} parent=43 // pred_fallthru
        _
    $region44: #{icnet_forward.11} parent=5 // pred_fallthru
      _
  $region6: #{icnet_forward.11} parent=0 // loop_footer
    %s12 = sadd.s32 1, %s8
  $region7: #{icnet_forward.11} parent=0 // loop_footer_branch
    %7 = sbr.rel target = $region3
  $region8: #{icnet_forward.11} parent=0 // loop_exit
    _

// kernel: icnet_forward.12
$region0: #{icnet_forward.12}
  #allocation0 [shape = 'u32[]', space=smem, size = 0x4, offset = 0x4, fixed_abs, tag = 'smem constant byte address 0x4 - core index']
  #allocation1 [shape = 'u32[144,128]{1,0:T(1,128)}', space=vmem, size = 0x12000, scoped, tag = 'internal scratch']
  #allocation2 [shape = 'f32[128,128]{1,0:T(8,128)}', space=vmem, size = 0x10000, scoped, tag = 'scratch operand']
  %s0 = inlined_call_operand.vmem [shape: bf16[128,288], index: 0, kind: input, shape index: {}]
  %s1 = inlined_call_operand.vmem [shape: bf16[288,128], index: 1, kind: input, shape index: {}]
  %s2 = inlined_call_operand.vmem [shape: bf16[128,128], index: 2, kind: output, shape index: {}]
  %s3 = sld [smem:[#allocation0]]
  $region26: #{icnet_forward.12} parent=0
    _
  %s5 = ssub.s32 1, %s3
  %s6 = scalar_select 0, %s5, %s3
  // Predicated region
  $region2: #{icnet_forward.12} parent=0 // pred_check
    _
  $region3: #{icnet_forward.12} parent=0 // pred_check_branch
    %8 = sbr.rel (0) target = $region5
  $region4: #{icnet_forward.12} parent=0 // pred_region
    _
  $region5: #{icnet_forward.12} parent=0 // pred_fallthru
    _
  // Predicated region
  $region6: #{icnet_forward.12} parent=0 // pred_check
    _
  $region7: #{icnet_forward.12} parent=0 // pred_check_branch
    %10 = sbr.rel (0) target = $region9
  $region8: #{icnet_forward.12} parent=0 // pred_region
    _
  $region9: #{icnet_forward.12} parent=0 // pred_fallthru
    _
  %p12 = scmp.eq.s32.totalorder 0, 0
  // Predicated region
  $region10: #{icnet_forward.12} parent=0 // pred_check
    %p13 = pneg %p12
  $region11: #{icnet_forward.12} parent=0 // pred_check_branch
    %15 = sbr.rel (%p13) target = $region13
  $region12: #{icnet_forward.12} parent=0 // pred_region
    %16 = vst [vmem:[#allocation2] sm:$0xff] 0.0
    %17 = vst [vmem:[#allocation2 + $0x8] sm:$0xff] 0.0
    %18 = vst [vmem:[#allocation2 + $0x10] sm:$0xff] 0.0
    %19 = vst [vmem:[#allocation2 + $0x18] sm:$0xff] 0.0
    %20 = vst [vmem:[#allocation2 + $0x20] sm:$0xff] 0.0
    %21 = vst [vmem:[#allocation2 + $0x28] sm:$0xff] 0.0
    %22 = vst [vmem:[#allocation2 + $0x30] sm:$0xff] 0.0
    %23 = vst [vmem:[#allocation2 + $0x38] sm:$0xff] 0.0
    %24 = vst [vmem:[#allocation2 + $0x40] sm:$0xff] 0.0
    %25 = vst [vmem:[#allocation2 + $0x48] sm:$0xff] 0.0
    %26 = vst [vmem:[#allocation2 + $0x50] sm:$0xff] 0.0
    %27 = vst [vmem:[#allocation2 + $0x58] sm:$0xff] 0.0
    %28 = vst [vmem:[#allocation2 + $0x60] sm:$0xff] 0.0
    %29 = vst [vmem:[#allocation2 + $0x68] sm:$0xff] 0.0
    %30 = vst [vmem:[#allocation2 + $0x70] sm:$0xff] 0.0
    %31 = vst [vmem:[#allocation2 + $0x78] sm:$0xff] 0.0
  $region13: #{icnet_forward.12} parent=0 // pred_fallthru
    _
  %v32 = vld [vmem:[#allocation2] sm:$0xff]
  %v33 = vld [vmem:[#allocation2 + $0x8] sm:$0xff]
  %v34 = vld [vmem:[#allocation2 + $0x10] sm:$0xff]
  %v35 = vld [vmem:[#allocation2 + $0x18] sm:$0xff]
  %v36 = vld [vmem:[#allocation2 + $0x20] sm:$0xff]
  %v37 = vld [vmem:[#allocation2 + $0x28] sm:$0xff]
  %v38 = vld [vmem:[#allocation2 + $0x30] sm:$0xff]
  %v39 = vld [vmem:[#allocation2 + $0x38] sm:$0xff]
  %v40 = vld [vmem:[#allocation2 + $0x40] sm:$0xff]
  %v41 = vld [vmem:[#allocation2 + $0x48] sm:$0xff]
  %v42 = vld [vmem:[#allocation2 + $0x50] sm:$0xff]
  %v43 = vld [vmem:[#allocation2 + $0x58] sm:$0xff]
  %v44 = vld [vmem:[#allocation2 + $0x60] sm:$0xff]
  %v45 = vld [vmem:[#allocation2 + $0x68] sm:$0xff]
  %v46 = vld [vmem:[#allocation2 + $0x70] sm:$0xff]
  %v47 = vld [vmem:[#allocation2 + $0x78] sm:$0xff]
  %v48 = vld [vmem:[%s0] sm:$0xff]
  %v49 = vld [vmem:[%s0 + $0x8] sm:$0xf]
  %v50 = vld [vmem:[%s0 + $0xc] sm:$0xff]
  %v51 = vld [vmem:[%s0 + $0x14] sm:$0xf]
  %v52 = vld [vmem:[%s0 + $0x18] sm:$0xff]
  %v53 = vld [vmem:[%s0 + $0x20] sm:$0xf]
  %v54 = vld [vmem:[%s0 + $0x24] sm:$0xff]
  %v55 = vld [vmem:[%s0 + $0x2c] sm:$0xf]
  %v56 = vld [vmem:[%s0 + $0x30] sm:$0xff]
  %v57 = vld [vmem:[%s0 + $0x38] sm:$0xf]
  %v58 = vld [vmem:[%s0 + $0x3c] sm:$0xff]
  %v59 = vld [vmem:[%s0 + $0x44] sm:$0xf]
  %v60 = vld [vmem:[%s0 + $0x48] sm:$0xff]
  %v61 = vld [vmem:[%s0 + $0x50] sm:$0xf]
  %v62 = vld [vmem:[%s0 + $0x54] sm:$0xff]
  %v63 = vld [vmem:[%s0 + $0x5c] sm:$0xf]
  %v64 = vld [vmem:[%s0 + $0x60] sm:$0xff]
  %v65 = vld [vmem:[%s0 + $0x68] sm:$0xf]
  %v66 = vld [vmem:[%s0 + $0x6c] sm:$0xff]
  %v67 = vld [vmem:[%s0 + $0x74] sm:$0xf]
  %v68 = vld [vmem:[%s0 + $0x78] sm:$0xff]
  %v69 = vld [vmem:[%s0 + $0x80] sm:$0xf]
  %v70 = vld [vmem:[%s0 + $0x84] sm:$0xff]
  %v71 = vld [vmem:[%s0 + $0x8c] sm:$0xf]
  %v72 = vld [vmem:[%s0 + $0x90] sm:$0xff]
  %v73 = vld [vmem:[%s0 + $0x98] sm:$0xf]
  %v74 = vld [vmem:[%s0 + $0x9c] sm:$0xff]
  %v75 = vld [vmem:[%s0 + $0xa4] sm:$0xf]
  %v76 = vld [vmem:[%s0 + $0xa8] sm:$0xff]
  %v77 = vld [vmem:[%s0 + $0xb0] sm:$0xf]
  %v78 = vld [vmem:[%s0 + $0xb4] sm:$0xff]
  %v79 = vld [vmem:[%s0 + $0xbc] sm:$0xf]
  %v80 = vld [vmem:[%s1] sm:$0xf]
  %v81 = vld [vmem:[%s1 + $0x4] sm:$0xf]
  %v82 = vld [vmem:[%s1 + $0x8] sm:$0xf]
  %v83 = vld [vmem:[%s1 + $0xc] sm:$0xf]
  %v84 = vld [vmem:[%s1 + $0x10] sm:$0xf]
  %v85 = vld [vmem:[%s1 + $0x14] sm:$0xf]
  %v86 = vld [vmem:[%s1 + $0x18] sm:$0xf]
  %v87 = vld [vmem:[%s1 + $0x1c] sm:$0xf]
  %v88 = vld [vmem:[%s1 + $0x20] sm:$0xf]
  %v89 = vld [vmem:[%s1 + $0x24] sm:$0xf]
  %v90 = vld [vmem:[%s1 + $0x28] sm:$0xf]
  %v91 = vld [vmem:[%s1 + $0x2c] sm:$0xf]
  %v92 = vld [vmem:[%s1 + $0x30] sm:$0xf]
  %v93 = vld [vmem:[%s1 + $0x34] sm:$0xf]
  %v94 = vld [vmem:[%s1 + $0x38] sm:$0xf]
  %v95 = vld [vmem:[%s1 + $0x3c] sm:$0xf]
  %v96 = vld [vmem:[%s1 + $0x40] sm:$0xf]
  %v97 = vld [vmem:[%s1 + $0x44] sm:$0xf]
  %v98 = vld [vmem:[%s1 + $0x48] sm:$0xf]
  %v99 = vld [vmem:[%s1 + $0x4c] sm:$0xf]
  %v100 = vld [vmem:[%s1 + $0x50] sm:$0xf]
  %v101 = vld [vmem:[%s1 + $0x54] sm:$0xf]
  %v102 = vld [vmem:[%s1 + $0x58] sm:$0xf]
  %v103 = vld [vmem:[%s1 + $0x5c] sm:$0xf]
  %v104 = vld [vmem:[%s1 + $0x60] sm:$0xf]
  %v105 = vld [vmem:[%s1 + $0x64] sm:$0xf]
  %v106 = vld [vmem:[%s1 + $0x68] sm:$0xf]
  %v107 = vld [vmem:[%s1 + $0x6c] sm:$0xf]
  %v108 = vld [vmem:[%s1 + $0x70] sm:$0xf]
  %v109 = vld [vmem:[%s1 + $0x74] sm:$0xf]
  %v110 = vld [vmem:[%s1 + $0x78] sm:$0xf]
  %v111 = vld [vmem:[%s1 + $0x7c] sm:$0xf]
  %v112 = vld [vmem:[%s1 + $0x80] sm:$0xf]
  %v113 = vld [vmem:[%s1 + $0x84] sm:$0xf]
  %v114 = vld [vmem:[%s1 + $0x88] sm:$0xf]
  %v115 = vld [vmem:[%s1 + $0x8c] sm:$0xf]
  %v148 = vunpack.c.l.b16 %v48
  %v149 = vunpack.c.h.b16 %v48
  %v150 = vunpack.c.l.b16 %v49
  %v151 = vunpack.c.l.b16 %v50
  %v152 = vunpack.c.h.b16 %v50
  %v153 = vunpack.c.l.b16 %v51
  %v154 = vunpack.c.l.b16 %v52
  %v155 = vunpack.c.h.b16 %v52
  %v156 = vunpack.c.l.b16 %v53
  %v157 = vunpack.c.l.b16 %v54
  %v158 = vunpack.c.h.b16 %v54
  %v159 = vunpack.c.l.b16 %v55
  %v160 = vunpack.c.l.b16 %v56
  %v161 = vunpack.c.h.b16 %v56
  %v162 = vunpack.c.l.b16 %v57
  %v163 = vunpack.c.l.b16 %v58
  %v164 = vunpack.c.h.b16 %v58
  %v165 = vunpack.c.l.b16 %v59
  %v166 = vunpack.c.l.b16 %v60
  %v167 = vunpack.c.h.b16 %v60
  %v168 = vunpack.c.l.b16 %v61
  %v169 = vunpack.c.l.b16 %v62
  %v170 = vunpack.c.h.b16 %v62
  %v171 = vunpack.c.l.b16 %v63
  %v172 = vunpack.c.l.b16 %v64
  %v173 = vunpack.c.h.b16 %v64
  %v174 = vunpack.c.l.b16 %v65
  %v175 = vunpack.c.l.b16 %v66
  %v176 = vunpack.c.h.b16 %v66
  %v177 = vunpack.c.l.b16 %v67
  %v178 = vunpack.c.l.b16 %v68
  %v179 = vunpack.c.h.b16 %v68
  %v180 = vunpack.c.l.b16 %v69
  %v181 = vunpack.c.l.b16 %v70
  %v182 = vunpack.c.h.b16 %v70
  %v183 = vunpack.c.l.b16 %v71
  %v184 = vunpack.c.l.b16 %v72
  %v185 = vunpack.c.h.b16 %v72
  %v186 = vunpack.c.l.b16 %v73
  %v187 = vunpack.c.l.b16 %v74
  %v188 = vunpack.c.h.b16 %v74
  %v189 = vunpack.c.l.b16 %v75
  %v190 = vunpack.c.l.b16 %v76
  %v191 = vunpack.c.h.b16 %v76
  %v192 = vunpack.c.l.b16 %v77
  %v193 = vunpack.c.l.b16 %v78
  %v194 = vunpack.c.h.b16 %v78
  %v195 = vunpack.c.l.b16 %v79
  %v196 = vpack.c.b16 %v151, %v148
  %v197 = vpack.c.b16 %v152, %v149
  %v198 = vpack.c.b16 %v153, %v150
  %v199 = vpack.c.b16 %v157, %v154
  %v200 = vpack.c.b16 %v158, %v155
  %v201 = vpack.c.b16 %v159, %v156
  %v202 = vpack.c.b16 %v163, %v160
  %v203 = vpack.c.b16 %v164, %v161
  %v204 = vpack.c.b16 %v165, %v162
  %v205 = vpack.c.b16 %v169, %v166
  %v206 = vpack.c.b16 %v170, %v167
  %v207 = vpack.c.b16 %v171, %v168
  %v208 = vpack.c.b16 %v175, %v172
  %v209 = vpack.c.b16 %v176, %v173
  %v210 = vpack.c.b16 %v177, %v174
  %v211 = vpack.c.b16 %v181, %v178
  %v212 = vpack.c.b16 %v182, %v179
  %v213 = vpack.c.b16 %v183, %v180
  %v214 = vpack.c.b16 %v187, %v184
  %v215 = vpack.c.b16 %v188, %v185
  %v216 = vpack.c.b16 %v189, %v186
  %v217 = vpack.c.b16 %v193, %v190
  %v218 = vpack.c.b16 %v194, %v191
  %v219 = vpack.c.b16 %v195, %v192
  %v272 = vunpack.c.l.b16 %v80
  %v273 = vunpack.c.l.b16 %v81
  %v274 = vunpack.c.l.b16 %v82
  %v275 = vunpack.c.l.b16 %v83
  %v276 = vunpack.c.l.b16 %v84
  %v277 = vunpack.c.l.b16 %v85
  %v278 = vunpack.c.l.b16 %v86
  %v279 = vunpack.c.l.b16 %v87
  %v280 = vunpack.c.l.b16 %v88
  %v281 = vunpack.c.l.b16 %v89
  %v282 = vunpack.c.l.b16 %v90
  %v283 = vunpack.c.l.b16 %v91
  %v284 = vunpack.c.l.b16 %v92
  %v285 = vunpack.c.l.b16 %v93
  %v286 = vunpack.c.l.b16 %v94
  %v287 = vunpack.c.l.b16 %v95
  %v288 = vunpack.c.l.b16 %v96
  %v289 = vunpack.c.l.b16 %v97
  %v290 = vunpack.c.l.b16 %v98
  %v291 = vunpack.c.l.b16 %v99
  %v292 = vunpack.c.l.b16 %v100
  %v293 = vunpack.c.l.b16 %v101
  %v294 = vunpack.c.l.b16 %v102
  %v295 = vunpack.c.l.b16 %v103
  %v296 = vunpack.c.l.b16 %v104
  %v297 = vunpack.c.l.b16 %v105
  %v298 = vunpack.c.l.b16 %v106
  %v299 = vunpack.c.l.b16 %v107
  %v300 = vunpack.c.l.b16 %v108
  %v301 = vunpack.c.l.b16 %v109
  %v302 = vunpack.c.l.b16 %v110
  %v303 = vunpack.c.l.b16 %v111
  %v304 = vunpack.c.l.b16 %v112
  %v305 = vunpack.c.l.b16 %v113
  %v306 = vunpack.c.l.b16 %v114
  %v307 = vunpack.c.l.b16 %v115
  %v308 = vpack.c.b16 %v273, %v272
  %v309 = vpack.c.b16 %v275, %v274
  %v310 = vpack.c.b16 %v277, %v276
  %v311 = vpack.c.b16 %v279, %v278
  %v312 = vpack.c.b16 %v281, %v280
  %v313 = vpack.c.b16 %v283, %v282
  %v314 = vpack.c.b16 %v285, %v284
  %v315 = vpack.c.b16 %v287, %v286
  %v316 = vpack.c.b16 %v289, %v288
  %v317 = vpack.c.b16 %v291, %v290
  %v318 = vpack.c.b16 %v293, %v292
  %v319 = vpack.c.b16 %v295, %v294
  %v320 = vpack.c.b16 %v297, %v296
  %v321 = vpack.c.b16 %v299, %v298
  %v322 = vpack.c.b16 %v301, %v300
  %v323 = vpack.c.b16 %v303, %v302
  %v324 = vpack.c.b16 %v305, %v304
  %v325 = vpack.c.b16 %v307, %v306
  %vm344 = vcmask 261120
  %v346 = vsel %vm344, %v198, 0
  %v349 = vsel %vm344, %v201, 0
  %v352 = vsel %vm344, %v204, 0
  %v355 = vsel %vm344, %v207, 0
  %v358 = vsel %vm344, %v210, 0
  %v361 = vsel %vm344, %v213, 0
  %v364 = vsel %vm344, %v216, 0
  %v367 = vsel %vm344, %v219, 0
  %369 = vmatprep.subr.bf16.mxu0 0
  %370 = vmatpush1.bf16.msra.mxu0 %v315
  %371 = vmatprep.subr.bf16.mxu0 0
  %372 = vmatpush1.bf16.msra.mxu0 %v314
  %373 = vmatprep.subr.bf16.mxu0 0
  %374 = vmatpush1.bf16.msra.mxu0 %v313
  %375 = vmatprep.subr.bf16.mxu0 0
  %376 = vmatpush1.bf16.msra.mxu0 %v312
  %377 = vmatprep.subr.bf16.mxu0 0
  %378 = vmatpush1.bf16.msra.mxu0 %v311
  %379 = vmatprep.subr.bf16.mxu0 0
  %380 = vmatpush1.bf16.msra.mxu0 %v310
  %381 = vmatprep.subr.bf16.mxu0 0
  %382 = vmatpush1.bf16.msra.mxu0 %v309
  %383 = vmatprep.subr.bf16.mxu0 0
  %384 = vmatpush1.bf16.msra.mxu0 %v308
  %385 = vmatprep.subr.bf16.mxu0 0
  %386 = vmatpush2.bf16.msra.mxu0 %v323
  %387 = vmatprep.subr.bf16.mxu0 0
  %388 = vmatpush2.bf16.msra.mxu0 %v322
  %389 = vmatprep.subr.bf16.mxu0 0
  %390 = vmatpush2.bf16.msra.mxu0 %v321
  %391 = vmatprep.subr.bf16.mxu0 0
  %392 = vmatpush2.bf16.msra.mxu0 %v320
  %393 = vmatprep.subr.bf16.mxu0 0
  %394 = vmatpush2.bf16.msra.mxu0 %v319
  %395 = vmatprep.subr.bf16.mxu0 0
  %396 = vmatpush2.bf16.msra.mxu0 %v318
  %397 = vmatprep.subr.bf16.mxu0 0
  %398 = vmatpush2.bf16.msra.mxu0 %v317
  %399 = vmatprep.subr.bf16.mxu0 0
  %400 = vmatpush2.bf16.msra.mxu0 %v316
  %401 = vmatprep.mubr.bf16.mxu0 %v197
  %402 = vmatmul.mubr.bf16.gmra.mxu0 %v196
  %v403 = vpop.f32.mrf.mxu0
  %v404 = vadd.f32 0.0, %v403
  %v405 = vpop.f32.mrf.mxu0
  %v406 = vpop.f32.mrf.mxu0
  %v407 = vadd.f32 0.0, %v406
  %v408 = vpop.f32.mrf.mxu0
  %409 = vmatprep.mubr.bf16.mxu0 %v200
  %410 = vmatmul.mubr.bf16.gmra.mxu0 %v199
  %v411 = vpop.f32.mrf.mxu0
  %v412 = vadd.f32 0.0, %v411
  %v413 = vpop.f32.mrf.mxu0
  %v414 = vpop.f32.mrf.mxu0
  %v415 = vadd.f32 0.0, %v414
  %v416 = vpop.f32.mrf.mxu0
  %417 = vmatprep.mubr.bf16.mxu0 %v203
  %418 = vmatmul.mubr.bf16.gmra.mxu0 %v202
  %v419 = vpop.f32.mrf.mxu0
  %v420 = vadd.f32 0.0, %v419
  %v421 = vpop.f32.mrf.mxu0
  %v422 = vpop.f32.mrf.mxu0
  %v423 = vadd.f32 0.0, %v422
  %v424 = vpop.f32.mrf.mxu0
  %425 = vmatprep.mubr.bf16.mxu0 %v206
  %426 = vmatmul.mubr.bf16.gmra.mxu0 %v205
  %v427 = vpop.f32.mrf.mxu0
  %v428 = vadd.f32 0.0, %v427
  %v429 = vpop.f32.mrf.mxu0
  %v430 = vpop.f32.mrf.mxu0
  %v431 = vadd.f32 0.0, %v430
  %v432 = vpop.f32.mrf.mxu0
  %433 = vmatprep.mubr.bf16.mxu0 %v209
  %434 = vmatmul.mubr.bf16.gmra.mxu0 %v208
  %v435 = vpop.f32.mrf.mxu0
  %v436 = vadd.f32 0.0, %v435
  %v437 = vpop.f32.mrf.mxu0
  %v438 = vpop.f32.mrf.mxu0
  %v439 = vadd.f32 0.0, %v438
  %v440 = vpop.f32.mrf.mxu0
  %441 = vmatprep.mubr.bf16.mxu0 %v212
  %442 = vmatmul.mubr.bf16.gmra.mxu0 %v211
  %v443 = vpop.f32.mrf.mxu0
  %v444 = vadd.f32 0.0, %v443
  %v445 = vpop.f32.mrf.mxu0
  %v446 = vpop.f32.mrf.mxu0
  %v447 = vadd.f32 0.0, %v446
  %v448 = vpop.f32.mrf.mxu0
  %449 = vmatprep.mubr.bf16.mxu0 %v215
  %450 = vmatmul.mubr.bf16.gmra.mxu0 %v214
  %v451 = vpop.f32.mrf.mxu0
  %v452 = vadd.f32 0.0, %v451
  %v453 = vpop.f32.mrf.mxu0
  %v454 = vpop.f32.mrf.mxu0
  %v455 = vadd.f32 0.0, %v454
  %v456 = vpop.f32.mrf.mxu0
  %457 = vmatprep.mubr.bf16.mxu0 %v218
  %458 = vmatmul.mubr.bf16.gmra.mxu0 %v217
  %v459 = vpop.f32.mrf.mxu0
  %v460 = vadd.f32 0.0, %v459
  %v461 = vpop.f32.mrf.mxu0
  %v462 = vpop.f32.mrf.mxu0
  %v463 = vadd.f32 0.0, %v462
  %v464 = vpop.f32.mrf.mxu0
  %465 = vdwg.mxu0
  %466 = vmatprep.subr.bf16.mxu0 0
  %467 = vmatpush1.bf16.msra.mxu0 0
  %468 = vmatprep.subr.bf16.mxu0 0
  %469 = vmatpush1.bf16.msra.mxu0 0
  %470 = vmatprep.subr.bf16.mxu0 0
  %471 = vmatpush1.bf16.msra.mxu0 0
  %472 = vmatprep.subr.bf16.mxu0 0
  %473 = vmatpush1.bf16.msra.mxu0 0
  %474 = vmatprep.subr.bf16.mxu0 0
  %475 = vmatpush1.bf16.msra.mxu0 0
  %476 = vmatprep.subr.bf16.mxu0 0
  %477 = vmatpush1.bf16.msra.mxu0 0
  %478 = vmatprep.subr.bf16.mxu0 0
  %479 = vmatpush1.bf16.msra.mxu0 %v325
  %480 = vmatprep.subr.bf16.mxu0 0
  %481 = vmatpush1.bf16.msra.mxu0 %v324
  %482 = vmatprep.subr.bf16.mxu0 0
  %483 = vmatpush2.bf16.msra.mxu0 0
  %484 = vmatprep.subr.bf16.mxu0 0
  %485 = vmatpush2.bf16.msra.mxu0 0
  %486 = vmatprep.subr.bf16.mxu0 0
  %487 = vmatpush2.bf16.msra.mxu0 0
  %488 = vmatprep.subr.bf16.mxu0 0
  %489 = vmatpush2.bf16.msra.mxu0 0
  %490 = vmatprep.subr.bf16.mxu0 0
  %491 = vmatpush2.bf16.msra.mxu0 0
  %492 = vmatprep.subr.bf16.mxu0 0
  %493 = vmatpush2.bf16.msra.mxu0 0
  %494 = vmatprep.subr.bf16.mxu0 0
  %495 = vmatpush2.bf16.msra.mxu0 0
  %496 = vmatprep.subr.bf16.mxu0 0
  %497 = vmatpush2.bf16.msra.mxu0 0
  %498 = vmatprep.mubr.bf16.mxu0 0
  %499 = vmatmul.mubr.bf16.gmra.mxu0 %v346
  %v500 = vpop.f32.mrf.mxu0
  %v501 = vadd.f32 %v404, %v500
  %v502 = vpop.f32.mrf.mxu0
  %v503 = vpop.f32.mrf.mxu0
  %v504 = vadd.f32 %v407, %v503
  %v505 = vpop.f32.mrf.mxu0
  %506 = vmatprep.mubr.bf16.mxu0 0
  %507 = vmatmul.mubr.bf16.gmra.mxu0 %v349
  %v508 = vpop.f32.mrf.mxu0
  %v509 = vadd.f32 %v412, %v508
  %v510 = vpop.f32.mrf.mxu0
  %v511 = vpop.f32.mrf.mxu0
  %v512 = vadd.f32 %v415, %v511
  %v513 = vpop.f32.mrf.mxu0
  %514 = vmatprep.mubr.bf16.mxu0 0
  %515 = vmatmul.mubr.bf16.gmra.mxu0 %v352
  %v516 = vpop.f32.mrf.mxu0
  %v517 = vadd.f32 %v420, %v516
  %v518 = vpop.f32.mrf.mxu0
  %v519 = vpop.f32.mrf.mxu0
  %v520 = vadd.f32 %v423, %v519
  %v521 = vpop.f32.mrf.mxu0
  %522 = vmatprep.mubr.bf16.mxu0 0
  %523 = vmatmul.mubr.bf16.gmra.mxu0 %v355
  %v524 = vpop.f32.mrf.mxu0
  %v525 = vadd.f32 %v428, %v524
  %v526 = vpop.f32.mrf.mxu0
  %v527 = vpop.f32.mrf.mxu0
  %v528 = vadd.f32 %v431, %v527
  %v529 = vpop.f32.mrf.mxu0
  %530 = vmatprep.mubr.bf16.mxu0 0
  %531 = vmatmul.mubr.bf16.gmra.mxu0 %v358
  %v532 = vpop.f32.mrf.mxu0
  %v533 = vadd.f32 %v436, %v532
  %v534 = vpop.f32.mrf.mxu0
  %v535 = vpop.f32.mrf.mxu0
  %v536 = vadd.f32 %v439, %v535
  %v537 = vpop.f32.mrf.mxu0
  %538 = vmatprep.mubr.bf16.mxu0 0
  %539 = vmatmul.mubr.bf16.gmra.mxu0 %v361
  %v540 = vpop.f32.mrf.mxu0
  %v541 = vadd.f32 %v444, %v540
  %v542 = vpop.f32.mrf.mxu0
  %v543 = vpop.f32.mrf.mxu0
  %v544 = vadd.f32 %v447, %v543
  %v545 = vpop.f32.mrf.mxu0
  %546 = vmatprep.mubr.bf16.mxu0 0
  %547 = vmatmul.mubr.bf16.gmra.mxu0 %v364
  %v548 = vpop.f32.mrf.mxu0
  %v549 = vadd.f32 %v452, %v548
  %v550 = vpop.f32.mrf.mxu0
  %v551 = vpop.f32.mrf.mxu0
  %v552 = vadd.f32 %v455, %v551
  %v553 = vpop.f32.mrf.mxu0
  %554 = vmatprep.mubr.bf16.mxu0 0
  %555 = vmatmul.mubr.bf16.gmra.mxu0 %v367
  %v556 = vpop.f32.mrf.mxu0
  %v557 = vadd.f32 %v460, %v556
  %v558 = vpop.f32.mrf.mxu0
  %v559 = vpop.f32.mrf.mxu0
  %v560 = vadd.f32 %v463, %v559
  %v561 = vpop.f32.mrf.mxu0
  %562 = vdwg.mxu0
  %v563 = vadd.f32 %v32, %v501
  %v564 = vadd.f32 %v33, %v504
  %v565 = vadd.f32 %v34, %v509
  %v566 = vadd.f32 %v35, %v512
  %v567 = vadd.f32 %v36, %v517
  %v568 = vadd.f32 %v37, %v520
  %v569 = vadd.f32 %v38, %v525
  %v570 = vadd.f32 %v39, %v528
  %v571 = vadd.f32 %v40, %v533
  %v572 = vadd.f32 %v41, %v536
  %v573 = vadd.f32 %v42, %v541
  %v574 = vadd.f32 %v43, %v544
  %v575 = vadd.f32 %v44, %v549
  %v576 = vadd.f32 %v45, %v552
  %v577 = vadd.f32 %v46, %v557
  %v578 = vadd.f32 %v47, %v560
  %579 = vst [vmem:[#allocation2] sm:$0xff] %v563
  %580 = vst [vmem:[#allocation2 + $0x8] sm:$0xff] %v564
  %581 = vst [vmem:[#allocation2 + $0x10] sm:$0xff] %v565
  %582 = vst [vmem:[#allocation2 + $0x18] sm:$0xff] %v566
  %583 = vst [vmem:[#allocation2 + $0x20] sm:$0xff] %v567
  %584 = vst [vmem:[#allocation2 + $0x28] sm:$0xff] %v568
  %585 = vst [vmem:[#allocation2 + $0x30] sm:$0xff] %v569
  %586 = vst [vmem:[#allocation2 + $0x38] sm:$0xff] %v570
  %587 = vst [vmem:[#allocation2 + $0x40] sm:$0xff] %v571
  %588 = vst [vmem:[#allocation2 + $0x48] sm:$0xff] %v572
  %589 = vst [vmem:[#allocation2 + $0x50] sm:$0xff] %v573
  %590 = vst [vmem:[#allocation2 + $0x58] sm:$0xff] %v574
  %591 = vst [vmem:[#allocation2 + $0x60] sm:$0xff] %v575
  %592 = vst [vmem:[#allocation2 + $0x68] sm:$0xff] %v576
  %593 = vst [vmem:[#allocation2 + $0x70] sm:$0xff] %v577
  %594 = vst [vmem:[#allocation2 + $0x78] sm:$0xff] %v578
  // Predicated region
  $region14: #{icnet_forward.12} parent=0 // pred_check
    %p595 = pneg %p12
  $region15: #{icnet_forward.12} parent=0 // pred_check_branch
    %597 = sbr.rel (%p595) target = $region17
  $region16: #{icnet_forward.12} parent=0 // pred_region
    %v598 = vld [vmem:[#allocation2] sm:$0xff]
    %v599 = vld [vmem:[#allocation2 + $0x8] sm:$0xff]
    %v600 = vld [vmem:[#allocation2 + $0x10] sm:$0xff]
    %v601 = vld [vmem:[#allocation2 + $0x18] sm:$0xff]
    %v602 = vld [vmem:[#allocation2 + $0x20] sm:$0xff]
    %v603 = vld [vmem:[#allocation2 + $0x28] sm:$0xff]
    %v604 = vld [vmem:[#allocation2 + $0x30] sm:$0xff]
    %v605 = vld [vmem:[#allocation2 + $0x38] sm:$0xff]
    %v606 = vld [vmem:[#allocation2 + $0x40] sm:$0xff]
    %v607 = vld [vmem:[#allocation2 + $0x48] sm:$0xff]
    %v608 = vld [vmem:[#allocation2 + $0x50] sm:$0xff]
    %v609 = vld [vmem:[#allocation2 + $0x58] sm:$0xff]
    %v610 = vld [vmem:[#allocation2 + $0x60] sm:$0xff]
    %v611 = vld [vmem:[#allocation2 + $0x68] sm:$0xff]
    %v612 = vld [vmem:[#allocation2 + $0x70] sm:$0xff]
    %v613 = vld [vmem:[#allocation2 + $0x78] sm:$0xff]
    %v614 = vmax.f32 %v598, 0.0
    %v615 = vmax.f32 %v599, 0.0
    %v616 = vmax.f32 %v600, 0.0
    %v617 = vmax.f32 %v601, 0.0
    %v618 = vmax.f32 %v602, 0.0
    %v619 = vmax.f32 %v603, 0.0
    %v620 = vmax.f32 %v604, 0.0
    %v621 = vmax.f32 %v605, 0.0
    %v622 = vmax.f32 %v606, 0.0
    %v623 = vmax.f32 %v607, 0.0
    %v624 = vmax.f32 %v608, 0.0
    %v625 = vmax.f32 %v609, 0.0
    %v626 = vmax.f32 %v610, 0.0
    %v627 = vmax.f32 %v611, 0.0
    %v628 = vmax.f32 %v612, 0.0
    %v629 = vmax.f32 %v613, 0.0
    %v630 = vpack.c.bf16 %v615, %v614
    %v631 = vpack.c.bf16 %v617, %v616
    %v632 = vpack.c.bf16 %v619, %v618
    %v633 = vpack.c.bf16 %v621, %v620
    %v634 = vpack.c.bf16 %v623, %v622
    %v635 = vpack.c.bf16 %v625, %v624
    %v636 = vpack.c.bf16 %v627, %v626
    %v637 = vpack.c.bf16 %v629, %v628
    %v646 = vunpack.c.l.b16 %v630
    %v647 = vunpack.c.h.b16 %v630
    %v648 = vunpack.c.l.b16 %v631
    %v649 = vunpack.c.h.b16 %v631
    %v650 = vunpack.c.l.b16 %v632
    %v651 = vunpack.c.h.b16 %v632
    %v652 = vunpack.c.l.b16 %v633
    %v653 = vunpack.c.h.b16 %v633
    %v654 = vunpack.c.l.b16 %v634
    %v655 = vunpack.c.h.b16 %v634
    %v656 = vunpack.c.l.b16 %v635
    %v657 = vunpack.c.h.b16 %v635
    %v658 = vunpack.c.l.b16 %v636
    %v659 = vunpack.c.h.b16 %v636
    %v660 = vunpack.c.l.b16 %v637
    %v661 = vunpack.c.h.b16 %v637
    %v662 = vpack.c.b16 %v646, %v646
    %v663 = vpack.c.b16 %v647, %v647
    %v664 = vpack.c.b16 %v648, %v648
    %v665 = vpack.c.b16 %v649, %v649
    %v666 = vpack.c.b16 %v650, %v650
    %v667 = vpack.c.b16 %v651, %v651
    %v668 = vpack.c.b16 %v652, %v652
    %v669 = vpack.c.b16 %v653, %v653
    %v670 = vpack.c.b16 %v654, %v654
    %v671 = vpack.c.b16 %v655, %v655
    %v672 = vpack.c.b16 %v656, %v656
    %v673 = vpack.c.b16 %v657, %v657
    %v674 = vpack.c.b16 %v658, %v658
    %v675 = vpack.c.b16 %v659, %v659
    %v676 = vpack.c.b16 %v660, %v660
    %v677 = vpack.c.b16 %v661, %v661
    %694 = vst [vmem:[%s2] sm:$0xf] %v662
    %695 = vst [vmem:[%s2 + $0x4] sm:$0xf] %v663
    %696 = vst [vmem:[%s2 + $0x8] sm:$0xf] %v664
    %697 = vst [vmem:[%s2 + $0xc] sm:$0xf] %v665
    %698 = vst [vmem:[%s2 + $0x10] sm:$0xf] %v666
    %699 = vst [vmem:[%s2 + $0x14] sm:$0xf] %v667
    %700 = vst [vmem:[%s2 + $0x18] sm:$0xf] %v668
    %701 = vst [vmem:[%s2 + $0x1c] sm:$0xf] %v669
    %702 = vst [vmem:[%s2 + $0x20] sm:$0xf] %v670
    %703 = vst [vmem:[%s2 + $0x24] sm:$0xf] %v671
    %704 = vst [vmem:[%s2 + $0x28] sm:$0xf] %v672
    %705 = vst [vmem:[%s2 + $0x2c] sm:$0xf] %v673
    %706 = vst [vmem:[%s2 + $0x30] sm:$0xf] %v674
    %707 = vst [vmem:[%s2 + $0x34] sm:$0xf] %v675
    %708 = vst [vmem:[%s2 + $0x38] sm:$0xf] %v676
    %709 = vst [vmem:[%s2 + $0x3c] sm:$0xf] %v677
  $region17: #{icnet_forward.12} parent=0 // pred_fallthru
    _
  // Predicated region
  $region18: #{icnet_forward.12} parent=0 // pred_check
    _
  $region19: #{icnet_forward.12} parent=0 // pred_check_branch
    %711 = sbr.rel (0) target = $region21
  $region20: #{icnet_forward.12} parent=0 // pred_region
    _
  $region21: #{icnet_forward.12} parent=0 // pred_fallthru
    _
  // Predicated region
  $region22: #{icnet_forward.12} parent=0 // pred_check
    _
  $region23: #{icnet_forward.12} parent=0 // pred_check_branch
    %713 = sbr.rel (0) target = $region25
  $region24: #{icnet_forward.12} parent=0 // pred_region
    _
  $region25: #{icnet_forward.12} parent=0 // pred_fallthru
    _

// kernel: icnet_forward.13
$region0: #{icnet_forward.13}
  #allocation0 [shape = 'u32[]', space=smem, size = 0x4, offset = 0x4, fixed_abs, tag = 'smem constant byte address 0x4 - core index']
  #allocation1 [shape = 'u32[144,128]{1,0:T(1,128)}', space=vmem, size = 0x12000, scoped, tag = 'internal scratch']
  #allocation2 [shape = 'f32[128,128]{1,0:T(8,128)}', space=vmem, size = 0x10000, scoped, tag = 'scratch operand']
  %s0 = inlined_call_operand.vmem [shape: bf16[128,1152], index: 0, kind: input, shape index: {}]
  %s1 = inlined_call_operand.vmem [shape: bf16[1152,128], index: 1, kind: input, shape index: {}]
  %s2 = inlined_call_operand.vmem [shape: bf16[128,128], index: 2, kind: output, shape index: {}]
  %s3 = sld [smem:[#allocation0]]
  $region90: #{icnet_forward.13} parent=0
    _
  %s5 = ssub.s32 1, %s3
  %s6 = scalar_select 0, %s5, %s3
  $region1: #{icnet_forward.13} parent=0
    #allocation3 [shape = 'u8[65536]{0}', space=vmem, size = 0x10000, scoped, tag = 'input window, operand 0']
    loop: start=0, step=1, limit=11
    $region2: #{icnet_forward.13} parent=1 // loop_pre_header
      _
    $region3: #{icnet_forward.13} parent=1 // loop_header
      %s8 = sphi 0, %s12
      %p9 = scmp.ge.s32.totalorder %s8, 11
      %s15 = sphi 0, %s34
      %s16 = sphi 0, %s30
      %s17 = sphi 0, %s26
      %s18 = sphi 0, %s15
      %s19 = sphi 0, %s16
      %s20 = sphi 0, %s17
      %s21 = sphi 0, %s18
      %s22 = sphi 0, %s19
      %s23 = sphi 0, %s20
      %s39 = sphi 0, %s41
      %s42 = sphi 0, %s39
      %s43 = sphi 0, %s42
      %s59 = sphi 0, %s43
      %s67 = sphi 0, %s69
      %s70 = sphi 0, %s67
      %s71 = sphi 0, %s70
      %s87 = sphi 0, %s71
      %s95 = sphi 0, %s97
      %s98 = sphi 0, %s95
      %s99 = sphi 0, %s98
      %s115 = sphi 0, %s99
    $region4: #{icnet_forward.13} parent=1 // loop_header_branch
      %11 = sbr.rel (%p9) target = $region8
    $region5: #{icnet_forward.13} parent=1 // loop_body
      %s13 = ssub.s32 %s8, 1
      %s14 = ssub.s32 %s8, 2
      %s24 = sadd.s32 1, %s17
      %p25 = scmp.ge.s32.totalorder %s24, 9
      %s26 = scalar_select %p25, 0, %s24
      %s27 = sadd.s32 1, %s16
      %s28 = scalar_select %p25, %s27, %s16
      %p29 = scmp.ge.s32.totalorder %s28, 1
      %s30 = scalar_select %p29, 0, %s28
      %s31 = sadd.s32 1, %s15
      %s32 = scalar_select %p29, %s31, %s15
      %p33 = scmp.ge.s32.totalorder %s32, 1
      %s34 = scalar_select %p33, 0, %s32
      %s35 = ssub.s32 %s15, %s34
      %s36 = ssub.s32 %s17, %s26
      %s37 = sor.u32 %s35, %s36
      %p38 = scmp.eq.s32.totalorder %s37, 0
      %s40 = sadd.s32 %s39, 1
      %s41 = scalar_select %p38, %s39, %s40
      %p44 = pneg %p38
      %p45 = scmp.eq.s32.totalorder %s8, 8
      %p46 = por %p44, %p45
      %p47 = scmp.ne.s32.totalorder %s39, %s42
      %p48 = scmp.eq.s32.totalorder %s8, 0
      %p49 = por %p47, %p48
      %p50 = scmp.ne.s32.totalorder %s39, %s42
      %p51 = scmp.eq.s32.totalorder %s13, 8
      %p52 = por %p50, %p51
      %p53 = scmp.ne.s32.totalorder %s42, %s43
      %p54 = scmp.eq.s32.totalorder %s13, 0
      %p55 = por %p53, %p54
      %p56 = scmp.ne.s32.totalorder %s42, %s43
      %p57 = scmp.eq.s32.totalorder %s14, 8
      %p58 = por %p56, %p57
      %p60 = scmp.ne.s32.totalorder %s43, %s59
      %p61 = scmp.eq.s32.totalorder %s14, 0
      %p62 = por %p60, %p61
      %s63 = ssub.s32 %s17, %s26
      %s64 = ssub.s32 %s16, %s30
      %s65 = sor.u32 %s63, %s64
      %p66 = scmp.eq.s32.totalorder %s65, 0
      %s68 = sadd.s32 %s67, 1
      %s69 = scalar_select %p66, %s67, %s68
      %p72 = pneg %p66
      %p73 = scmp.eq.s32.totalorder %s8, 8
      %p74 = por %p72, %p73
      %p75 = scmp.ne.s32.totalorder %s67, %s70
      %p76 = scmp.eq.s32.totalorder %s8, 0
      %p77 = por %p75, %p76
      %p78 = scmp.ne.s32.totalorder %s67, %s70
      %p79 = scmp.eq.s32.totalorder %s13, 8
      %p80 = por %p78, %p79
      %p81 = scmp.ne.s32.totalorder %s70, %s71
      %p82 = scmp.eq.s32.totalorder %s13, 0
      %p83 = por %p81, %p82
      %p84 = scmp.ne.s32.totalorder %s70, %s71
      %p85 = scmp.eq.s32.totalorder %s14, 8
      %p86 = por %p84, %p85
      %p88 = scmp.ne.s32.totalorder %s71, %s87
      %p89 = scmp.eq.s32.totalorder %s14, 0
      %p90 = por %p88, %p89
      %s91 = ssub.s32 %s15, %s34
      %s92 = ssub.s32 %s16, %s30
      %s93 = sor.u32 %s91, %s92
      %p94 = scmp.eq.s32.totalorder %s93, 0
      %s96 = sadd.s32 %s95, 1
      %s97 = scalar_select %p94, %s95, %s96
      %p100 = pneg %p94
      %p101 = scmp.eq.s32.totalorder %s8, 8
      %p102 = por %p100, %p101
      %p103 = scmp.ne.s32.totalorder %s95, %s98
      %p104 = scmp.eq.s32.totalorder %s8, 0
      %p105 = por %p103, %p104
      %p106 = scmp.ne.s32.totalorder %s95, %s98
      %p107 = scmp.eq.s32.totalorder %s13, 8
      %p108 = por %p106, %p107
      %p109 = scmp.ne.s32.totalorder %s98, %s99
      %p110 = scmp.eq.s32.totalorder %s13, 0
      %p111 = por %p109, %p110
      %p112 = scmp.ne.s32.totalorder %s98, %s99
      %p113 = scmp.eq.s32.totalorder %s14, 8
      %p114 = por %p112, %p113
      %p116 = scmp.ne.s32.totalorder %s99, %s115
      %p117 = scmp.eq.s32.totalorder %s14, 0
      %p118 = por %p116, %p117
      %p119 = scmp.le.s32.totalorder 1, %s8
      %p120 = scmp.lt.s32.totalorder %s8, 10
      %p121 = pnand %p119, %p120
      %p122 = pneg %p121
      // Predicated region
      $region9: #{icnet_forward.13} parent=5 // pred_check
        _
      $region10: #{icnet_forward.13} parent=5 // pred_check_branch
        %124 = sbr.rel (%p121) target = $region12
      $region11: #{icnet_forward.13} parent=5 // pred_region
        %s125 = ssub.s32 %s8, 1
      $region12: #{icnet_forward.13} parent=5 // pred_fallthru
        _
      %p126 = scmp.lt.s32.totalorder %s8, 9
      // Predicated region
      $region13: #{icnet_forward.13} parent=5 // pred_check
        %p127 = pneg %p126
      $region14: #{icnet_forward.13} parent=5 // pred_check_branch
        %129 = sbr.rel (%p127) target = $region16
      $region15: #{icnet_forward.13} parent=5 // pred_region
        // Predicated region
        $region17: #{icnet_forward.13} parent=15 // pred_check
          %p130 = pneg %p49
        $region18: #{icnet_forward.13} parent=15 // pred_check_branch
          %132 = sbr.rel (%p130) target = $region20
        $region19: #{icnet_forward.13} parent=15 // pred_region
          %s133 = sand.u32 %s39, 1
          %s134 = sand.u32 %s39, 1
          %s135 = smul.addr %s134, 64
          %s136 = scalar_lea.vmem [#allocation3], %s135
          %s137 = smul.u32 16, %s15
          %s138 = smul.addr %s137, 9
          %s139 = sadd.s32 %s17, %s138
          %s140 = smul.addr %s139, 4
          %s141 = scalar_lea.vmem %s0, %s140
          // Predicated region
          $region21: #{icnet_forward.13} parent=19 // pred_check
            _
          $region22: #{icnet_forward.13} parent=19 // pred_check_branch
            %143 = sbr.rel (0) target = $region24
          $region23: #{icnet_forward.13} parent=19 // pred_region
            // Predicated region
            $region25: #{icnet_forward.13} parent=23 // pred_check
              _
            $region26: #{icnet_forward.13} parent=23 // pred_check_branch
              %145 = sbr.rel target = $region28
            $region27: #{icnet_forward.13} parent=23 // pred_region
              // Predicated region
              $region40: #{icnet_forward.13} parent=27 // pred_check
                _
              $region41: #{icnet_forward.13} parent=27 // pred_check_branch
                %191 = sbr.rel (0) target = $region43
              $region42: #{icnet_forward.13} parent=27 // pred_region
                loop: start=0, step=1, limit=1
                $region44: #{icnet_forward.13} parent=42 // loop_pre_header
                  _
                $region45: #{icnet_forward.13} parent=42 // loop_header
                  %s193 = sphi 0, %s197
                  %p194 = scmp.ge.s32.totalorder %s193, 1
                  %s198 = sphi %s141, %s141
                  %s199 = sphi %s136, %s136
                $region46: #{icnet_forward.13} parent=42 // loop_header_branch
                  %196 = sbr.rel (%p194) target = $region50
                $region47: #{icnet_forward.13} parent=42 // loop_body
                  _
                $region48: #{icnet_forward.13} parent=42 // loop_footer
                  %s197 = sadd.s32 1, %s193
                $region49: #{icnet_forward.13} parent=42 // loop_footer_branch
                  %192 = sbr.rel target = $region45
                $region50: #{icnet_forward.13} parent=42 // loop_exit
                  _
                %s201 = ssub.s32 16, 1
                loop: start=0, step=1, limit=1
                $region51: #{icnet_forward.13} parent=42 // loop_pre_header
                  _
                $region52: #{icnet_forward.13} parent=42 // loop_header
                  %s203 = sphi 0, %s207
                  %p204 = scmp.ge.s32.totalorder %s203, 1
                  %s208 = sphi %s141, %s141
                  %s209 = sphi %s136, %s136
                $region53: #{icnet_forward.13} parent=42 // loop_header_branch
                  %206 = sbr.rel (%p204) target = $region57
                $region54: #{icnet_forward.13} parent=42 // loop_body
                  %v210 = vld [vmem:[%s208] sm:%s201]
                  %211 = vst [vmem:[%s209] sm:%s201] %v210
                  %v212 = vld [vmem:[%s208 + $0x24] sm:%s201]
                  %213 = vst [vmem:[%s209 + $0x4] sm:%s201] %v212
                  %v214 = vld [vmem:[%s208 + $0x48] sm:%s201]
                  %215 = vst [vmem:[%s209 + $0x8] sm:%s201] %v214
                  %v216 = vld [vmem:[%s208 + $0x6c] sm:%s201]
                  %217 = vst [vmem:[%s209 + $0xc] sm:%s201] %v216
                  %v218 = vld [vmem:[%s208 + $0x90] sm:%s201]
                  %219 = vst [vmem:[%s209 + $0x10] sm:%s201] %v218
                  %v220 = vld [vmem:[%s208 + $0xb4] sm:%s201]
                  %221 = vst [vmem:[%s209 + $0x14] sm:%s201] %v220
                  %v222 = vld [vmem:[%s208 + $0xd8] sm:%s201]
                  %223 = vst [vmem:[%s209 + $0x18] sm:%s201] %v222
                  %v224 = vld [vmem:[%s208 + $0xfc] sm:%s201]
                  %225 = vst [vmem:[%s209 + $0x1c] sm:%s201] %v224
                  %v226 = vld [vmem:[%s208 + $0x120] sm:%s201]
                  %227 = vst [vmem:[%s209 + $0x20] sm:%s201] %v226
                  %v228 = vld [vmem:[%s208 + $0x144] sm:%s201]
                  %229 = vst [vmem:[%s209 + $0x24] sm:%s201] %v228
                  %v230 = vld [vmem:[%s208 + $0x168] sm:%s201]
                  %231 = vst [vmem:[%s209 + $0x28] sm:%s201] %v230
                  %v232 = vld [vmem:[%s208 + $0x18c] sm:%s201]
                  %233 = vst [vmem:[%s209 + $0x2c] sm:%s201] %v232
                  %v234 = vld [vmem:[%s208 + $0x1b0] sm:%s201]
                  %235 = vst [vmem:[%s209 + $0x30] sm:%s201] %v234
                  %v236 = vld [vmem:[%s208 + $0x1d4] sm:%s201]
                  %237 = vst [vmem:[%s209 + $0x34] sm:%s201] %v236
                  %v238 = vld [vmem:[%s208 + $0x1f8] sm:%s201]
                  %239 = vst [vmem:[%s209 + $0x38] sm:%s201] %v238
                  %v240 = vld [vmem:[%s208 + $0x21c] sm:%s201]
                  %241 = vst [vmem:[%s209 + $0x3c] sm:%s201] %v240
                $region55: #{icnet_forward.13} parent=42 // loop_footer
                  %s207 = sadd.s32 1, %s203
                $region56: #{icnet_forward.13} parent=42 // loop_footer_branch
                  %202 = sbr.rel target = $region52
                $region57: #{icnet_forward.13} parent=42 // loop_exit
                  _
              $region43: #{icnet_forward.13} parent=27 // pred_fallthru
                _
            $region28: #{icnet_forward.13} parent=23 // pred_fallthru
              _
            // Predicated region
            $region29: #{icnet_forward.13} parent=23 // pred_check
              _
            $region30: #{icnet_forward.13} parent=23 // pred_check_branch
              %147 = sbr.rel (0) target = $region32
            $region31: #{icnet_forward.13} parent=23 // pred_region
              %s149 = ssub.s32 16, 1
              loop: start=0, step=1, limit=1
              $region33: #{icnet_forward.13} parent=31 // loop_pre_header
                _
              $region34: #{icnet_forward.13} parent=31 // loop_header
                %s151 = sphi 0, %s155
                %p152 = scmp.ge.s32.totalorder %s151, 1
                %s156 = sphi %s141, %s141
                %s157 = sphi %s136, %s136
              $region35: #{icnet_forward.13} parent=31 // loop_header_branch
                %154 = sbr.rel (%p152) target = $region39
              $region36: #{icnet_forward.13} parent=31 // loop_body
                %v158 = vld [vmem:[%s156] sm:%s149]
                %159 = vst [vmem:[%s157] sm:%s149] %v158
                %v160 = vld [vmem:[%s156 + $0x24] sm:%s149]
                %161 = vst [vmem:[%s157 + $0x4] sm:%s149] %v160
                %v162 = vld [vmem:[%s156 + $0x48] sm:%s149]
                %163 = vst [vmem:[%s157 + $0x8] sm:%s149] %v162
                %v164 = vld [vmem:[%s156 + $0x6c] sm:%s149]
                %165 = vst [vmem:[%s157 + $0xc] sm:%s149] %v164
                %v166 = vld [vmem:[%s156 + $0x90] sm:%s149]
                %167 = vst [vmem:[%s157 + $0x10] sm:%s149] %v166
                %v168 = vld [vmem:[%s156 + $0xb4] sm:%s149]
                %169 = vst [vmem:[%s157 + $0x14] sm:%s149] %v168
                %v170 = vld [vmem:[%s156 + $0xd8] sm:%s149]
                %171 = vst [vmem:[%s157 + $0x18] sm:%s149] %v170
                %v172 = vld [vmem:[%s156 + $0xfc] sm:%s149]
                %173 = vst [vmem:[%s157 + $0x1c] sm:%s149] %v172
                %v174 = vld [vmem:[%s156 + $0x120] sm:%s149]
                %175 = vst [vmem:[%s157 + $0x20] sm:%s149] %v174
                %v176 = vld [vmem:[%s156 + $0x144] sm:%s149]
                %177 = vst [vmem:[%s157 + $0x24] sm:%s149] %v176
                %v178 = vld [vmem:[%s156 + $0x168] sm:%s149]
                %179 = vst [vmem:[%s157 + $0x28] sm:%s149] %v178
                %v180 = vld [vmem:[%s156 + $0x18c] sm:%s149]
                %181 = vst [vmem:[%s157 + $0x2c] sm:%s149] %v180
                %v182 = vld [vmem:[%s156 + $0x1b0] sm:%s149]
                %183 = vst [vmem:[%s157 + $0x30] sm:%s149] %v182
                %v184 = vld [vmem:[%s156 + $0x1d4] sm:%s149]
                %185 = vst [vmem:[%s157 + $0x34] sm:%s149] %v184
                %v186 = vld [vmem:[%s156 + $0x1f8] sm:%s149]
                %187 = vst [vmem:[%s157 + $0x38] sm:%s149] %v186
                %v188 = vld [vmem:[%s156 + $0x21c] sm:%s149]
                %189 = vst [vmem:[%s157 + $0x3c] sm:%s149] %v188
              $region37: #{icnet_forward.13} parent=31 // loop_footer
                %s155 = sadd.s32 1, %s151
              $region38: #{icnet_forward.13} parent=31 // loop_footer_branch
                %150 = sbr.rel target = $region34
              $region39: #{icnet_forward.13} parent=31 // loop_exit
                _
            $region32: #{icnet_forward.13} parent=23 // pred_fallthru
              _
          $region24: #{icnet_forward.13} parent=19 // pred_fallthru
            _
          %242 = vnop
        $region20: #{icnet_forward.13} parent=15 // pred_fallthru
          _
        // Predicated region
        $region58: #{icnet_forward.13} parent=15 // pred_check
          %p243 = pneg %p77
        $region59: #{icnet_forward.13} parent=15 // pred_check_branch
          %245 = sbr.rel (%p243) target = $region61
        $region60: #{icnet_forward.13} parent=15 // pred_region
          %s246 = smul.u32 16, %s17
          %p247 = scmp.lt.s32.totalorder %s246, 143
          %s248 = scalar_select %p247, %s246, 143
          %p249 = scmp.lt.s32.totalorder %s16, 0
          %s250 = scalar_select %p249, %s16, 0
          %s251 = sadd.s32 %s250, %s248
          %s252 = smul.addr %s251, 4
          %s253 = scalar_lea.vmem %s1, %s252
          %s254 = smul.u32 16, %s17
        $region61: #{icnet_forward.13} parent=15 // pred_fallthru
          _
      $region16: #{icnet_forward.13} parent=5 // pred_fallthru
        _
      %p255 = scmp.le.s32.totalorder 1, %s8
      %p256 = scmp.lt.s32.totalorder %s8, 10
      %p257 = pnand %p255, %p256
      %p258 = pneg %p257
      // Predicated region
      $region62: #{icnet_forward.13} parent=5 // pred_check
        _
      $region63: #{icnet_forward.13} parent=5 // pred_check_branch
        %260 = sbr.rel (%p257) target = $region65
      $region64: #{icnet_forward.13} parent=5 // pred_region
        %s261 = ssub.s32 %s8, 1
        %s262 = sand.u32 %s42, 1
        %s263 = sand.u32 %s42, 1
        %s264 = smul.addr %s263, 64
        %s265 = scalar_lea.vmem [#allocation3], %s264
        // Predicated region
        $region66: #{icnet_forward.13} parent=64 // pred_check
          %p266 = pneg %p55
        $region67: #{icnet_forward.13} parent=64 // pred_check_branch
          %268 = sbr.rel (%p266) target = $region69
        $region68: #{icnet_forward.13} parent=64 // pred_region
          _
        $region69: #{icnet_forward.13} parent=64 // pred_fallthru
          _
        %s269 = sand.u32 %s42, 1
        %s270 = sand.u32 %s42, 1
        %s271 = smul.addr %s270, 64
        %s272 = scalar_lea.vmem [#allocation3], %s271
        %p273 = pneg %p55
        %p274 = pneg %p52
        %s275 = smul.u32 16, %s20
        %p276 = scmp.lt.s32.totalorder %s275, 143
        %s277 = scalar_select %p276, %s275, 143
        %p278 = scmp.lt.s32.totalorder %s19, 0
        %s279 = scalar_select %p278, %s19, 0
        %s280 = sadd.s32 %s279, %s277
        %s281 = smul.addr %s280, 4
        %s282 = scalar_lea.vmem %s1, %s281
        %p283 = pneg %p83
        %p284 = pneg %p80
        %p285 = pneg %p111
        %p286 = pneg %p108
        %s287 = smul.u32 16, %s18
        %p288 = scmp.lt.s32.totalorder %s287, 15
        %s289 = scalar_select %p288, %s287, 15
        %p290 = scmp.lt.s32.totalorder %s19, 0
        %s291 = scalar_select %p290, %s19, 0
        %s292 = sadd.s32 %s291, %s289
        %s293 = smul.addr %s292, 4
        %s294 = scalar_lea.vmem %s2, %s293
        %s295 = smul.u32 16, %s18
        %s296 = smul.u32 16, %s20
        %p297 = scmp.lt.s32.totalorder %s296, 143
        %s298 = scalar_select %p297, %s296, 143
        %p299 = scmp.lt.s32.totalorder %s19, 0
        %s300 = scalar_select %p299, %s19, 0
        %s301 = sadd.s32 %s300, %s298
        %s302 = smul.addr %s301, 4
        %s303 = scalar_lea.vmem %s1, %s302
        %s304 = smul.u32 16, %s20
        %s305 = smul.u32 16, %s18
        %p306 = scmp.lt.s32.totalorder %s305, 15
        %s307 = scalar_select %p306, %s305, 15
        %p308 = scmp.lt.s32.totalorder %s19, 0
        %s309 = scalar_select %p308, %s19, 0
        %s310 = sadd.s32 %s309, %s307
        %s311 = smul.addr %s310, 4
        %s312 = scalar_lea.vmem %s2, %s311
        %s313 = smul.u32 16, %s18
        %p315 = scmp.eq.s32.totalorder %s20, 0
        // Predicated region
        $region70: #{icnet_forward.13} parent=64 // pred_check
          %p316 = pneg %p315
        $region71: #{icnet_forward.13} parent=64 // pred_check_branch
          %318 = sbr.rel (%p316) target = $region73
        $region72: #{icnet_forward.13} parent=64 // pred_region
          %319 = vst [vmem:[#allocation2] sm:$0xff] 0.0
          %320 = vst [vmem:[#allocation2 + $0x8] sm:$0xff] 0.0
          %321 = vst [vmem:[#allocation2 + $0x10] sm:$0xff] 0.0
          %322 = vst [vmem:[#allocation2 + $0x18] sm:$0xff] 0.0
          %323 = vst [vmem:[#allocation2 + $0x20] sm:$0xff] 0.0
          %324 = vst [vmem:[#allocation2 + $0x28] sm:$0xff] 0.0
          %325 = vst [vmem:[#allocation2 + $0x30] sm:$0xff] 0.0
          %326 = vst [vmem:[#allocation2 + $0x38] sm:$0xff] 0.0
          %327 = vst [vmem:[#allocation2 + $0x40] sm:$0xff] 0.0
          %328 = vst [vmem:[#allocation2 + $0x48] sm:$0xff] 0.0
          %329 = vst [vmem:[#allocation2 + $0x50] sm:$0xff] 0.0
          %330 = vst [vmem:[#allocation2 + $0x58] sm:$0xff] 0.0
          %331 = vst [vmem:[#allocation2 + $0x60] sm:$0xff] 0.0
          %332 = vst [vmem:[#allocation2 + $0x68] sm:$0xff] 0.0
          %333 = vst [vmem:[#allocation2 + $0x70] sm:$0xff] 0.0
          %334 = vst [vmem:[#allocation2 + $0x78] sm:$0xff] 0.0
        $region73: #{icnet_forward.13} parent=64 // pred_fallthru
          _
        %v335 = vld [vmem:[#allocation2] sm:$0xff]
        %v336 = vld [vmem:[#allocation2 + $0x8] sm:$0xff]
        %v337 = vld [vmem:[#allocation2 + $0x10] sm:$0xff]
        %v338 = vld [vmem:[#allocation2 + $0x18] sm:$0xff]
        %v339 = vld [vmem:[#allocation2 + $0x20] sm:$0xff]
        %v340 = vld [vmem:[#allocation2 + $0x28] sm:$0xff]
        %v341 = vld [vmem:[#allocation2 + $0x30] sm:$0xff]
        %v342 = vld [vmem:[#allocation2 + $0x38] sm:$0xff]
        %v343 = vld [vmem:[#allocation2 + $0x40] sm:$0xff]
        %v344 = vld [vmem:[#allocation2 + $0x48] sm:$0xff]
        %v345 = vld [vmem:[#allocation2 + $0x50] sm:$0xff]
        %v346 = vld [vmem:[#allocation2 + $0x58] sm:$0xff]
        %v347 = vld [vmem:[#allocation2 + $0x60] sm:$0xff]
        %v348 = vld [vmem:[#allocation2 + $0x68] sm:$0xff]
        %v349 = vld [vmem:[#allocation2 + $0x70] sm:$0xff]
        %v350 = vld [vmem:[#allocation2 + $0x78] sm:$0xff]
        %v351 = vld [vmem:[%s265] sm:$0xf]
        %v352 = vld [vmem:[%s265 + $0x4] sm:$0xf]
        %v353 = vld [vmem:[%s265 + $0x8] sm:$0xf]
        %v354 = vld [vmem:[%s265 + $0xc] sm:$0xf]
        %v355 = vld [vmem:[%s265 + $0x10] sm:$0xf]
        %v356 = vld [vmem:[%s265 + $0x14] sm:$0xf]
        %v357 = vld [vmem:[%s265 + $0x18] sm:$0xf]
        %v358 = vld [vmem:[%s265 + $0x1c] sm:$0xf]
        %v359 = vld [vmem:[%s265 + $0x20] sm:$0xf]
        %v360 = vld [vmem:[%s265 + $0x24] sm:$0xf]
        %v361 = vld [vmem:[%s265 + $0x28] sm:$0xf]
        %v362 = vld [vmem:[%s265 + $0x2c] sm:$0xf]
        %v363 = vld [vmem:[%s265 + $0x30] sm:$0xf]
        %v364 = vld [vmem:[%s265 + $0x34] sm:$0xf]
        %v365 = vld [vmem:[%s265 + $0x38] sm:$0xf]
        %v366 = vld [vmem:[%s265 + $0x3c] sm:$0xf]
        %v367 = vld [vmem:[%s303] sm:$0xf]
        %v368 = vld [vmem:[%s303 + $0x4] sm:$0xf]
        %v369 = vld [vmem:[%s303 + $0x8] sm:$0xf]
        %v370 = vld [vmem:[%s303 + $0xc] sm:$0xf]
        %v371 = vld [vmem:[%s303 + $0x10] sm:$0xf]
        %v372 = vld [vmem:[%s303 + $0x14] sm:$0xf]
        %v373 = vld [vmem:[%s303 + $0x18] sm:$0xf]
        %v374 = vld [vmem:[%s303 + $0x1c] sm:$0xf]
        %v375 = vld [vmem:[%s303 + $0x20] sm:$0xf]
        %v376 = vld [vmem:[%s303 + $0x24] sm:$0xf]
        %v377 = vld [vmem:[%s303 + $0x28] sm:$0xf]
        %v378 = vld [vmem:[%s303 + $0x2c] sm:$0xf]
        %v379 = vld [vmem:[%s303 + $0x30] sm:$0xf]
        %v380 = vld [vmem:[%s303 + $0x34] sm:$0xf]
        %v381 = vld [vmem:[%s303 + $0x38] sm:$0xf]
        %v382 = vld [vmem:[%s303 + $0x3c] sm:$0xf]
        %v399 = vunpack.c.l.b16 %v351
        %v400 = vunpack.c.l.b16 %v352
        %v401 = vunpack.c.l.b16 %v353
        %v402 = vunpack.c.l.b16 %v354
        %v403 = vunpack.c.l.b16 %v355
        %v404 = vunpack.c.l.b16 %v356
        %v405 = vunpack.c.l.b16 %v357
        %v406 = vunpack.c.l.b16 %v358
        %v407 = vunpack.c.l.b16 %v359
        %v408 = vunpack.c.l.b16 %v360
        %v409 = vunpack.c.l.b16 %v361
        %v410 = vunpack.c.l.b16 %v362
        %v411 = vunpack.c.l.b16 %v363
        %v412 = vunpack.c.l.b16 %v364
        %v413 = vunpack.c.l.b16 %v365
        %v414 = vunpack.c.l.b16 %v366
        %v415 = vpack.c.b16 %v400, %v399
        %v416 = vpack.c.b16 %v402, %v401
        %v417 = vpack.c.b16 %v404, %v403
        %v418 = vpack.c.b16 %v406, %v405
        %v419 = vpack.c.b16 %v408, %v407
        %v420 = vpack.c.b16 %v410, %v409
        %v421 = vpack.c.b16 %v412, %v411
        %v422 = vpack.c.b16 %v414, %v413
        %v447 = vunpack.c.l.b16 %v367
        %v448 = vunpack.c.l.b16 %v368
        %v449 = vunpack.c.l.b16 %v369
        %v450 = vunpack.c.l.b16 %v370
        %v451 = vunpack.c.l.b16 %v371
        %v452 = vunpack.c.l.b16 %v372
        %v453 = vunpack.c.l.b16 %v373
        %v454 = vunpack.c.l.b16 %v374
        %v455 = vunpack.c.l.b16 %v375
        %v456 = vunpack.c.l.b16 %v376
        %v457 = vunpack.c.l.b16 %v377
        %v458 = vunpack.c.l.b16 %v378
        %v459 = vunpack.c.l.b16 %v379
        %v460 = vunpack.c.l.b16 %v380
        %v461 = vunpack.c.l.b16 %v381
        %v462 = vunpack.c.l.b16 %v382
        %v463 = vpack.c.b16 %v448, %v447
        %v464 = vpack.c.b16 %v450, %v449
        %v465 = vpack.c.b16 %v452, %v451
        %v466 = vpack.c.b16 %v454, %v453
        %v467 = vpack.c.b16 %v456, %v455
        %v468 = vpack.c.b16 %v458, %v457
        %v469 = vpack.c.b16 %v460, %v459
        %v470 = vpack.c.b16 %v462, %v461
        %479 = vmatprep.subr.bf16.mxu0 0
        %480 = vmatpush1.bf16.msra.mxu0 %v470
        %481 = vmatprep.subr.bf16.mxu0 0
        %482 = vmatpush1.bf16.msra.mxu0 %v469
        %483 = vmatprep.subr.bf16.mxu0 0
        %484 = vmatpush1.bf16.msra.mxu0 %v468
        %485 = vmatprep.subr.bf16.mxu0 0
        %486 = vmatpush1.bf16.msra.mxu0 %v467
        %487 = vmatprep.subr.bf16.mxu0 0
        %488 = vmatpush1.bf16.msra.mxu0 %v466
        %489 = vmatprep.subr.bf16.mxu0 0
        %490 = vmatpush1.bf16.msra.mxu0 %v465
        %491 = vmatprep.subr.bf16.mxu0 0
        %492 = vmatpush1.bf16.msra.mxu0 %v464
        %493 = vmatprep.subr.bf16.mxu0 0
        %494 = vmatpush1.bf16.msra.mxu0 %v463
        %495 = vmatprep.subr.bf16.mxu0 0
        %496 = vmatpush2.bf16.msra.mxu0 0
        %497 = vmatprep.subr.bf16.mxu0 0
        %498 = vmatpush2.bf16.msra.mxu0 0
        %499 = vmatprep.subr.bf16.mxu0 0
        %500 = vmatpush2.bf16.msra.mxu0 0
        %501 = vmatprep.subr.bf16.mxu0 0
        %502 = vmatpush2.bf16.msra.mxu0 0
        %503 = vmatprep.subr.bf16.mxu0 0
        %504 = vmatpush2.bf16.msra.mxu0 0
        %505 = vmatprep.subr.bf16.mxu0 0
        %506 = vmatpush2.bf16.msra.mxu0 0
        %507 = vmatprep.subr.bf16.mxu0 0
        %508 = vmatpush2.bf16.msra.mxu0 0
        %509 = vmatprep.subr.bf16.mxu0 0
        %510 = vmatpush2.bf16.msra.mxu0 0
        %511 = vmatprep.mubr.bf16.mxu0 0
        %512 = vmatmul.mubr.bf16.gmra.mxu0 %v415
        %v513 = vpop.f32.mrf.mxu0
        %v514 = vadd.f32 0.0, %v513
        %v515 = vpop.f32.mrf.mxu0
        %v516 = vpop.f32.mrf.mxu0
        %v517 = vadd.f32 0.0, %v516
        %v518 = vpop.f32.mrf.mxu0
        %519 = vmatprep.mubr.bf16.mxu0 0
        %520 = vmatmul.mubr.bf16.gmra.mxu0 %v416
        %v521 = vpop.f32.mrf.mxu0
        %v522 = vadd.f32 0.0, %v521
        %v523 = vpop.f32.mrf.mxu0
        %v524 = vpop.f32.mrf.mxu0
        %v525 = vadd.f32 0.0, %v524
        %v526 = vpop.f32.mrf.mxu0
        %527 = vmatprep.mubr.bf16.mxu0 0
        %528 = vmatmul.mubr.bf16.gmra.mxu0 %v417
        %v529 = vpop.f32.mrf.mxu0
        %v530 = vadd.f32 0.0, %v529
        %v531 = vpop.f32.mrf.mxu0
        %v532 = vpop.f32.mrf.mxu0
        %v533 = vadd.f32 0.0, %v532
        %v534 = vpop.f32.mrf.mxu0
        %535 = vmatprep.mubr.bf16.mxu0 0
        %536 = vmatmul.mubr.bf16.gmra.mxu0 %v418
        %v537 = vpop.f32.mrf.mxu0
        %v538 = vadd.f32 0.0, %v537
        %v539 = vpop.f32.mrf.mxu0
        %v540 = vpop.f32.mrf.mxu0
        %v541 = vadd.f32 0.0, %v540
        %v542 = vpop.f32.mrf.mxu0
        %543 = vmatprep.mubr.bf16.mxu0 0
        %544 = vmatmul.mubr.bf16.gmra.mxu0 %v419
        %v545 = vpop.f32.mrf.mxu0
        %v546 = vadd.f32 0.0, %v545
        %v547 = vpop.f32.mrf.mxu0
        %v548 = vpop.f32.mrf.mxu0
        %v549 = vadd.f32 0.0, %v548
        %v550 = vpop.f32.mrf.mxu0
        %551 = vmatprep.mubr.bf16.mxu0 0
        %552 = vmatmul.mubr.bf16.gmra.mxu0 %v420
        %v553 = vpop.f32.mrf.mxu0
        %v554 = vadd.f32 0.0, %v553
        %v555 = vpop.f32.mrf.mxu0
        %v556 = vpop.f32.mrf.mxu0
        %v557 = vadd.f32 0.0, %v556
        %v558 = vpop.f32.mrf.mxu0
        %559 = vmatprep.mubr.bf16.mxu0 0
        %560 = vmatmul.mubr.bf16.gmra.mxu0 %v421
        %v561 = vpop.f32.mrf.mxu0
        %v562 = vadd.f32 0.0, %v561
        %v563 = vpop.f32.mrf.mxu0
        %v564 = vpop.f32.mrf.mxu0
        %v565 = vadd.f32 0.0, %v564
        %v566 = vpop.f32.mrf.mxu0
        %567 = vmatprep.mubr.bf16.mxu0 0
        %568 = vmatmul.mubr.bf16.gmra.mxu0 %v422
        %v569 = vpop.f32.mrf.mxu0
        %v570 = vadd.f32 0.0, %v569
        %v571 = vpop.f32.mrf.mxu0
        %v572 = vpop.f32.mrf.mxu0
        %v573 = vadd.f32 0.0, %v572
        %v574 = vpop.f32.mrf.mxu0
        %575 = vdwg.mxu0
        %v576 = vadd.f32 %v335, %v514
        %v577 = vadd.f32 %v336, %v517
        %v578 = vadd.f32 %v337, %v522
        %v579 = vadd.f32 %v338, %v525
        %v580 = vadd.f32 %v339, %v530
        %v581 = vadd.f32 %v340, %v533
        %v582 = vadd.f32 %v341, %v538
        %v583 = vadd.f32 %v342, %v541
        %v584 = vadd.f32 %v343, %v546
        %v585 = vadd.f32 %v344, %v549
        %v586 = vadd.f32 %v345, %v554
        %v587 = vadd.f32 %v346, %v557
        %v588 = vadd.f32 %v347, %v562
        %v589 = vadd.f32 %v348, %v565
        %v590 = vadd.f32 %v349, %v570
        %v591 = vadd.f32 %v350, %v573
        %592 = vst [vmem:[#allocation2] sm:$0xff] %v576
        %593 = vst [vmem:[#allocation2 + $0x8] sm:$0xff] %v577
        %594 = vst [vmem:[#allocation2 + $0x10] sm:$0xff] %v578
        %595 = vst [vmem:[#allocation2 + $0x18] sm:$0xff] %v579
        %596 = vst [vmem:[#allocation2 + $0x20] sm:$0xff] %v580
        %597 = vst [vmem:[#allocation2 + $0x28] sm:$0xff] %v581
        %598 = vst [vmem:[#allocation2 + $0x30] sm:$0xff] %v582
        %599 = vst [vmem:[#allocation2 + $0x38] sm:$0xff] %v583
        %600 = vst [vmem:[#allocation2 + $0x40] sm:$0xff] %v584
        %601 = vst [vmem:[#allocation2 + $0x48] sm:$0xff] %v585
        %602 = vst [vmem:[#allocation2 + $0x50] sm:$0xff] %v586
        %603 = vst [vmem:[#allocation2 + $0x58] sm:$0xff] %v587
        %604 = vst [vmem:[#allocation2 + $0x60] sm:$0xff] %v588
        %605 = vst [vmem:[#allocation2 + $0x68] sm:$0xff] %v589
        %606 = vst [vmem:[#allocation2 + $0x70] sm:$0xff] %v590
        %607 = vst [vmem:[#allocation2 + $0x78] sm:$0xff] %v591
        %p608 = scmp.eq.s32.totalorder %s20, 8
        // Predicated region
        $region74: #{icnet_forward.13} parent=64 // pred_check
          %p609 = pneg %p608
        $region75: #{icnet_forward.13} parent=64 // pred_check_branch
          %611 = sbr.rel (%p609) target = $region77
        $region76: #{icnet_forward.13} parent=64 // pred_region
          %v612 = vld [vmem:[#allocation2] sm:$0xff]
          %v613 = vld [vmem:[#allocation2 + $0x8] sm:$0xff]
          %v614 = vld [vmem:[#allocation2 + $0x10] sm:$0xff]
          %v615 = vld [vmem:[#allocation2 + $0x18] sm:$0xff]
          %v616 = vld [vmem:[#allocation2 + $0x20] sm:$0xff]
          %v617 = vld [vmem:[#allocation2 + $0x28] sm:$0xff]
          %v618 = vld [vmem:[#allocation2 + $0x30] sm:$0xff]
          %v619 = vld [vmem:[#allocation2 + $0x38] sm:$0xff]
          %v620 = vld [vmem:[#allocation2 + $0x40] sm:$0xff]
          %v621 = vld [vmem:[#allocation2 + $0x48] sm:$0xff]
          %v622 = vld [vmem:[#allocation2 + $0x50] sm:$0xff]
          %v623 = vld [vmem:[#allocation2 + $0x58] sm:$0xff]
          %v624 = vld [vmem:[#allocation2 + $0x60] sm:$0xff]
          %v625 = vld [vmem:[#allocation2 + $0x68] sm:$0xff]
          %v626 = vld [vmem:[#allocation2 + $0x70] sm:$0xff]
          %v627 = vld [vmem:[#allocation2 + $0x78] sm:$0xff]
          %v628 = vpack.c.bf16 %v613, %v612
          %v629 = vpack.c.bf16 %v615, %v614
          %v630 = vpack.c.bf16 %v617, %v616
          %v631 = vpack.c.bf16 %v619, %v618
          %v632 = vpack.c.bf16 %v621, %v620
          %v633 = vpack.c.bf16 %v623, %v622
          %v634 = vpack.c.bf16 %v625, %v624
          %v635 = vpack.c.bf16 %v627, %v626
          %v644 = vunpack.c.l.b16 %v628
          %v645 = vunpack.c.h.b16 %v628
          %v646 = vunpack.c.l.b16 %v629
          %v647 = vunpack.c.h.b16 %v629
          %v648 = vunpack.c.l.b16 %v630
          %v649 = vunpack.c.h.b16 %v630
          %v650 = vunpack.c.l.b16 %v631
          %v651 = vunpack.c.h.b16 %v631
          %v652 = vunpack.c.l.b16 %v632
          %v653 = vunpack.c.h.b16 %v632
          %v654 = vunpack.c.l.b16 %v633
          %v655 = vunpack.c.h.b16 %v633
          %v656 = vunpack.c.l.b16 %v634
          %v657 = vunpack.c.h.b16 %v634
          %v658 = vunpack.c.l.b16 %v635
          %v659 = vunpack.c.h.b16 %v635
          %v660 = vpack.c.b16 %v644, %v644
          %v661 = vpack.c.b16 %v645, %v645
          %v662 = vpack.c.b16 %v646, %v646
          %v663 = vpack.c.b16 %v647, %v647
          %v664 = vpack.c.b16 %v648, %v648
          %v665 = vpack.c.b16 %v649, %v649
          %v666 = vpack.c.b16 %v650, %v650
          %v667 = vpack.c.b16 %v651, %v651
          %v668 = vpack.c.b16 %v652, %v652
          %v669 = vpack.c.b16 %v653, %v653
          %v670 = vpack.c.b16 %v654, %v654
          %v671 = vpack.c.b16 %v655, %v655
          %v672 = vpack.c.b16 %v656, %v656
          %v673 = vpack.c.b16 %v657, %v657
          %v674 = vpack.c.b16 %v658, %v658
          %v675 = vpack.c.b16 %v659, %v659
          %692 = vst [vmem:[%s312] sm:$0xf] %v660
          %693 = vst [vmem:[%s312 + $0x4] sm:$0xf] %v661
          %694 = vst [vmem:[%s312 + $0x8] sm:$0xf] %v662
          %695 = vst [vmem:[%s312 + $0xc] sm:$0xf] %v663
          %696 = vst [vmem:[%s312 + $0x10] sm:$0xf] %v664
          %697 = vst [vmem:[%s312 + $0x14] sm:$0xf] %v665
          %698 = vst [vmem:[%s312 + $0x18] sm:$0xf] %v666
          %699 = vst [vmem:[%s312 + $0x1c] sm:$0xf] %v667
          %700 = vst [vmem:[%s312 + $0x20] sm:$0xf] %v668
          %701 = vst [vmem:[%s312 + $0x24] sm:$0xf] %v669
          %702 = vst [vmem:[%s312 + $0x28] sm:$0xf] %v670
          %703 = vst [vmem:[%s312 + $0x2c] sm:$0xf] %v671
          %704 = vst [vmem:[%s312 + $0x30] sm:$0xf] %v672
          %705 = vst [vmem:[%s312 + $0x34] sm:$0xf] %v673
          %706 = vst [vmem:[%s312 + $0x38] sm:$0xf] %v674
          %707 = vst [vmem:[%s312 + $0x3c] sm:$0xf] %v675
        $region77: #{icnet_forward.13} parent=64 // pred_fallthru
          _
        %s708 = smul.u32 16, %s18
        %p709 = scmp.lt.s32.totalorder %s708, 15
        %s710 = scalar_select %p709, %s708, 15
        %p711 = scmp.lt.s32.totalorder %s19, 0
        %s712 = scalar_select %p711, %s19, 0
        %s713 = sadd.s32 %s712, %s710
        %s714 = smul.addr %s713, 4
        %s715 = scalar_lea.vmem %s2, %s714
        // Predicated region
        $region78: #{icnet_forward.13} parent=64 // pred_check
          %p716 = pneg %p108
        $region79: #{icnet_forward.13} parent=64 // pred_check_branch
          %718 = sbr.rel (%p716) target = $region81
        $region80: #{icnet_forward.13} parent=64 // pred_region
          %s719 = smul.u32 16, %s18
        $region81: #{icnet_forward.13} parent=64 // pred_fallthru
          _
        // Predicated region
        $region82: #{icnet_forward.13} parent=64 // pred_check
          %p720 = pneg %p108
        $region83: #{icnet_forward.13} parent=64 // pred_check_branch
          %722 = sbr.rel (%p720) target = $region85
        $region84: #{icnet_forward.13} parent=64 // pred_region
          %s723 = smul.u32 16, %s18
          %p724 = scmp.lt.s32.totalorder %s723, 15
          %s725 = scalar_select %p724, %s723, 15
          %p726 = scmp.lt.s32.totalorder %s19, 0
          %s727 = scalar_select %p726, %s19, 0
          %s728 = sadd.s32 %s727, %s725
          %s729 = smul.addr %s728, 4
          %s730 = scalar_lea.vmem %s2, %s729
        $region85: #{icnet_forward.13} parent=64 // pred_fallthru
          _
      $region65: #{icnet_forward.13} parent=5 // pred_fallthru
        _
      %p731 = scmp.le.s32.totalorder 2, %s8
      // Predicated region
      $region86: #{icnet_forward.13} parent=5 // pred_check
        %p732 = pneg %p731
      $region87: #{icnet_forward.13} parent=5 // pred_check_branch
        %734 = sbr.rel (%p732) target = $region89
      $region88: #{icnet_forward.13} parent=5 // pred_region
        %s735 = ssub.s32 %s8, 2
      $region89: #{icnet_forward.13} parent=5 // pred_fallthru
        _
    $region6: #{icnet_forward.13} parent=1 // loop_footer
      %s12 = sadd.s32 1, %s8
    $region7: #{icnet_forward.13} parent=1 // loop_footer_branch
      %7 = sbr.rel target = $region3
    $region8: #{icnet_forward.13} parent=1 // loop_exit
      _

// kernel: icnet_forward.8
$region0: #{icnet_forward.8}
  #allocation0 [shape = 'u32[]', space=smem, size = 0x4, offset = 0x4, fixed_abs, tag = 'smem constant byte address 0x4 - core index']
  #allocation1 [shape = 'u32[144,128]{1,0:T(1,128)}', space=vmem, size = 0x12000, scoped, tag = 'internal scratch']
  #allocation2 [shape = 'f32[512,128]{1,0:T(8,128)}', space=vmem, size = 0x40000, scoped, tag = 'scratch operand']
  %s0 = inlined_call_operand.vmem [shape: bf16[2048,32], index: 0, kind: input, shape index: {}]
  %s1 = inlined_call_operand.vmem [shape: bf16[32,128], index: 1, kind: input, shape index: {}]
  %s2 = inlined_call_operand.vmem [shape: bf16[2048,128], index: 2, kind: output, shape index: {}]
  %s3 = sld [smem:[#allocation0]]
  $region49: #{icnet_forward.8} parent=0
    _
  %s5 = ssub.s32 1, %s3
  %s6 = scalar_select 0, %s5, %s3
  loop: start=0, step=1, limit=6
  $region2: #{icnet_forward.8} parent=0 // loop_pre_header
    _
  $region3: #{icnet_forward.8} parent=0 // loop_header
    %s8 = sphi 0, %s12
    %p9 = scmp.ge.s32.totalorder %s8, 6
    %s15 = sphi 0, %s34
    %s16 = sphi 0, %s30
    %s17 = sphi 0, %s26
    %s18 = sphi 0, %s15
    %s19 = sphi 0, %s16
    %s20 = sphi 0, %s17
    %s21 = sphi 0, %s18
    %s22 = sphi 0, %s19
    %s23 = sphi 0, %s20
    %s39 = sphi 0, %s41
    %s42 = sphi 0, %s39
    %s43 = sphi 0, %s42
    %s59 = sphi 0, %s43
    %s67 = sphi 0, %s69
    %s70 = sphi 0, %s67
    %s71 = sphi 0, %s70
    %s87 = sphi 0, %s71
    %s95 = sphi 0, %s97
    %s98 = sphi 0, %s95
    %s99 = sphi 0, %s98
    %s115 = sphi 0, %s99
  $region4: #{icnet_forward.8} parent=0 // loop_header_branch
    %11 = sbr.rel (%p9) target = $region8
  $region5: #{icnet_forward.8} parent=0 // loop_body
    %s13 = ssub.s32 %s8, 1
    %s14 = ssub.s32 %s8, 2
    %s24 = sadd.s32 1, %s17
    %p25 = scmp.ge.s32.totalorder %s24, 1
    %s26 = scalar_select %p25, 0, %s24
    %s27 = sadd.s32 1, %s16
    %s28 = scalar_select %p25, %s27, %s16
    %p29 = scmp.ge.s32.totalorder %s28, 1
    %s30 = scalar_select %p29, 0, %s28
    %s31 = sadd.s32 1, %s15
    %s32 = scalar_select %p29, %s31, %s15
    %p33 = scmp.ge.s32.totalorder %s32, 4
    %s34 = scalar_select %p33, 0, %s32
    %s35 = ssub.s32 %s15, %s34
    %s36 = ssub.s32 %s17, %s26
    %s37 = sor.u32 %s35, %s36
    %p38 = scmp.eq.s32.totalorder %s37, 0
    %s40 = sadd.s32 %s39, 1
    %s41 = scalar_select %p38, %s39, %s40
    %p44 = pneg %p38
    %p45 = scmp.eq.s32.totalorder %s8, 3
    %p46 = por %p44, %p45
    %p47 = scmp.ne.s32.totalorder %s39, %s42
    %p48 = scmp.eq.s32.totalorder %s8, 0
    %p49 = por %p47, %p48
    %p50 = scmp.ne.s32.totalorder %s39, %s42
    %p51 = scmp.eq.s32.totalorder %s13, 3
    %p52 = por %p50, %p51
    %p53 = scmp.ne.s32.totalorder %s42, %s43
    %p54 = scmp.eq.s32.totalorder %s13, 0
    %p55 = por %p53, %p54
    %p56 = scmp.ne.s32.totalorder %s42, %s43
    %p57 = scmp.eq.s32.totalorder %s14, 3
    %p58 = por %p56, %p57
    %p60 = scmp.ne.s32.totalorder %s43, %s59
    %p61 = scmp.eq.s32.totalorder %s14, 0
    %p62 = por %p60, %p61
    %s63 = ssub.s32 %s17, %s26
    %s64 = ssub.s32 %s16, %s30
    %s65 = sor.u32 %s63, %s64
    %p66 = scmp.eq.s32.totalorder %s65, 0
    %s68 = sadd.s32 %s67, 1
    %s69 = scalar_select %p66, %s67, %s68
    %p72 = pneg %p66
    %p73 = scmp.eq.s32.totalorder %s8, 3
    %p74 = por %p72, %p73
    %p75 = scmp.ne.s32.totalorder %s67, %s70
    %p76 = scmp.eq.s32.totalorder %s8, 0
    %p77 = por %p75, %p76
    %p78 = scmp.ne.s32.totalorder %s67, %s70
    %p79 = scmp.eq.s32.totalorder %s13, 3
    %p80 = por %p78, %p79
    %p81 = scmp.ne.s32.totalorder %s70, %s71
    %p82 = scmp.eq.s32.totalorder %s13, 0
    %p83 = por %p81, %p82
    %p84 = scmp.ne.s32.totalorder %s70, %s71
    %p85 = scmp.eq.s32.totalorder %s14, 3
    %p86 = por %p84, %p85
    %p88 = scmp.ne.s32.totalorder %s71, %s87
    %p89 = scmp.eq.s32.totalorder %s14, 0
    %p90 = por %p88, %p89
    %s91 = ssub.s32 %s15, %s34
    %s92 = ssub.s32 %s16, %s30
    %s93 = sor.u32 %s91, %s92
    %p94 = scmp.eq.s32.totalorder %s93, 0
    %s96 = sadd.s32 %s95, 1
    %s97 = scalar_select %p94, %s95, %s96
    %p100 = pneg %p94
    %p101 = scmp.eq.s32.totalorder %s8, 3
    %p102 = por %p100, %p101
    %p103 = scmp.ne.s32.totalorder %s95, %s98
    %p104 = scmp.eq.s32.totalorder %s8, 0
    %p105 = por %p103, %p104
    %p106 = scmp.ne.s32.totalorder %s95, %s98
    %p107 = scmp.eq.s32.totalorder %s13, 3
    %p108 = por %p106, %p107
    %p109 = scmp.ne.s32.totalorder %s98, %s99
    %p110 = scmp.eq.s32.totalorder %s13, 0
    %p111 = por %p109, %p110
    %p112 = scmp.ne.s32.totalorder %s98, %s99
    %p113 = scmp.eq.s32.totalorder %s14, 3
    %p114 = por %p112, %p113
    %p116 = scmp.ne.s32.totalorder %s99, %s115
    %p117 = scmp.eq.s32.totalorder %s14, 0
    %p118 = por %p116, %p117
    %p119 = scmp.le.s32.totalorder 1, %s8
    %p120 = scmp.lt.s32.totalorder %s8, 5
    %p121 = pnand %p119, %p120
    %p122 = pneg %p121
    // Predicated region
    $region9: #{icnet_forward.8} parent=5 // pred_check
      _
    $region10: #{icnet_forward.8} parent=5 // pred_check_branch
      %124 = sbr.rel (%p121) target = $region12
    $region11: #{icnet_forward.8} parent=5 // pred_region
      %s125 = ssub.s32 %s8, 1
      // Predicated region
      $region13: #{icnet_forward.8} parent=11 // pred_check
        %p126 = pneg %p83
      $region14: #{icnet_forward.8} parent=11 // pred_check_branch
        %128 = sbr.rel (%p126) target = $region16
      $region15: #{icnet_forward.8} parent=11 // pred_region
        %s129 = smul.u32 4, %s20
        %p130 = scmp.lt.s32.totalorder %s129, 3
        %s131 = scalar_select %p130, %s129, 3
        %p132 = scmp.lt.s32.totalorder %s19, 0
        %s133 = scalar_select %p132, %s19, 0
        %s134 = sadd.s32 %s133, %s131
        %s135 = smul.addr %s134, 4
        %s136 = scalar_lea.vmem %s1, %s135
        %s137 = smul.u32 4, %s20
      $region16: #{icnet_forward.8} parent=11 // pred_fallthru
        _
    $region12: #{icnet_forward.8} parent=5 // pred_fallthru
      _
    %p138 = scmp.lt.s32.totalorder %s8, 4
    // Predicated region
    $region17: #{icnet_forward.8} parent=5 // pred_check
      %p139 = pneg %p138
    $region18: #{icnet_forward.8} parent=5 // pred_check_branch
      %141 = sbr.rel (%p139) target = $region20
    $region19: #{icnet_forward.8} parent=5 // pred_region
      // Predicated region
      $region21: #{icnet_forward.8} parent=19 // pred_check
        %p142 = pneg %p49
      $region22: #{icnet_forward.8} parent=19 // pred_check_branch
        %144 = sbr.rel (%p142) target = $region24
      $region23: #{icnet_forward.8} parent=19 // pred_region
        %s145 = smul.u32 64, %s15
        %p146 = scmp.lt.s32.totalorder %s145, 255
        %s147 = scalar_select %p146, %s145, 255
        %p148 = scmp.lt.s32.totalorder %s17, 0
        %s149 = scalar_select %p148, %s17, 0
        %s150 = sadd.s32 %s149, %s147
        %s151 = smul.addr %s150, 4
        %s152 = scalar_lea.vmem %s0, %s151
        %s153 = smul.u32 64, %s15
      $region24: #{icnet_forward.8} parent=19 // pred_fallthru
        _
    $region20: #{icnet_forward.8} parent=5 // pred_fallthru
      _
    %p154 = scmp.le.s32.totalorder 1, %s8
    %p155 = scmp.lt.s32.totalorder %s8, 5
    %p156 = pnand %p154, %p155
    %p157 = pneg %p156
    // Predicated region
    $region25: #{icnet_forward.8} parent=5 // pred_check
      _
    $region26: #{icnet_forward.8} parent=5 // pred_check_branch
      %159 = sbr.rel (%p156) target = $region28
    $region27: #{icnet_forward.8} parent=5 // pred_region
      %s160 = ssub.s32 %s8, 1
      %s161 = smul.u32 64, %s18
      %p162 = scmp.lt.s32.totalorder %s161, 255
      %s163 = scalar_select %p162, %s161, 255
      %p164 = scmp.lt.s32.totalorder %s20, 0
      %s165 = scalar_select %p164, %s20, 0
      %s166 = sadd.s32 %s165, %s163
      %s167 = smul.addr %s166, 4
      %s168 = scalar_lea.vmem %s0, %s167
      %p169 = pneg %p55
      %p170 = pneg %p52
      %s171 = smul.u32 4, %s20
      %p172 = scmp.lt.s32.totalorder %s171, 3
      %s173 = scalar_select %p172, %s171, 3
      %p174 = scmp.lt.s32.totalorder %s19, 0
      %s175 = scalar_select %p174, %s19, 0
      %s176 = sadd.s32 %s175, %s173
      %s177 = smul.addr %s176, 4
      %s178 = scalar_lea.vmem %s1, %s177
      %p179 = pneg %p83
      %p180 = pneg %p80
      %p181 = pneg %p111
      %p182 = pneg %p108
      %s183 = smul.u32 64, %s18
      %p184 = scmp.lt.s32.totalorder %s183, 255
      %s185 = scalar_select %p184, %s183, 255
      %p186 = scmp.lt.s32.totalorder %s19, 0
      %s187 = scalar_select %p186, %s19, 0
      %s188 = sadd.s32 %s187, %s185
      %s189 = smul.addr %s188, 4
      %s190 = scalar_lea.vmem %s2, %s189
      %s191 = smul.u32 64, %s18
      %p192 = scmp.lt.s32.totalorder %s191, 255
      %s193 = scalar_select %p192, %s191, 255
      %p194 = scmp.lt.s32.totalorder %s20, 0
      %s195 = scalar_select %p194, %s20, 0
      %s196 = sadd.s32 %s195, %s193
      %s197 = smul.addr %s196, 4
      %s198 = scalar_lea.vmem %s0, %s197
      %s199 = smul.u32 64, %s18
      %s200 = smul.u32 4, %s20
      %p201 = scmp.lt.s32.totalorder %s200, 3
      %s202 = scalar_select %p201, %s200, 3
      %p203 = scmp.lt.s32.totalorder %s19, 0
      %s204 = scalar_select %p203, %s19, 0
      %s205 = sadd.s32 %s204, %s202
      %s206 = smul.addr %s205, 4
      %s207 = scalar_lea.vmem %s1, %s206
      %s208 = smul.u32 4, %s20
      %s209 = smul.u32 64, %s18
      %p210 = scmp.lt.s32.totalorder %s209, 255
      %s211 = scalar_select %p210, %s209, 255
      %p212 = scmp.lt.s32.totalorder %s19, 0
      %s213 = scalar_select %p212, %s19, 0
      %s214 = sadd.s32 %s213, %s211
      %s215 = smul.addr %s214, 4
      %s216 = scalar_lea.vmem %s2, %s215
      %s217 = smul.u32 64, %s18
      %p219 = scmp.eq.s32.totalorder %s20, 0
      // Predicated region
      $region29: #{icnet_forward.8} parent=27 // pred_check
        %p220 = pneg %p219
      $region30: #{icnet_forward.8} parent=27 // pred_check_branch
        %222 = sbr.rel (%p220) target = $region32
      $region31: #{icnet_forward.8} parent=27 // pred_region
        %223 = vst [vmem:[#allocation2] sm:$0xff] 0.0
        %224 = vst [vmem:[#allocation2 + $0x8] sm:$0xff] 0.0
        %225 = vst [vmem:[#allocation2 + $0x10] sm:$0xff] 0.0
        %226 = vst [vmem:[#allocation2 + $0x18] sm:$0xff] 0.0
        %227 = vst [vmem:[#allocation2 + $0x20] sm:$0xff] 0.0
        %228 = vst [vmem:[#allocation2 + $0x28] sm:$0xff] 0.0
        %229 = vst [vmem:[#allocation2 + $0x30] sm:$0xff] 0.0
        %230 = vst [vmem:[#allocation2 + $0x38] sm:$0xff] 0.0
        %231 = vst [vmem:[#allocation2 + $0x40] sm:$0xff] 0.0
        %232 = vst [vmem:[#allocation2 + $0x48] sm:$0xff] 0.0
        %233 = vst [vmem:[#allocation2 + $0x50] sm:$0xff] 0.0
        %234 = vst [vmem:[#allocation2 + $0x58] sm:$0xff] 0.0
        %235 = vst [vmem:[#allocation2 + $0x60] sm:$0xff] 0.0
        %236 = vst [vmem:[#allocation2 + $0x68] sm:$0xff] 0.0
        %237 = vst [vmem:[#allocation2 + $0x70] sm:$0xff] 0.0
        %238 = vst [vmem:[#allocation2 + $0x78] sm:$0xff] 0.0
        %239 = vst [vmem:[#allocation2 + $0x80] sm:$0xff] 0.0
        %240 = vst [vmem:[#allocation2 + $0x88] sm:$0xff] 0.0
        %241 = vst [vmem:[#allocation2 + $0x90] sm:$0xff] 0.0
        %242 = vst [vmem:[#allocation2 + $0x98] sm:$0xff] 0.0
        %243 = vst [vmem:[#allocation2 + $0xa0] sm:$0xff] 0.0
        %244 = vst [vmem:[#allocation2 + $0xa8] sm:$0xff] 0.0
        %245 = vst [vmem:[#allocation2 + $0xb0] sm:$0xff] 0.0
        %246 = vst [vmem:[#allocation2 + $0xb8] sm:$0xff] 0.0
        %247 = vst [vmem:[#allocation2 + $0xc0] sm:$0xff] 0.0
        %248 = vst [vmem:[#allocation2 + $0xc8] sm:$0xff] 0.0
        %249 = vst [vmem:[#allocation2 + $0xd0] sm:$0xff] 0.0
        %250 = vst [vmem:[#allocation2 + $0xd8] sm:$0xff] 0.0
        %251 = vst [vmem:[#allocation2 + $0xe0] sm:$0xff] 0.0
        %252 = vst [vmem:[#allocation2 + $0xe8] sm:$0xff] 0.0
        %253 = vst [vmem:[#allocation2 + $0xf0] sm:$0xff] 0.0
        %254 = vst [vmem:[#allocation2 + $0xf8] sm:$0xff] 0.0
        %255 = vst [vmem:[#allocation2 + $0x100] sm:$0xff] 0.0
        %256 = vst [vmem:[#allocation2 + $0x108] sm:$0xff] 0.0
        %257 = vst [vmem:[#allocation2 + $0x110] sm:$0xff] 0.0
        %258 = vst [vmem:[#allocation2 + $0x118] sm:$0xff] 0.0
        %259 = vst [vmem:[#allocation2 + $0x120] sm:$0xff] 0.0
        %260 = vst [vmem:[#allocation2 + $0x128] sm:$0xff] 0.0
        %261 = vst [vmem:[#allocation2 + $0x130] sm:$0xff] 0.0
        %262 = vst [vmem:[#allocation2 + $0x138] sm:$0xff] 0.0
        %263 = vst [vmem:[#allocation2 + $0x140] sm:$0xff] 0.0
        %264 = vst [vmem:[#allocation2 + $0x148] sm:$0xff] 0.0
        %265 = vst [vmem:[#allocation2 + $0x150] sm:$0xff] 0.0
        %266 = vst [vmem:[#allocation2 + $0x158] sm:$0xff] 0.0
        %267 = vst [vmem:[#allocation2 + $0x160] sm:$0xff] 0.0
        %268 = vst [vmem:[#allocation2 + $0x168] sm:$0xff] 0.0
        %269 = vst [vmem:[#allocation2 + $0x170] sm:$0xff] 0.0
        %270 = vst [vmem:[#allocation2 + $0x178] sm:$0xff] 0.0
        %271 = vst [vmem:[#allocation2 + $0x180] sm:$0xff] 0.0
        %272 = vst [vmem:[#allocation2 + $0x188] sm:$0xff] 0.0
        %273 = vst [vmem:[#allocation2 + $0x190] sm:$0xff] 0.0
        %274 = vst [vmem:[#allocation2 + $0x198] sm:$0xff] 0.0
        %275 = vst [vmem:[#allocation2 + $0x1a0] sm:$0xff] 0.0
        %276 = vst [vmem:[#allocation2 + $0x1a8] sm:$0xff] 0.0
        %277 = vst [vmem:[#allocation2 + $0x1b0] sm:$0xff] 0.0
        %278 = vst [vmem:[#allocation2 + $0x1b8] sm:$0xff] 0.0
        %279 = vst [vmem:[#allocation2 + $0x1c0] sm:$0xff] 0.0
        %280 = vst [vmem:[#allocation2 + $0x1c8] sm:$0xff] 0.0
        %281 = vst [vmem:[#allocation2 + $0x1d0] sm:$0xff] 0.0
        %282 = vst [vmem:[#allocation2 + $0x1d8] sm:$0xff] 0.0
        %283 = vst [vmem:[#allocation2 + $0x1e0] sm:$0xff] 0.0
        %284 = vst [vmem:[#allocation2 + $0x1e8] sm:$0xff] 0.0
        %285 = vst [vmem:[#allocation2 + $0x1f0] sm:$0xff] 0.0
        %286 = vst [vmem:[#allocation2 + $0x1f8] sm:$0xff] 0.0
      $region32: #{icnet_forward.8} parent=27 // pred_fallthru
        _
      %v287 = vld [vmem:[#allocation2] sm:$0xff]
      %v288 = vld [vmem:[#allocation2 + $0x8] sm:$0xff]
      %v289 = vld [vmem:[#allocation2 + $0x10] sm:$0xff]
      %v290 = vld [vmem:[#allocation2 + $0x18] sm:$0xff]
      %v291 = vld [vmem:[#allocation2 + $0x20] sm:$0xff]
      %v292 = vld [vmem:[#allocation2 + $0x28] sm:$0xff]
      %v293 = vld [vmem:[#allocation2 + $0x30] sm:$0xff]
      %v294 = vld [vmem:[#allocation2 + $0x38] sm:$0xff]
      %v295 = vld [vmem:[#allocation2 + $0x40] sm:$0xff]
      %v296 = vld [vmem:[#allocation2 + $0x48] sm:$0xff]
      %v297 = vld [vmem:[#allocation2 + $0x50] sm:$0xff]
      %v298 = vld [vmem:[#allocation2 + $0x58] sm:$0xff]
      %v299 = vld [vmem:[#allocation2 + $0x60] sm:$0xff]
      %v300 = vld [vmem:[#allocation2 + $0x68] sm:$0xff]
      %v301 = vld [vmem:[#allocation2 + $0x70] sm:$0xff]
      %v302 = vld [vmem:[#allocation2 + $0x78] sm:$0xff]
      %v303 = vld [vmem:[#allocation2 + $0x80] sm:$0xff]
      %v304 = vld [vmem:[#allocation2 + $0x88] sm:$0xff]
      %v305 = vld [vmem:[#allocation2 + $0x90] sm:$0xff]
      %v306 = vld [vmem:[#allocation2 + $0x98] sm:$0xff]
      %v307 = vld [vmem:[#allocation2 + $0xa0] sm:$0xff]
      %v308 = vld [vmem:[#allocation2 + $0xa8] sm:$0xff]
      %v309 = vld [vmem:[#allocation2 + $0xb0] sm:$0xff]
      %v310 = vld [vmem:[#allocation2 + $0xb8] sm:$0xff]
      %v311 = vld [vmem:[#allocation2 + $0xc0] sm:$0xff]
      %v312 = vld [vmem:[#allocation2 + $0xc8] sm:$0xff]
      %v313 = vld [vmem:[#allocation2 + $0xd0] sm:$0xff]
      %v314 = vld [vmem:[#allocation2 + $0xd8] sm:$0xff]
      %v315 = vld [vmem:[#allocation2 + $0xe0] sm:$0xff]
      %v316 = vld [vmem:[#allocation2 + $0xe8] sm:$0xff]
      %v317 = vld [vmem:[#allocation2 + $0xf0] sm:$0xff]
      %v318 = vld [vmem:[#allocation2 + $0xf8] sm:$0xff]
      %v319 = vld [vmem:[#allocation2 + $0x100] sm:$0xff]
      %v320 = vld [vmem:[#allocation2 + $0x108] sm:$0xff]
      %v321 = vld [vmem:[#allocation2 + $0x110] sm:$0xff]
      %v322 = vld [vmem:[#allocation2 + $0x118] sm:$0xff]
      %v323 = vld [vmem:[#allocation2 + $0x120] sm:$0xff]
      %v324 = vld [vmem:[#allocation2 + $0x128] sm:$0xff]
      %v325 = vld [vmem:[#allocation2 + $0x130] sm:$0xff]
      %v326 = vld [vmem:[#allocation2 + $0x138] sm:$0xff]
      %v327 = vld [vmem:[#allocation2 + $0x140] sm:$0xff]
      %v328 = vld [vmem:[#allocation2 + $0x148] sm:$0xff]
      %v329 = vld [vmem:[#allocation2 + $0x150] sm:$0xff]
      %v330 = vld [vmem:[#allocation2 + $0x158] sm:$0xff]
      %v331 = vld [vmem:[#allocation2 + $0x160] sm:$0xff]
      %v332 = vld [vmem:[#allocation2 + $0x168] sm:$0xff]
      %v333 = vld [vmem:[#allocation2 + $0x170] sm:$0xff]
      %v334 = vld [vmem:[#allocation2 + $0x178] sm:$0xff]
      %v335 = vld [vmem:[#allocation2 + $0x180] sm:$0xff]
      %v336 = vld [vmem:[#allocation2 + $0x188] sm:$0xff]
      %v337 = vld [vmem:[#allocation2 + $0x190] sm:$0xff]
      %v338 = vld [vmem:[#allocation2 + $0x198] sm:$0xff]
      %v339 = vld [vmem:[#allocation2 + $0x1a0] sm:$0xff]
      %v340 = vld [vmem:[#allocation2 + $0x1a8] sm:$0xff]
      %v341 = vld [vmem:[#allocation2 + $0x1b0] sm:$0xff]
      %v342 = vld [vmem:[#allocation2 + $0x1b8] sm:$0xff]
      %v343 = vld [vmem:[#allocation2 + $0x1c0] sm:$0xff]
      %v344 = vld [vmem:[#allocation2 + $0x1c8] sm:$0xff]
      %v345 = vld [vmem:[#allocation2 + $0x1d0] sm:$0xff]
      %v346 = vld [vmem:[#allocation2 + $0x1d8] sm:$0xff]
      %v347 = vld [vmem:[#allocation2 + $0x1e0] sm:$0xff]
      %v348 = vld [vmem:[#allocation2 + $0x1e8] sm:$0xff]
      %v349 = vld [vmem:[#allocation2 + $0x1f0] sm:$0xff]
      %v350 = vld [vmem:[#allocation2 + $0x1f8] sm:$0xff]
      %v351 = vld [vmem:[%s198] sm:$0xf]
      %v352 = vld [vmem:[%s198 + $0x4] sm:$0xf]
      %v353 = vld [vmem:[%s198 + $0x8] sm:$0xf]
      %v354 = vld [vmem:[%s198 + $0xc] sm:$0xf]
      %v355 = vld [vmem:[%s198 + $0x10] sm:$0xf]
      %v356 = vld [vmem:[%s198 + $0x14] sm:$0xf]
      %v357 = vld [vmem:[%s198 + $0x18] sm:$0xf]
      %v358 = vld [vmem:[%s198 + $0x1c] sm:$0xf]
      %v359 = vld [vmem:[%s198 + $0x20] sm:$0xf]
      %v360 = vld [vmem:[%s198 + $0x24] sm:$0xf]
      %v361 = vld [vmem:[%s198 + $0x28] sm:$0xf]
      %v362 = vld [vmem:[%s198 + $0x2c] sm:$0xf]
      %v363 = vld [vmem:[%s198 + $0x30] sm:$0xf]
      %v364 = vld [vmem:[%s198 + $0x34] sm:$0xf]
      %v365 = vld [vmem:[%s198 + $0x38] sm:$0xf]
      %v366 = vld [vmem:[%s198 + $0x3c] sm:$0xf]
      %v367 = vld [vmem:[%s198 + $0x40] sm:$0xf]
      %v368 = vld [vmem:[%s198 + $0x44] sm:$0xf]
      %v369 = vld [vmem:[%s198 + $0x48] sm:$0xf]
      %v370 = vld [vmem:[%s198 + $0x4c] sm:$0xf]
      %v371 = vld [vmem:[%s198 + $0x50] sm:$0xf]
      %v372 = vld [vmem:[%s198 + $0x54] sm:$0xf]
      %v373 = vld [vmem:[%s198 + $0x58] sm:$0xf]
      %v374 = vld [vmem:[%s198 + $0x5c] sm:$0xf]
      %v375 = vld [vmem:[%s198 + $0x60] sm:$0xf]
      %v376 = vld [vmem:[%s198 + $0x64] sm:$0xf]
      %v377 = vld [vmem:[%s198 + $0x68] sm:$0xf]
      %v378 = vld [vmem:[%s198 + $0x6c] sm:$0xf]
      %v379 = vld [vmem:[%s198 + $0x70] sm:$0xf]
      %v380 = vld [vmem:[%s198 + $0x74] sm:$0xf]
      %v381 = vld [vmem:[%s198 + $0x78] sm:$0xf]
      %v382 = vld [vmem:[%s198 + $0x7c] sm:$0xf]
      %v383 = vld [vmem:[%s198 + $0x80] sm:$0xf]
      %v384 = vld [vmem:[%s198 + $0x84] sm:$0xf]
      %v385 = vld [vmem:[%s198 + $0x88] sm:$0xf]
      %v386 = vld [vmem:[%s198 + $0x8c] sm:$0xf]
      %v387 = vld [vmem:[%s198 + $0x90] sm:$0xf]
      %v388 = vld [vmem:[%s198 + $0x94] sm:$0xf]
      %v389 = vld [vmem:[%s198 + $0x98] sm:$0xf]
      %v390 = vld [vmem:[%s198 + $0x9c] sm:$0xf]
      %v391 = vld [vmem:[%s198 + $0xa0] sm:$0xf]
      %v392 = vld [vmem:[%s198 + $0xa4] sm:$0xf]
      %v393 = vld [vmem:[%s198 + $0xa8] sm:$0xf]
      %v394 = vld [vmem:[%s198 + $0xac] sm:$0xf]
      %v395 = vld [vmem:[%s198 + $0xb0] sm:$0xf]
      %v396 = vld [vmem:[%s198 + $0xb4] sm:$0xf]
      %v397 = vld [vmem:[%s198 + $0xb8] sm:$0xf]
      %v398 = vld [vmem:[%s198 + $0xbc] sm:$0xf]
      %v399 = vld [vmem:[%s198 + $0xc0] sm:$0xf]
      %v400 = vld [vmem:[%s198 + $0xc4] sm:$0xf]
      %v401 = vld [vmem:[%s198 + $0xc8] sm:$0xf]
      %v402 = vld [vmem:[%s198 + $0xcc] sm:$0xf]
      %v403 = vld [vmem:[%s198 + $0xd0] sm:$0xf]
      %v404 = vld [vmem:[%s198 + $0xd4] sm:$0xf]
      %v405 = vld [vmem:[%s198 + $0xd8] sm:$0xf]
      %v406 = vld [vmem:[%s198 + $0xdc] sm:$0xf]
      %v407 = vld [vmem:[%s198 + $0xe0] sm:$0xf]
      %v408 = vld [vmem:[%s198 + $0xe4] sm:$0xf]
      %v409 = vld [vmem:[%s198 + $0xe8] sm:$0xf]
      %v410 = vld [vmem:[%s198 + $0xec] sm:$0xf]
      %v411 = vld [vmem:[%s198 + $0xf0] sm:$0xf]
      %v412 = vld [vmem:[%s198 + $0xf4] sm:$0xf]
      %v413 = vld [vmem:[%s198 + $0xf8] sm:$0xf]
      %v414 = vld [vmem:[%s198 + $0xfc] sm:$0xf]
      %v415 = vld [vmem:[%s207] sm:$0xf]
      %v416 = vld [vmem:[%s207 + $0x4] sm:$0xf]
      %v417 = vld [vmem:[%s207 + $0x8] sm:$0xf]
      %v418 = vld [vmem:[%s207 + $0xc] sm:$0xf]
      %v483 = vunpack.c.l.b16 %v351
      %v484 = vunpack.c.l.b16 %v352
      %v485 = vunpack.c.l.b16 %v353
      %v486 = vunpack.c.l.b16 %v354
      %v487 = vunpack.c.l.b16 %v355
      %v488 = vunpack.c.l.b16 %v356
      %v489 = vunpack.c.l.b16 %v357
      %v490 = vunpack.c.l.b16 %v358
      %v491 = vunpack.c.l.b16 %v359
      %v492 = vunpack.c.l.b16 %v360
      %v493 = vunpack.c.l.b16 %v361
      %v494 = vunpack.c.l.b16 %v362
      %v495 = vunpack.c.l.b16 %v363
      %v496 = vunpack.c.l.b16 %v364
      %v497 = vunpack.c.l.b16 %v365
      %v498 = vunpack.c.l.b16 %v366
      %v499 = vunpack.c.l.b16 %v367
      %v500 = vunpack.c.l.b16 %v368
      %v501 = vunpack.c.l.b16 %v369
      %v502 = vunpack.c.l.b16 %v370
      %v503 = vunpack.c.l.b16 %v371
      %v504 = vunpack.c.l.b16 %v372
      %v505 = vunpack.c.l.b16 %v373
      %v506 = vunpack.c.l.b16 %v374
      %v507 = vunpack.c.l.b16 %v375
      %v508 = vunpack.c.l.b16 %v376
      %v509 = vunpack.c.l.b16 %v377
      %v510 = vunpack.c.l.b16 %v378
      %v511 = vunpack.c.l.b16 %v379
      %v512 = vunpack.c.l.b16 %v380
      %v513 = vunpack.c.l.b16 %v381
      %v514 = vunpack.c.l.b16 %v382
      %v515 = vunpack.c.l.b16 %v383
      %v516 = vunpack.c.l.b16 %v384
      %v517 = vunpack.c.l.b16 %v385
      %v518 = vunpack.c.l.b16 %v386
      %v519 = vunpack.c.l.b16 %v387
      %v520 = vunpack.c.l.b16 %v388
      %v521 = vunpack.c.l.b16 %v389
      %v522 = vunpack.c.l.b16 %v390
      %v523 = vunpack.c.l.b16 %v391
      %v524 = vunpack.c.l.b16 %v392
      %v525 = vunpack.c.l.b16 %v393
      %v526 = vunpack.c.l.b16 %v394
      %v527 = vunpack.c.l.b16 %v395
      %v528 = vunpack.c.l.b16 %v396
      %v529 = vunpack.c.l.b16 %v397
      %v530 = vunpack.c.l.b16 %v398
      %v531 = vunpack.c.l.b16 %v399
      %v532 = vunpack.c.l.b16 %v400
      %v533 = vunpack.c.l.b16 %v401
      %v534 = vunpack.c.l.b16 %v402
      %v535 = vunpack.c.l.b16 %v403
      %v536 = vunpack.c.l.b16 %v404
      %v537 = vunpack.c.l.b16 %v405
      %v538 = vunpack.c.l.b16 %v406
      %v539 = vunpack.c.l.b16 %v407
      %v540 = vunpack.c.l.b16 %v408
      %v541 = vunpack.c.l.b16 %v409
      %v542 = vunpack.c.l.b16 %v410
      %v543 = vunpack.c.l.b16 %v411
      %v544 = vunpack.c.l.b16 %v412
      %v545 = vunpack.c.l.b16 %v413
      %v546 = vunpack.c.l.b16 %v414
      %v547 = vpack.c.b16 %v484, %v483
      %v548 = vpack.c.b16 %v486, %v485
      %v549 = vpack.c.b16 %v488, %v487
      %v550 = vpack.c.b16 %v490, %v489
      %v551 = vpack.c.b16 %v492, %v491
      %v552 = vpack.c.b16 %v494, %v493
      %v553 = vpack.c.b16 %v496, %v495
      %v554 = vpack.c.b16 %v498, %v497
      %v555 = vpack.c.b16 %v500, %v499
      %v556 = vpack.c.b16 %v502, %v501
      %v557 = vpack.c.b16 %v504, %v503
      %v558 = vpack.c.b16 %v506, %v505
      %v559 = vpack.c.b16 %v508, %v507
      %v560 = vpack.c.b16 %v510, %v509
      %v561 = vpack.c.b16 %v512, %v511
      %v562 = vpack.c.b16 %v514, %v513
      %v563 = vpack.c.b16 %v516, %v515
      %v564 = vpack.c.b16 %v518, %v517
      %v565 = vpack.c.b16 %v520, %v519
      %v566 = vpack.c.b16 %v522, %v521
      %v567 = vpack.c.b16 %v524, %v523
      %v568 = vpack.c.b16 %v526, %v525
      %v569 = vpack.c.b16 %v528, %v527
      %v570 = vpack.c.b16 %v530, %v529
      %v571 = vpack.c.b16 %v532, %v531
      %v572 = vpack.c.b16 %v534, %v533
      %v573 = vpack.c.b16 %v536, %v535
      %v574 = vpack.c.b16 %v538, %v537
      %v575 = vpack.c.b16 %v540, %v539
      %v576 = vpack.c.b16 %v542, %v541
      %v577 = vpack.c.b16 %v544, %v543
      %v578 = vpack.c.b16 %v546, %v545
      %v583 = vunpack.c.l.b16 %v415
      %v584 = vunpack.c.l.b16 %v416
      %v585 = vunpack.c.l.b16 %v417
      %v586 = vunpack.c.l.b16 %v418
      %v587 = vpack.c.b16 %v584, %v583
      %v588 = vpack.c.b16 %v586, %v585
      %vm591 = vcmask 261120
      %v593 = vsel %vm591, %v547, 0
      %v596 = vsel %vm591, %v548, 0
      %v599 = vsel %vm591, %v549, 0
      %v602 = vsel %vm591, %v550, 0
      %v605 = vsel %vm591, %v551, 0
      %v608 = vsel %vm591, %v552, 0
      %v611 = vsel %vm591, %v553, 0
      %v614 = vsel %vm591, %v554, 0
      %v617 = vsel %vm591, %v555, 0
      %v620 = vsel %vm591, %v556, 0
      %v623 = vsel %vm591, %v557, 0
      %v626 = vsel %vm591, %v558, 0
      %v629 = vsel %vm591, %v559, 0
      %v632 = vsel %vm591, %v560, 0
      %v635 = vsel %vm591, %v561, 0
      %v638 = vsel %vm591, %v562, 0
      %v641 = vsel %vm591, %v563, 0
      %v644 = vsel %vm591, %v564, 0
      %v647 = vsel %vm591, %v565, 0
      %v650 = vsel %vm591, %v566, 0
      %v653 = vsel %vm591, %v567, 0
      %v656 = vsel %vm591, %v568, 0
      %v659 = vsel %vm591, %v569, 0
      %v662 = vsel %vm591, %v570, 0
      %v665 = vsel %vm591, %v571, 0
      %v668 = vsel %vm591, %v572, 0
      %v671 = vsel %vm591, %v573, 0
      %v674 = vsel %vm591, %v574, 0
      %v677 = vsel %vm591, %v575, 0
      %v680 = vsel %vm591, %v576, 0
      %v683 = vsel %vm591, %v577, 0
      %v686 = vsel %vm591, %v578, 0
      %688 = vmatprep.subr.bf16.mxu0 0
      %689 = vmatpush1.bf16.msra.mxu0 0
      %690 = vmatprep.subr.bf16.mxu0 0
      %691 = vmatpush1.bf16.msra.mxu0 0
      %692 = vmatprep.subr.bf16.mxu0 0
      %693 = vmatpush1.bf16.msra.mxu0 0
      %694 = vmatprep.subr.bf16.mxu0 0
      %695 = vmatpush1.bf16.msra.mxu0 0
      %696 = vmatprep.subr.bf16.mxu0 0
      %697 = vmatpush1.bf16.msra.mxu0 0
      %698 = vmatprep.subr.bf16.mxu0 0
      %699 = vmatpush1.bf16.msra.mxu0 0
      %700 = vmatprep.subr.bf16.mxu0 0
      %701 = vmatpush1.bf16.msra.mxu0 %v588
      %702 = vmatprep.subr.bf16.mxu0 0
      %703 = vmatpush1.bf16.msra.mxu0 %v587
      %704 = vmatprep.subr.bf16.mxu0 0
      %705 = vmatpush2.bf16.msra.mxu0 0
      %706 = vmatprep.subr.bf16.mxu0 0
      %707 = vmatpush2.bf16.msra.mxu0 0
      %708 = vmatprep.subr.bf16.mxu0 0
      %709 = vmatpush2.bf16.msra.mxu0 0
      %710 = vmatprep.subr.bf16.mxu0 0
      %711 = vmatpush2.bf16.msra.mxu0 0
      %712 = vmatprep.subr.bf16.mxu0 0
      %713 = vmatpush2.bf16.msra.mxu0 0
      %714 = vmatprep.subr.bf16.mxu0 0
      %715 = vmatpush2.bf16.msra.mxu0 0
      %716 = vmatprep.subr.bf16.mxu0 0
      %717 = vmatpush2.bf16.msra.mxu0 0
      %718 = vmatprep.subr.bf16.mxu0 0
      %719 = vmatpush2.bf16.msra.mxu0 0
      %720 = vmatprep.mubr.bf16.mxu0 0
      %721 = vmatmul.mubr.bf16.gmra.mxu0 %v593
      %v722 = vpop.f32.mrf.mxu0
      %v723 = vadd.f32 0.0, %v722
      %v724 = vpop.f32.mrf.mxu0
      %v725 = vpop.f32.mrf.mxu0
      %v726 = vadd.f32 0.0, %v725
      %v727 = vpop.f32.mrf.mxu0
      %728 = vmatprep.mubr.bf16.mxu0 0
      %729 = vmatmul.mubr.bf16.gmra.mxu0 %v596
      %v730 = vpop.f32.mrf.mxu0
      %v731 = vadd.f32 0.0, %v730
      %v732 = vpop.f32.mrf.mxu0
      %v733 = vpop.f32.mrf.mxu0
      %v734 = vadd.f32 0.0, %v733
      %v735 = vpop.f32.mrf.mxu0
      %736 = vmatprep.mubr.bf16.mxu0 0
      %737 = vmatmul.mubr.bf16.gmra.mxu0 %v599
      %v738 = vpop.f32.mrf.mxu0
      %v739 = vadd.f32 0.0, %v738
      %v740 = vpop.f32.mrf.mxu0
      %v741 = vpop.f32.mrf.mxu0
      %v742 = vadd.f32 0.0, %v741
      %v743 = vpop.f32.mrf.mxu0
      %744 = vmatprep.mubr.bf16.mxu0 0
      %745 = vmatmul.mubr.bf16.gmra.mxu0 %v602
      %v746 = vpop.f32.mrf.mxu0
      %v747 = vadd.f32 0.0, %v746
      %v748 = vpop.f32.mrf.mxu0
      %v749 = vpop.f32.mrf.mxu0
      %v750 = vadd.f32 0.0, %v749
      %v751 = vpop.f32.mrf.mxu0
      %752 = vmatprep.mubr.bf16.mxu0 0
      %753 = vmatmul.mubr.bf16.gmra.mxu0 %v605
      %v754 = vpop.f32.mrf.mxu0
      %v755 = vadd.f32 0.0, %v754
      %v756 = vpop.f32.mrf.mxu0
      %v757 = vpop.f32.mrf.mxu0
      %v758 = vadd.f32 0.0, %v757
      %v759 = vpop.f32.mrf.mxu0
      %760 = vmatprep.mubr.bf16.mxu0 0
      %761 = vmatmul.mubr.bf16.gmra.mxu0 %v608
      %v762 = vpop.f32.mrf.mxu0
      %v763 = vadd.f32 0.0, %v762
      %v764 = vpop.f32.mrf.mxu0
      %v765 = vpop.f32.mrf.mxu0
      %v766 = vadd.f32 0.0, %v765
      %v767 = vpop.f32.mrf.mxu0
      %768 = vmatprep.mubr.bf16.mxu0 0
      %769 = vmatmul.mubr.bf16.gmra.mxu0 %v611
      %v770 = vpop.f32.mrf.mxu0
      %v771 = vadd.f32 0.0, %v770
      %v772 = vpop.f32.mrf.mxu0
      %v773 = vpop.f32.mrf.mxu0
      %v774 = vadd.f32 0.0, %v773
      %v775 = vpop.f32.mrf.mxu0
      %776 = vmatprep.mubr.bf16.mxu0 0
      %777 = vmatmul.mubr.bf16.gmra.mxu0 %v614
      %v778 = vpop.f32.mrf.mxu0
      %v779 = vadd.f32 0.0, %v778
      %v780 = vpop.f32.mrf.mxu0
      %v781 = vpop.f32.mrf.mxu0
      %v782 = vadd.f32 0.0, %v781
      %v783 = vpop.f32.mrf.mxu0
      %784 = vmatprep.mubr.bf16.mxu0 0
      %785 = vmatmul.mubr.bf16.gmra.mxu0 %v617
      %v786 = vpop.f32.mrf.mxu0
      %v787 = vadd.f32 0.0, %v786
      %v788 = vpop.f32.mrf.mxu0
      %v789 = vpop.f32.mrf.mxu0
      %v790 = vadd.f32 0.0, %v789
      %v791 = vpop.f32.mrf.mxu0
      %792 = vmatprep.mubr.bf16.mxu0 0
      %793 = vmatmul.mubr.bf16.gmra.mxu0 %v620
      %v794 = vpop.f32.mrf.mxu0
      %v795 = vadd.f32 0.0, %v794
      %v796 = vpop.f32.mrf.mxu0
      %v797 = vpop.f32.mrf.mxu0
      %v798 = vadd.f32 0.0, %v797
      %v799 = vpop.f32.mrf.mxu0
      %800 = vmatprep.mubr.bf16.mxu0 0
      %801 = vmatmul.mubr.bf16.gmra.mxu0 %v623
      %v802 = vpop.f32.mrf.mxu0
      %v803 = vadd.f32 0.0, %v802
      %v804 = vpop.f32.mrf.mxu0
      %v805 = vpop.f32.mrf.mxu0
      %v806 = vadd.f32 0.0, %v805
      %v807 = vpop.f32.mrf.mxu0
      %808 = vmatprep.mubr.bf16.mxu0 0
      %809 = vmatmul.mubr.bf16.gmra.mxu0 %v626
      %v810 = vpop.f32.mrf.mxu0
      %v811 = vadd.f32 0.0, %v810
      %v812 = vpop.f32.mrf.mxu0
      %v813 = vpop.f32.mrf.mxu0
      %v814 = vadd.f32 0.0, %v813
      %v815 = vpop.f32.mrf.mxu0
      %816 = vmatprep.mubr.bf16.mxu0 0
      %817 = vmatmul.mubr.bf16.gmra.mxu0 %v629
      %v818 = vpop.f32.mrf.mxu0
      %v819 = vadd.f32 0.0, %v818
      %v820 = vpop.f32.mrf.mxu0
      %v821 = vpop.f32.mrf.mxu0
      %v822 = vadd.f32 0.0, %v821
      %v823 = vpop.f32.mrf.mxu0
      %824 = vmatprep.mubr.bf16.mxu0 0
      %825 = vmatmul.mubr.bf16.gmra.mxu0 %v632
      %v826 = vpop.f32.mrf.mxu0
      %v827 = vadd.f32 0.0, %v826
      %v828 = vpop.f32.mrf.mxu0
      %v829 = vpop.f32.mrf.mxu0
      %v830 = vadd.f32 0.0, %v829
      %v831 = vpop.f32.mrf.mxu0
      %832 = vmatprep.mubr.bf16.mxu0 0
      %833 = vmatmul.mubr.bf16.gmra.mxu0 %v635
      %v834 = vpop.f32.mrf.mxu0
      %v835 = vadd.f32 0.0, %v834
      %v836 = vpop.f32.mrf.mxu0
      %v837 = vpop.f32.mrf.mxu0
      %v838 = vadd.f32 0.0, %v837
      %v839 = vpop.f32.mrf.mxu0
      %840 = vmatprep.mubr.bf16.mxu0 0
      %841 = vmatmul.mubr.bf16.gmra.mxu0 %v638
      %v842 = vpop.f32.mrf.mxu0
      %v843 = vadd.f32 0.0, %v842
      %v844 = vpop.f32.mrf.mxu0
      %v845 = vpop.f32.mrf.mxu0
      %v846 = vadd.f32 0.0, %v845
      %v847 = vpop.f32.mrf.mxu0
      %848 = vmatprep.mubr.bf16.mxu0 0
      %849 = vmatmul.mubr.bf16.gmra.mxu0 %v641
      %v850 = vpop.f32.mrf.mxu0
      %v851 = vadd.f32 0.0, %v850
      %v852 = vpop.f32.mrf.mxu0
      %v853 = vpop.f32.mrf.mxu0
      %v854 = vadd.f32 0.0, %v853
      %v855 = vpop.f32.mrf.mxu0
      %856 = vmatprep.mubr.bf16.mxu0 0
      %857 = vmatmul.mubr.bf16.gmra.mxu0 %v644
      %v858 = vpop.f32.mrf.mxu0
      %v859 = vadd.f32 0.0, %v858
      %v860 = vpop.f32.mrf.mxu0
      %v861 = vpop.f32.mrf.mxu0
      %v862 = vadd.f32 0.0, %v861
      %v863 = vpop.f32.mrf.mxu0
      %864 = vmatprep.mubr.bf16.mxu0 0
      %865 = vmatmul.mubr.bf16.gmra.mxu0 %v647
      %v866 = vpop.f32.mrf.mxu0
      %v867 = vadd.f32 0.0, %v866
      %v868 = vpop.f32.mrf.mxu0
      %v869 = vpop.f32.mrf.mxu0
      %v870 = vadd.f32 0.0, %v869
      %v871 = vpop.f32.mrf.mxu0
      %872 = vmatprep.mubr.bf16.mxu0 0
      %873 = vmatmul.mubr.bf16.gmra.mxu0 %v650
      %v874 = vpop.f32.mrf.mxu0
      %v875 = vadd.f32 0.0, %v874
      %v876 = vpop.f32.mrf.mxu0
      %v877 = vpop.f32.mrf.mxu0
      %v878 = vadd.f32 0.0, %v877
      %v879 = vpop.f32.mrf.mxu0
      %880 = vmatprep.mubr.bf16.mxu0 0
      %881 = vmatmul.mubr.bf16.gmra.mxu0 %v653
      %v882 = vpop.f32.mrf.mxu0
      %v883 = vadd.f32 0.0, %v882
      %v884 = vpop.f32.mrf.mxu0
      %v885 = vpop.f32.mrf.mxu0
      %v886 = vadd.f32 0.0, %v885
      %v887 = vpop.f32.mrf.mxu0
      %888 = vmatprep.mubr.bf16.mxu0 0
      %889 = vmatmul.mubr.bf16.gmra.mxu0 %v656
      %v890 = vpop.f32.mrf.mxu0
      %v891 = vadd.f32 0.0, %v890
      %v892 = vpop.f32.mrf.mxu0
      %v893 = vpop.f32.mrf.mxu0
      %v894 = vadd.f32 0.0, %v893
      %v895 = vpop.f32.mrf.mxu0
      %896 = vmatprep.mubr.bf16.mxu0 0
      %897 = vmatmul.mubr.bf16.gmra.mxu0 %v659
      %v898 = vpop.f32.mrf.mxu0
      %v899 = vadd.f32 0.0, %v898
      %v900 = vpop.f32.mrf.mxu0
      %v901 = vpop.f32.mrf.mxu0
      %v902 = vadd.f32 0.0, %v901
      %v903 = vpop.f32.mrf.mxu0
      %904 = vmatprep.mubr.bf16.mxu0 0
      %905 = vmatmul.mubr.bf16.gmra.mxu0 %v662
      %v906 = vpop.f32.mrf.mxu0
      %v907 = vadd.f32 0.0, %v906
      %v908 = vpop.f32.mrf.mxu0
      %v909 = vpop.f32.mrf.mxu0
      %v910 = vadd.f32 0.0, %v909
      %v911 = vpop.f32.mrf.mxu0
      %912 = vmatprep.mubr.bf16.mxu0 0
      %913 = vmatmul.mubr.bf16.gmra.mxu0 %v665
      %v914 = vpop.f32.mrf.mxu0
      %v915 = vadd.f32 0.0, %v914
      %v916 = vpop.f32.mrf.mxu0
      %v917 = vpop.f32.mrf.mxu0
      %v918 = vadd.f32 0.0, %v917
      %v919 = vpop.f32.mrf.mxu0
      %920 = vmatprep.mubr.bf16.mxu0 0
      %921 = vmatmul.mubr.bf16.gmra.mxu0 %v668
      %v922 = vpop.f32.mrf.mxu0
      %v923 = vadd.f32 0.0, %v922
      %v924 = vpop.f32.mrf.mxu0
      %v925 = vpop.f32.mrf.mxu0
      %v926 = vadd.f32 0.0, %v925
      %v927 = vpop.f32.mrf.mxu0
      %928 = vmatprep.mubr.bf16.mxu0 0
      %929 = vmatmul.mubr.bf16.gmra.mxu0 %v671
      %v930 = vpop.f32.mrf.mxu0
      %v931 = vadd.f32 0.0, %v930
      %v932 = vpop.f32.mrf.mxu0
      %v933 = vpop.f32.mrf.mxu0
      %v934 = vadd.f32 0.0, %v933
      %v935 = vpop.f32.mrf.mxu0
      %936 = vmatprep.mubr.bf16.mxu0 0
      %937 = vmatmul.mubr.bf16.gmra.mxu0 %v674
      %v938 = vpop.f32.mrf.mxu0
      %v939 = vadd.f32 0.0, %v938
      %v940 = vpop.f32.mrf.mxu0
      %v941 = vpop.f32.mrf.mxu0
      %v942 = vadd.f32 0.0, %v941
      %v943 = vpop.f32.mrf.mxu0
      %944 = vmatprep.mubr.bf16.mxu0 0
      %945 = vmatmul.mubr.bf16.gmra.mxu0 %v677
      %v946 = vpop.f32.mrf.mxu0
      %v947 = vadd.f32 0.0, %v946
      %v948 = vpop.f32.mrf.mxu0
      %v949 = vpop.f32.mrf.mxu0
      %v950 = vadd.f32 0.0, %v949
      %v951 = vpop.f32.mrf.mxu0
      %952 = vmatprep.mubr.bf16.mxu0 0
      %953 = vmatmul.mubr.bf16.gmra.mxu0 %v680
      %v954 = vpop.f32.mrf.mxu0
      %v955 = vadd.f32 0.0, %v954
      %v956 = vpop.f32.mrf.mxu0
      %v957 = vpop.f32.mrf.mxu0
      %v958 = vadd.f32 0.0, %v957
      %v959 = vpop.f32.mrf.mxu0
      %960 = vmatprep.mubr.bf16.mxu0 0
      %961 = vmatmul.mubr.bf16.gmra.mxu0 %v683
      %v962 = vpop.f32.mrf.mxu0
      %v963 = vadd.f32 0.0, %v962
      %v964 = vpop.f32.mrf.mxu0
      %v965 = vpop.f32.mrf.mxu0
      %v966 = vadd.f32 0.0, %v965
      %v967 = vpop.f32.mrf.mxu0
      %968 = vmatprep.mubr.bf16.mxu0 0
      %969 = vmatmul.mubr.bf16.gmra.mxu0 %v686
      %v970 = vpop.f32.mrf.mxu0
      %v971 = vadd.f32 0.0, %v970
      %v972 = vpop.f32.mrf.mxu0
      %v973 = vpop.f32.mrf.mxu0
      %v974 = vadd.f32 0.0, %v973
      %v975 = vpop.f32.mrf.mxu0
      %976 = vdwg.mxu0
      %v977 = vadd.f32 %v287, %v723
      %v978 = vadd.f32 %v288, %v726
      %v979 = vadd.f32 %v289, %v731
      %v980 = vadd.f32 %v290, %v734
      %v981 = vadd.f32 %v291, %v739
      %v982 = vadd.f32 %v292, %v742
      %v983 = vadd.f32 %v293, %v747
      %v984 = vadd.f32 %v294, %v750
      %v985 = vadd.f32 %v295, %v755
      %v986 = vadd.f32 %v296, %v758
      %v987 = vadd.f32 %v297, %v763
      %v988 = vadd.f32 %v298, %v766
      %v989 = vadd.f32 %v299, %v771
      %v990 = vadd.f32 %v300, %v774
      %v991 = vadd.f32 %v301, %v779
      %v992 = vadd.f32 %v302, %v782
      %v993 = vadd.f32 %v303, %v787
      %v994 = vadd.f32 %v304, %v790
      %v995 = vadd.f32 %v305, %v795
      %v996 = vadd.f32 %v306, %v798
      %v997 = vadd.f32 %v307, %v803
      %v998 = vadd.f32 %v308, %v806
      %v999 = vadd.f32 %v309, %v811
      %v1000 = vadd.f32 %v310, %v814
      %v1001 = vadd.f32 %v311, %v819
      %v1002 = vadd.f32 %v312, %v822
      %v1003 = vadd.f32 %v313, %v827
      %v1004 = vadd.f32 %v314, %v830
      %v1005 = vadd.f32 %v315, %v835
      %v1006 = vadd.f32 %v316, %v838
      %v1007 = vadd.f32 %v317, %v843
      %v1008 = vadd.f32 %v318, %v846
      %v1009 = vadd.f32 %v319, %v851
      %v1010 = vadd.f32 %v320, %v854
      %v1011 = vadd.f32 %v321, %v859
      %v1012 = vadd.f32 %v322, %v862
      %v1013 = vadd.f32 %v323, %v867
      %v1014 = vadd.f32 %v324, %v870
      %v1015 = vadd.f32 %v325, %v875
      %v1016 = vadd.f32 %v326, %v878
      %v1017 = vadd.f32 %v327, %v883
      %v1018 = vadd.f32 %v328, %v886
      %v1019 = vadd.f32 %v329, %v891
      %v1020 = vadd.f32 %v330, %v894
      %v1021 = vadd.f32 %v331, %v899
      %v1022 = vadd.f32 %v332, %v902
      %v1023 = vadd.f32 %v333, %v907
      %v1024 = vadd.f32 %v334, %v910
      %v1025 = vadd.f32 %v335, %v915
      %v1026 = vadd.f32 %v336, %v918
      %v1027 = vadd.f32 %v337, %v923
      %v1028 = vadd.f32 %v338, %v926
      %v1029 = vadd.f32 %v339, %v931
      %v1030 = vadd.f32 %v340, %v934
      %v1031 = vadd.f32 %v341, %v939
      %v1032 = vadd.f32 %v342, %v942
      %v1033 = vadd.f32 %v343, %v947
      %v1034 = vadd.f32 %v344, %v950
      %v1035 = vadd.f32 %v345, %v955
      %v1036 = vadd.f32 %v346, %v958
      %v1037 = vadd.f32 %v347, %v963
      %v1038 = vadd.f32 %v348, %v966
      %v1039 = vadd.f32 %v349, %v971
      %v1040 = vadd.f32 %v350, %v974
      %1041 = vst [vmem:[#allocation2] sm:$0xff] %v977
      %1042 = vst [vmem:[#allocation2 + $0x8] sm:$0xff] %v978
      %1043 = vst [vmem:[#allocation2 + $0x10] sm:$0xff] %v979
      %1044 = vst [vmem:[#allocation2 + $0x18] sm:$0xff] %v980
      %1045 = vst [vmem:[#allocation2 + $0x20] sm:$0xff] %v981
      %1046 = vst [vmem:[#allocation2 + $0x28] sm:$0xff] %v982
      %1047 = vst [vmem:[#allocation2 + $0x30] sm:$0xff] %v983
      %1048 = vst [vmem:[#allocation2 + $0x38] sm:$0xff] %v984
      %1049 = vst [vmem:[#allocation2 + $0x40] sm:$0xff] %v985
      %1050 = vst [vmem:[#allocation2 + $0x48] sm:$0xff] %v986
      %1051 = vst [vmem:[#allocation2 + $0x50] sm:$0xff] %v987
      %1052 = vst [vmem:[#allocation2 + $0x58] sm:$0xff] %v988
      %1053 = vst [vmem:[#allocation2 + $0x60] sm:$0xff] %v989
      %1054 = vst [vmem:[#allocation2 + $0x68] sm:$0xff] %v990
      %1055 = vst [vmem:[#allocation2 + $0x70] sm:$0xff] %v991
      %1056 = vst [vmem:[#allocation2 + $0x78] sm:$0xff] %v992
      %1057 = vst [vmem:[#allocation2 + $0x80] sm:$0xff] %v993
      %1058 = vst [vmem:[#allocation2 + $0x88] sm:$0xff] %v994
      %1059 = vst [vmem:[#allocation2 + $0x90] sm:$0xff] %v995
      %1060 = vst [vmem:[#allocation2 + $0x98] sm:$0xff] %v996
      %1061 = vst [vmem:[#allocation2 + $0xa0] sm:$0xff] %v997
      %1062 = vst [vmem:[#allocation2 + $0xa8] sm:$0xff] %v998
      %1063 = vst [vmem:[#allocation2 + $0xb0] sm:$0xff] %v999
      %1064 = vst [vmem:[#allocation2 + $0xb8] sm:$0xff] %v1000
      %1065 = vst [vmem:[#allocation2 + $0xc0] sm:$0xff] %v1001
      %1066 = vst [vmem:[#allocation2 + $0xc8] sm:$0xff] %v1002
      %1067 = vst [vmem:[#allocation2 + $0xd0] sm:$0xff] %v1003
      %1068 = vst [vmem:[#allocation2 + $0xd8] sm:$0xff] %v1004
      %1069 = vst [vmem:[#allocation2 + $0xe0] sm:$0xff] %v1005
      %1070 = vst [vmem:[#allocation2 + $0xe8] sm:$0xff] %v1006
      %1071 = vst [vmem:[#allocation2 + $0xf0] sm:$0xff] %v1007
      %1072 = vst [vmem:[#allocation2 + $0xf8] sm:$0xff] %v1008
      %1073 = vst [vmem:[#allocation2 + $0x100] sm:$0xff] %v1009
      %1074 = vst [vmem:[#allocation2 + $0x108] sm:$0xff] %v1010
      %1075 = vst [vmem:[#allocation2 + $0x110] sm:$0xff] %v1011
      %1076 = vst [vmem:[#allocation2 + $0x118] sm:$0xff] %v1012
      %1077 = vst [vmem:[#allocation2 + $0x120] sm:$0xff] %v1013
      %1078 = vst [vmem:[#allocation2 + $0x128] sm:$0xff] %v1014
      %1079 = vst [vmem:[#allocation2 + $0x130] sm:$0xff] %v1015
      %1080 = vst [vmem:[#allocation2 + $0x138] sm:$0xff] %v1016
      %1081 = vst [vmem:[#allocation2 + $0x140] sm:$0xff] %v1017
      %1082 = vst [vmem:[#allocation2 + $0x148] sm:$0xff] %v1018
      %1083 = vst [vmem:[#allocation2 + $0x150] sm:$0xff] %v1019
      %1084 = vst [vmem:[#allocation2 + $0x158] sm:$0xff] %v1020
      %1085 = vst [vmem:[#allocation2 + $0x160] sm:$0xff] %v1021
      %1086 = vst [vmem:[#allocation2 + $0x168] sm:$0xff] %v1022
      %1087 = vst [vmem:[#allocation2 + $0x170] sm:$0xff] %v1023
      %1088 = vst [vmem:[#allocation2 + $0x178] sm:$0xff] %v1024
      %1089 = vst [vmem:[#allocation2 + $0x180] sm:$0xff] %v1025
      %1090 = vst [vmem:[#allocation2 + $0x188] sm:$0xff] %v1026
      %1091 = vst [vmem:[#allocation2 + $0x190] sm:$0xff] %v1027
      %1092 = vst [vmem:[#allocation2 + $0x198] sm:$0xff] %v1028
      %1093 = vst [vmem:[#allocation2 + $0x1a0] sm:$0xff] %v1029
      %1094 = vst [vmem:[#allocation2 + $0x1a8] sm:$0xff] %v1030
      %1095 = vst [vmem:[#allocation2 + $0x1b0] sm:$0xff] %v1031
      %1096 = vst [vmem:[#allocation2 + $0x1b8] sm:$0xff] %v1032
      %1097 = vst [vmem:[#allocation2 + $0x1c0] sm:$0xff] %v1033
      %1098 = vst [vmem:[#allocation2 + $0x1c8] sm:$0xff] %v1034
      %1099 = vst [vmem:[#allocation2 + $0x1d0] sm:$0xff] %v1035
      %1100 = vst [vmem:[#allocation2 + $0x1d8] sm:$0xff] %v1036
      %1101 = vst [vmem:[#allocation2 + $0x1e0] sm:$0xff] %v1037
      %1102 = vst [vmem:[#allocation2 + $0x1e8] sm:$0xff] %v1038
      %1103 = vst [vmem:[#allocation2 + $0x1f0] sm:$0xff] %v1039
      %1104 = vst [vmem:[#allocation2 + $0x1f8] sm:$0xff] %v1040
      // Predicated region
      $region33: #{icnet_forward.8} parent=27 // pred_check
        %p1105 = pneg %p219
      $region34: #{icnet_forward.8} parent=27 // pred_check_branch
        %1107 = sbr.rel (%p1105) target = $region36
      $region35: #{icnet_forward.8} parent=27 // pred_region
        %v1108 = vld [vmem:[#allocation2] sm:$0xff]
        %v1109 = vld [vmem:[#allocation2 + $0x8] sm:$0xff]
        %v1110 = vld [vmem:[#allocation2 + $0x10] sm:$0xff]
        %v1111 = vld [vmem:[#allocation2 + $0x18] sm:$0xff]
        %v1112 = vld [vmem:[#allocation2 + $0x20] sm:$0xff]
        %v1113 = vld [vmem:[#allocation2 + $0x28] sm:$0xff]
        %v1114 = vld [vmem:[#allocation2 + $0x30] sm:$0xff]
        %v1115 = vld [vmem:[#allocation2 + $0x38] sm:$0xff]
        %v1116 = vld [vmem:[#allocation2 + $0x40] sm:$0xff]
        %v1117 = vld [vmem:[#allocation2 + $0x48] sm:$0xff]
        %v1118 = vld [vmem:[#allocation2 + $0x50] sm:$0xff]
        %v1119 = vld [vmem:[#allocation2 + $0x58] sm:$0xff]
        %v1120 = vld [vmem:[#allocation2 + $0x60] sm:$0xff]
        %v1121 = vld [vmem:[#allocation2 + $0x68] sm:$0xff]
        %v1122 = vld [vmem:[#allocation2 + $0x70] sm:$0xff]
        %v1123 = vld [vmem:[#allocation2 + $0x78] sm:$0xff]
        %v1124 = vld [vmem:[#allocation2 + $0x80] sm:$0xff]
        %v1125 = vld [vmem:[#allocation2 + $0x88] sm:$0xff]
        %v1126 = vld [vmem:[#allocation2 + $0x90] sm:$0xff]
        %v1127 = vld [vmem:[#allocation2 + $0x98] sm:$0xff]
        %v1128 = vld [vmem:[#allocation2 + $0xa0] sm:$0xff]
        %v1129 = vld [vmem:[#allocation2 + $0xa8] sm:$0xff]
        %v1130 = vld [vmem:[#allocation2 + $0xb0] sm:$0xff]
        %v1131 = vld [vmem:[#allocation2 + $0xb8] sm:$0xff]
        %v1132 = vld [vmem:[#allocation2 + $0xc0] sm:$0xff]
        %v1133 = vld [vmem:[#allocation2 + $0xc8] sm:$0xff]
        %v1134 = vld [vmem:[#allocation2 + $0xd0] sm:$0xff]
        %v1135 = vld [vmem:[#allocation2 + $0xd8] sm:$0xff]
        %v1136 = vld [vmem:[#allocation2 + $0xe0] sm:$0xff]
        %v1137 = vld [vmem:[#allocation2 + $0xe8] sm:$0xff]
        %v1138 = vld [vmem:[#allocation2 + $0xf0] sm:$0xff]
        %v1139 = vld [vmem:[#allocation2 + $0xf8] sm:$0xff]
        %v1140 = vld [vmem:[#allocation2 + $0x100] sm:$0xff]
        %v1141 = vld [vmem:[#allocation2 + $0x108] sm:$0xff]
        %v1142 = vld [vmem:[#allocation2 + $0x110] sm:$0xff]
        %v1143 = vld [vmem:[#allocation2 + $0x118] sm:$0xff]
        %v1144 = vld [vmem:[#allocation2 + $0x120] sm:$0xff]
        %v1145 = vld [vmem:[#allocation2 + $0x128] sm:$0xff]
        %v1146 = vld [vmem:[#allocation2 + $0x130] sm:$0xff]
        %v1147 = vld [vmem:[#allocation2 + $0x138] sm:$0xff]
        %v1148 = vld [vmem:[#allocation2 + $0x140] sm:$0xff]
        %v1149 = vld [vmem:[#allocation2 + $0x148] sm:$0xff]
        %v1150 = vld [vmem:[#allocation2 + $0x150] sm:$0xff]
        %v1151 = vld [vmem:[#allocation2 + $0x158] sm:$0xff]
        %v1152 = vld [vmem:[#allocation2 + $0x160] sm:$0xff]
        %v1153 = vld [vmem:[#allocation2 + $0x168] sm:$0xff]
        %v1154 = vld [vmem:[#allocation2 + $0x170] sm:$0xff]
        %v1155 = vld [vmem:[#allocation2 + $0x178] sm:$0xff]
        %v1156 = vld [vmem:[#allocation2 + $0x180] sm:$0xff]
        %v1157 = vld [vmem:[#allocation2 + $0x188] sm:$0xff]
        %v1158 = vld [vmem:[#allocation2 + $0x190] sm:$0xff]
        %v1159 = vld [vmem:[#allocation2 + $0x198] sm:$0xff]
        %v1160 = vld [vmem:[#allocation2 + $0x1a0] sm:$0xff]
        %v1161 = vld [vmem:[#allocation2 + $0x1a8] sm:$0xff]
        %v1162 = vld [vmem:[#allocation2 + $0x1b0] sm:$0xff]
        %v1163 = vld [vmem:[#allocation2 + $0x1b8] sm:$0xff]
        %v1164 = vld [vmem:[#allocation2 + $0x1c0] sm:$0xff]
        %v1165 = vld [vmem:[#allocation2 + $0x1c8] sm:$0xff]
        %v1166 = vld [vmem:[#allocation2 + $0x1d0] sm:$0xff]
        %v1167 = vld [vmem:[#allocation2 + $0x1d8] sm:$0xff]
        %v1168 = vld [vmem:[#allocation2 + $0x1e0] sm:$0xff]
        %v1169 = vld [vmem:[#allocation2 + $0x1e8] sm:$0xff]
        %v1170 = vld [vmem:[#allocation2 + $0x1f0] sm:$0xff]
        %v1171 = vld [vmem:[#allocation2 + $0x1f8] sm:$0xff]
        %v1172 = vmax.f32 %v1108, 0.0
        %v1173 = vmax.f32 %v1109, 0.0
        %v1174 = vmax.f32 %v1110, 0.0
        %v1175 = vmax.f32 %v1111, 0.0
        %v1176 = vmax.f32 %v1112, 0.0
        %v1177 = vmax.f32 %v1113, 0.0
        %v1178 = vmax.f32 %v1114, 0.0
        %v1179 = vmax.f32 %v1115, 0.0
        %v1180 = vmax.f32 %v1116, 0.0
        %v1181 = vmax.f32 %v1117, 0.0
        %v1182 = vmax.f32 %v1118, 0.0
        %v1183 = vmax.f32 %v1119, 0.0
        %v1184 = vmax.f32 %v1120, 0.0
        %v1185 = vmax.f32 %v1121, 0.0
        %v1186 = vmax.f32 %v1122, 0.0
        %v1187 = vmax.f32 %v1123, 0.0
        %v1188 = vmax.f32 %v1124, 0.0
        %v1189 = vmax.f32 %v1125, 0.0
        %v1190 = vmax.f32 %v1126, 0.0
        %v1191 = vmax.f32 %v1127, 0.0
        %v1192 = vmax.f32 %v1128, 0.0
        %v1193 = vmax.f32 %v1129, 0.0
        %v1194 = vmax.f32 %v1130, 0.0
        %v1195 = vmax.f32 %v1131, 0.0
        %v1196 = vmax.f32 %v1132, 0.0
        %v1197 = vmax.f32 %v1133, 0.0
        %v1198 = vmax.f32 %v1134, 0.0
        %v1199 = vmax.f32 %v1135, 0.0
        %v1200 = vmax.f32 %v1136, 0.0
        %v1201 = vmax.f32 %v1137, 0.0
        %v1202 = vmax.f32 %v1138, 0.0
        %v1203 = vmax.f32 %v1139, 0.0
        %v1204 = vmax.f32 %v1140, 0.0
        %v1205 = vmax.f32 %v1141, 0.0
        %v1206 = vmax.f32 %v1142, 0.0
        %v1207 = vmax.f32 %v1143, 0.0
        %v1208 = vmax.f32 %v1144, 0.0
        %v1209 = vmax.f32 %v1145, 0.0
        %v1210 = vmax.f32 %v1146, 0.0
        %v1211 = vmax.f32 %v1147, 0.0
        %v1212 = vmax.f32 %v1148, 0.0
        %v1213 = vmax.f32 %v1149, 0.0
        %v1214 = vmax.f32 %v1150, 0.0
        %v1215 = vmax.f32 %v1151, 0.0
        %v1216 = vmax.f32 %v1152, 0.0
        %v1217 = vmax.f32 %v1153, 0.0
        %v1218 = vmax.f32 %v1154, 0.0
        %v1219 = vmax.f32 %v1155, 0.0
        %v1220 = vmax.f32 %v1156, 0.0
        %v1221 = vmax.f32 %v1157, 0.0
        %v1222 = vmax.f32 %v1158, 0.0
        %v1223 = vmax.f32 %v1159, 0.0
        %v1224 = vmax.f32 %v1160, 0.0
        %v1225 = vmax.f32 %v1161, 0.0
        %v1226 = vmax.f32 %v1162, 0.0
        %v1227 = vmax.f32 %v1163, 0.0
        %v1228 = vmax.f32 %v1164, 0.0
        %v1229 = vmax.f32 %v1165, 0.0
        %v1230 = vmax.f32 %v1166, 0.0
        %v1231 = vmax.f32 %v1167, 0.0
        %v1232 = vmax.f32 %v1168, 0.0
        %v1233 = vmax.f32 %v1169, 0.0
        %v1234 = vmax.f32 %v1170, 0.0
        %v1235 = vmax.f32 %v1171, 0.0
        %v1236 = vpack.c.bf16 %v1173, %v1172
        %v1237 = vpack.c.bf16 %v1175, %v1174
        %v1238 = vpack.c.bf16 %v1177, %v1176
        %v1239 = vpack.c.bf16 %v1179, %v1178
        %v1240 = vpack.c.bf16 %v1181, %v1180
        %v1241 = vpack.c.bf16 %v1183, %v1182
        %v1242 = vpack.c.bf16 %v1185, %v1184
        %v1243 = vpack.c.bf16 %v1187, %v1186
        %v1244 = vpack.c.bf16 %v1189, %v1188
        %v1245 = vpack.c.bf16 %v1191, %v1190
        %v1246 = vpack.c.bf16 %v1193, %v1192
        %v1247 = vpack.c.bf16 %v1195, %v1194
        %v1248 = vpack.c.bf16 %v1197, %v1196
        %v1249 = vpack.c.bf16 %v1199, %v1198
        %v1250 = vpack.c.bf16 %v1201, %v1200
        %v1251 = vpack.c.bf16 %v1203, %v1202
        %v1252 = vpack.c.bf16 %v1205, %v1204
        %v1253 = vpack.c.bf16 %v1207, %v1206
        %v1254 = vpack.c.bf16 %v1209, %v1208
        %v1255 = vpack.c.bf16 %v1211, %v1210
        %v1256 = vpack.c.bf16 %v1213, %v1212
        %v1257 = vpack.c.bf16 %v1215, %v1214
        %v1258 = vpack.c.bf16 %v1217, %v1216
        %v1259 = vpack.c.bf16 %v1219, %v1218
        %v1260 = vpack.c.bf16 %v1221, %v1220
        %v1261 = vpack.c.bf16 %v1223, %v1222
        %v1262 = vpack.c.bf16 %v1225, %v1224
        %v1263 = vpack.c.bf16 %v1227, %v1226
        %v1264 = vpack.c.bf16 %v1229, %v1228
        %v1265 = vpack.c.bf16 %v1231, %v1230
        %v1266 = vpack.c.bf16 %v1233, %v1232
        %v1267 = vpack.c.bf16 %v1235, %v1234
        %v1300 = vunpack.c.l.b16 %v1236
        %v1301 = vunpack.c.h.b16 %v1236
        %v1302 = vunpack.c.l.b16 %v1237
        %v1303 = vunpack.c.h.b16 %v1237
        %v1304 = vunpack.c.l.b16 %v1238
        %v1305 = vunpack.c.h.b16 %v1238
        %v1306 = vunpack.c.l.b16 %v1239
        %v1307 = vunpack.c.h.b16 %v1239
        %v1308 = vunpack.c.l.b16 %v1240
        %v1309 = vunpack.c.h.b16 %v1240
        %v1310 = vunpack.c.l.b16 %v1241
        %v1311 = vunpack.c.h.b16 %v1241
        %v1312 = vunpack.c.l.b16 %v1242
        %v1313 = vunpack.c.h.b16 %v1242
        %v1314 = vunpack.c.l.b16 %v1243
        %v1315 = vunpack.c.h.b16 %v1243
        %v1316 = vunpack.c.l.b16 %v1244
        %v1317 = vunpack.c.h.b16 %v1244
        %v1318 = vunpack.c.l.b16 %v1245
        %v1319 = vunpack.c.h.b16 %v1245
        %v1320 = vunpack.c.l.b16 %v1246
        %v1321 = vunpack.c.h.b16 %v1246
        %v1322 = vunpack.c.l.b16 %v1247
        %v1323 = vunpack.c.h.b16 %v1247
        %v1324 = vunpack.c.l.b16 %v1248
        %v1325 = vunpack.c.h.b16 %v1248
        %v1326 = vunpack.c.l.b16 %v1249
        %v1327 = vunpack.c.h.b16 %v1249
        %v1328 = vunpack.c.l.b16 %v1250
        %v1329 = vunpack.c.h.b16 %v1250
        %v1330 = vunpack.c.l.b16 %v1251
        %v1331 = vunpack.c.h.b16 %v1251
        %v1332 = vunpack.c.l.b16 %v1252
        %v1333 = vunpack.c.h.b16 %v1252
        %v1334 = vunpack.c.l.b16 %v1253
        %v1335 = vunpack.c.h.b16 %v1253
        %v1336 = vunpack.c.l.b16 %v1254
        %v1337 = vunpack.c.h.b16 %v1254
        %v1338 = vunpack.c.l.b16 %v1255
        %v1339 = vunpack.c.h.b16 %v1255
        %v1340 = vunpack.c.l.b16 %v1256
        %v1341 = vunpack.c.h.b16 %v1256
        %v1342 = vunpack.c.l.b16 %v1257
        %v1343 = vunpack.c.h.b16 %v1257
        %v1344 = vunpack.c.l.b16 %v1258
        %v1345 = vunpack.c.h.b16 %v1258
        %v1346 = vunpack.c.l.b16 %v1259
        %v1347 = vunpack.c.h.b16 %v1259
        %v1348 = vunpack.c.l.b16 %v1260
        %v1349 = vunpack.c.h.b16 %v1260
        %v1350 = vunpack.c.l.b16 %v1261
        %v1351 = vunpack.c.h.b16 %v1261
        %v1352 = vunpack.c.l.b16 %v1262
        %v1353 = vunpack.c.h.b16 %v1262
        %v1354 = vunpack.c.l.b16 %v1263
        %v1355 = vunpack.c.h.b16 %v1263
        %v1356 = vunpack.c.l.b16 %v1264
        %v1357 = vunpack.c.h.b16 %v1264
        %v1358 = vunpack.c.l.b16 %v1265
        %v1359 = vunpack.c.h.b16 %v1265
        %v1360 = vunpack.c.l.b16 %v1266
        %v1361 = vunpack.c.h.b16 %v1266
        %v1362 = vunpack.c.l.b16 %v1267
        %v1363 = vunpack.c.h.b16 %v1267
        %v1364 = vpack.c.b16 %v1300, %v1300
        %v1365 = vpack.c.b16 %v1301, %v1301
        %v1366 = vpack.c.b16 %v1302, %v1302
        %v1367 = vpack.c.b16 %v1303, %v1303
        %v1368 = vpack.c.b16 %v1304, %v1304
        %v1369 = vpack.c.b16 %v1305, %v1305
        %v1370 = vpack.c.b16 %v1306, %v1306
        %v1371 = vpack.c.b16 %v1307, %v1307
        %v1372 = vpack.c.b16 %v1308, %v1308
        %v1373 = vpack.c.b16 %v1309, %v1309
        %v1374 = vpack.c.b16 %v1310, %v1310
        %v1375 = vpack.c.b16 %v1311, %v1311
        %v1376 = vpack.c.b16 %v1312, %v1312
        %v1377 = vpack.c.b16 %v1313, %v1313
        %v1378 = vpack.c.b16 %v1314, %v1314
        %v1379 = vpack.c.b16 %v1315, %v1315
        %v1380 = vpack.c.b16 %v1316, %v1316
        %v1381 = vpack.c.b16 %v1317, %v1317
        %v1382 = vpack.c.b16 %v1318, %v1318
        %v1383 = vpack.c.b16 %v1319, %v1319
        %v1384 = vpack.c.b16 %v1320, %v1320
        %v1385 = vpack.c.b16 %v1321, %v1321
        %v1386 = vpack.c.b16 %v1322, %v1322
        %v1387 = vpack.c.b16 %v1323, %v1323
        %v1388 = vpack.c.b16 %v1324, %v1324
        %v1389 = vpack.c.b16 %v1325, %v1325
        %v1390 = vpack.c.b16 %v1326, %v1326
        %v1391 = vpack.c.b16 %v1327, %v1327
        %v1392 = vpack.c.b16 %v1328, %v1328
        %v1393 = vpack.c.b16 %v1329, %v1329
        %v1394 = vpack.c.b16 %v1330, %v1330
        %v1395 = vpack.c.b16 %v1331, %v1331
        %v1396 = vpack.c.b16 %v1332, %v1332
        %v1397 = vpack.c.b16 %v1333, %v1333
        %v1398 = vpack.c.b16 %v1334, %v1334
        %v1399 = vpack.c.b16 %v1335, %v1335
        %v1400 = vpack.c.b16 %v1336, %v1336
        %v1401 = vpack.c.b16 %v1337, %v1337
        %v1402 = vpack.c.b16 %v1338, %v1338
        %v1403 = vpack.c.b16 %v1339, %v1339
        %v1404 = vpack.c.b16 %v1340, %v1340
        %v1405 = vpack.c.b16 %v1341, %v1341
        %v1406 = vpack.c.b16 %v1342, %v1342
        %v1407 = vpack.c.b16 %v1343, %v1343
        %v1408 = vpack.c.b16 %v1344, %v1344
        %v1409 = vpack.c.b16 %v1345, %v1345
        %v1410 = vpack.c.b16 %v1346, %v1346
        %v1411 = vpack.c.b16 %v1347, %v1347
        %v1412 = vpack.c.b16 %v1348, %v1348
        %v1413 = vpack.c.b16 %v1349, %v1349
        %v1414 = vpack.c.b16 %v1350, %v1350
        %v1415 = vpack.c.b16 %v1351, %v1351
        %v1416 = vpack.c.b16 %v1352, %v1352
        %v1417 = vpack.c.b16 %v1353, %v1353
        %v1418 = vpack.c.b16 %v1354, %v1354
        %v1419 = vpack.c.b16 %v1355, %v1355
        %v1420 = vpack.c.b16 %v1356, %v1356
        %v1421 = vpack.c.b16 %v1357, %v1357
        %v1422 = vpack.c.b16 %v1358, %v1358
        %v1423 = vpack.c.b16 %v1359, %v1359
        %v1424 = vpack.c.b16 %v1360, %v1360
        %v1425 = vpack.c.b16 %v1361, %v1361
        %v1426 = vpack.c.b16 %v1362, %v1362
        %v1427 = vpack.c.b16 %v1363, %v1363
        %1492 = vst [vmem:[%s216] sm:$0xf] %v1364
        %1493 = vst [vmem:[%s216 + $0x4] sm:$0xf] %v1365
        %1494 = vst [vmem:[%s216 + $0x8] sm:$0xf] %v1366
        %1495 = vst [vmem:[%s216 + $0xc] sm:$0xf] %v1367
        %1496 = vst [vmem:[%s216 + $0x10] sm:$0xf] %v1368
        %1497 = vst [vmem:[%s216 + $0x14] sm:$0xf] %v1369
        %1498 = vst [vmem:[%s216 + $0x18] sm:$0xf] %v1370
        %1499 = vst [vmem:[%s216 + $0x1c] sm:$0xf] %v1371
        %1500 = vst [vmem:[%s216 + $0x20] sm:$0xf] %v1372
        %1501 = vst [vmem:[%s216 + $0x24] sm:$0xf] %v1373
        %1502 = vst [vmem:[%s216 + $0x28] sm:$0xf] %v1374
        %1503 = vst [vmem:[%s216 + $0x2c] sm:$0xf] %v1375
        %1504 = vst [vmem:[%s216 + $0x30] sm:$0xf] %v1376
        %1505 = vst [vmem:[%s216 + $0x34] sm:$0xf] %v1377
        %1506 = vst [vmem:[%s216 + $0x38] sm:$0xf] %v1378
        %1507 = vst [vmem:[%s216 + $0x3c] sm:$0xf] %v1379
        %1508 = vst [vmem:[%s216 + $0x40] sm:$0xf] %v1380
        %1509 = vst [vmem:[%s216 + $0x44] sm:$0xf] %v1381
        %1510 = vst [vmem:[%s216 + $0x48] sm:$0xf] %v1382
        %1511 = vst [vmem:[%s216 + $0x4c] sm:$0xf] %v1383
        %1512 = vst [vmem:[%s216 + $0x50] sm:$0xf] %v1384
        %1513 = vst [vmem:[%s216 + $0x54] sm:$0xf] %v1385
        %1514 = vst [vmem:[%s216 + $0x58] sm:$0xf] %v1386
        %1515 = vst [vmem:[%s216 + $0x5c] sm:$0xf] %v1387
        %1516 = vst [vmem:[%s216 + $0x60] sm:$0xf] %v1388
        %1517 = vst [vmem:[%s216 + $0x64] sm:$0xf] %v1389
        %1518 = vst [vmem:[%s216 + $0x68] sm:$0xf] %v1390
        %1519 = vst [vmem:[%s216 + $0x6c] sm:$0xf] %v1391
        %1520 = vst [vmem:[%s216 + $0x70] sm:$0xf] %v1392
        %1521 = vst [vmem:[%s216 + $0x74] sm:$0xf] %v1393
        %1522 = vst [vmem:[%s216 + $0x78] sm:$0xf] %v1394
        %1523 = vst [vmem:[%s216 + $0x7c] sm:$0xf] %v1395
        %1524 = vst [vmem:[%s216 + $0x80] sm:$0xf] %v1396
        %1525 = vst [vmem:[%s216 + $0x84] sm:$0xf] %v1397
        %1526 = vst [vmem:[%s216 + $0x88] sm:$0xf] %v1398
        %1527 = vst [vmem:[%s216 + $0x8c] sm:$0xf] %v1399
        %1528 = vst [vmem:[%s216 + $0x90] sm:$0xf] %v1400
        %1529 = vst [vmem:[%s216 + $0x94] sm:$0xf] %v1401
        %1530 = vst [vmem:[%s216 + $0x98] sm:$0xf] %v1402
        %1531 = vst [vmem:[%s216 + $0x9c] sm:$0xf] %v1403
        %1532 = vst [vmem:[%s216 + $0xa0] sm:$0xf] %v1404
        %1533 = vst [vmem:[%s216 + $0xa4] sm:$0xf] %v1405
        %1534 = vst [vmem:[%s216 + $0xa8] sm:$0xf] %v1406
        %1535 = vst [vmem:[%s216 + $0xac] sm:$0xf] %v1407
        %1536 = vst [vmem:[%s216 + $0xb0] sm:$0xf] %v1408
        %1537 = vst [vmem:[%s216 + $0xb4] sm:$0xf] %v1409
        %1538 = vst [vmem:[%s216 + $0xb8] sm:$0xf] %v1410
        %1539 = vst [vmem:[%s216 + $0xbc] sm:$0xf] %v1411
        %1540 = vst [vmem:[%s216 + $0xc0] sm:$0xf] %v1412
        %1541 = vst [vmem:[%s216 + $0xc4] sm:$0xf] %v1413
        %1542 = vst [vmem:[%s216 + $0xc8] sm:$0xf] %v1414
        %1543 = vst [vmem:[%s216 + $0xcc] sm:$0xf] %v1415
        %1544 = vst [vmem:[%s216 + $0xd0] sm:$0xf] %v1416
        %1545 = vst [vmem:[%s216 + $0xd4] sm:$0xf] %v1417
        %1546 = vst [vmem:[%s216 + $0xd8] sm:$0xf] %v1418
        %1547 = vst [vmem:[%s216 + $0xdc] sm:$0xf] %v1419
        %1548 = vst [vmem:[%s216 + $0xe0] sm:$0xf] %v1420
        %1549 = vst [vmem:[%s216 + $0xe4] sm:$0xf] %v1421
        %1550 = vst [vmem:[%s216 + $0xe8] sm:$0xf] %v1422
        %1551 = vst [vmem:[%s216 + $0xec] sm:$0xf] %v1423
        %1552 = vst [vmem:[%s216 + $0xf0] sm:$0xf] %v1424
        %1553 = vst [vmem:[%s216 + $0xf4] sm:$0xf] %v1425
        %1554 = vst [vmem:[%s216 + $0xf8] sm:$0xf] %v1426
        %1555 = vst [vmem:[%s216 + $0xfc] sm:$0xf] %v1427
      $region36: #{icnet_forward.8} parent=27 // pred_fallthru
        _
      %s1556 = smul.u32 64, %s18
      %p1557 = scmp.lt.s32.totalorder %s1556, 255
      %s1558 = scalar_select %p1557, %s1556, 255
      %p1559 = scmp.lt.s32.totalorder %s19, 0
      %s1560 = scalar_select %p1559, %s19, 0
      %s1561 = sadd.s32 %s1560, %s1558
      %s1562 = smul.addr %s1561, 4
      %s1563 = scalar_lea.vmem %s2, %s1562
      // Predicated region
      $region37: #{icnet_forward.8} parent=27 // pred_check
        %p1564 = pneg %p108
      $region38: #{icnet_forward.8} parent=27 // pred_check_branch
        %1566 = sbr.rel (%p1564) target = $region40
      $region39: #{icnet_forward.8} parent=27 // pred_region
        %s1567 = smul.u32 64, %s18
      $region40: #{icnet_forward.8} parent=27 // pred_fallthru
        _
    $region28: #{icnet_forward.8} parent=5 // pred_fallthru
      _
    %p1568 = scmp.le.s32.totalorder 2, %s8
    // Predicated region
    $region41: #{icnet_forward.8} parent=5 // pred_check
      %p1569 = pneg %p1568
    $region42: #{icnet_forward.8} parent=5 // pred_check_branch
      %1571 = sbr.rel (%p1569) target = $region44
    $region43: #{icnet_forward.8} parent=5 // pred_region
      %s1572 = ssub.s32 %s8, 2
      // Predicated region
      $region45: #{icnet_forward.8} parent=43 // pred_check
        %p1573 = pneg %p114
      $region46: #{icnet_forward.8} parent=43 // pred_check_branch
        %1575 = sbr.rel (%p1573) target = $region48
      $region47: #{icnet_forward.8} parent=43 // pred_region
        %s1576 = smul.u32 64, %s21
        %p1577 = scmp.lt.s32.totalorder %s1576, 255
        %s1578 = scalar_select %p1577, %s1576, 255
        %p1579 = scmp.lt.s32.totalorder %s22, 0
        %s1580 = scalar_select %p1579, %s22, 0
        %s1581 = sadd.s32 %s1580, %s1578
        %s1582 = smul.addr %s1581, 4
        %s1583 = scalar_lea.vmem %s2, %s1582
      $region48: #{icnet_forward.8} parent=43 // pred_fallthru
        _
    $region44: #{icnet_forward.8} parent=5 // pred_fallthru
      _
  $region6: #{icnet_forward.8} parent=0 // loop_footer
    %s12 = sadd.s32 1, %s8
  $region7: #{icnet_forward.8} parent=0 // loop_footer_branch
    %7 = sbr.rel target = $region3
  $region8: #{icnet_forward.8} parent=0 // loop_exit
    _

// kernel: icnet_forward.9
$region0: #{icnet_forward.9}
  #allocation0 [shape = 'u32[]', space=smem, size = 0x4, offset = 0x4, fixed_abs, tag = 'smem constant byte address 0x4 - core index']
  #allocation1 [shape = 'u32[144,128]{1,0:T(1,128)}', space=vmem, size = 0x12000, scoped, tag = 'internal scratch']
  #allocation2 [shape = 'f32[256,128]{1,0:T(8,128)}', space=vmem, size = 0x20000, scoped, tag = 'scratch operand']
  %s0 = inlined_call_operand.vmem [shape: bf16[512,288], index: 0, kind: input, shape index: {}]
  %s1 = inlined_call_operand.vmem [shape: bf16[288,128], index: 1, kind: input, shape index: {}]
  %s2 = inlined_call_operand.vmem [shape: bf16[512,128], index: 2, kind: output, shape index: {}]
  %s3 = sld [smem:[#allocation0]]
  $region49: #{icnet_forward.9} parent=0
    _
  %s5 = ssub.s32 1, %s3
  %s6 = scalar_select 0, %s5, %s3
  loop: start=0, step=1, limit=4
  $region2: #{icnet_forward.9} parent=0 // loop_pre_header
    _
  $region3: #{icnet_forward.9} parent=0 // loop_header
    %s8 = sphi 0, %s12
    %p9 = scmp.ge.s32.totalorder %s8, 4
    %s15 = sphi 0, %s34
    %s16 = sphi 0, %s30
    %s17 = sphi 0, %s26
    %s18 = sphi 0, %s15
    %s19 = sphi 0, %s16
    %s20 = sphi 0, %s17
    %s21 = sphi 0, %s18
    %s22 = sphi 0, %s19
    %s23 = sphi 0, %s20
    %s39 = sphi 0, %s41
    %s42 = sphi 0, %s39
    %s43 = sphi 0, %s42
    %s59 = sphi 0, %s43
    %s67 = sphi 0, %s69
    %s70 = sphi 0, %s67
    %s71 = sphi 0, %s70
    %s87 = sphi 0, %s71
    %s95 = sphi 0, %s97
    %s98 = sphi 0, %s95
    %s99 = sphi 0, %s98
    %s115 = sphi 0, %s99
  $region4: #{icnet_forward.9} parent=0 // loop_header_branch
    %11 = sbr.rel (%p9) target = $region8
  $region5: #{icnet_forward.9} parent=0 // loop_body
    %s13 = ssub.s32 %s8, 1
    %s14 = ssub.s32 %s8, 2
    %s24 = sadd.s32 1, %s17
    %p25 = scmp.ge.s32.totalorder %s24, 1
    %s26 = scalar_select %p25, 0, %s24
    %s27 = sadd.s32 1, %s16
    %s28 = scalar_select %p25, %s27, %s16
    %p29 = scmp.ge.s32.totalorder %s28, 1
    %s30 = scalar_select %p29, 0, %s28
    %s31 = sadd.s32 1, %s15
    %s32 = scalar_select %p29, %s31, %s15
    %p33 = scmp.ge.s32.totalorder %s32, 2
    %s34 = scalar_select %p33, 0, %s32
    %s35 = ssub.s32 %s15, %s34
    %s36 = ssub.s32 %s17, %s26
    %s37 = sor.u32 %s35, %s36
    %p38 = scmp.eq.s32.totalorder %s37, 0
    %s40 = sadd.s32 %s39, 1
    %s41 = scalar_select %p38, %s39, %s40
    %p44 = pneg %p38
    %p45 = scmp.eq.s32.totalorder %s8, 1
    %p46 = por %p44, %p45
    %p47 = scmp.ne.s32.totalorder %s39, %s42
    %p48 = scmp.eq.s32.totalorder %s8, 0
    %p49 = por %p47, %p48
    %p50 = scmp.ne.s32.totalorder %s39, %s42
    %p51 = scmp.eq.s32.totalorder %s13, 1
    %p52 = por %p50, %p51
    %p53 = scmp.ne.s32.totalorder %s42, %s43
    %p54 = scmp.eq.s32.totalorder %s13, 0
    %p55 = por %p53, %p54
    %p56 = scmp.ne.s32.totalorder %s42, %s43
    %p57 = scmp.eq.s32.totalorder %s14, 1
    %p58 = por %p56, %p57
    %p60 = scmp.ne.s32.totalorder %s43, %s59
    %p61 = scmp.eq.s32.totalorder %s14, 0
    %p62 = por %p60, %p61
    %s63 = ssub.s32 %s17, %s26
    %s64 = ssub.s32 %s16, %s30
    %s65 = sor.u32 %s63, %s64
    %p66 = scmp.eq.s32.totalorder %s65, 0
    %s68 = sadd.s32 %s67, 1
    %s69 = scalar_select %p66, %s67, %s68
    %p72 = pneg %p66
    %p73 = scmp.eq.s32.totalorder %s8, 1
    %p74 = por %p72, %p73
    %p75 = scmp.ne.s32.totalorder %s67, %s70
    %p76 = scmp.eq.s32.totalorder %s8, 0
    %p77 = por %p75, %p76
    %p78 = scmp.ne.s32.totalorder %s67, %s70
    %p79 = scmp.eq.s32.totalorder %s13, 1
    %p80 = por %p78, %p79
    %p81 = scmp.ne.s32.totalorder %s70, %s71
    %p82 = scmp.eq.s32.totalorder %s13, 0
    %p83 = por %p81, %p82
    %p84 = scmp.ne.s32.totalorder %s70, %s71
    %p85 = scmp.eq.s32.totalorder %s14, 1
    %p86 = por %p84, %p85
    %p88 = scmp.ne.s32.totalorder %s71, %s87
    %p89 = scmp.eq.s32.totalorder %s14, 0
    %p90 = por %p88, %p89
    %s91 = ssub.s32 %s15, %s34
    %s92 = ssub.s32 %s16, %s30
    %s93 = sor.u32 %s91, %s92
    %p94 = scmp.eq.s32.totalorder %s93, 0
    %s96 = sadd.s32 %s95, 1
    %s97 = scalar_select %p94, %s95, %s96
    %p100 = pneg %p94
    %p101 = scmp.eq.s32.totalorder %s8, 1
    %p102 = por %p100, %p101
    %p103 = scmp.ne.s32.totalorder %s95, %s98
    %p104 = scmp.eq.s32.totalorder %s8, 0
    %p105 = por %p103, %p104
    %p106 = scmp.ne.s32.totalorder %s95, %s98
    %p107 = scmp.eq.s32.totalorder %s13, 1
    %p108 = por %p106, %p107
    %p109 = scmp.ne.s32.totalorder %s98, %s99
    %p110 = scmp.eq.s32.totalorder %s13, 0
    %p111 = por %p109, %p110
    %p112 = scmp.ne.s32.totalorder %s98, %s99
    %p113 = scmp.eq.s32.totalorder %s14, 1
    %p114 = por %p112, %p113
    %p116 = scmp.ne.s32.totalorder %s99, %s115
    %p117 = scmp.eq.s32.totalorder %s14, 0
    %p118 = por %p116, %p117
    %p119 = scmp.le.s32.totalorder 1, %s8
    %p120 = scmp.lt.s32.totalorder %s8, 3
    %p121 = pnand %p119, %p120
    %p122 = pneg %p121
    // Predicated region
    $region9: #{icnet_forward.9} parent=5 // pred_check
      _
    $region10: #{icnet_forward.9} parent=5 // pred_check_branch
      %124 = sbr.rel (%p121) target = $region12
    $region11: #{icnet_forward.9} parent=5 // pred_region
      %s125 = ssub.s32 %s8, 1
      // Predicated region
      $region13: #{icnet_forward.9} parent=11 // pred_check
        %p126 = pneg %p83
      $region14: #{icnet_forward.9} parent=11 // pred_check_branch
        %128 = sbr.rel (%p126) target = $region16
      $region15: #{icnet_forward.9} parent=11 // pred_region
        %s129 = smul.u32 36, %s20
        %p130 = scmp.lt.s32.totalorder %s129, 35
        %s131 = scalar_select %p130, %s129, 35
        %p132 = scmp.lt.s32.totalorder %s19, 0
        %s133 = scalar_select %p132, %s19, 0
        %s134 = sadd.s32 %s133, %s131
        %s135 = smul.addr %s134, 4
        %s136 = scalar_lea.vmem %s1, %s135
        %s137 = smul.u32 36, %s20
      $region16: #{icnet_forward.9} parent=11 // pred_fallthru
        _
    $region12: #{icnet_forward.9} parent=5 // pred_fallthru
      _
    %p138 = scmp.lt.s32.totalorder %s8, 2
    // Predicated region
    $region17: #{icnet_forward.9} parent=5 // pred_check
      %p139 = pneg %p138
    $region18: #{icnet_forward.9} parent=5 // pred_check_branch
      %141 = sbr.rel (%p139) target = $region20
    $region19: #{icnet_forward.9} parent=5 // pred_region
      // Predicated region
      $region21: #{icnet_forward.9} parent=19 // pred_check
        %p142 = pneg %p49
      $region22: #{icnet_forward.9} parent=19 // pred_check_branch
        %144 = sbr.rel (%p142) target = $region24
      $region23: #{icnet_forward.9} parent=19 // pred_region
        %s145 = smul.u32 32, %s15
        %s146 = smul.u32 3, %s17
        %p147 = scmp.lt.s32.totalorder %s145, 63
        %s148 = scalar_select %p147, %s145, 63
        %p149 = scmp.lt.s32.totalorder %s146, 2
        %s150 = scalar_select %p149, %s146, 2
        %s151 = smul.addr %s148, 3
        %s152 = sadd.s32 %s150, %s151
        %s153 = smul.addr %s152, 4
        %s154 = scalar_lea.vmem %s0, %s153
        %s155 = smul.u32 32, %s15
        %s156 = smul.u32 3, %s17
      $region24: #{icnet_forward.9} parent=19 // pred_fallthru
        _
    $region20: #{icnet_forward.9} parent=5 // pred_fallthru
      _
    %p157 = scmp.le.s32.totalorder 1, %s8
    %p158 = scmp.lt.s32.totalorder %s8, 3
    %p159 = pnand %p157, %p158
    %p160 = pneg %p159
    // Predicated region
    $region25: #{icnet_forward.9} parent=5 // pred_check
      _
    $region26: #{icnet_forward.9} parent=5 // pred_check_branch
      %162 = sbr.rel (%p159) target = $region28
    $region27: #{icnet_forward.9} parent=5 // pred_region
      %s163 = ssub.s32 %s8, 1
      %s164 = smul.u32 32, %s18
      %s165 = smul.u32 3, %s20
      %p166 = scmp.lt.s32.totalorder %s164, 63
      %s167 = scalar_select %p166, %s164, 63
      %p168 = scmp.lt.s32.totalorder %s165, 2
      %s169 = scalar_select %p168, %s165, 2
      %s170 = smul.addr %s167, 3
      %s171 = sadd.s32 %s169, %s170
      %s172 = smul.addr %s171, 4
      %s173 = scalar_lea.vmem %s0, %s172
      %p174 = pneg %p55
      %p175 = pneg %p52
      %s176 = smul.u32 36, %s20
      %p177 = scmp.lt.s32.totalorder %s176, 35
      %s178 = scalar_select %p177, %s176, 35
      %p179 = scmp.lt.s32.totalorder %s19, 0
      %s180 = scalar_select %p179, %s19, 0
      %s181 = sadd.s32 %s180, %s178
      %s182 = smul.addr %s181, 4
      %s183 = scalar_lea.vmem %s1, %s182
      %p184 = pneg %p83
      %p185 = pneg %p80
      %p186 = pneg %p111
      %p187 = pneg %p108
      %s188 = smul.u32 32, %s18
      %p189 = scmp.lt.s32.totalorder %s188, 63
      %s190 = scalar_select %p189, %s188, 63
      %p191 = scmp.lt.s32.totalorder %s19, 0
      %s192 = scalar_select %p191, %s19, 0
      %s193 = sadd.s32 %s192, %s190
      %s194 = smul.addr %s193, 4
      %s195 = scalar_lea.vmem %s2, %s194
      %s196 = smul.u32 32, %s18
      %s197 = smul.u32 3, %s20
      %p198 = scmp.lt.s32.totalorder %s196, 63
      %s199 = scalar_select %p198, %s196, 63
      %p200 = scmp.lt.s32.totalorder %s197, 2
      %s201 = scalar_select %p200, %s197, 2
      %s202 = smul.addr %s199, 3
      %s203 = sadd.s32 %s201, %s202
      %s204 = smul.addr %s203, 4
      %s205 = scalar_lea.vmem %s0, %s204
      %s206 = smul.u32 32, %s18
      %s207 = smul.u32 3, %s20
      %s208 = smul.u32 36, %s20
      %p209 = scmp.lt.s32.totalorder %s208, 35
      %s210 = scalar_select %p209, %s208, 35
      %p211 = scmp.lt.s32.totalorder %s19, 0
      %s212 = scalar_select %p211, %s19, 0
      %s213 = sadd.s32 %s212, %s210
      %s214 = smul.addr %s213, 4
      %s215 = scalar_lea.vmem %s1, %s214
      %s216 = smul.u32 36, %s20
      %s217 = smul.u32 32, %s18
      %p218 = scmp.lt.s32.totalorder %s217, 63
      %s219 = scalar_select %p218, %s217, 63
      %p220 = scmp.lt.s32.totalorder %s19, 0
      %s221 = scalar_select %p220, %s19, 0
      %s222 = sadd.s32 %s221, %s219
      %s223 = smul.addr %s222, 4
      %s224 = scalar_lea.vmem %s2, %s223
      %s225 = smul.u32 32, %s18
      %p227 = scmp.eq.s32.totalorder %s20, 0
      // Predicated region
      $region29: #{icnet_forward.9} parent=27 // pred_check
        %p228 = pneg %p227
      $region30: #{icnet_forward.9} parent=27 // pred_check_branch
        %230 = sbr.rel (%p228) target = $region32
      $region31: #{icnet_forward.9} parent=27 // pred_region
        %231 = vst [vmem:[#allocation2] sm:$0xff] 0.0
        %232 = vst [vmem:[#allocation2 + $0x8] sm:$0xff] 0.0
        %233 = vst [vmem:[#allocation2 + $0x10] sm:$0xff] 0.0
        %234 = vst [vmem:[#allocation2 + $0x18] sm:$0xff] 0.0
        %235 = vst [vmem:[#allocation2 + $0x20] sm:$0xff] 0.0
        %236 = vst [vmem:[#allocation2 + $0x28] sm:$0xff] 0.0
        %237 = vst [vmem:[#allocation2 + $0x30] sm:$0xff] 0.0
        %238 = vst [vmem:[#allocation2 + $0x38] sm:$0xff] 0.0
        %239 = vst [vmem:[#allocation2 + $0x40] sm:$0xff] 0.0
        %240 = vst [vmem:[#allocation2 + $0x48] sm:$0xff] 0.0
        %241 = vst [vmem:[#allocation2 + $0x50] sm:$0xff] 0.0
        %242 = vst [vmem:[#allocation2 + $0x58] sm:$0xff] 0.0
        %243 = vst [vmem:[#allocation2 + $0x60] sm:$0xff] 0.0
        %244 = vst [vmem:[#allocation2 + $0x68] sm:$0xff] 0.0
        %245 = vst [vmem:[#allocation2 + $0x70] sm:$0xff] 0.0
        %246 = vst [vmem:[#allocation2 + $0x78] sm:$0xff] 0.0
        %247 = vst [vmem:[#allocation2 + $0x80] sm:$0xff] 0.0
        %248 = vst [vmem:[#allocation2 + $0x88] sm:$0xff] 0.0
        %249 = vst [vmem:[#allocation2 + $0x90] sm:$0xff] 0.0
        %250 = vst [vmem:[#allocation2 + $0x98] sm:$0xff] 0.0
        %251 = vst [vmem:[#allocation2 + $0xa0] sm:$0xff] 0.0
        %252 = vst [vmem:[#allocation2 + $0xa8] sm:$0xff] 0.0
        %253 = vst [vmem:[#allocation2 + $0xb0] sm:$0xff] 0.0
        %254 = vst [vmem:[#allocation2 + $0xb8] sm:$0xff] 0.0
        %255 = vst [vmem:[#allocation2 + $0xc0] sm:$0xff] 0.0
        %256 = vst [vmem:[#allocation2 + $0xc8] sm:$0xff] 0.0
        %257 = vst [vmem:[#allocation2 + $0xd0] sm:$0xff] 0.0
        %258 = vst [vmem:[#allocation2 + $0xd8] sm:$0xff] 0.0
        %259 = vst [vmem:[#allocation2 + $0xe0] sm:$0xff] 0.0
        %260 = vst [vmem:[#allocation2 + $0xe8] sm:$0xff] 0.0
        %261 = vst [vmem:[#allocation2 + $0xf0] sm:$0xff] 0.0
        %262 = vst [vmem:[#allocation2 + $0xf8] sm:$0xff] 0.0
      $region32: #{icnet_forward.9} parent=27 // pred_fallthru
        _
      %v263 = vld [vmem:[#allocation2] sm:$0xff]
      %v264 = vld [vmem:[#allocation2 + $0x8] sm:$0xff]
      %v265 = vld [vmem:[#allocation2 + $0x10] sm:$0xff]
      %v266 = vld [vmem:[#allocation2 + $0x18] sm:$0xff]
      %v267 = vld [vmem:[#allocation2 + $0x20] sm:$0xff]
      %v268 = vld [vmem:[#allocation2 + $0x28] sm:$0xff]
      %v269 = vld [vmem:[#allocation2 + $0x30] sm:$0xff]
      %v270 = vld [vmem:[#allocation2 + $0x38] sm:$0xff]
      %v271 = vld [vmem:[#allocation2 + $0x40] sm:$0xff]
      %v272 = vld [vmem:[#allocation2 + $0x48] sm:$0xff]
      %v273 = vld [vmem:[#allocation2 + $0x50] sm:$0xff]
      %v274 = vld [vmem:[#allocation2 + $0x58] sm:$0xff]
      %v275 = vld [vmem:[#allocation2 + $0x60] sm:$0xff]
      %v276 = vld [vmem:[#allocation2 + $0x68] sm:$0xff]
      %v277 = vld [vmem:[#allocation2 + $0x70] sm:$0xff]
      %v278 = vld [vmem:[#allocation2 + $0x78] sm:$0xff]
      %v279 = vld [vmem:[#allocation2 + $0x80] sm:$0xff]
      %v280 = vld [vmem:[#allocation2 + $0x88] sm:$0xff]
      %v281 = vld [vmem:[#allocation2 + $0x90] sm:$0xff]
      %v282 = vld [vmem:[#allocation2 + $0x98] sm:$0xff]
      %v283 = vld [vmem:[#allocation2 + $0xa0] sm:$0xff]
      %v284 = vld [vmem:[#allocation2 + $0xa8] sm:$0xff]
      %v285 = vld [vmem:[#allocation2 + $0xb0] sm:$0xff]
      %v286 = vld [vmem:[#allocation2 + $0xb8] sm:$0xff]
      %v287 = vld [vmem:[#allocation2 + $0xc0] sm:$0xff]
      %v288 = vld [vmem:[#allocation2 + $0xc8] sm:$0xff]
      %v289 = vld [vmem:[#allocation2 + $0xd0] sm:$0xff]
      %v290 = vld [vmem:[#allocation2 + $0xd8] sm:$0xff]
      %v291 = vld [vmem:[#allocation2 + $0xe0] sm:$0xff]
      %v292 = vld [vmem:[#allocation2 + $0xe8] sm:$0xff]
      %v293 = vld [vmem:[#allocation2 + $0xf0] sm:$0xff]
      %v294 = vld [vmem:[#allocation2 + $0xf8] sm:$0xff]
      %v295 = vld [vmem:[%s205] sm:$0xff]
      %v296 = vld [vmem:[%s205 + $0x8] sm:$0xf]
      %v297 = vld [vmem:[%s205 + $0xc] sm:$0xff]
      %v298 = vld [vmem:[%s205 + $0x14] sm:$0xf]
      %v299 = vld [vmem:[%s205 + $0x18] sm:$0xff]
      %v300 = vld [vmem:[%s205 + $0x20] sm:$0xf]
      %v301 = vld [vmem:[%s205 + $0x24] sm:$0xff]
      %v302 = vld [vmem:[%s205 + $0x2c] sm:$0xf]
      %v303 = vld [vmem:[%s205 + $0x30] sm:$0xff]
      %v304 = vld [vmem:[%s205 + $0x38] sm:$0xf]
      %v305 = vld [vmem:[%s205 + $0x3c] sm:$0xff]
      %v306 = vld [vmem:[%s205 + $0x44] sm:$0xf]
      %v307 = vld [vmem:[%s205 + $0x48] sm:$0xff]
      %v308 = vld [vmem:[%s205 + $0x50] sm:$0xf]
      %v309 = vld [vmem:[%s205 + $0x54] sm:$0xff]
      %v310 = vld [vmem:[%s205 + $0x5c] sm:$0xf]
      %v311 = vld [vmem:[%s205 + $0x60] sm:$0xff]
      %v312 = vld [vmem:[%s205 + $0x68] sm:$0xf]
      %v313 = vld [vmem:[%s205 + $0x6c] sm:$0xff]
      %v314 = vld [vmem:[%s205 + $0x74] sm:$0xf]
      %v315 = vld [vmem:[%s205 + $0x78] sm:$0xff]
      %v316 = vld [vmem:[%s205 + $0x80] sm:$0xf]
      %v317 = vld [vmem:[%s205 + $0x84] sm:$0xff]
      %v318 = vld [vmem:[%s205 + $0x8c] sm:$0xf]
      %v319 = vld [vmem:[%s205 + $0x90] sm:$0xff]
      %v320 = vld [vmem:[%s205 + $0x98] sm:$0xf]
      %v321 = vld [vmem:[%s205 + $0x9c] sm:$0xff]
      %v322 = vld [vmem:[%s205 + $0xa4] sm:$0xf]
      %v323 = vld [vmem:[%s205 + $0xa8] sm:$0xff]
      %v324 = vld [vmem:[%s205 + $0xb0] sm:$0xf]
      %v325 = vld [vmem:[%s205 + $0xb4] sm:$0xff]
      %v326 = vld [vmem:[%s205 + $0xbc] sm:$0xf]
      %v327 = vld [vmem:[%s205 + $0xc0] sm:$0xff]
      %v328 = vld [vmem:[%s205 + $0xc8] sm:$0xf]
      %v329 = vld [vmem:[%s205 + $0xcc] sm:$0xff]
      %v330 = vld [vmem:[%s205 + $0xd4] sm:$0xf]
      %v331 = vld [vmem:[%s205 + $0xd8] sm:$0xff]
      %v332 = vld [vmem:[%s205 + $0xe0] sm:$0xf]
      %v333 = vld [vmem:[%s205 + $0xe4] sm:$0xff]
      %v334 = vld [vmem:[%s205 + $0xec] sm:$0xf]
      %v335 = vld [vmem:[%s205 + $0xf0] sm:$0xff]
      %v336 = vld [vmem:[%s205 + $0xf8] sm:$0xf]
      %v337 = vld [vmem:[%s205 + $0xfc] sm:$0xff]
      %v338 = vld [vmem:[%s205 + $0x104] sm:$0xf]
      %v339 = vld [vmem:[%s205 + $0x108] sm:$0xff]
      %v340 = vld [vmem:[%s205 + $0x110] sm:$0xf]
      %v341 = vld [vmem:[%s205 + $0x114] sm:$0xff]
      %v342 = vld [vmem:[%s205 + $0x11c] sm:$0xf]
      %v343 = vld [vmem:[%s205 + $0x120] sm:$0xff]
      %v344 = vld [vmem:[%s205 + $0x128] sm:$0xf]
      %v345 = vld [vmem:[%s205 + $0x12c] sm:$0xff]
      %v346 = vld [vmem:[%s205 + $0x134] sm:$0xf]
      %v347 = vld [vmem:[%s205 + $0x138] sm:$0xff]
      %v348 = vld [vmem:[%s205 + $0x140] sm:$0xf]
      %v349 = vld [vmem:[%s205 + $0x144] sm:$0xff]
      %v350 = vld [vmem:[%s205 + $0x14c] sm:$0xf]
      %v351 = vld [vmem:[%s205 + $0x150] sm:$0xff]
      %v352 = vld [vmem:[%s205 + $0x158] sm:$0xf]
      %v353 = vld [vmem:[%s205 + $0x15c] sm:$0xff]
      %v354 = vld [vmem:[%s205 + $0x164] sm:$0xf]
      %v355 = vld [vmem:[%s205 + $0x168] sm:$0xff]
      %v356 = vld [vmem:[%s205 + $0x170] sm:$0xf]
      %v357 = vld [vmem:[%s205 + $0x174] sm:$0xff]
      %v358 = vld [vmem:[%s205 + $0x17c] sm:$0xf]
      %v359 = vld [vmem:[%s215] sm:$0xf]
      %v360 = vld [vmem:[%s215 + $0x4] sm:$0xf]
      %v361 = vld [vmem:[%s215 + $0x8] sm:$0xf]
      %v362 = vld [vmem:[%s215 + $0xc] sm:$0xf]
      %v363 = vld [vmem:[%s215 + $0x10] sm:$0xf]
      %v364 = vld [vmem:[%s215 + $0x14] sm:$0xf]
      %v365 = vld [vmem:[%s215 + $0x18] sm:$0xf]
      %v366 = vld [vmem:[%s215 + $0x1c] sm:$0xf]
      %v367 = vld [vmem:[%s215 + $0x20] sm:$0xf]
      %v368 = vld [vmem:[%s215 + $0x24] sm:$0xf]
      %v369 = vld [vmem:[%s215 + $0x28] sm:$0xf]
      %v370 = vld [vmem:[%s215 + $0x2c] sm:$0xf]
      %v371 = vld [vmem:[%s215 + $0x30] sm:$0xf]
      %v372 = vld [vmem:[%s215 + $0x34] sm:$0xf]
      %v373 = vld [vmem:[%s215 + $0x38] sm:$0xf]
      %v374 = vld [vmem:[%s215 + $0x3c] sm:$0xf]
      %v375 = vld [vmem:[%s215 + $0x40] sm:$0xf]
      %v376 = vld [vmem:[%s215 + $0x44] sm:$0xf]
      %v377 = vld [vmem:[%s215 + $0x48] sm:$0xf]
      %v378 = vld [vmem:[%s215 + $0x4c] sm:$0xf]
      %v379 = vld [vmem:[%s215 + $0x50] sm:$0xf]
      %v380 = vld [vmem:[%s215 + $0x54] sm:$0xf]
      %v381 = vld [vmem:[%s215 + $0x58] sm:$0xf]
      %v382 = vld [vmem:[%s215 + $0x5c] sm:$0xf]
      %v383 = vld [vmem:[%s215 + $0x60] sm:$0xf]
      %v384 = vld [vmem:[%s215 + $0x64] sm:$0xf]
      %v385 = vld [vmem:[%s215 + $0x68] sm:$0xf]
      %v386 = vld [vmem:[%s215 + $0x6c] sm:$0xf]
      %v387 = vld [vmem:[%s215 + $0x70] sm:$0xf]
      %v388 = vld [vmem:[%s215 + $0x74] sm:$0xf]
      %v389 = vld [vmem:[%s215 + $0x78] sm:$0xf]
      %v390 = vld [vmem:[%s215 + $0x7c] sm:$0xf]
      %v391 = vld [vmem:[%s215 + $0x80] sm:$0xf]
      %v392 = vld [vmem:[%s215 + $0x84] sm:$0xf]
      %v393 = vld [vmem:[%s215 + $0x88] sm:$0xf]
      %v394 = vld [vmem:[%s215 + $0x8c] sm:$0xf]
      %v459 = vunpack.c.l.b16 %v295
      %v460 = vunpack.c.h.b16 %v295
      %v461 = vunpack.c.l.b16 %v296
      %v462 = vunpack.c.l.b16 %v297
      %v463 = vunpack.c.h.b16 %v297
      %v464 = vunpack.c.l.b16 %v298
      %v465 = vunpack.c.l.b16 %v299
      %v466 = vunpack.c.h.b16 %v299
      %v467 = vunpack.c.l.b16 %v300
      %v468 = vunpack.c.l.b16 %v301
      %v469 = vunpack.c.h.b16 %v301
      %v470 = vunpack.c.l.b16 %v302
      %v471 = vunpack.c.l.b16 %v303
      %v472 = vunpack.c.h.b16 %v303
      %v473 = vunpack.c.l.b16 %v304
      %v474 = vunpack.c.l.b16 %v305
      %v475 = vunpack.c.h.b16 %v305
      %v476 = vunpack.c.l.b16 %v306
      %v477 = vunpack.c.l.b16 %v307
      %v478 = vunpack.c.h.b16 %v307
      %v479 = vunpack.c.l.b16 %v308
      %v480 = vunpack.c.l.b16 %v309
      %v481 = vunpack.c.h.b16 %v309
      %v482 = vunpack.c.l.b16 %v310
      %v483 = vunpack.c.l.b16 %v311
      %v484 = vunpack.c.h.b16 %v311
      %v485 = vunpack.c.l.b16 %v312
      %v486 = vunpack.c.l.b16 %v313
      %v487 = vunpack.c.h.b16 %v313
      %v488 = vunpack.c.l.b16 %v314
      %v489 = vunpack.c.l.b16 %v315
      %v490 = vunpack.c.h.b16 %v315
      %v491 = vunpack.c.l.b16 %v316
      %v492 = vunpack.c.l.b16 %v317
      %v493 = vunpack.c.h.b16 %v317
      %v494 = vunpack.c.l.b16 %v318
      %v495 = vunpack.c.l.b16 %v319
      %v496 = vunpack.c.h.b16 %v319
      %v497 = vunpack.c.l.b16 %v320
      %v498 = vunpack.c.l.b16 %v321
      %v499 = vunpack.c.h.b16 %v321
      %v500 = vunpack.c.l.b16 %v322
      %v501 = vunpack.c.l.b16 %v323
      %v502 = vunpack.c.h.b16 %v323
      %v503 = vunpack.c.l.b16 %v324
      %v504 = vunpack.c.l.b16 %v325
      %v505 = vunpack.c.h.b16 %v325
      %v506 = vunpack.c.l.b16 %v326
      %v507 = vunpack.c.l.b16 %v327
      %v508 = vunpack.c.h.b16 %v327
      %v509 = vunpack.c.l.b16 %v328
      %v510 = vunpack.c.l.b16 %v329
      %v511 = vunpack.c.h.b16 %v329
      %v512 = vunpack.c.l.b16 %v330
      %v513 = vunpack.c.l.b16 %v331
      %v514 = vunpack.c.h.b16 %v331
      %v515 = vunpack.c.l.b16 %v332
      %v516 = vunpack.c.l.b16 %v333
      %v517 = vunpack.c.h.b16 %v333
      %v518 = vunpack.c.l.b16 %v334
      %v519 = vunpack.c.l.b16 %v335
      %v520 = vunpack.c.h.b16 %v335
      %v521 = vunpack.c.l.b16 %v336
      %v522 = vunpack.c.l.b16 %v337
      %v523 = vunpack.c.h.b16 %v337
      %v524 = vunpack.c.l.b16 %v338
      %v525 = vunpack.c.l.b16 %v339
      %v526 = vunpack.c.h.b16 %v339
      %v527 = vunpack.c.l.b16 %v340
      %v528 = vunpack.c.l.b16 %v341
      %v529 = vunpack.c.h.b16 %v341
      %v530 = vunpack.c.l.b16 %v342
      %v531 = vunpack.c.l.b16 %v343
      %v532 = vunpack.c.h.b16 %v343
      %v533 = vunpack.c.l.b16 %v344
      %v534 = vunpack.c.l.b16 %v345
      %v535 = vunpack.c.h.b16 %v345
      %v536 = vunpack.c.l.b16 %v346
      %v537 = vunpack.c.l.b16 %v347
      %v538 = vunpack.c.h.b16 %v347
      %v539 = vunpack.c.l.b16 %v348
      %v540 = vunpack.c.l.b16 %v349
      %v541 = vunpack.c.h.b16 %v349
      %v542 = vunpack.c.l.b16 %v350
      %v543 = vunpack.c.l.b16 %v351
      %v544 = vunpack.c.h.b16 %v351
      %v545 = vunpack.c.l.b16 %v352
      %v546 = vunpack.c.l.b16 %v353
      %v547 = vunpack.c.h.b16 %v353
      %v548 = vunpack.c.l.b16 %v354
      %v549 = vunpack.c.l.b16 %v355
      %v550 = vunpack.c.h.b16 %v355
      %v551 = vunpack.c.l.b16 %v356
      %v552 = vunpack.c.l.b16 %v357
      %v553 = vunpack.c.h.b16 %v357
      %v554 = vunpack.c.l.b16 %v358
      %v555 = vpack.c.b16 %v462, %v459
      %v556 = vpack.c.b16 %v463, %v460
      %v557 = vpack.c.b16 %v464, %v461
      %v558 = vpack.c.b16 %v468, %v465
      %v559 = vpack.c.b16 %v469, %v466
      %v560 = vpack.c.b16 %v470, %v467
      %v561 = vpack.c.b16 %v474, %v471
      %v562 = vpack.c.b16 %v475, %v472
      %v563 = vpack.c.b16 %v476, %v473
      %v564 = vpack.c.b16 %v480, %v477
      %v565 = vpack.c.b16 %v481, %v478
      %v566 = vpack.c.b16 %v482, %v479
      %v567 = vpack.c.b16 %v486, %v483
      %v568 = vpack.c.b16 %v487, %v484
      %v569 = vpack.c.b16 %v488, %v485
      %v570 = vpack.c.b16 %v492, %v489
      %v571 = vpack.c.b16 %v493, %v490
      %v572 = vpack.c.b16 %v494, %v491
      %v573 = vpack.c.b16 %v498, %v495
      %v574 = vpack.c.b16 %v499, %v496
      %v575 = vpack.c.b16 %v500, %v497
      %v576 = vpack.c.b16 %v504, %v501
      %v577 = vpack.c.b16 %v505, %v502
      %v578 = vpack.c.b16 %v506, %v503
      %v579 = vpack.c.b16 %v510, %v507
      %v580 = vpack.c.b16 %v511, %v508
      %v581 = vpack.c.b16 %v512, %v509
      %v582 = vpack.c.b16 %v516, %v513
      %v583 = vpack.c.b16 %v517, %v514
      %v584 = vpack.c.b16 %v518, %v515
      %v585 = vpack.c.b16 %v522, %v519
      %v586 = vpack.c.b16 %v523, %v520
      %v587 = vpack.c.b16 %v524, %v521
      %v588 = vpack.c.b16 %v528, %v525
      %v589 = vpack.c.b16 %v529, %v526
      %v590 = vpack.c.b16 %v530, %v527
      %v591 = vpack.c.b16 %v534, %v531
      %v592 = vpack.c.b16 %v535, %v532
      %v593 = vpack.c.b16 %v536, %v533
      %v594 = vpack.c.b16 %v540, %v537
      %v595 = vpack.c.b16 %v541, %v538
      %v596 = vpack.c.b16 %v542, %v539
      %v597 = vpack.c.b16 %v546, %v543
      %v598 = vpack.c.b16 %v547, %v544
      %v599 = vpack.c.b16 %v548, %v545
      %v600 = vpack.c.b16 %v552, %v549
      %v601 = vpack.c.b16 %v553, %v550
      %v602 = vpack.c.b16 %v554, %v551
      %v671 = vunpack.c.l.b16 %v359
      %v672 = vunpack.c.l.b16 %v360
      %v673 = vunpack.c.l.b16 %v361
      %v674 = vunpack.c.l.b16 %v362
      %v675 = vunpack.c.l.b16 %v363
      %v676 = vunpack.c.l.b16 %v364
      %v677 = vunpack.c.l.b16 %v365
      %v678 = vunpack.c.l.b16 %v366
      %v679 = vunpack.c.l.b16 %v367
      %v680 = vunpack.c.l.b16 %v368
      %v681 = vunpack.c.l.b16 %v369
      %v682 = vunpack.c.l.b16 %v370
      %v683 = vunpack.c.l.b16 %v371
      %v684 = vunpack.c.l.b16 %v372
      %v685 = vunpack.c.l.b16 %v373
      %v686 = vunpack.c.l.b16 %v374
      %v687 = vunpack.c.l.b16 %v375
      %v688 = vunpack.c.l.b16 %v376
      %v689 = vunpack.c.l.b16 %v377
      %v690 = vunpack.c.l.b16 %v378
      %v691 = vunpack.c.l.b16 %v379
      %v692 = vunpack.c.l.b16 %v380
      %v693 = vunpack.c.l.b16 %v381
      %v694 = vunpack.c.l.b16 %v382
      %v695 = vunpack.c.l.b16 %v383
      %v696 = vunpack.c.l.b16 %v384
      %v697 = vunpack.c.l.b16 %v385
      %v698 = vunpack.c.l.b16 %v386
      %v699 = vunpack.c.l.b16 %v387
      %v700 = vunpack.c.l.b16 %v388
      %v701 = vunpack.c.l.b16 %v389
      %v702 = vunpack.c.l.b16 %v390
      %v703 = vunpack.c.l.b16 %v391
      %v704 = vunpack.c.l.b16 %v392
      %v705 = vunpack.c.l.b16 %v393
      %v706 = vunpack.c.l.b16 %v394
      %v707 = vpack.c.b16 %v672, %v671
      %v708 = vpack.c.b16 %v674, %v673
      %v709 = vpack.c.b16 %v676, %v675
      %v710 = vpack.c.b16 %v678, %v677
      %v711 = vpack.c.b16 %v680, %v679
      %v712 = vpack.c.b16 %v682, %v681
      %v713 = vpack.c.b16 %v684, %v683
      %v714 = vpack.c.b16 %v686, %v685
      %v715 = vpack.c.b16 %v688, %v687
      %v716 = vpack.c.b16 %v690, %v689
      %v717 = vpack.c.b16 %v692, %v691
      %v718 = vpack.c.b16 %v694, %v693
      %v719 = vpack.c.b16 %v696, %v695
      %v720 = vpack.c.b16 %v698, %v697
      %v721 = vpack.c.b16 %v700, %v699
      %v722 = vpack.c.b16 %v702, %v701
      %v723 = vpack.c.b16 %v704, %v703
      %v724 = vpack.c.b16 %v706, %v705
      %vm743 = vcmask 261120
      %v745 = vsel %vm743, %v557, 0
      %v748 = vsel %vm743, %v560, 0
      %v751 = vsel %vm743, %v563, 0
      %v754 = vsel %vm743, %v566, 0
      %v757 = vsel %vm743, %v569, 0
      %v760 = vsel %vm743, %v572, 0
      %v763 = vsel %vm743, %v575, 0
      %v766 = vsel %vm743, %v578, 0
      %v769 = vsel %vm743, %v581, 0
      %v772 = vsel %vm743, %v584, 0
      %v775 = vsel %vm743, %v587, 0
      %v778 = vsel %vm743, %v590, 0
      %v781 = vsel %vm743, %v593, 0
      %v784 = vsel %vm743, %v596, 0
      %v787 = vsel %vm743, %v599, 0
      %v790 = vsel %vm743, %v602, 0
      %792 = vmatprep.subr.bf16.mxu0 0
      %793 = vmatpush1.bf16.msra.mxu0 %v714
      %794 = vmatprep.subr.bf16.mxu0 0
      %795 = vmatpush1.bf16.msra.mxu0 %v713
      %796 = vmatprep.subr.bf16.mxu0 0
      %797 = vmatpush1.bf16.msra.mxu0 %v712
      %798 = vmatprep.subr.bf16.mxu0 0
      %799 = vmatpush1.bf16.msra.mxu0 %v711
      %800 = vmatprep.subr.bf16.mxu0 0
      %801 = vmatpush1.bf16.msra.mxu0 %v710
      %802 = vmatprep.subr.bf16.mxu0 0
      %803 = vmatpush1.bf16.msra.mxu0 %v709
      %804 = vmatprep.subr.bf16.mxu0 0
      %805 = vmatpush1.bf16.msra.mxu0 %v708
      %806 = vmatprep.subr.bf16.mxu0 0
      %807 = vmatpush1.bf16.msra.mxu0 %v707
      %808 = vmatprep.subr.bf16.mxu0 0
      %809 = vmatpush2.bf16.msra.mxu0 %v722
      %810 = vmatprep.subr.bf16.mxu0 0
      %811 = vmatpush2.bf16.msra.mxu0 %v721
      %812 = vmatprep.subr.bf16.mxu0 0
      %813 = vmatpush2.bf16.msra.mxu0 %v720
      %814 = vmatprep.subr.bf16.mxu0 0
      %815 = vmatpush2.bf16.msra.mxu0 %v719
      %816 = vmatprep.subr.bf16.mxu0 0
      %817 = vmatpush2.bf16.msra.mxu0 %v718
      %818 = vmatprep.subr.bf16.mxu0 0
      %819 = vmatpush2.bf16.msra.mxu0 %v717
      %820 = vmatprep.subr.bf16.mxu0 0
      %821 = vmatpush2.bf16.msra.mxu0 %v716
      %822 = vmatprep.subr.bf16.mxu0 0
      %823 = vmatpush2.bf16.msra.mxu0 %v715
      %824 = vmatprep.mubr.bf16.mxu0 %v556
      %825 = vmatmul.mubr.bf16.gmra.mxu0 %v555
      %v826 = vpop.f32.mrf.mxu0
      %v827 = vadd.f32 0.0, %v826
      %v828 = vpop.f32.mrf.mxu0
      %v829 = vpop.f32.mrf.mxu0
      %v830 = vadd.f32 0.0, %v829
      %v831 = vpop.f32.mrf.mxu0
      %832 = vmatprep.mubr.bf16.mxu0 %v559
      %833 = vmatmul.mubr.bf16.gmra.mxu0 %v558
      %v834 = vpop.f32.mrf.mxu0
      %v835 = vadd.f32 0.0, %v834
      %v836 = vpop.f32.mrf.mxu0
      %v837 = vpop.f32.mrf.mxu0
      %v838 = vadd.f32 0.0, %v837
      %v839 = vpop.f32.mrf.mxu0
      %840 = vmatprep.mubr.bf16.mxu0 %v562
      %841 = vmatmul.mubr.bf16.gmra.mxu0 %v561
      %v842 = vpop.f32.mrf.mxu0
      %v843 = vadd.f32 0.0, %v842
      %v844 = vpop.f32.mrf.mxu0
      %v845 = vpop.f32.mrf.mxu0
      %v846 = vadd.f32 0.0, %v845
      %v847 = vpop.f32.mrf.mxu0
      %848 = vmatprep.mubr.bf16.mxu0 %v565
      %849 = vmatmul.mubr.bf16.gmra.mxu0 %v564
      %v850 = vpop.f32.mrf.mxu0
      %v851 = vadd.f32 0.0, %v850
      %v852 = vpop.f32.mrf.mxu0
      %v853 = vpop.f32.mrf.mxu0
      %v854 = vadd.f32 0.0, %v853
      %v855 = vpop.f32.mrf.mxu0
      %856 = vmatprep.mubr.bf16.mxu0 %v568
      %857 = vmatmul.mubr.bf16.gmra.mxu0 %v567
      %v858 = vpop.f32.mrf.mxu0
      %v859 = vadd.f32 0.0, %v858
      %v860 = vpop.f32.mrf.mxu0
      %v861 = vpop.f32.mrf.mxu0
      %v862 = vadd.f32 0.0, %v861
      %v863 = vpop.f32.mrf.mxu0
      %864 = vmatprep.mubr.bf16.mxu0 %v571
      %865 = vmatmul.mubr.bf16.gmra.mxu0 %v570
      %v866 = vpop.f32.mrf.mxu0
      %v867 = vadd.f32 0.0, %v866
      %v868 = vpop.f32.mrf.mxu0
      %v869 = vpop.f32.mrf.mxu0
      %v870 = vadd.f32 0.0, %v869
      %v871 = vpop.f32.mrf.mxu0
      %872 = vmatprep.mubr.bf16.mxu0 %v574
      %873 = vmatmul.mubr.bf16.gmra.mxu0 %v573
      %v874 = vpop.f32.mrf.mxu0
      %v875 = vadd.f32 0.0, %v874
      %v876 = vpop.f32.mrf.mxu0
      %v877 = vpop.f32.mrf.mxu0
      %v878 = vadd.f32 0.0, %v877
      %v879 = vpop.f32.mrf.mxu0
      %880 = vmatprep.mubr.bf16.mxu0 %v577
      %881 = vmatmul.mubr.bf16.gmra.mxu0 %v576
      %v882 = vpop.f32.mrf.mxu0
      %v883 = vadd.f32 0.0, %v882
      %v884 = vpop.f32.mrf.mxu0
      %v885 = vpop.f32.mrf.mxu0
      %v886 = vadd.f32 0.0, %v885
      %v887 = vpop.f32.mrf.mxu0
      %888 = vmatprep.mubr.bf16.mxu0 %v580
      %889 = vmatmul.mubr.bf16.gmra.mxu0 %v579
      %v890 = vpop.f32.mrf.mxu0
      %v891 = vadd.f32 0.0, %v890
      %v892 = vpop.f32.mrf.mxu0
      %v893 = vpop.f32.mrf.mxu0
      %v894 = vadd.f32 0.0, %v893
      %v895 = vpop.f32.mrf.mxu0
      %896 = vmatprep.mubr.bf16.mxu0 %v583
      %897 = vmatmul.mubr.bf16.gmra.mxu0 %v582
      %v898 = vpop.f32.mrf.mxu0
      %v899 = vadd.f32 0.0, %v898
      %v900 = vpop.f32.mrf.mxu0
      %v901 = vpop.f32.mrf.mxu0
      %v902 = vadd.f32 0.0, %v901
      %v903 = vpop.f32.mrf.mxu0
      %904 = vmatprep.mubr.bf16.mxu0 %v586
      %905 = vmatmul.mubr.bf16.gmra.mxu0 %v585
      %v906 = vpop.f32.mrf.mxu0
      %v907 = vadd.f32 0.0, %v906
      %v908 = vpop.f32.mrf.mxu0
      %v909 = vpop.f32.mrf.mxu0
      %v910 = vadd.f32 0.0, %v909
      %v911 = vpop.f32.mrf.mxu0
      %912 = vmatprep.mubr.bf16.mxu0 %v589
      %913 = vmatmul.mubr.bf16.gmra.mxu0 %v588
      %v914 = vpop.f32.mrf.mxu0
      %v915 = vadd.f32 0.0, %v914
      %v916 = vpop.f32.mrf.mxu0
      %v917 = vpop.f32.mrf.mxu0
      %v918 = vadd.f32 0.0, %v917
      %v919 = vpop.f32.mrf.mxu0
      %920 = vmatprep.mubr.bf16.mxu0 %v592
      %921 = vmatmul.mubr.bf16.gmra.mxu0 %v591
      %v922 = vpop.f32.mrf.mxu0
      %v923 = vadd.f32 0.0, %v922
      %v924 = vpop.f32.mrf.mxu0
      %v925 = vpop.f32.mrf.mxu0
      %v926 = vadd.f32 0.0, %v925
      %v927 = vpop.f32.mrf.mxu0
      %928 = vmatprep.mubr.bf16.mxu0 %v595
      %929 = vmatmul.mubr.bf16.gmra.mxu0 %v594
      %v930 = vpop.f32.mrf.mxu0
      %v931 = vadd.f32 0.0, %v930
      %v932 = vpop.f32.mrf.mxu0
      %v933 = vpop.f32.mrf.mxu0
      %v934 = vadd.f32 0.0, %v933
      %v935 = vpop.f32.mrf.mxu0
      %936 = vmatprep.mubr.bf16.mxu0 %v598
      %937 = vmatmul.mubr.bf16.gmra.mxu0 %v597
      %v938 = vpop.f32.mrf.mxu0
      %v939 = vadd.f32 0.0, %v938
      %v940 = vpop.f32.mrf.mxu0
      %v941 = vpop.f32.mrf.mxu0
      %v942 = vadd.f32 0.0, %v941
      %v943 = vpop.f32.mrf.mxu0
      %944 = vmatprep.mubr.bf16.mxu0 %v601
      %945 = vmatmul.mubr.bf16.gmra.mxu0 %v600
      %v946 = vpop.f32.mrf.mxu0
      %v947 = vadd.f32 0.0, %v946
      %v948 = vpop.f32.mrf.mxu0
      %v949 = vpop.f32.mrf.mxu0
      %v950 = vadd.f32 0.0, %v949
      %v951 = vpop.f32.mrf.mxu0
      %952 = vdwg.mxu0
      %953 = vmatprep.subr.bf16.mxu0 0
      %954 = vmatpush1.bf16.msra.mxu0 0
      %955 = vmatprep.subr.bf16.mxu0 0
      %956 = vmatpush1.bf16.msra.mxu0 0
      %957 = vmatprep.subr.bf16.mxu0 0
      %958 = vmatpush1.bf16.msra.mxu0 0
      %959 = vmatprep.subr.bf16.mxu0 0
      %960 = vmatpush1.bf16.msra.mxu0 0
      %961 = vmatprep.subr.bf16.mxu0 0
      %962 = vmatpush1.bf16.msra.mxu0 0
      %963 = vmatprep.subr.bf16.mxu0 0
      %964 = vmatpush1.bf16.msra.mxu0 0
      %965 = vmatprep.subr.bf16.mxu0 0
      %966 = vmatpush1.bf16.msra.mxu0 %v724
      %967 = vmatprep.subr.bf16.mxu0 0
      %968 = vmatpush1.bf16.msra.mxu0 %v723
      %969 = vmatprep.subr.bf16.mxu0 0
      %970 = vmatpush2.bf16.msra.mxu0 0
      %971 = vmatprep.subr.bf16.mxu0 0
      %972 = vmatpush2.bf16.msra.mxu0 0
      %973 = vmatprep.subr.bf16.mxu0 0
      %974 = vmatpush2.bf16.msra.mxu0 0
      %975 = vmatprep.subr.bf16.mxu0 0
      %976 = vmatpush2.bf16.msra.mxu0 0
      %977 = vmatprep.subr.bf16.mxu0 0
      %978 = vmatpush2.bf16.msra.mxu0 0
      %979 = vmatprep.subr.bf16.mxu0 0
      %980 = vmatpush2.bf16.msra.mxu0 0
      %981 = vmatprep.subr.bf16.mxu0 0
      %982 = vmatpush2.bf16.msra.mxu0 0
      %983 = vmatprep.subr.bf16.mxu0 0
      %984 = vmatpush2.bf16.msra.mxu0 0
      %985 = vmatprep.mubr.bf16.mxu0 0
      %986 = vmatmul.mubr.bf16.gmra.mxu0 %v745
      %v987 = vpop.f32.mrf.mxu0
      %v988 = vadd.f32 %v827, %v987
      %v989 = vpop.f32.mrf.mxu0
      %v990 = vpop.f32.mrf.mxu0
      %v991 = vadd.f32 %v830, %v990
      %v992 = vpop.f32.mrf.mxu0
      %993 = vmatprep.mubr.bf16.mxu0 0
      %994 = vmatmul.mubr.bf16.gmra.mxu0 %v748
      %v995 = vpop.f32.mrf.mxu0
      %v996 = vadd.f32 %v835, %v995
      %v997 = vpop.f32.mrf.mxu0
      %v998 = vpop.f32.mrf.mxu0
      %v999 = vadd.f32 %v838, %v998
      %v1000 = vpop.f32.mrf.mxu0
      %1001 = vmatprep.mubr.bf16.mxu0 0
      %1002 = vmatmul.mubr.bf16.gmra.mxu0 %v751
      %v1003 = vpop.f32.mrf.mxu0
      %v1004 = vadd.f32 %v843, %v1003
      %v1005 = vpop.f32.mrf.mxu0
      %v1006 = vpop.f32.mrf.mxu0
      %v1007 = vadd.f32 %v846, %v1006
      %v1008 = vpop.f32.mrf.mxu0
      %1009 = vmatprep.mubr.bf16.mxu0 0
      %1010 = vmatmul.mubr.bf16.gmra.mxu0 %v754
      %v1011 = vpop.f32.mrf.mxu0
      %v1012 = vadd.f32 %v851, %v1011
      %v1013 = vpop.f32.mrf.mxu0
      %v1014 = vpop.f32.mrf.mxu0
      %v1015 = vadd.f32 %v854, %v1014
      %v1016 = vpop.f32.mrf.mxu0
      %1017 = vmatprep.mubr.bf16.mxu0 0
      %1018 = vmatmul.mubr.bf16.gmra.mxu0 %v757
      %v1019 = vpop.f32.mrf.mxu0
      %v1020 = vadd.f32 %v859, %v1019
      %v1021 = vpop.f32.mrf.mxu0
      %v1022 = vpop.f32.mrf.mxu0
      %v1023 = vadd.f32 %v862, %v1022
      %v1024 = vpop.f32.mrf.mxu0
      %1025 = vmatprep.mubr.bf16.mxu0 0
      %1026 = vmatmul.mubr.bf16.gmra.mxu0 %v760
      %v1027 = vpop.f32.mrf.mxu0
      %v1028 = vadd.f32 %v867, %v1027
      %v1029 = vpop.f32.mrf.mxu0
      %v1030 = vpop.f32.mrf.mxu0
      %v1031 = vadd.f32 %v870, %v1030
      %v1032 = vpop.f32.mrf.mxu0
      %1033 = vmatprep.mubr.bf16.mxu0 0
      %1034 = vmatmul.mubr.bf16.gmra.mxu0 %v763
      %v1035 = vpop.f32.mrf.mxu0
      %v1036 = vadd.f32 %v875, %v1035
      %v1037 = vpop.f32.mrf.mxu0
      %v1038 = vpop.f32.mrf.mxu0
      %v1039 = vadd.f32 %v878, %v1038
      %v1040 = vpop.f32.mrf.mxu0
      %1041 = vmatprep.mubr.bf16.mxu0 0
      %1042 = vmatmul.mubr.bf16.gmra.mxu0 %v766
      %v1043 = vpop.f32.mrf.mxu0
      %v1044 = vadd.f32 %v883, %v1043
      %v1045 = vpop.f32.mrf.mxu0
      %v1046 = vpop.f32.mrf.mxu0
      %v1047 = vadd.f32 %v886, %v1046
      %v1048 = vpop.f32.mrf.mxu0
      %1049 = vmatprep.mubr.bf16.mxu0 0
      %1050 = vmatmul.mubr.bf16.gmra.mxu0 %v769
      %v1051 = vpop.f32.mrf.mxu0
      %v1052 = vadd.f32 %v891, %v1051
      %v1053 = vpop.f32.mrf.mxu0
      %v1054 = vpop.f32.mrf.mxu0
      %v1055 = vadd.f32 %v894, %v1054
      %v1056 = vpop.f32.mrf.mxu0
      %1057 = vmatprep.mubr.bf16.mxu0 0
      %1058 = vmatmul.mubr.bf16.gmra.mxu0 %v772
      %v1059 = vpop.f32.mrf.mxu0
      %v1060 = vadd.f32 %v899, %v1059
      %v1061 = vpop.f32.mrf.mxu0
      %v1062 = vpop.f32.mrf.mxu0
      %v1063 = vadd.f32 %v902, %v1062
      %v1064 = vpop.f32.mrf.mxu0
      %1065 = vmatprep.mubr.bf16.mxu0 0
      %1066 = vmatmul.mubr.bf16.gmra.mxu0 %v775
      %v1067 = vpop.f32.mrf.mxu0
      %v1068 = vadd.f32 %v907, %v1067
      %v1069 = vpop.f32.mrf.mxu0
      %v1070 = vpop.f32.mrf.mxu0
      %v1071 = vadd.f32 %v910, %v1070
      %v1072 = vpop.f32.mrf.mxu0
      %1073 = vmatprep.mubr.bf16.mxu0 0
      %1074 = vmatmul.mubr.bf16.gmra.mxu0 %v778
      %v1075 = vpop.f32.mrf.mxu0
      %v1076 = vadd.f32 %v915, %v1075
      %v1077 = vpop.f32.mrf.mxu0
      %v1078 = vpop.f32.mrf.mxu0
      %v1079 = vadd.f32 %v918, %v1078
      %v1080 = vpop.f32.mrf.mxu0
      %1081 = vmatprep.mubr.bf16.mxu0 0
      %1082 = vmatmul.mubr.bf16.gmra.mxu0 %v781
      %v1083 = vpop.f32.mrf.mxu0
      %v1084 = vadd.f32 %v923, %v1083
      %v1085 = vpop.f32.mrf.mxu0
      %v1086 = vpop.f32.mrf.mxu0
      %v1087 = vadd.f32 %v926, %v1086
      %v1088 = vpop.f32.mrf.mxu0
      %1089 = vmatprep.mubr.bf16.mxu0 0
      %1090 = vmatmul.mubr.bf16.gmra.mxu0 %v784
      %v1091 = vpop.f32.mrf.mxu0
      %v1092 = vadd.f32 %v931, %v1091
      %v1093 = vpop.f32.mrf.mxu0
      %v1094 = vpop.f32.mrf.mxu0
      %v1095 = vadd.f32 %v934, %v1094
      %v1096 = vpop.f32.mrf.mxu0
      %1097 = vmatprep.mubr.bf16.mxu0 0
      %1098 = vmatmul.mubr.bf16.gmra.mxu0 %v787
      %v1099 = vpop.f32.mrf.mxu0
      %v1100 = vadd.f32 %v939, %v1099
      %v1101 = vpop.f32.mrf.mxu0
      %v1102 = vpop.f32.mrf.mxu0
      %v1103 = vadd.f32 %v942, %v1102
      %v1104 = vpop.f32.mrf.mxu0
      %1105 = vmatprep.mubr.bf16.mxu0 0
      %1106 = vmatmul.mubr.bf16.gmra.mxu0 %v790
      %v1107 = vpop.f32.mrf.mxu0
      %v1108 = vadd.f32 %v947, %v1107
      %v1109 = vpop.f32.mrf.mxu0
      %v1110 = vpop.f32.mrf.mxu0
      %v1111 = vadd.f32 %v950, %v1110
      %v1112 = vpop.f32.mrf.mxu0
      %1113 = vdwg.mxu0
      %v1114 = vadd.f32 %v263, %v988
      %v1115 = vadd.f32 %v264, %v991
      %v1116 = vadd.f32 %v265, %v996
      %v1117 = vadd.f32 %v266, %v999
      %v1118 = vadd.f32 %v267, %v1004
      %v1119 = vadd.f32 %v268, %v1007
      %v1120 = vadd.f32 %v269, %v1012
      %v1121 = vadd.f32 %v270, %v1015
      %v1122 = vadd.f32 %v271, %v1020
      %v1123 = vadd.f32 %v272, %v1023
      %v1124 = vadd.f32 %v273, %v1028
      %v1125 = vadd.f32 %v274, %v1031
      %v1126 = vadd.f32 %v275, %v1036
      %v1127 = vadd.f32 %v276, %v1039
      %v1128 = vadd.f32 %v277, %v1044
      %v1129 = vadd.f32 %v278, %v1047
      %v1130 = vadd.f32 %v279, %v1052
      %v1131 = vadd.f32 %v280, %v1055
      %v1132 = vadd.f32 %v281, %v1060
      %v1133 = vadd.f32 %v282, %v1063
      %v1134 = vadd.f32 %v283, %v1068
      %v1135 = vadd.f32 %v284, %v1071
      %v1136 = vadd.f32 %v285, %v1076
      %v1137 = vadd.f32 %v286, %v1079
      %v1138 = vadd.f32 %v287, %v1084
      %v1139 = vadd.f32 %v288, %v1087
      %v1140 = vadd.f32 %v289, %v1092
      %v1141 = vadd.f32 %v290, %v1095
      %v1142 = vadd.f32 %v291, %v1100
      %v1143 = vadd.f32 %v292, %v1103
      %v1144 = vadd.f32 %v293, %v1108
      %v1145 = vadd.f32 %v294, %v1111
      %1146 = vst [vmem:[#allocation2] sm:$0xff] %v1114
      %1147 = vst [vmem:[#allocation2 + $0x8] sm:$0xff] %v1115
      %1148 = vst [vmem:[#allocation2 + $0x10] sm:$0xff] %v1116
      %1149 = vst [vmem:[#allocation2 + $0x18] sm:$0xff] %v1117
      %1150 = vst [vmem:[#allocation2 + $0x20] sm:$0xff] %v1118
      %1151 = vst [vmem:[#allocation2 + $0x28] sm:$0xff] %v1119
      %1152 = vst [vmem:[#allocation2 + $0x30] sm:$0xff] %v1120
      %1153 = vst [vmem:[#allocation2 + $0x38] sm:$0xff] %v1121
      %1154 = vst [vmem:[#allocation2 + $0x40] sm:$0xff] %v1122
      %1155 = vst [vmem:[#allocation2 + $0x48] sm:$0xff] %v1123
      %1156 = vst [vmem:[#allocation2 + $0x50] sm:$0xff] %v1124
      %1157 = vst [vmem:[#allocation2 + $0x58] sm:$0xff] %v1125
      %1158 = vst [vmem:[#allocation2 + $0x60] sm:$0xff] %v1126
      %1159 = vst [vmem:[#allocation2 + $0x68] sm:$0xff] %v1127
      %1160 = vst [vmem:[#allocation2 + $0x70] sm:$0xff] %v1128
      %1161 = vst [vmem:[#allocation2 + $0x78] sm:$0xff] %v1129
      %1162 = vst [vmem:[#allocation2 + $0x80] sm:$0xff] %v1130
      %1163 = vst [vmem:[#allocation2 + $0x88] sm:$0xff] %v1131
      %1164 = vst [vmem:[#allocation2 + $0x90] sm:$0xff] %v1132
      %1165 = vst [vmem:[#allocation2 + $0x98] sm:$0xff] %v1133
      %1166 = vst [vmem:[#allocation2 + $0xa0] sm:$0xff] %v1134
      %1167 = vst [vmem:[#allocation2 + $0xa8] sm:$0xff] %v1135
      %1168 = vst [vmem:[#allocation2 + $0xb0] sm:$0xff] %v1136
      %1169 = vst [vmem:[#allocation2 + $0xb8] sm:$0xff] %v1137
      %1170 = vst [vmem:[#allocation2 + $0xc0] sm:$0xff] %v1138
      %1171 = vst [vmem:[#allocation2 + $0xc8] sm:$0xff] %v1139
      %1172 = vst [vmem:[#allocation2 + $0xd0] sm:$0xff] %v1140
      %1173 = vst [vmem:[#allocation2 + $0xd8] sm:$0xff] %v1141
      %1174 = vst [vmem:[#allocation2 + $0xe0] sm:$0xff] %v1142
      %1175 = vst [vmem:[#allocation2 + $0xe8] sm:$0xff] %v1143
      %1176 = vst [vmem:[#allocation2 + $0xf0] sm:$0xff] %v1144
      %1177 = vst [vmem:[#allocation2 + $0xf8] sm:$0xff] %v1145
      // Predicated region
      $region33: #{icnet_forward.9} parent=27 // pred_check
        %p1178 = pneg %p227
      $region34: #{icnet_forward.9} parent=27 // pred_check_branch
        %1180 = sbr.rel (%p1178) target = $region36
      $region35: #{icnet_forward.9} parent=27 // pred_region
        %v1181 = vld [vmem:[#allocation2] sm:$0xff]
        %v1182 = vld [vmem:[#allocation2 + $0x8] sm:$0xff]
        %v1183 = vld [vmem:[#allocation2 + $0x10] sm:$0xff]
        %v1184 = vld [vmem:[#allocation2 + $0x18] sm:$0xff]
        %v1185 = vld [vmem:[#allocation2 + $0x20] sm:$0xff]
        %v1186 = vld [vmem:[#allocation2 + $0x28] sm:$0xff]
        %v1187 = vld [vmem:[#allocation2 + $0x30] sm:$0xff]
        %v1188 = vld [vmem:[#allocation2 + $0x38] sm:$0xff]
        %v1189 = vld [vmem:[#allocation2 + $0x40] sm:$0xff]
        %v1190 = vld [vmem:[#allocation2 + $0x48] sm:$0xff]
        %v1191 = vld [vmem:[#allocation2 + $0x50] sm:$0xff]
        %v1192 = vld [vmem:[#allocation2 + $0x58] sm:$0xff]
        %v1193 = vld [vmem:[#allocation2 + $0x60] sm:$0xff]
        %v1194 = vld [vmem:[#allocation2 + $0x68] sm:$0xff]
        %v1195 = vld [vmem:[#allocation2 + $0x70] sm:$0xff]
        %v1196 = vld [vmem:[#allocation2 + $0x78] sm:$0xff]
        %v1197 = vld [vmem:[#allocation2 + $0x80] sm:$0xff]
        %v1198 = vld [vmem:[#allocation2 + $0x88] sm:$0xff]
        %v1199 = vld [vmem:[#allocation2 + $0x90] sm:$0xff]
        %v1200 = vld [vmem:[#allocation2 + $0x98] sm:$0xff]
        %v1201 = vld [vmem:[#allocation2 + $0xa0] sm:$0xff]
        %v1202 = vld [vmem:[#allocation2 + $0xa8] sm:$0xff]
        %v1203 = vld [vmem:[#allocation2 + $0xb0] sm:$0xff]
        %v1204 = vld [vmem:[#allocation2 + $0xb8] sm:$0xff]
        %v1205 = vld [vmem:[#allocation2 + $0xc0] sm:$0xff]
        %v1206 = vld [vmem:[#allocation2 + $0xc8] sm:$0xff]
        %v1207 = vld [vmem:[#allocation2 + $0xd0] sm:$0xff]
        %v1208 = vld [vmem:[#allocation2 + $0xd8] sm:$0xff]
        %v1209 = vld [vmem:[#allocation2 + $0xe0] sm:$0xff]
        %v1210 = vld [vmem:[#allocation2 + $0xe8] sm:$0xff]
        %v1211 = vld [vmem:[#allocation2 + $0xf0] sm:$0xff]
        %v1212 = vld [vmem:[#allocation2 + $0xf8] sm:$0xff]
        %v1213 = vmax.f32 %v1181, 0.0
        %v1214 = vmax.f32 %v1182, 0.0
        %v1215 = vmax.f32 %v1183, 0.0
        %v1216 = vmax.f32 %v1184, 0.0
        %v1217 = vmax.f32 %v1185, 0.0
        %v1218 = vmax.f32 %v1186, 0.0
        %v1219 = vmax.f32 %v1187, 0.0
        %v1220 = vmax.f32 %v1188, 0.0
        %v1221 = vmax.f32 %v1189, 0.0
        %v1222 = vmax.f32 %v1190, 0.0
        %v1223 = vmax.f32 %v1191, 0.0
        %v1224 = vmax.f32 %v1192, 0.0
        %v1225 = vmax.f32 %v1193, 0.0
        %v1226 = vmax.f32 %v1194, 0.0
        %v1227 = vmax.f32 %v1195, 0.0
        %v1228 = vmax.f32 %v1196, 0.0
        %v1229 = vmax.f32 %v1197, 0.0
        %v1230 = vmax.f32 %v1198, 0.0
        %v1231 = vmax.f32 %v1199, 0.0
        %v1232 = vmax.f32 %v1200, 0.0
        %v1233 = vmax.f32 %v1201, 0.0
        %v1234 = vmax.f32 %v1202, 0.0
        %v1235 = vmax.f32 %v1203, 0.0
        %v1236 = vmax.f32 %v1204, 0.0
        %v1237 = vmax.f32 %v1205, 0.0
        %v1238 = vmax.f32 %v1206, 0.0
        %v1239 = vmax.f32 %v1207, 0.0
        %v1240 = vmax.f32 %v1208, 0.0
        %v1241 = vmax.f32 %v1209, 0.0
        %v1242 = vmax.f32 %v1210, 0.0
        %v1243 = vmax.f32 %v1211, 0.0
        %v1244 = vmax.f32 %v1212, 0.0
        %v1245 = vpack.c.bf16 %v1214, %v1213
        %v1246 = vpack.c.bf16 %v1216, %v1215
        %v1247 = vpack.c.bf16 %v1218, %v1217
        %v1248 = vpack.c.bf16 %v1220, %v1219
        %v1249 = vpack.c.bf16 %v1222, %v1221
        %v1250 = vpack.c.bf16 %v1224, %v1223
        %v1251 = vpack.c.bf16 %v1226, %v1225
        %v1252 = vpack.c.bf16 %v1228, %v1227
        %v1253 = vpack.c.bf16 %v1230, %v1229
        %v1254 = vpack.c.bf16 %v1232, %v1231
        %v1255 = vpack.c.bf16 %v1234, %v1233
        %v1256 = vpack.c.bf16 %v1236, %v1235
        %v1257 = vpack.c.bf16 %v1238, %v1237
        %v1258 = vpack.c.bf16 %v1240, %v1239
        %v1259 = vpack.c.bf16 %v1242, %v1241
        %v1260 = vpack.c.bf16 %v1244, %v1243
        %v1277 = vunpack.c.l.b16 %v1245
        %v1278 = vunpack.c.h.b16 %v1245
        %v1279 = vunpack.c.l.b16 %v1246
        %v1280 = vunpack.c.h.b16 %v1246
        %v1281 = vunpack.c.l.b16 %v1247
        %v1282 = vunpack.c.h.b16 %v1247
        %v1283 = vunpack.c.l.b16 %v1248
        %v1284 = vunpack.c.h.b16 %v1248
        %v1285 = vunpack.c.l.b16 %v1249
        %v1286 = vunpack.c.h.b16 %v1249
        %v1287 = vunpack.c.l.b16 %v1250
        %v1288 = vunpack.c.h.b16 %v1250
        %v1289 = vunpack.c.l.b16 %v1251
        %v1290 = vunpack.c.h.b16 %v1251
        %v1291 = vunpack.c.l.b16 %v1252
        %v1292 = vunpack.c.h.b16 %v1252
        %v1293 = vunpack.c.l.b16 %v1253
        %v1294 = vunpack.c.h.b16 %v1253
        %v1295 = vunpack.c.l.b16 %v1254
        %v1296 = vunpack.c.h.b16 %v1254
        %v1297 = vunpack.c.l.b16 %v1255
        %v1298 = vunpack.c.h.b16 %v1255
        %v1299 = vunpack.c.l.b16 %v1256
        %v1300 = vunpack.c.h.b16 %v1256
        %v1301 = vunpack.c.l.b16 %v1257
        %v1302 = vunpack.c.h.b16 %v1257
        %v1303 = vunpack.c.l.b16 %v1258
        %v1304 = vunpack.c.h.b16 %v1258
        %v1305 = vunpack.c.l.b16 %v1259
        %v1306 = vunpack.c.h.b16 %v1259
        %v1307 = vunpack.c.l.b16 %v1260
        %v1308 = vunpack.c.h.b16 %v1260
        %v1309 = vpack.c.b16 %v1277, %v1277
        %v1310 = vpack.c.b16 %v1278, %v1278
        %v1311 = vpack.c.b16 %v1279, %v1279
        %v1312 = vpack.c.b16 %v1280, %v1280
        %v1313 = vpack.c.b16 %v1281, %v1281
        %v1314 = vpack.c.b16 %v1282, %v1282
        %v1315 = vpack.c.b16 %v1283, %v1283
        %v1316 = vpack.c.b16 %v1284, %v1284
        %v1317 = vpack.c.b16 %v1285, %v1285
        %v1318 = vpack.c.b16 %v1286, %v1286
        %v1319 = vpack.c.b16 %v1287, %v1287
        %v1320 = vpack.c.b16 %v1288, %v1288
        %v1321 = vpack.c.b16 %v1289, %v1289
        %v1322 = vpack.c.b16 %v1290, %v1290
        %v1323 = vpack.c.b16 %v1291, %v1291
        %v1324 = vpack.c.b16 %v1292, %v1292
        %v1325 = vpack.c.b16 %v1293, %v1293
        %v1326 = vpack.c.b16 %v1294, %v1294
        %v1327 = vpack.c.b16 %v1295, %v1295
        %v1328 = vpack.c.b16 %v1296, %v1296
        %v1329 = vpack.c.b16 %v1297, %v1297
        %v1330 = vpack.c.b16 %v1298, %v1298
        %v1331 = vpack.c.b16 %v1299, %v1299
        %v1332 = vpack.c.b16 %v1300, %v1300
        %v1333 = vpack.c.b16 %v1301, %v1301
        %v1334 = vpack.c.b16 %v1302, %v1302
        %v1335 = vpack.c.b16 %v1303, %v1303
        %v1336 = vpack.c.b16 %v1304, %v1304
        %v1337 = vpack.c.b16 %v1305, %v1305
        %v1338 = vpack.c.b16 %v1306, %v1306
        %v1339 = vpack.c.b16 %v1307, %v1307
        %v1340 = vpack.c.b16 %v1308, %v1308
        %1373 = vst [vmem:[%s224] sm:$0xf] %v1309
        %1374 = vst [vmem:[%s224 + $0x4] sm:$0xf] %v1310
        %1375 = vst [vmem:[%s224 + $0x8] sm:$0xf] %v1311
        %1376 = vst [vmem:[%s224 + $0xc] sm:$0xf] %v1312
        %1377 = vst [vmem:[%s224 + $0x10] sm:$0xf] %v1313
        %1378 = vst [vmem:[%s224 + $0x14] sm:$0xf] %v1314
        %1379 = vst [vmem:[%s224 + $0x18] sm:$0xf] %v1315
        %1380 = vst [vmem:[%s224 + $0x1c] sm:$0xf] %v1316
        %1381 = vst [vmem:[%s224 + $0x20] sm:$0xf] %v1317
        %1382 = vst [vmem:[%s224 + $0x24] sm:$0xf] %v1318
        %1383 = vst [vmem:[%s224 + $0x28] sm:$0xf] %v1319
        %1384 = vst [vmem:[%s224 + $0x2c] sm:$0xf] %v1320
        %1385 = vst [vmem:[%s224 + $0x30] sm:$0xf] %v1321
        %1386 = vst [vmem:[%s224 + $0x34] sm:$0xf] %v1322
        %1387 = vst [vmem:[%s224 + $0x38] sm:$0xf] %v1323
        %1388 = vst [vmem:[%s224 + $0x3c] sm:$0xf] %v1324
        %1389 = vst [vmem:[%s224 + $0x40] sm:$0xf] %v1325
        %1390 = vst [vmem:[%s224 + $0x44] sm:$0xf] %v1326
        %1391 = vst [vmem:[%s224 + $0x48] sm:$0xf] %v1327
        %1392 = vst [vmem:[%s224 + $0x4c] sm:$0xf] %v1328
        %1393 = vst [vmem:[%s224 + $0x50] sm:$0xf] %v1329
        %1394 = vst [vmem:[%s224 + $0x54] sm:$0xf] %v1330
        %1395 = vst [vmem:[%s224 + $0x58] sm:$0xf] %v1331
        %1396 = vst [vmem:[%s224 + $0x5c] sm:$0xf] %v1332
        %1397 = vst [vmem:[%s224 + $0x60] sm:$0xf] %v1333
        %1398 = vst [vmem:[%s224 + $0x64] sm:$0xf] %v1334
        %1399 = vst [vmem:[%s224 + $0x68] sm:$0xf] %v1335
        %1400 = vst [vmem:[%s224 + $0x6c] sm:$0xf] %v1336
        %1401 = vst [vmem:[%s224 + $0x70] sm:$0xf] %v1337
        %1402 = vst [vmem:[%s224 + $0x74] sm:$0xf] %v1338
        %1403 = vst [vmem:[%s224 + $0x78] sm:$0xf] %v1339
        %1404 = vst [vmem:[%s224 + $0x7c] sm:$0xf] %v1340
      $region36: #{icnet_forward.9} parent=27 // pred_fallthru
        _
      %s1405 = smul.u32 32, %s18
      %p1406 = scmp.lt.s32.totalorder %s1405, 63
      %s1407 = scalar_select %p1406, %s1405, 63
      %p1408 = scmp.lt.s32.totalorder %s19, 0
      %s1409 = scalar_select %p1408, %s19, 0
      %s1410 = sadd.s32 %s1409, %s1407
      %s1411 = smul.addr %s1410, 4
      %s1412 = scalar_lea.vmem %s2, %s1411
      // Predicated region
      $region37: #{icnet_forward.9} parent=27 // pred_check
        %p1413 = pneg %p108
      $region38: #{icnet_forward.9} parent=27 // pred_check_branch
        %1415 = sbr.rel (%p1413) target = $region40
      $region39: #{icnet_forward.9} parent=27 // pred_region
        %s1416 = smul.u32 32, %s18
      $region40: #{icnet_forward.9} parent=27 // pred_fallthru
        _
    $region28: #{icnet_forward.9} parent=5 // pred_fallthru
      _
    %p1417 = scmp.le.s32.totalorder 2, %s8
    // Predicated region
    $region41: #{icnet_forward.9} parent=5 // pred_check
      %p1418 = pneg %p1417
    $region42: #{icnet_forward.9} parent=5 // pred_check_branch
      %1420 = sbr.rel (%p1418) target = $region44
    $region43: #{icnet_forward.9} parent=5 // pred_region
      %s1421 = ssub.s32 %s8, 2
      // Predicated region
      $region45: #{icnet_forward.9} parent=43 // pred_check
        %p1422 = pneg %p114
      $region46: #{icnet_forward.9} parent=43 // pred_check_branch
        %1424 = sbr.rel (%p1422) target = $region48
      $region47: #{icnet_forward.9} parent=43 // pred_region
        %s1425 = smul.u32 32, %s21
        %p1426 = scmp.lt.s32.totalorder %s1425, 63
        %s1427 = scalar_select %p1426, %s1425, 63
        %p1428 = scmp.lt.s32.totalorder %s22, 0
        %s1429 = scalar_select %p1428, %s22, 0
        %s1430 = sadd.s32 %s1429, %s1427
        %s1431 = smul.addr %s1430, 4
        %s1432 = scalar_lea.vmem %s2, %s1431
      $region48: #{icnet_forward.9} parent=43 // pred_fallthru
        _
    $region44: #{icnet_forward.9} parent=5 // pred_fallthru
      _
  $region6: #{icnet_forward.9} parent=0 // loop_footer
    %s12 = sadd.s32 1, %s8
  $region7: #{icnet_forward.9} parent=0 // loop_footer_branch
    %7 = sbr.rel target = $region3
  $region8: #{icnet_forward.9} parent=0 // loop_exit
    _

// kernel: icnet_forward.14
$region0: #{icnet_forward.14}
  #allocation0 [shape = 'u32[]', space=smem, size = 0x4, offset = 0x4, fixed_abs, tag = 'smem constant byte address 0x4 - core index']
  #allocation1 [shape = 'u32[144,128]{1,0:T(1,128)}', space=vmem, size = 0x12000, scoped, tag = 'internal scratch']
  #allocation2 [shape = 'f32[128,128]{1,0:T(8,128)}', space=vmem, size = 0x10000, scoped, tag = 'scratch operand']
  %s0 = inlined_call_operand.vmem [shape: bf16[128,64], index: 0, kind: input, shape index: {}]
  %s1 = inlined_call_operand.vmem [shape: bf16[64,128], index: 1, kind: input, shape index: {}]
  %s2 = inlined_call_operand.vmem [shape: bf16[128,128], index: 2, kind: input, shape index: {}]
  %s3 = inlined_call_operand.vmem [shape: bf16[128,128], index: 3, kind: output, shape index: {}]
  %s4 = sld [smem:[#allocation0]]
  $region30: #{icnet_forward.14} parent=0
    _
  %s6 = ssub.s32 1, %s4
  %s7 = scalar_select 0, %s6, %s4
  // Predicated region
  $region2: #{icnet_forward.14} parent=0 // pred_check
    _
  $region3: #{icnet_forward.14} parent=0 // pred_check_branch
    %9 = sbr.rel (0) target = $region5
  $region4: #{icnet_forward.14} parent=0 // pred_region
    _
  $region5: #{icnet_forward.14} parent=0 // pred_fallthru
    _
  // Predicated region
  $region6: #{icnet_forward.14} parent=0 // pred_check
    _
  $region7: #{icnet_forward.14} parent=0 // pred_check_branch
    %11 = sbr.rel (0) target = $region9
  $region8: #{icnet_forward.14} parent=0 // pred_region
    _
  $region9: #{icnet_forward.14} parent=0 // pred_fallthru
    _
  // Predicated region
  $region10: #{icnet_forward.14} parent=0 // pred_check
    _
  $region11: #{icnet_forward.14} parent=0 // pred_check_branch
    %13 = sbr.rel (0) target = $region13
  $region12: #{icnet_forward.14} parent=0 // pred_region
    _
  $region13: #{icnet_forward.14} parent=0 // pred_fallthru
    _
  %p15 = scmp.eq.s32.totalorder 0, 0
  // Predicated region
  $region14: #{icnet_forward.14} parent=0 // pred_check
    %p16 = pneg %p15
  $region15: #{icnet_forward.14} parent=0 // pred_check_branch
    %18 = sbr.rel (%p16) target = $region17
  $region16: #{icnet_forward.14} parent=0 // pred_region
    %19 = vst [vmem:[#allocation2] sm:$0xff] 0.0
    %20 = vst [vmem:[#allocation2 + $0x8] sm:$0xff] 0.0
    %21 = vst [vmem:[#allocation2 + $0x10] sm:$0xff] 0.0
    %22 = vst [vmem:[#allocation2 + $0x18] sm:$0xff] 0.0
    %23 = vst [vmem:[#allocation2 + $0x20] sm:$0xff] 0.0
    %24 = vst [vmem:[#allocation2 + $0x28] sm:$0xff] 0.0
    %25 = vst [vmem:[#allocation2 + $0x30] sm:$0xff] 0.0
    %26 = vst [vmem:[#allocation2 + $0x38] sm:$0xff] 0.0
    %27 = vst [vmem:[#allocation2 + $0x40] sm:$0xff] 0.0
    %28 = vst [vmem:[#allocation2 + $0x48] sm:$0xff] 0.0
    %29 = vst [vmem:[#allocation2 + $0x50] sm:$0xff] 0.0
    %30 = vst [vmem:[#allocation2 + $0x58] sm:$0xff] 0.0
    %31 = vst [vmem:[#allocation2 + $0x60] sm:$0xff] 0.0
    %32 = vst [vmem:[#allocation2 + $0x68] sm:$0xff] 0.0
    %33 = vst [vmem:[#allocation2 + $0x70] sm:$0xff] 0.0
    %34 = vst [vmem:[#allocation2 + $0x78] sm:$0xff] 0.0
  $region17: #{icnet_forward.14} parent=0 // pred_fallthru
    _
  %v35 = vld [vmem:[#allocation2] sm:$0xff]
  %v36 = vld [vmem:[#allocation2 + $0x8] sm:$0xff]
  %v37 = vld [vmem:[#allocation2 + $0x10] sm:$0xff]
  %v38 = vld [vmem:[#allocation2 + $0x18] sm:$0xff]
  %v39 = vld [vmem:[#allocation2 + $0x20] sm:$0xff]
  %v40 = vld [vmem:[#allocation2 + $0x28] sm:$0xff]
  %v41 = vld [vmem:[#allocation2 + $0x30] sm:$0xff]
  %v42 = vld [vmem:[#allocation2 + $0x38] sm:$0xff]
  %v43 = vld [vmem:[#allocation2 + $0x40] sm:$0xff]
  %v44 = vld [vmem:[#allocation2 + $0x48] sm:$0xff]
  %v45 = vld [vmem:[#allocation2 + $0x50] sm:$0xff]
  %v46 = vld [vmem:[#allocation2 + $0x58] sm:$0xff]
  %v47 = vld [vmem:[#allocation2 + $0x60] sm:$0xff]
  %v48 = vld [vmem:[#allocation2 + $0x68] sm:$0xff]
  %v49 = vld [vmem:[#allocation2 + $0x70] sm:$0xff]
  %v50 = vld [vmem:[#allocation2 + $0x78] sm:$0xff]
  %v51 = vld [vmem:[%s0] sm:$0xf]
  %v52 = vld [vmem:[%s0 + $0x4] sm:$0xf]
  %v53 = vld [vmem:[%s0 + $0x8] sm:$0xf]
  %v54 = vld [vmem:[%s0 + $0xc] sm:$0xf]
  %v55 = vld [vmem:[%s0 + $0x10] sm:$0xf]
  %v56 = vld [vmem:[%s0 + $0x14] sm:$0xf]
  %v57 = vld [vmem:[%s0 + $0x18] sm:$0xf]
  %v58 = vld [vmem:[%s0 + $0x1c] sm:$0xf]
  %v59 = vld [vmem:[%s0 + $0x20] sm:$0xf]
  %v60 = vld [vmem:[%s0 + $0x24] sm:$0xf]
  %v61 = vld [vmem:[%s0 + $0x28] sm:$0xf]
  %v62 = vld [vmem:[%s0 + $0x2c] sm:$0xf]
  %v63 = vld [vmem:[%s0 + $0x30] sm:$0xf]
  %v64 = vld [vmem:[%s0 + $0x34] sm:$0xf]
  %v65 = vld [vmem:[%s0 + $0x38] sm:$0xf]
  %v66 = vld [vmem:[%s0 + $0x3c] sm:$0xf]
  %v67 = vld [vmem:[%s1] sm:$0xf]
  %v68 = vld [vmem:[%s1 + $0x4] sm:$0xf]
  %v69 = vld [vmem:[%s1 + $0x8] sm:$0xf]
  %v70 = vld [vmem:[%s1 + $0xc] sm:$0xf]
  %v71 = vld [vmem:[%s1 + $0x10] sm:$0xf]
  %v72 = vld [vmem:[%s1 + $0x14] sm:$0xf]
  %v73 = vld [vmem:[%s1 + $0x18] sm:$0xf]
  %v74 = vld [vmem:[%s1 + $0x1c] sm:$0xf]
  %v91 = vunpack.c.l.b16 %v51
  %v92 = vunpack.c.l.b16 %v52
  %v93 = vunpack.c.l.b16 %v53
  %v94 = vunpack.c.l.b16 %v54
  %v95 = vunpack.c.l.b16 %v55
  %v96 = vunpack.c.l.b16 %v56
  %v97 = vunpack.c.l.b16 %v57
  %v98 = vunpack.c.l.b16 %v58
  %v99 = vunpack.c.l.b16 %v59
  %v100 = vunpack.c.l.b16 %v60
  %v101 = vunpack.c.l.b16 %v61
  %v102 = vunpack.c.l.b16 %v62
  %v103 = vunpack.c.l.b16 %v63
  %v104 = vunpack.c.l.b16 %v64
  %v105 = vunpack.c.l.b16 %v65
  %v106 = vunpack.c.l.b16 %v66
  %v107 = vpack.c.b16 %v92, %v91
  %v108 = vpack.c.b16 %v94, %v93
  %v109 = vpack.c.b16 %v96, %v95
  %v110 = vpack.c.b16 %v98, %v97
  %v111 = vpack.c.b16 %v100, %v99
  %v112 = vpack.c.b16 %v102, %v101
  %v113 = vpack.c.b16 %v104, %v103
  %v114 = vpack.c.b16 %v106, %v105
  %v123 = vunpack.c.l.b16 %v67
  %v124 = vunpack.c.l.b16 %v68
  %v125 = vunpack.c.l.b16 %v69
  %v126 = vunpack.c.l.b16 %v70
  %v127 = vunpack.c.l.b16 %v71
  %v128 = vunpack.c.l.b16 %v72
  %v129 = vunpack.c.l.b16 %v73
  %v130 = vunpack.c.l.b16 %v74
  %v131 = vpack.c.b16 %v124, %v123
  %v132 = vpack.c.b16 %v126, %v125
  %v133 = vpack.c.b16 %v128, %v127
  %v134 = vpack.c.b16 %v130, %v129
  %vm139 = vcmask 523264
  %v141 = vsel %vm139, %v107, 0
  %v144 = vsel %vm139, %v108, 0
  %v147 = vsel %vm139, %v109, 0
  %v150 = vsel %vm139, %v110, 0
  %v153 = vsel %vm139, %v111, 0
  %v156 = vsel %vm139, %v112, 0
  %v159 = vsel %vm139, %v113, 0
  %v162 = vsel %vm139, %v114, 0
  %164 = vmatprep.subr.bf16.mxu0 0
  %165 = vmatpush1.bf16.msra.mxu0 0
  %166 = vmatprep.subr.bf16.mxu0 0
  %167 = vmatpush1.bf16.msra.mxu0 0
  %168 = vmatprep.subr.bf16.mxu0 0
  %169 = vmatpush1.bf16.msra.mxu0 0
  %170 = vmatprep.subr.bf16.mxu0 0
  %171 = vmatpush1.bf16.msra.mxu0 0
  %172 = vmatprep.subr.bf16.mxu0 0
  %173 = vmatpush1.bf16.msra.mxu0 %v134
  %174 = vmatprep.subr.bf16.mxu0 0
  %175 = vmatpush1.bf16.msra.mxu0 %v133
  %176 = vmatprep.subr.bf16.mxu0 0
  %177 = vmatpush1.bf16.msra.mxu0 %v132
  %178 = vmatprep.subr.bf16.mxu0 0
  %179 = vmatpush1.bf16.msra.mxu0 %v131
  %180 = vmatprep.subr.bf16.mxu0 0
  %181 = vmatpush2.bf16.msra.mxu0 0
  %182 = vmatprep.subr.bf16.mxu0 0
  %183 = vmatpush2.bf16.msra.mxu0 0
  %184 = vmatprep.subr.bf16.mxu0 0
  %185 = vmatpush2.bf16.msra.mxu0 0
  %186 = vmatprep.subr.bf16.mxu0 0
  %187 = vmatpush2.bf16.msra.mxu0 0
  %188 = vmatprep.subr.bf16.mxu0 0
  %189 = vmatpush2.bf16.msra.mxu0 0
  %190 = vmatprep.subr.bf16.mxu0 0
  %191 = vmatpush2.bf16.msra.mxu0 0
  %192 = vmatprep.subr.bf16.mxu0 0
  %193 = vmatpush2.bf16.msra.mxu0 0
  %194 = vmatprep.subr.bf16.mxu0 0
  %195 = vmatpush2.bf16.msra.mxu0 0
  %196 = vmatprep.mubr.bf16.mxu0 0
  %197 = vmatmul.mubr.bf16.gmra.mxu0 %v141
  %v198 = vpop.f32.mrf.mxu0
  %v199 = vadd.f32 0.0, %v198
  %v200 = vpop.f32.mrf.mxu0
  %v201 = vpop.f32.mrf.mxu0
  %v202 = vadd.f32 0.0, %v201
  %v203 = vpop.f32.mrf.mxu0
  %204 = vmatprep.mubr.bf16.mxu0 0
  %205 = vmatmul.mubr.bf16.gmra.mxu0 %v144
  %v206 = vpop.f32.mrf.mxu0
  %v207 = vadd.f32 0.0, %v206
  %v208 = vpop.f32.mrf.mxu0
  %v209 = vpop.f32.mrf.mxu0
  %v210 = vadd.f32 0.0, %v209
  %v211 = vpop.f32.mrf.mxu0
  %212 = vmatprep.mubr.bf16.mxu0 0
  %213 = vmatmul.mubr.bf16.gmra.mxu0 %v147
  %v214 = vpop.f32.mrf.mxu0
  %v215 = vadd.f32 0.0, %v214
  %v216 = vpop.f32.mrf.mxu0
  %v217 = vpop.f32.mrf.mxu0
  %v218 = vadd.f32 0.0, %v217
  %v219 = vpop.f32.mrf.mxu0
  %220 = vmatprep.mubr.bf16.mxu0 0
  %221 = vmatmul.mubr.bf16.gmra.mxu0 %v150
  %v222 = vpop.f32.mrf.mxu0
  %v223 = vadd.f32 0.0, %v222
  %v224 = vpop.f32.mrf.mxu0
  %v225 = vpop.f32.mrf.mxu0
  %v226 = vadd.f32 0.0, %v225
  %v227 = vpop.f32.mrf.mxu0
  %228 = vmatprep.mubr.bf16.mxu0 0
  %229 = vmatmul.mubr.bf16.gmra.mxu0 %v153
  %v230 = vpop.f32.mrf.mxu0
  %v231 = vadd.f32 0.0, %v230
  %v232 = vpop.f32.mrf.mxu0
  %v233 = vpop.f32.mrf.mxu0
  %v234 = vadd.f32 0.0, %v233
  %v235 = vpop.f32.mrf.mxu0
  %236 = vmatprep.mubr.bf16.mxu0 0
  %237 = vmatmul.mubr.bf16.gmra.mxu0 %v156
  %v238 = vpop.f32.mrf.mxu0
  %v239 = vadd.f32 0.0, %v238
  %v240 = vpop.f32.mrf.mxu0
  %v241 = vpop.f32.mrf.mxu0
  %v242 = vadd.f32 0.0, %v241
  %v243 = vpop.f32.mrf.mxu0
  %244 = vmatprep.mubr.bf16.mxu0 0
  %245 = vmatmul.mubr.bf16.gmra.mxu0 %v159
  %v246 = vpop.f32.mrf.mxu0
  %v247 = vadd.f32 0.0, %v246
  %v248 = vpop.f32.mrf.mxu0
  %v249 = vpop.f32.mrf.mxu0
  %v250 = vadd.f32 0.0, %v249
  %v251 = vpop.f32.mrf.mxu0
  %252 = vmatprep.mubr.bf16.mxu0 0
  %253 = vmatmul.mubr.bf16.gmra.mxu0 %v162
  %v254 = vpop.f32.mrf.mxu0
  %v255 = vadd.f32 0.0, %v254
  %v256 = vpop.f32.mrf.mxu0
  %v257 = vpop.f32.mrf.mxu0
  %v258 = vadd.f32 0.0, %v257
  %v259 = vpop.f32.mrf.mxu0
  %260 = vdwg.mxu0
  %v261 = vadd.f32 %v35, %v199
  %v262 = vadd.f32 %v36, %v202
  %v263 = vadd.f32 %v37, %v207
  %v264 = vadd.f32 %v38, %v210
  %v265 = vadd.f32 %v39, %v215
  %v266 = vadd.f32 %v40, %v218
  %v267 = vadd.f32 %v41, %v223
  %v268 = vadd.f32 %v42, %v226
  %v269 = vadd.f32 %v43, %v231
  %v270 = vadd.f32 %v44, %v234
  %v271 = vadd.f32 %v45, %v239
  %v272 = vadd.f32 %v46, %v242
  %v273 = vadd.f32 %v47, %v247
  %v274 = vadd.f32 %v48, %v250
  %v275 = vadd.f32 %v49, %v255
  %v276 = vadd.f32 %v50, %v258
  %277 = vst [vmem:[#allocation2] sm:$0xff] %v261
  %278 = vst [vmem:[#allocation2 + $0x8] sm:$0xff] %v262
  %279 = vst [vmem:[#allocation2 + $0x10] sm:$0xff] %v263
  %280 = vst [vmem:[#allocation2 + $0x18] sm:$0xff] %v264
  %281 = vst [vmem:[#allocation2 + $0x20] sm:$0xff] %v265
  %282 = vst [vmem:[#allocation2 + $0x28] sm:$0xff] %v266
  %283 = vst [vmem:[#allocation2 + $0x30] sm:$0xff] %v267
  %284 = vst [vmem:[#allocation2 + $0x38] sm:$0xff] %v268
  %285 = vst [vmem:[#allocation2 + $0x40] sm:$0xff] %v269
  %286 = vst [vmem:[#allocation2 + $0x48] sm:$0xff] %v270
  %287 = vst [vmem:[#allocation2 + $0x50] sm:$0xff] %v271
  %288 = vst [vmem:[#allocation2 + $0x58] sm:$0xff] %v272
  %289 = vst [vmem:[#allocation2 + $0x60] sm:$0xff] %v273
  %290 = vst [vmem:[#allocation2 + $0x68] sm:$0xff] %v274
  %291 = vst [vmem:[#allocation2 + $0x70] sm:$0xff] %v275
  %292 = vst [vmem:[#allocation2 + $0x78] sm:$0xff] %v276
  // Predicated region
  $region18: #{icnet_forward.14} parent=0 // pred_check
    %p293 = pneg %p15
  $region19: #{icnet_forward.14} parent=0 // pred_check_branch
    %295 = sbr.rel (%p293) target = $region21
  $region20: #{icnet_forward.14} parent=0 // pred_region
    %v296 = vld [vmem:[#allocation2] sm:$0xff]
    %v297 = vld [vmem:[#allocation2 + $0x8] sm:$0xff]
    %v298 = vld [vmem:[#allocation2 + $0x10] sm:$0xff]
    %v299 = vld [vmem:[#allocation2 + $0x18] sm:$0xff]
    %v300 = vld [vmem:[#allocation2 + $0x20] sm:$0xff]
    %v301 = vld [vmem:[#allocation2 + $0x28] sm:$0xff]
    %v302 = vld [vmem:[#allocation2 + $0x30] sm:$0xff]
    %v303 = vld [vmem:[#allocation2 + $0x38] sm:$0xff]
    %v304 = vld [vmem:[#allocation2 + $0x40] sm:$0xff]
    %v305 = vld [vmem:[#allocation2 + $0x48] sm:$0xff]
    %v306 = vld [vmem:[#allocation2 + $0x50] sm:$0xff]
    %v307 = vld [vmem:[#allocation2 + $0x58] sm:$0xff]
    %v308 = vld [vmem:[#allocation2 + $0x60] sm:$0xff]
    %v309 = vld [vmem:[#allocation2 + $0x68] sm:$0xff]
    %v310 = vld [vmem:[#allocation2 + $0x70] sm:$0xff]
    %v311 = vld [vmem:[#allocation2 + $0x78] sm:$0xff]
    %v312 = vld [vmem:[%s2] sm:$0xf]
    %v313 = vld [vmem:[%s2 + $0x4] sm:$0xf]
    %v314 = vld [vmem:[%s2 + $0x8] sm:$0xf]
    %v315 = vld [vmem:[%s2 + $0xc] sm:$0xf]
    %v316 = vld [vmem:[%s2 + $0x10] sm:$0xf]
    %v317 = vld [vmem:[%s2 + $0x14] sm:$0xf]
    %v318 = vld [vmem:[%s2 + $0x18] sm:$0xf]
    %v319 = vld [vmem:[%s2 + $0x1c] sm:$0xf]
    %v320 = vld [vmem:[%s2 + $0x20] sm:$0xf]
    %v321 = vld [vmem:[%s2 + $0x24] sm:$0xf]
    %v322 = vld [vmem:[%s2 + $0x28] sm:$0xf]
    %v323 = vld [vmem:[%s2 + $0x2c] sm:$0xf]
    %v324 = vld [vmem:[%s2 + $0x30] sm:$0xf]
    %v325 = vld [vmem:[%s2 + $0x34] sm:$0xf]
    %v326 = vld [vmem:[%s2 + $0x38] sm:$0xf]
    %v327 = vld [vmem:[%s2 + $0x3c] sm:$0xf]
    %v328 = vunpack.c.l.bf16 %v312
    %v329 = vunpack.c.l.bf16 %v313
    %v330 = vunpack.c.l.bf16 %v314
    %v331 = vunpack.c.l.bf16 %v315
    %v332 = vunpack.c.l.bf16 %v316
    %v333 = vunpack.c.l.bf16 %v317
    %v334 = vunpack.c.l.bf16 %v318
    %v335 = vunpack.c.l.bf16 %v319
    %v336 = vunpack.c.l.bf16 %v320
    %v337 = vunpack.c.l.bf16 %v321
    %v338 = vunpack.c.l.bf16 %v322
    %v339 = vunpack.c.l.bf16 %v323
    %v340 = vunpack.c.l.bf16 %v324
    %v341 = vunpack.c.l.bf16 %v325
    %v342 = vunpack.c.l.bf16 %v326
    %v343 = vunpack.c.l.bf16 %v327
    %v344 = vadd.f32 %v296, %v328
    %v345 = vadd.f32 %v297, %v329
    %v346 = vadd.f32 %v298, %v330
    %v347 = vadd.f32 %v299, %v331
    %v348 = vadd.f32 %v300, %v332
    %v349 = vadd.f32 %v301, %v333
    %v350 = vadd.f32 %v302, %v334
    %v351 = vadd.f32 %v303, %v335
    %v352 = vadd.f32 %v304, %v336
    %v353 = vadd.f32 %v305, %v337
    %v354 = vadd.f32 %v306, %v338
    %v355 = vadd.f32 %v307, %v339
    %v356 = vadd.f32 %v308, %v340
    %v357 = vadd.f32 %v309, %v341
    %v358 = vadd.f32 %v310, %v342
    %v359 = vadd.f32 %v311, %v343
    %v360 = vmax.f32 %v344, 0.0
    %v361 = vmax.f32 %v345, 0.0
    %v362 = vmax.f32 %v346, 0.0
    %v363 = vmax.f32 %v347, 0.0
    %v364 = vmax.f32 %v348, 0.0
    %v365 = vmax.f32 %v349, 0.0
    %v366 = vmax.f32 %v350, 0.0
    %v367 = vmax.f32 %v351, 0.0
    %v368 = vmax.f32 %v352, 0.0
    %v369 = vmax.f32 %v353, 0.0
    %v370 = vmax.f32 %v354, 0.0
    %v371 = vmax.f32 %v355, 0.0
    %v372 = vmax.f32 %v356, 0.0
    %v373 = vmax.f32 %v357, 0.0
    %v374 = vmax.f32 %v358, 0.0
    %v375 = vmax.f32 %v359, 0.0
    %v376 = vpack.c.bf16 %v361, %v360
    %v377 = vpack.c.bf16 %v363, %v362
    %v378 = vpack.c.bf16 %v365, %v364
    %v379 = vpack.c.bf16 %v367, %v366
    %v380 = vpack.c.bf16 %v369, %v368
    %v381 = vpack.c.bf16 %v371, %v370
    %v382 = vpack.c.bf16 %v373, %v372
    %v383 = vpack.c.bf16 %v375, %v374
    %v392 = vunpack.c.l.b16 %v376
    %v393 = vunpack.c.h.b16 %v376
    %v394 = vunpack.c.l.b16 %v377
    %v395 = vunpack.c.h.b16 %v377
    %v396 = vunpack.c.l.b16 %v378
    %v397 = vunpack.c.h.b16 %v378
    %v398 = vunpack.c.l.b16 %v379
    %v399 = vunpack.c.h.b16 %v379
    %v400 = vunpack.c.l.b16 %v380
    %v401 = vunpack.c.h.b16 %v380
    %v402 = vunpack.c.l.b16 %v381
    %v403 = vunpack.c.h.b16 %v381
    %v404 = vunpack.c.l.b16 %v382
    %v405 = vunpack.c.h.b16 %v382
    %v406 = vunpack.c.l.b16 %v383
    %v407 = vunpack.c.h.b16 %v383
    %v408 = vpack.c.b16 %v392, %v392
    %v409 = vpack.c.b16 %v393, %v393
    %v410 = vpack.c.b16 %v394, %v394
    %v411 = vpack.c.b16 %v395, %v395
    %v412 = vpack.c.b16 %v396, %v396
    %v413 = vpack.c.b16 %v397, %v397
    %v414 = vpack.c.b16 %v398, %v398
    %v415 = vpack.c.b16 %v399, %v399
    %v416 = vpack.c.b16 %v400, %v400
    %v417 = vpack.c.b16 %v401, %v401
    %v418 = vpack.c.b16 %v402, %v402
    %v419 = vpack.c.b16 %v403, %v403
    %v420 = vpack.c.b16 %v404, %v404
    %v421 = vpack.c.b16 %v405, %v405
    %v422 = vpack.c.b16 %v406, %v406
    %v423 = vpack.c.b16 %v407, %v407
    %440 = vst [vmem:[%s3] sm:$0xf] %v408
    %441 = vst [vmem:[%s3 + $0x4] sm:$0xf] %v409
    %442 = vst [vmem:[%s3 + $0x8] sm:$0xf] %v410
    %443 = vst [vmem:[%s3 + $0xc] sm:$0xf] %v411
    %444 = vst [vmem:[%s3 + $0x10] sm:$0xf] %v412
    %445 = vst [vmem:[%s3 + $0x14] sm:$0xf] %v413
    %446 = vst [vmem:[%s3 + $0x18] sm:$0xf] %v414
    %447 = vst [vmem:[%s3 + $0x1c] sm:$0xf] %v415
    %448 = vst [vmem:[%s3 + $0x20] sm:$0xf] %v416
    %449 = vst [vmem:[%s3 + $0x24] sm:$0xf] %v417
    %450 = vst [vmem:[%s3 + $0x28] sm:$0xf] %v418
    %451 = vst [vmem:[%s3 + $0x2c] sm:$0xf] %v419
    %452 = vst [vmem:[%s3 + $0x30] sm:$0xf] %v420
    %453 = vst [vmem:[%s3 + $0x34] sm:$0xf] %v421
    %454 = vst [vmem:[%s3 + $0x38] sm:$0xf] %v422
    %455 = vst [vmem:[%s3 + $0x3c] sm:$0xf] %v423
  $region21: #{icnet_forward.14} parent=0 // pred_fallthru
    _
  // Predicated region
  $region22: #{icnet_forward.14} parent=0 // pred_check
    _
  $region23: #{icnet_forward.14} parent=0 // pred_check_branch
    %457 = sbr.rel (0) target = $region25
  $region24: #{icnet_forward.14} parent=0 // pred_region
    _
  $region25: #{icnet_forward.14} parent=0 // pred_fallthru
    _
  // Predicated region
  $region26: #{icnet_forward.14} parent=0 // pred_check
    _
  $region27: #{icnet_forward.14} parent=0 // pred_check_branch
    %459 = sbr.rel (0) target = $region29
  $region28: #{icnet_forward.14} parent=0 // pred_region
    _
  $region29: #{icnet_forward.14} parent=0 // pred_fallthru
    _

// kernel: icnet_forward.15
$region0: #{icnet_forward.15}
  #allocation0 [shape = 'u32[]', space=smem, size = 0x4, offset = 0x4, fixed_abs, tag = 'smem constant byte address 0x4 - core index']
  #allocation1 [shape = 'u32[144,128]{1,0:T(1,128)}', space=vmem, size = 0x12000, scoped, tag = 'internal scratch']
  #allocation2 [shape = 'f32[128,128]{1,0:T(8,128)}', space=vmem, size = 0x10000, scoped, tag = 'scratch operand']
  %s0 = inlined_call_operand.vmem [shape: bf16[128,128], index: 0, kind: input, shape index: {}]
  %s1 = inlined_call_operand.vmem [shape: bf16[128,128], index: 1, kind: input, shape index: {}]
  %s2 = inlined_call_operand.vmem [shape: bf16[128,128], index: 2, kind: output, shape index: {}]
  %s3 = sld [smem:[#allocation0]]
  $region26: #{icnet_forward.15} parent=0
    _
  %s5 = ssub.s32 1, %s3
  %s6 = scalar_select 0, %s5, %s3
  // Predicated region
  $region2: #{icnet_forward.15} parent=0 // pred_check
    _
  $region3: #{icnet_forward.15} parent=0 // pred_check_branch
    %8 = sbr.rel (0) target = $region5
  $region4: #{icnet_forward.15} parent=0 // pred_region
    _
  $region5: #{icnet_forward.15} parent=0 // pred_fallthru
    _
  // Predicated region
  $region6: #{icnet_forward.15} parent=0 // pred_check
    _
  $region7: #{icnet_forward.15} parent=0 // pred_check_branch
    %10 = sbr.rel (0) target = $region9
  $region8: #{icnet_forward.15} parent=0 // pred_region
    _
  $region9: #{icnet_forward.15} parent=0 // pred_fallthru
    _
  %p12 = scmp.eq.s32.totalorder 0, 0
  // Predicated region
  $region10: #{icnet_forward.15} parent=0 // pred_check
    %p13 = pneg %p12
  $region11: #{icnet_forward.15} parent=0 // pred_check_branch
    %15 = sbr.rel (%p13) target = $region13
  $region12: #{icnet_forward.15} parent=0 // pred_region
    %16 = vst [vmem:[#allocation2] sm:$0xff] 0.0
    %17 = vst [vmem:[#allocation2 + $0x8] sm:$0xff] 0.0
    %18 = vst [vmem:[#allocation2 + $0x10] sm:$0xff] 0.0
    %19 = vst [vmem:[#allocation2 + $0x18] sm:$0xff] 0.0
    %20 = vst [vmem:[#allocation2 + $0x20] sm:$0xff] 0.0
    %21 = vst [vmem:[#allocation2 + $0x28] sm:$0xff] 0.0
    %22 = vst [vmem:[#allocation2 + $0x30] sm:$0xff] 0.0
    %23 = vst [vmem:[#allocation2 + $0x38] sm:$0xff] 0.0
    %24 = vst [vmem:[#allocation2 + $0x40] sm:$0xff] 0.0
    %25 = vst [vmem:[#allocation2 + $0x48] sm:$0xff] 0.0
    %26 = vst [vmem:[#allocation2 + $0x50] sm:$0xff] 0.0
    %27 = vst [vmem:[#allocation2 + $0x58] sm:$0xff] 0.0
    %28 = vst [vmem:[#allocation2 + $0x60] sm:$0xff] 0.0
    %29 = vst [vmem:[#allocation2 + $0x68] sm:$0xff] 0.0
    %30 = vst [vmem:[#allocation2 + $0x70] sm:$0xff] 0.0
    %31 = vst [vmem:[#allocation2 + $0x78] sm:$0xff] 0.0
  $region13: #{icnet_forward.15} parent=0 // pred_fallthru
    _
  %v32 = vld [vmem:[#allocation2] sm:$0xff]
  %v33 = vld [vmem:[#allocation2 + $0x8] sm:$0xff]
  %v34 = vld [vmem:[#allocation2 + $0x10] sm:$0xff]
  %v35 = vld [vmem:[#allocation2 + $0x18] sm:$0xff]
  %v36 = vld [vmem:[#allocation2 + $0x20] sm:$0xff]
  %v37 = vld [vmem:[#allocation2 + $0x28] sm:$0xff]
  %v38 = vld [vmem:[#allocation2 + $0x30] sm:$0xff]
  %v39 = vld [vmem:[#allocation2 + $0x38] sm:$0xff]
  %v40 = vld [vmem:[#allocation2 + $0x40] sm:$0xff]
  %v41 = vld [vmem:[#allocation2 + $0x48] sm:$0xff]
  %v42 = vld [vmem:[#allocation2 + $0x50] sm:$0xff]
  %v43 = vld [vmem:[#allocation2 + $0x58] sm:$0xff]
  %v44 = vld [vmem:[#allocation2 + $0x60] sm:$0xff]
  %v45 = vld [vmem:[#allocation2 + $0x68] sm:$0xff]
  %v46 = vld [vmem:[#allocation2 + $0x70] sm:$0xff]
  %v47 = vld [vmem:[#allocation2 + $0x78] sm:$0xff]
  %v48 = vld [vmem:[%s0] sm:$0xf]
  %v49 = vld [vmem:[%s0 + $0x4] sm:$0xf]
  %v50 = vld [vmem:[%s0 + $0x8] sm:$0xf]
  %v51 = vld [vmem:[%s0 + $0xc] sm:$0xf]
  %v52 = vld [vmem:[%s0 + $0x10] sm:$0xf]
  %v53 = vld [vmem:[%s0 + $0x14] sm:$0xf]
  %v54 = vld [vmem:[%s0 + $0x18] sm:$0xf]
  %v55 = vld [vmem:[%s0 + $0x1c] sm:$0xf]
  %v56 = vld [vmem:[%s0 + $0x20] sm:$0xf]
  %v57 = vld [vmem:[%s0 + $0x24] sm:$0xf]
  %v58 = vld [vmem:[%s0 + $0x28] sm:$0xf]
  %v59 = vld [vmem:[%s0 + $0x2c] sm:$0xf]
  %v60 = vld [vmem:[%s0 + $0x30] sm:$0xf]
  %v61 = vld [vmem:[%s0 + $0x34] sm:$0xf]
  %v62 = vld [vmem:[%s0 + $0x38] sm:$0xf]
  %v63 = vld [vmem:[%s0 + $0x3c] sm:$0xf]
  %v64 = vld [vmem:[%s1] sm:$0xf]
  %v65 = vld [vmem:[%s1 + $0x4] sm:$0xf]
  %v66 = vld [vmem:[%s1 + $0x8] sm:$0xf]
  %v67 = vld [vmem:[%s1 + $0xc] sm:$0xf]
  %v68 = vld [vmem:[%s1 + $0x10] sm:$0xf]
  %v69 = vld [vmem:[%s1 + $0x14] sm:$0xf]
  %v70 = vld [vmem:[%s1 + $0x18] sm:$0xf]
  %v71 = vld [vmem:[%s1 + $0x1c] sm:$0xf]
  %v72 = vld [vmem:[%s1 + $0x20] sm:$0xf]
  %v73 = vld [vmem:[%s1 + $0x24] sm:$0xf]
  %v74 = vld [vmem:[%s1 + $0x28] sm:$0xf]
  %v75 = vld [vmem:[%s1 + $0x2c] sm:$0xf]
  %v76 = vld [vmem:[%s1 + $0x30] sm:$0xf]
  %v77 = vld [vmem:[%s1 + $0x34] sm:$0xf]
  %v78 = vld [vmem:[%s1 + $0x38] sm:$0xf]
  %v79 = vld [vmem:[%s1 + $0x3c] sm:$0xf]
  %v96 = vunpack.c.l.b16 %v48
  %v97 = vunpack.c.l.b16 %v49
  %v98 = vunpack.c.l.b16 %v50
  %v99 = vunpack.c.l.b16 %v51
  %v100 = vunpack.c.l.b16 %v52
  %v101 = vunpack.c.l.b16 %v53
  %v102 = vunpack.c.l.b16 %v54
  %v103 = vunpack.c.l.b16 %v55
  %v104 = vunpack.c.l.b16 %v56
  %v105 = vunpack.c.l.b16 %v57
  %v106 = vunpack.c.l.b16 %v58
  %v107 = vunpack.c.l.b16 %v59
  %v108 = vunpack.c.l.b16 %v60
  %v109 = vunpack.c.l.b16 %v61
  %v110 = vunpack.c.l.b16 %v62
  %v111 = vunpack.c.l.b16 %v63
  %v112 = vpack.c.b16 %v97, %v96
  %v113 = vpack.c.b16 %v99, %v98
  %v114 = vpack.c.b16 %v101, %v100
  %v115 = vpack.c.b16 %v103, %v102
  %v116 = vpack.c.b16 %v105, %v104
  %v117 = vpack.c.b16 %v107, %v106
  %v118 = vpack.c.b16 %v109, %v108
  %v119 = vpack.c.b16 %v111, %v110
  %v144 = vunpack.c.l.b16 %v64
  %v145 = vunpack.c.l.b16 %v65
  %v146 = vunpack.c.l.b16 %v66
  %v147 = vunpack.c.l.b16 %v67
  %v148 = vunpack.c.l.b16 %v68
  %v149 = vunpack.c.l.b16 %v69
  %v150 = vunpack.c.l.b16 %v70
  %v151 = vunpack.c.l.b16 %v71
  %v152 = vunpack.c.l.b16 %v72
  %v153 = vunpack.c.l.b16 %v73
  %v154 = vunpack.c.l.b16 %v74
  %v155 = vunpack.c.l.b16 %v75
  %v156 = vunpack.c.l.b16 %v76
  %v157 = vunpack.c.l.b16 %v77
  %v158 = vunpack.c.l.b16 %v78
  %v159 = vunpack.c.l.b16 %v79
  %v160 = vpack.c.b16 %v145, %v144
  %v161 = vpack.c.b16 %v147, %v146
  %v162 = vpack.c.b16 %v149, %v148
  %v163 = vpack.c.b16 %v151, %v150
  %v164 = vpack.c.b16 %v153, %v152
  %v165 = vpack.c.b16 %v155, %v154
  %v166 = vpack.c.b16 %v157, %v156
  %v167 = vpack.c.b16 %v159, %v158
  %176 = vmatprep.subr.bf16.mxu0 0
  %177 = vmatpush1.bf16.msra.mxu0 %v167
  %178 = vmatprep.subr.bf16.mxu0 0
  %179 = vmatpush1.bf16.msra.mxu0 %v166
  %180 = vmatprep.subr.bf16.mxu0 0
  %181 = vmatpush1.bf16.msra.mxu0 %v165
  %182 = vmatprep.subr.bf16.mxu0 0
  %183 = vmatpush1.bf16.msra.mxu0 %v164
  %184 = vmatprep.subr.bf16.mxu0 0
  %185 = vmatpush1.bf16.msra.mxu0 %v163
  %186 = vmatprep.subr.bf16.mxu0 0
  %187 = vmatpush1.bf16.msra.mxu0 %v162
  %188 = vmatprep.subr.bf16.mxu0 0
  %189 = vmatpush1.bf16.msra.mxu0 %v161
  %190 = vmatprep.subr.bf16.mxu0 0
  %191 = vmatpush1.bf16.msra.mxu0 %v160
  %192 = vmatprep.subr.bf16.mxu0 0
  %193 = vmatpush2.bf16.msra.mxu0 0
  %194 = vmatprep.subr.bf16.mxu0 0
  %195 = vmatpush2.bf16.msra.mxu0 0
  %196 = vmatprep.subr.bf16.mxu0 0
  %197 = vmatpush2.bf16.msra.mxu0 0
  %198 = vmatprep.subr.bf16.mxu0 0
  %199 = vmatpush2.bf16.msra.mxu0 0
  %200 = vmatprep.subr.bf16.mxu0 0
  %201 = vmatpush2.bf16.msra.mxu0 0
  %202 = vmatprep.subr.bf16.mxu0 0
  %203 = vmatpush2.bf16.msra.mxu0 0
  %204 = vmatprep.subr.bf16.mxu0 0
  %205 = vmatpush2.bf16.msra.mxu0 0
  %206 = vmatprep.subr.bf16.mxu0 0
  %207 = vmatpush2.bf16.msra.mxu0 0
  %208 = vmatprep.mubr.bf16.mxu0 0
  %209 = vmatmul.mubr.bf16.gmra.mxu0 %v112
  %v210 = vpop.f32.mrf.mxu0
  %v211 = vadd.f32 0.0, %v210
  %v212 = vpop.f32.mrf.mxu0
  %v213 = vpop.f32.mrf.mxu0
  %v214 = vadd.f32 0.0, %v213
  %v215 = vpop.f32.mrf.mxu0
  %216 = vmatprep.mubr.bf16.mxu0 0
  %217 = vmatmul.mubr.bf16.gmra.mxu0 %v113
  %v218 = vpop.f32.mrf.mxu0
  %v219 = vadd.f32 0.0, %v218
  %v220 = vpop.f32.mrf.mxu0
  %v221 = vpop.f32.mrf.mxu0
  %v222 = vadd.f32 0.0, %v221
  %v223 = vpop.f32.mrf.mxu0
  %224 = vmatprep.mubr.bf16.mxu0 0
  %225 = vmatmul.mubr.bf16.gmra.mxu0 %v114
  %v226 = vpop.f32.mrf.mxu0
  %v227 = vadd.f32 0.0, %v226
  %v228 = vpop.f32.mrf.mxu0
  %v229 = vpop.f32.mrf.mxu0
  %v230 = vadd.f32 0.0, %v229
  %v231 = vpop.f32.mrf.mxu0
  %232 = vmatprep.mubr.bf16.mxu0 0
  %233 = vmatmul.mubr.bf16.gmra.mxu0 %v115
  %v234 = vpop.f32.mrf.mxu0
  %v235 = vadd.f32 0.0, %v234
  %v236 = vpop.f32.mrf.mxu0
  %v237 = vpop.f32.mrf.mxu0
  %v238 = vadd.f32 0.0, %v237
  %v239 = vpop.f32.mrf.mxu0
  %240 = vmatprep.mubr.bf16.mxu0 0
  %241 = vmatmul.mubr.bf16.gmra.mxu0 %v116
  %v242 = vpop.f32.mrf.mxu0
  %v243 = vadd.f32 0.0, %v242
  %v244 = vpop.f32.mrf.mxu0
  %v245 = vpop.f32.mrf.mxu0
  %v246 = vadd.f32 0.0, %v245
  %v247 = vpop.f32.mrf.mxu0
  %248 = vmatprep.mubr.bf16.mxu0 0
  %249 = vmatmul.mubr.bf16.gmra.mxu0 %v117
  %v250 = vpop.f32.mrf.mxu0
  %v251 = vadd.f32 0.0, %v250
  %v252 = vpop.f32.mrf.mxu0
  %v253 = vpop.f32.mrf.mxu0
  %v254 = vadd.f32 0.0, %v253
  %v255 = vpop.f32.mrf.mxu0
  %256 = vmatprep.mubr.bf16.mxu0 0
  %257 = vmatmul.mubr.bf16.gmra.mxu0 %v118
  %v258 = vpop.f32.mrf.mxu0
  %v259 = vadd.f32 0.0, %v258
  %v260 = vpop.f32.mrf.mxu0
  %v261 = vpop.f32.mrf.mxu0
  %v262 = vadd.f32 0.0, %v261
  %v263 = vpop.f32.mrf.mxu0
  %264 = vmatprep.mubr.bf16.mxu0 0
  %265 = vmatmul.mubr.bf16.gmra.mxu0 %v119
  %v266 = vpop.f32.mrf.mxu0
  %v267 = vadd.f32 0.0, %v266
  %v268 = vpop.f32.mrf.mxu0
  %v269 = vpop.f32.mrf.mxu0
  %v270 = vadd.f32 0.0, %v269
  %v271 = vpop.f32.mrf.mxu0
  %272 = vdwg.mxu0
  %v273 = vadd.f32 %v32, %v211
  %v274 = vadd.f32 %v33, %v214
  %v275 = vadd.f32 %v34, %v219
  %v276 = vadd.f32 %v35, %v222
  %v277 = vadd.f32 %v36, %v227
  %v278 = vadd.f32 %v37, %v230
  %v279 = vadd.f32 %v38, %v235
  %v280 = vadd.f32 %v39, %v238
  %v281 = vadd.f32 %v40, %v243
  %v282 = vadd.f32 %v41, %v246
  %v283 = vadd.f32 %v42, %v251
  %v284 = vadd.f32 %v43, %v254
  %v285 = vadd.f32 %v44, %v259
  %v286 = vadd.f32 %v45, %v262
  %v287 = vadd.f32 %v46, %v267
  %v288 = vadd.f32 %v47, %v270
  %289 = vst [vmem:[#allocation2] sm:$0xff] %v273
  %290 = vst [vmem:[#allocation2 + $0x8] sm:$0xff] %v274
  %291 = vst [vmem:[#allocation2 + $0x10] sm:$0xff] %v275
  %292 = vst [vmem:[#allocation2 + $0x18] sm:$0xff] %v276
  %293 = vst [vmem:[#allocation2 + $0x20] sm:$0xff] %v277
  %294 = vst [vmem:[#allocation2 + $0x28] sm:$0xff] %v278
  %295 = vst [vmem:[#allocation2 + $0x30] sm:$0xff] %v279
  %296 = vst [vmem:[#allocation2 + $0x38] sm:$0xff] %v280
  %297 = vst [vmem:[#allocation2 + $0x40] sm:$0xff] %v281
  %298 = vst [vmem:[#allocation2 + $0x48] sm:$0xff] %v282
  %299 = vst [vmem:[#allocation2 + $0x50] sm:$0xff] %v283
  %300 = vst [vmem:[#allocation2 + $0x58] sm:$0xff] %v284
  %301 = vst [vmem:[#allocation2 + $0x60] sm:$0xff] %v285
  %302 = vst [vmem:[#allocation2 + $0x68] sm:$0xff] %v286
  %303 = vst [vmem:[#allocation2 + $0x70] sm:$0xff] %v287
  %304 = vst [vmem:[#allocation2 + $0x78] sm:$0xff] %v288
  // Predicated region
  $region14: #{icnet_forward.15} parent=0 // pred_check
    %p305 = pneg %p12
  $region15: #{icnet_forward.15} parent=0 // pred_check_branch
    %307 = sbr.rel (%p305) target = $region17
  $region16: #{icnet_forward.15} parent=0 // pred_region
    %v308 = vld [vmem:[#allocation2] sm:$0xff]
    %v309 = vld [vmem:[#allocation2 + $0x8] sm:$0xff]
    %v310 = vld [vmem:[#allocation2 + $0x10] sm:$0xff]
    %v311 = vld [vmem:[#allocation2 + $0x18] sm:$0xff]
    %v312 = vld [vmem:[#allocation2 + $0x20] sm:$0xff]
    %v313 = vld [vmem:[#allocation2 + $0x28] sm:$0xff]
    %v314 = vld [vmem:[#allocation2 + $0x30] sm:$0xff]
    %v315 = vld [vmem:[#allocation2 + $0x38] sm:$0xff]
    %v316 = vld [vmem:[#allocation2 + $0x40] sm:$0xff]
    %v317 = vld [vmem:[#allocation2 + $0x48] sm:$0xff]
    %v318 = vld [vmem:[#allocation2 + $0x50] sm:$0xff]
    %v319 = vld [vmem:[#allocation2 + $0x58] sm:$0xff]
    %v320 = vld [vmem:[#allocation2 + $0x60] sm:$0xff]
    %v321 = vld [vmem:[#allocation2 + $0x68] sm:$0xff]
    %v322 = vld [vmem:[#allocation2 + $0x70] sm:$0xff]
    %v323 = vld [vmem:[#allocation2 + $0x78] sm:$0xff]
    %v324 = vpack.c.bf16 %v309, %v308
    %v325 = vpack.c.bf16 %v311, %v310
    %v326 = vpack.c.bf16 %v313, %v312
    %v327 = vpack.c.bf16 %v315, %v314
    %v328 = vpack.c.bf16 %v317, %v316
    %v329 = vpack.c.bf16 %v319, %v318
    %v330 = vpack.c.bf16 %v321, %v320
    %v331 = vpack.c.bf16 %v323, %v322
    %v340 = vunpack.c.l.b16 %v324
    %v341 = vunpack.c.h.b16 %v324
    %v342 = vunpack.c.l.b16 %v325
    %v343 = vunpack.c.h.b16 %v325
    %v344 = vunpack.c.l.b16 %v326
    %v345 = vunpack.c.h.b16 %v326
    %v346 = vunpack.c.l.b16 %v327
    %v347 = vunpack.c.h.b16 %v327
    %v348 = vunpack.c.l.b16 %v328
    %v349 = vunpack.c.h.b16 %v328
    %v350 = vunpack.c.l.b16 %v329
    %v351 = vunpack.c.h.b16 %v329
    %v352 = vunpack.c.l.b16 %v330
    %v353 = vunpack.c.h.b16 %v330
    %v354 = vunpack.c.l.b16 %v331
    %v355 = vunpack.c.h.b16 %v331
    %v356 = vpack.c.b16 %v340, %v340
    %v357 = vpack.c.b16 %v341, %v341
    %v358 = vpack.c.b16 %v342, %v342
    %v359 = vpack.c.b16 %v343, %v343
    %v360 = vpack.c.b16 %v344, %v344
    %v361 = vpack.c.b16 %v345, %v345
    %v362 = vpack.c.b16 %v346, %v346
    %v363 = vpack.c.b16 %v347, %v347
    %v364 = vpack.c.b16 %v348, %v348
    %v365 = vpack.c.b16 %v349, %v349
    %v366 = vpack.c.b16 %v350, %v350
    %v367 = vpack.c.b16 %v351, %v351
    %v368 = vpack.c.b16 %v352, %v352
    %v369 = vpack.c.b16 %v353, %v353
    %v370 = vpack.c.b16 %v354, %v354
    %v371 = vpack.c.b16 %v355, %v355
    %388 = vst [vmem:[%s2] sm:$0xf] %v356
    %389 = vst [vmem:[%s2 + $0x4] sm:$0xf] %v357
    %390 = vst [vmem:[%s2 + $0x8] sm:$0xf] %v358
    %391 = vst [vmem:[%s2 + $0xc] sm:$0xf] %v359
    %392 = vst [vmem:[%s2 + $0x10] sm:$0xf] %v360
    %393 = vst [vmem:[%s2 + $0x14] sm:$0xf] %v361
    %394 = vst [vmem:[%s2 + $0x18] sm:$0xf] %v362
    %395 = vst [vmem:[%s2 + $0x1c] sm:$0xf] %v363
    %396 = vst [vmem:[%s2 + $0x20] sm:$0xf] %v364
    %397 = vst [vmem:[%s2 + $0x24] sm:$0xf] %v365
    %398 = vst [vmem:[%s2 + $0x28] sm:$0xf] %v366
    %399 = vst [vmem:[%s2 + $0x2c] sm:$0xf] %v367
    %400 = vst [vmem:[%s2 + $0x30] sm:$0xf] %v368
    %401 = vst [vmem:[%s2 + $0x34] sm:$0xf] %v369
    %402 = vst [vmem:[%s2 + $0x38] sm:$0xf] %v370
    %403 = vst [vmem:[%s2 + $0x3c] sm:$0xf] %v371
  $region17: #{icnet_forward.15} parent=0 // pred_fallthru
    _
  // Predicated region
  $region18: #{icnet_forward.15} parent=0 // pred_check
    _
  $region19: #{icnet_forward.15} parent=0 // pred_check_branch
    %405 = sbr.rel (0) target = $region21
  $region20: #{icnet_forward.15} parent=0 // pred_region
    _
  $region21: #{icnet_forward.15} parent=0 // pred_fallthru
    _
  // Predicated region
  $region22: #{icnet_forward.15} parent=0 // pred_check
    _
  $region23: #{icnet_forward.15} parent=0 // pred_check_branch
    %407 = sbr.rel (0) target = $region25
  $region24: #{icnet_forward.15} parent=0 // pred_region
    _
  $region25: #{icnet_forward.15} parent=0 // pred_fallthru
    _

</llo_original>
